<compile_context>
chip_gen: v7x
topology: tpu7x:2x2x1
jax: 0.10.0
libtpu: 0.0.40
codegen_flags: <defaults>
</compile_context>

<pallas_src>
from functools import partial

import jax
import jax.numpy as jnp
from jax.experimental import pallas as pl
from jax.experimental.pallas import tpu as pltpu

NCLASS = 10          # TODO(synk): `nclass` not defined in source; fixed to 10.
NPAD = 128           # classifier lane-padded width inside the kernel
HIDDEN = 128         # synthesized LSTM hidden size (lane-aligned)
SEQ_LEN = 22         # 22 * 128 == 2816 == Linear in_features
IN_CH = 3
FEAT = SEQ_LEN * HIDDEN   # 2816
NEG_BIG = -1.0e30


# ----------------------- fused LSTM + Linear + log_softmax kernel -----------------------
def _ultra_gloves_kernel(x_ref, wih_ref, whh_ref, b_ref, wfc_ref, bfc_ref,
                         o_ref, xg_ref, hf_ref):
    T, BB, C = x_ref.shape          # (22, BB, 3), static
    H = HIDDEN

    # ---- Prologue (off the serial chain): precompute x @ W_ih + b for every timestep.
    # K=3 projection done with VPU broadcast-mul-adds; result lives in a VMEM scratch.
    wih = wih_ref[...]                                   # (C, 4H) f32
    b_l = b_ref[...]                                     # (1, 4H) f32 (b_ih + b_hh)
    for t in range(T):
        x_t = x_ref[t]                                   # (BB, C) f32
        g = b_l + x_t[:, 0:1] * wih[0:1, :]
        for ci in range(1, C):
            g = g + x_t[:, ci:ci + 1] * wih[ci:ci + 1, :]
        xg_ref[t] = g                                    # (BB, 4H)

    # ---- Serial recurrence: per step only matmul -> nonlinearity -> elementwise.
    h = jnp.zeros((BB, H), jnp.float32)
    c_state = jnp.zeros((BB, H), jnp.float32)
    for t in range(T):
        gates = xg_ref[t] + jnp.dot(h, whh_ref[...],
                                    preferred_element_type=jnp.float32)   # (BB, 4H)
        i_g = jax.nn.sigmoid(gates[:, 0:H])              # H=128 -> lane-aligned slices
        f_g = jax.nn.sigmoid(gates[:, H:2 * H])
        g_g = jnp.tanh(gates[:, 2 * H:3 * H])
        o_g = jax.nn.sigmoid(gates[:, 3 * H:4 * H])
        c_state = f_g * c_state + i_g * g_g
        h = o_g * jnp.tanh(c_state)
        hf_ref[:, t * H:(t + 1) * H] = h                 # batch-first flattened features

    # ---- Epilogue (off the serial chain): ONE (BB,2816)@(2816,128) GEMM + log_softmax.
    logits = jnp.dot(hf_ref[...], wfc_ref[...],
                     preferred_element_type=jnp.float32) + bfc_ref[...]   # (BB, NPAD)
    m = jnp.max(logits, axis=-1, keepdims=True)
    shifted = logits - m
    lse = jnp.log(jnp.sum(jnp.exp(shifted), axis=-1, keepdims=True))
    o_ref[...] = (shifted - lse).astype(o_ref.dtype)


# ------------------------------ one-time parameter prep --------------------------------
def prepare_params(params):
    """Pad / reshape weights once at load time (kept out of the per-call path)."""
    w_fc_pad = jnp.zeros((FEAT, NPAD), jnp.float32)
    w_fc_pad = w_fc_pad.at[:, :NCLASS].set(params["w_fc"].astype(jnp.float32))
    b_fc_pad = jnp.full((1, NPAD), NEG_BIG, jnp.float32)
    b_fc_pad = b_fc_pad.at[:, :NCLASS].set(
        params["b_fc"].reshape(1, NCLASS).astype(jnp.float32))
    return {
        "w_ih": params["w_ih"].astype(jnp.float32),                         # (C, 4H)
        "w_hh": params["w_hh"].astype(jnp.float32),                         # (H, 4H)
        "b_lstm": params["b_lstm"].reshape(1, 4 * HIDDEN).astype(jnp.float32),
        "w_fc_pad": w_fc_pad,                                               # (2816, 128)
        "b_fc_pad": b_fc_pad,                                               # (1, 128)
    }


# --------------------------------------- wrapper ---------------------------------------
@partial(jax.jit, static_argnames=("batch_blocks",))
def ultra_gloves_forward(x, prep, batch_blocks=1):
    """x: (B, SEQ_LEN, IN_CH) float32; returns (B, NCLASS) log-probabilities.

    batch_blocks > 1 splits the batch over a parallel grid axis (use 2 on v7x to
    engage both TensorCores; leave at 1 on single-TC v5e/v6e).
    """
    B, T, C = x.shape
    assert T == SEQ_LEN and C == IN_CH
    assert B % batch_blocks == 0
    BB = B // batch_blocks
    if batch_blocks > 1 and BB % 8 != 0:
        raise ValueError("per-block batch must be a multiple of 8 (sublane tiling)")

    x_tbc = jnp.transpose(x, (1, 0, 2)).astype(jnp.float32)   # (T, B, C), time-major

    out_pad = pl.pallas_call(
        _ultra_gloves_kernel,
        out_shape=jax.ShapeDtypeStruct((B, NPAD), jnp.float32),
        grid=(batch_blocks,),
        in_specs=[
            pl.BlockSpec((SEQ_LEN, BB, IN_CH), lambda i: (0, i, 0)),
            pl.BlockSpec((IN_CH, 4 * HIDDEN), lambda i: (0, 0)),
            pl.BlockSpec((HIDDEN, 4 * HIDDEN), lambda i: (0, 0)),
            pl.BlockSpec((1, 4 * HIDDEN), lambda i: (0, 0)),
            pl.BlockSpec((FEAT, NPAD), lambda i: (0, 0)),
            pl.BlockSpec((1, NPAD), lambda i: (0, 0)),
        ],
        out_specs=pl.BlockSpec((BB, NPAD), lambda i: (i, 0)),
        scratch_shapes=[
            pltpu.VMEM((SEQ_LEN, BB, 4 * HIDDEN), jnp.float32),  # precomputed x@W_ih + b
            pltpu.VMEM((BB, FEAT), jnp.float32),                 # flattened hidden states
        ],
        compiler_params=pltpu.CompilerParams(dimension_semantics=("parallel",)),
    )(x_tbc, prep["w_ih"], prep["w_hh"], prep["b_lstm"],
      prep["w_fc_pad"], prep["b_fc_pad"])

    return out_pad[:, :NCLASS]


# ------------------------------- pure-JAX reference ------------------------------------
def _reference_forward(x, params):
    B = x.shape[0]
    h = jnp.zeros((B, HIDDEN), jnp.float32)
    c = jnp.zeros((B, HIDDEN), jnp.float32)
    hs = []
    for t in range(SEQ_LEN):
        gates = (x[:, t, :] @ params["w_ih"] + h @ params["w_hh"]
                 + params["b_lstm"].reshape(1, -1))
        i_g = jax.nn.sigmoid(gates[:, 0:HIDDEN])
        f_g = jax.nn.sigmoid(gates[:, HIDDEN:2 * HIDDEN])
        g_g = jnp.tanh(gates[:, 2 * HIDDEN:3 * HIDDEN])
        o_g = jax.nn.sigmoid(gates[:, 3 * HIDDEN:4 * HIDDEN])
        c = f_g * c + i_g * g_g
        h = o_g * jnp.tanh(c)
        hs.append(h)
    feats = jnp.concatenate(hs, axis=-1)                        # (B, 2816)
    logits = feats @ params["w_fc"] + params["b_fc"].reshape(1, -1)
    return jax.nn.log_softmax(logits, axis=-1)


if __name__ == "__main__":
    key = jax.random.PRNGKey(0)
    kx, k1, k2, k3, k4, k5 = jax.random.split(key, 6)
    B = 8
    x = jax.random.normal(kx, (B, SEQ_LEN, IN_CH), dtype=jnp.float32)
    raw = {
        "w_ih": 0.1 * jax.random.normal(k1, (IN_CH, 4 * HIDDEN), jnp.float32),
        "w_hh": 0.1 * jax.random.normal(k2, (HIDDEN, 4 * HIDDEN), jnp.float32),
        "b_lstm": 0.1 * jax.random.normal(k3, (1, 4 * HIDDEN), jnp.float32),  # b_ih+b_hh
        "w_fc": 0.02 * jax.random.normal(k4, (FEAT, NCLASS), jnp.float32),
        "b_fc": 0.02 * jax.random.normal(k5, (NCLASS,), jnp.float32),
    }
    prep = prepare_params(raw)   # one-time weight padding / reshaping

    out = ultra_gloves_forward(x, prep)          # batch_blocks=1 (single TC)
    jax.block_until_ready(out)
    assert out.shape == (B, NCLASS)
    assert bool(jnp.all(jnp.isfinite(out)))
    # log_softmax rows must (approximately) exponentiate-sum to 1.
    assert bool(jnp.allclose(jnp.sum(jnp.exp(out), axis=-1), 1.0, atol=1e-3))
    # Validate against a pure-JAX f32 reference of the same math.
    ref = _reference_forward(x, raw)
    assert bool(jnp.allclose(out, ref, atol=1e-3, rtol=1e-3))

    # Exercise the parallel-grid path (what v7x uses to run on both TensorCores).
    x16 = jax.random.normal(kx, (16, SEQ_LEN, IN_CH), dtype=jnp.float32)
    o_1 = ultra_gloves_forward(x16, prep, batch_blocks=1)
    o_2 = ultra_gloves_forward(x16, prep, batch_blocks=2)
    jax.block_until_ready((o_1, o_2))
    assert bool(jnp.allclose(o_1, o_2, atol=1e-4, rtol=1e-4))

    print("KERNEL_OK")
</pallas_src>

<mosaic_0001>
module attributes {stable_mosaic.version = 11 : i64} {
  func.func @_ultra_gloves_kernel(%arg0: i32, %arg1: memref<22x8x3xf32, #tpu.memory_space<vmem>>, %arg2: memref<3x512xf32, #tpu.memory_space<vmem>>, %arg3: memref<128x512xf32, #tpu.memory_space<vmem>>, %arg4: memref<1x512xf32, #tpu.memory_space<vmem>>, %arg5: memref<2816x128xf32, #tpu.memory_space<vmem>>, %arg6: memref<1x128xf32, #tpu.memory_space<vmem>>, %arg7: memref<8x128xf32, #tpu.memory_space<vmem>>, %arg8: memref<22x8x512xf32, #tpu.memory_space<vmem>>, %arg9: memref<8x2816xf32, #tpu.memory_space<vmem>>) attributes {dimension_semantics = [#tpu.dimension_semantics<parallel>], iteration_bounds = array<i64: 1>, scalar_prefetch = 0 : i64, scratch_operands = 2 : i64, tpu.core_type = #tpu.core_type<tc>, window_params = [{transform_indices = @transform_0, window_bounds = array<i64: 22, 8, 3>}, {pipeline_mode = #tpu.pipeline_mode<synchronous>, transform_indices = @transform_1, window_bounds = array<i64: 3, 512>}, {pipeline_mode = #tpu.pipeline_mode<synchronous>, transform_indices = @transform_2, window_bounds = array<i64: 128, 512>}, {pipeline_mode = #tpu.pipeline_mode<synchronous>, transform_indices = @transform_3, window_bounds = array<i64: 1, 512>}, {pipeline_mode = #tpu.pipeline_mode<synchronous>, transform_indices = @transform_4, window_bounds = array<i64: 2816, 128>}, {pipeline_mode = #tpu.pipeline_mode<synchronous>, transform_indices = @transform_5, window_bounds = array<i64: 1, 128>}, {transform_indices = @transform_6, window_bounds = array<i64: 8, 128>}]} {
    %c0 = arith.constant 0 : index
    %c0_0 = arith.constant 0 : index
    %0 = vector.load %arg2[%c0, %c0_0] : memref<3x512xf32, #tpu.memory_space<vmem>>, vector<3x512xf32>
    %c0_1 = arith.constant 0 : index
    %c0_2 = arith.constant 0 : index
    %1 = vector.load %arg4[%c0_1, %c0_2] : memref<1x512xf32, #tpu.memory_space<vmem>>, vector<1x512xf32>
    %c0_3 = arith.constant 0 : index
    %c0_4 = arith.constant 0 : index
    %c0_5 = arith.constant 0 : index
    %2 = vector.load %arg1[%c0_3, %c0_4, %c0_5] : memref<22x8x3xf32, #tpu.memory_space<vmem>>, vector<1x8x3xf32>
    %3 = vector.shape_cast %2 : vector<1x8x3xf32> to vector<8x3xf32>
    %4 = vector.extract_strided_slice %3 {offsets = [0, 0], sizes = [8, 1], strides = [1, 1]} : vector<8x3xf32> to vector<8x1xf32>
    %5 = vector.extract_strided_slice %0 {offsets = [0, 0], sizes = [1, 512], strides = [1, 1]} : vector<3x512xf32> to vector<1x512xf32>
    %6 = vector.broadcast %4 : vector<8x1xf32> to vector<8x512xf32>
    %7 = vector.broadcast %5 : vector<1x512xf32> to vector<8x512xf32>
    %8 = arith.mulf %6, %7 : vector<8x512xf32>
    %9 = vector.broadcast %1 : vector<1x512xf32> to vector<8x512xf32>
    %10 = arith.addf %9, %8 : vector<8x512xf32>
    %11 = vector.extract_strided_slice %3 {offsets = [0, 1], sizes = [8, 1], strides = [1, 1]} : vector<8x3xf32> to vector<8x1xf32>
    %12 = vector.extract_strided_slice %0 {offsets = [1, 0], sizes = [1, 512], strides = [1, 1]} : vector<3x512xf32> to vector<1x512xf32>
    %13 = vector.broadcast %11 : vector<8x1xf32> to vector<8x512xf32>
    %14 = vector.broadcast %12 : vector<1x512xf32> to vector<8x512xf32>
    %15 = arith.mulf %13, %14 : vector<8x512xf32>
    %16 = arith.addf %10, %15 : vector<8x512xf32>
    %17 = vector.extract_strided_slice %3 {offsets = [0, 2], sizes = [8, 1], strides = [1, 1]} : vector<8x3xf32> to vector<8x1xf32>
    %18 = vector.extract_strided_slice %0 {offsets = [2, 0], sizes = [1, 512], strides = [1, 1]} : vector<3x512xf32> to vector<1x512xf32>
    %19 = vector.broadcast %17 : vector<8x1xf32> to vector<8x512xf32>
    %20 = vector.broadcast %18 : vector<1x512xf32> to vector<8x512xf32>
    %21 = arith.mulf %19, %20 : vector<8x512xf32>
    %22 = arith.addf %16, %21 : vector<8x512xf32>
    %c0_6 = arith.constant 0 : index
    %c0_7 = arith.constant 0 : index
    %c0_8 = arith.constant 0 : index
    %23 = vector.load %arg8[%c0_6, %c0_7, %c0_8] : memref<22x8x512xf32, #tpu.memory_space<vmem>>, vector<1x8x512xf32>
    %24 = vector.shape_cast %23 : vector<1x8x512xf32> to vector<8x512xf32>
    %25 = vector.shape_cast %22 : vector<8x512xf32> to vector<1x8x512xf32>
    tpu.vector_store %arg8[%c0_6, %c0_7, %c0_8], %25 {strides = array<i32>} : memref<22x8x512xf32, #tpu.memory_space<vmem>>, vector<1x8x512xf32>,
    %c1 = arith.constant 1 : index
    %c0_9 = arith.constant 0 : index
    %c0_10 = arith.constant 0 : index
    %26 = vector.load %arg1[%c1, %c0_9, %c0_10] : memref<22x8x3xf32, #tpu.memory_space<vmem>>, vector<1x8x3xf32>
    %27 = vector.shape_cast %26 : vector<1x8x3xf32> to vector<8x3xf32>
    %28 = vector.extract_strided_slice %27 {offsets = [0, 0], sizes = [8, 1], strides = [1, 1]} : vector<8x3xf32> to vector<8x1xf32>
    %29 = vector.extract_strided_slice %0 {offsets = [0, 0], sizes = [1, 512], strides = [1, 1]} : vector<3x512xf32> to vector<1x512xf32>
    %30 = vector.broadcast %28 : vector<8x1xf32> to vector<8x512xf32>
    %31 = vector.broadcast %29 : vector<1x512xf32> to vector<8x512xf32>
    %32 = arith.mulf %30, %31 : vector<8x512xf32>
    %33 = vector.broadcast %1 : vector<1x512xf32> to vector<8x512xf32>
    %34 = arith.addf %33, %32 : vector<8x512xf32>
    %35 = vector.extract_strided_slice %27 {offsets = [0, 1], sizes = [8, 1], strides = [1, 1]} : vector<8x3xf32> to vector<8x1xf32>
    %36 = vector.extract_strided_slice %0 {offsets = [1, 0], sizes = [1, 512], strides = [1, 1]} : vector<3x512xf32> to vector<1x512xf32>
    %37 = vector.broadcast %35 : vector<8x1xf32> to vector<8x512xf32>
    %38 = vector.broadcast %36 : vector<1x512xf32> to vector<8x512xf32>
    %39 = arith.mulf %37, %38 : vector<8x512xf32>
    %40 = arith.addf %34, %39 : vector<8x512xf32>
    %41 = vector.extract_strided_slice %27 {offsets = [0, 2], sizes = [8, 1], strides = [1, 1]} : vector<8x3xf32> to vector<8x1xf32>
    %42 = vector.extract_strided_slice %0 {offsets = [2, 0], sizes = [1, 512], strides = [1, 1]} : vector<3x512xf32> to vector<1x512xf32>
    %43 = vector.broadcast %41 : vector<8x1xf32> to vector<8x512xf32>
    %44 = vector.broadcast %42 : vector<1x512xf32> to vector<8x512xf32>
    %45 = arith.mulf %43, %44 : vector<8x512xf32>
    %46 = arith.addf %40, %45 : vector<8x512xf32>
    %c1_11 = arith.constant 1 : index
    %c0_12 = arith.constant 0 : index
    %c0_13 = arith.constant 0 : index
    %47 = vector.load %arg8[%c1_11, %c0_12, %c0_13] : memref<22x8x512xf32, #tpu.memory_space<vmem>>, vector<1x8x512xf32>
    %48 = vector.shape_cast %47 : vector<1x8x512xf32> to vector<8x512xf32>
    %49 = vector.shape_cast %46 : vector<8x512xf32> to vector<1x8x512xf32>
    tpu.vector_store %arg8[%c1_11, %c0_12, %c0_13], %49 {strides = array<i32>} : memref<22x8x512xf32, #tpu.memory_space<vmem>>, vector<1x8x512xf32>,
    %c2 = arith.constant 2 : index
    %c0_14 = arith.constant 0 : index
    %c0_15 = arith.constant 0 : index
    %50 = vector.load %arg1[%c2, %c0_14, %c0_15] : memref<22x8x3xf32, #tpu.memory_space<vmem>>, vector<1x8x3xf32>
    %51 = vector.shape_cast %50 : vector<1x8x3xf32> to vector<8x3xf32>
    %52 = vector.extract_strided_slice %51 {offsets = [0, 0], sizes = [8, 1], strides = [1, 1]} : vector<8x3xf32> to vector<8x1xf32>
    %53 = vector.extract_strided_slice %0 {offsets = [0, 0], sizes = [1, 512], strides = [1, 1]} : vector<3x512xf32> to vector<1x512xf32>
    %54 = vector.broadcast %52 : vector<8x1xf32> to vector<8x512xf32>
    %55 = vector.broadcast %53 : vector<1x512xf32> to vector<8x512xf32>
    %56 = arith.mulf %54, %55 : vector<8x512xf32>
    %57 = vector.broadcast %1 : vector<1x512xf32> to vector<8x512xf32>
    %58 = arith.addf %57, %56 : vector<8x512xf32>
    %59 = vector.extract_strided_slice %51 {offsets = [0, 1], sizes = [8, 1], strides = [1, 1]} : vector<8x3xf32> to vector<8x1xf32>
    %60 = vector.extract_strided_slice %0 {offsets = [1, 0], sizes = [1, 512], strides = [1, 1]} : vector<3x512xf32> to vector<1x512xf32>
    %61 = vector.broadcast %59 : vector<8x1xf32> to vector<8x512xf32>
    %62 = vector.broadcast %60 : vector<1x512xf32> to vector<8x512xf32>
    %63 = arith.mulf %61, %62 : vector<8x512xf32>
    %64 = arith.addf %58, %63 : vector<8x512xf32>
    %65 = vector.extract_strided_slice %51 {offsets = [0, 2], sizes = [8, 1], strides = [1, 1]} : vector<8x3xf32> to vector<8x1xf32>
    %66 = vector.extract_strided_slice %0 {offsets = [2, 0], sizes = [1, 512], strides = [1, 1]} : vector<3x512xf32> to vector<1x512xf32>
    %67 = vector.broadcast %65 : vector<8x1xf32> to vector<8x512xf32>
    %68 = vector.broadcast %66 : vector<1x512xf32> to vector<8x512xf32>
    %69 = arith.mulf %67, %68 : vector<8x512xf32>
    %70 = arith.addf %64, %69 : vector<8x512xf32>
    %c2_16 = arith.constant 2 : index
    %c0_17 = arith.constant 0 : index
    %c0_18 = arith.constant 0 : index
    %71 = vector.load %arg8[%c2_16, %c0_17, %c0_18] : memref<22x8x512xf32, #tpu.memory_space<vmem>>, vector<1x8x512xf32>
    %72 = vector.shape_cast %71 : vector<1x8x512xf32> to vector<8x512xf32>
    %73 = vector.shape_cast %70 : vector<8x512xf32> to vector<1x8x512xf32>
    tpu.vector_store %arg8[%c2_16, %c0_17, %c0_18], %73 {strides = array<i32>} : memref<22x8x512xf32, #tpu.memory_space<vmem>>, vector<1x8x512xf32>,
    %c3 = arith.constant 3 : index
    %c0_19 = arith.constant 0 : index
    %c0_20 = arith.constant 0 : index
    %74 = vector.load %arg1[%c3, %c0_19, %c0_20] : memref<22x8x3xf32, #tpu.memory_space<vmem>>, vector<1x8x3xf32>
    %75 = vector.shape_cast %74 : vector<1x8x3xf32> to vector<8x3xf32>
    %76 = vector.extract_strided_slice %75 {offsets = [0, 0], sizes = [8, 1], strides = [1, 1]} : vector<8x3xf32> to vector<8x1xf32>
    %77 = vector.extract_strided_slice %0 {offsets = [0, 0], sizes = [1, 512], strides = [1, 1]} : vector<3x512xf32> to vector<1x512xf32>
    %78 = vector.broadcast %76 : vector<8x1xf32> to vector<8x512xf32>
    %79 = vector.broadcast %77 : vector<1x512xf32> to vector<8x512xf32>
    %80 = arith.mulf %78, %79 : vector<8x512xf32>
    %81 = vector.broadcast %1 : vector<1x512xf32> to vector<8x512xf32>
    %82 = arith.addf %81, %80 : vector<8x512xf32>
    %83 = vector.extract_strided_slice %75 {offsets = [0, 1], sizes = [8, 1], strides = [1, 1]} : vector<8x3xf32> to vector<8x1xf32>
    %84 = vector.extract_strided_slice %0 {offsets = [1, 0], sizes = [1, 512], strides = [1, 1]} : vector<3x512xf32> to vector<1x512xf32>
    %85 = vector.broadcast %83 : vector<8x1xf32> to vector<8x512xf32>
    %86 = vector.broadcast %84 : vector<1x512xf32> to vector<8x512xf32>
    %87 = arith.mulf %85, %86 : vector<8x512xf32>
    %88 = arith.addf %82, %87 : vector<8x512xf32>
    %89 = vector.extract_strided_slice %75 {offsets = [0, 2], sizes = [8, 1], strides = [1, 1]} : vector<8x3xf32> to vector<8x1xf32>
    %90 = vector.extract_strided_slice %0 {offsets = [2, 0], sizes = [1, 512], strides = [1, 1]} : vector<3x512xf32> to vector<1x512xf32>
    %91 = vector.broadcast %89 : vector<8x1xf32> to vector<8x512xf32>
    %92 = vector.broadcast %90 : vector<1x512xf32> to vector<8x512xf32>
    %93 = arith.mulf %91, %92 : vector<8x512xf32>
    %94 = arith.addf %88, %93 : vector<8x512xf32>
    %c3_21 = arith.constant 3 : index
    %c0_22 = arith.constant 0 : index
    %c0_23 = arith.constant 0 : index
    %95 = vector.load %arg8[%c3_21, %c0_22, %c0_23] : memref<22x8x512xf32, #tpu.memory_space<vmem>>, vector<1x8x512xf32>
    %96 = vector.shape_cast %95 : vector<1x8x512xf32> to vector<8x512xf32>
    %97 = vector.shape_cast %94 : vector<8x512xf32> to vector<1x8x512xf32>
    tpu.vector_store %arg8[%c3_21, %c0_22, %c0_23], %97 {strides = array<i32>} : memref<22x8x512xf32, #tpu.memory_space<vmem>>, vector<1x8x512xf32>,
    %c4 = arith.constant 4 : index
    %c0_24 = arith.constant 0 : index
    %c0_25 = arith.constant 0 : index
    %98 = vector.load %arg1[%c4, %c0_24, %c0_25] : memref<22x8x3xf32, #tpu.memory_space<vmem>>, vector<1x8x3xf32>
    %99 = vector.shape_cast %98 : vector<1x8x3xf32> to vector<8x3xf32>
    %100 = vector.extract_strided_slice %99 {offsets = [0, 0], sizes = [8, 1], strides = [1, 1]} : vector<8x3xf32> to vector<8x1xf32>
    %101 = vector.extract_strided_slice %0 {offsets = [0, 0], sizes = [1, 512], strides = [1, 1]} : vector<3x512xf32> to vector<1x512xf32>
    %102 = vector.broadcast %100 : vector<8x1xf32> to vector<8x512xf32>
    %103 = vector.broadcast %101 : vector<1x512xf32> to vector<8x512xf32>
    %104 = arith.mulf %102, %103 : vector<8x512xf32>
    %105 = vector.broadcast %1 : vector<1x512xf32> to vector<8x512xf32>
    %106 = arith.addf %105, %104 : vector<8x512xf32>
    %107 = vector.extract_strided_slice %99 {offsets = [0, 1], sizes = [8, 1], strides = [1, 1]} : vector<8x3xf32> to vector<8x1xf32>
    %108 = vector.extract_strided_slice %0 {offsets = [1, 0], sizes = [1, 512], strides = [1, 1]} : vector<3x512xf32> to vector<1x512xf32>
    %109 = vector.broadcast %107 : vector<8x1xf32> to vector<8x512xf32>
    %110 = vector.broadcast %108 : vector<1x512xf32> to vector<8x512xf32>
    %111 = arith.mulf %109, %110 : vector<8x512xf32>
    %112 = arith.addf %106, %111 : vector<8x512xf32>
    %113 = vector.extract_strided_slice %99 {offsets = [0, 2], sizes = [8, 1], strides = [1, 1]} : vector<8x3xf32> to vector<8x1xf32>
    %114 = vector.extract_strided_slice %0 {offsets = [2, 0], sizes = [1, 512], strides = [1, 1]} : vector<3x512xf32> to vector<1x512xf32>
    %115 = vector.broadcast %113 : vector<8x1xf32> to vector<8x512xf32>
    %116 = vector.broadcast %114 : vector<1x512xf32> to vector<8x512xf32>
    %117 = arith.mulf %115, %116 : vector<8x512xf32>
    %118 = arith.addf %112, %117 : vector<8x512xf32>
    %c4_26 = arith.constant 4 : index
    %c0_27 = arith.constant 0 : index
    %c0_28 = arith.constant 0 : index
    %119 = vector.load %arg8[%c4_26, %c0_27, %c0_28] : memref<22x8x512xf32, #tpu.memory_space<vmem>>, vector<1x8x512xf32>
    %120 = vector.shape_cast %119 : vector<1x8x512xf32> to vector<8x512xf32>
    %121 = vector.shape_cast %118 : vector<8x512xf32> to vector<1x8x512xf32>
    tpu.vector_store %arg8[%c4_26, %c0_27, %c0_28], %121 {strides = array<i32>} : memref<22x8x512xf32, #tpu.memory_space<vmem>>, vector<1x8x512xf32>,
    %c5 = arith.constant 5 : index
    %c0_29 = arith.constant 0 : index
    %c0_30 = arith.constant 0 : index
    %122 = vector.load %arg1[%c5, %c0_29, %c0_30] : memref<22x8x3xf32, #tpu.memory_space<vmem>>, vector<1x8x3xf32>
    %123 = vector.shape_cast %122 : vector<1x8x3xf32> to vector<8x3xf32>
    %124 = vector.extract_strided_slice %123 {offsets = [0, 0], sizes = [8, 1], strides = [1, 1]} : vector<8x3xf32> to vector<8x1xf32>
    %125 = vector.extract_strided_slice %0 {offsets = [0, 0], sizes = [1, 512], strides = [1, 1]} : vector<3x512xf32> to vector<1x512xf32>
    %126 = vector.broadcast %124 : vector<8x1xf32> to vector<8x512xf32>
    %127 = vector.broadcast %125 : vector<1x512xf32> to vector<8x512xf32>
    %128 = arith.mulf %126, %127 : vector<8x512xf32>
    %129 = vector.broadcast %1 : vector<1x512xf32> to vector<8x512xf32>
    %130 = arith.addf %129, %128 : vector<8x512xf32>
    %131 = vector.extract_strided_slice %123 {offsets = [0, 1], sizes = [8, 1], strides = [1, 1]} : vector<8x3xf32> to vector<8x1xf32>
    %132 = vector.extract_strided_slice %0 {offsets = [1, 0], sizes = [1, 512], strides = [1, 1]} : vector<3x512xf32> to vector<1x512xf32>
    %133 = vector.broadcast %131 : vector<8x1xf32> to vector<8x512xf32>
    %134 = vector.broadcast %132 : vector<1x512xf32> to vector<8x512xf32>
    %135 = arith.mulf %133, %134 : vector<8x512xf32>
    %136 = arith.addf %130, %135 : vector<8x512xf32>
    %137 = vector.extract_strided_slice %123 {offsets = [0, 2], sizes = [8, 1], strides = [1, 1]} : vector<8x3xf32> to vector<8x1xf32>
    %138 = vector.extract_strided_slice %0 {offsets = [2, 0], sizes = [1, 512], strides = [1, 1]} : vector<3x512xf32> to vector<1x512xf32>
    %139 = vector.broadcast %137 : vector<8x1xf32> to vector<8x512xf32>
    %140 = vector.broadcast %138 : vector<1x512xf32> to vector<8x512xf32>
    %141 = arith.mulf %139, %140 : vector<8x512xf32>
    %142 = arith.addf %136, %141 : vector<8x512xf32>
    %c5_31 = arith.constant 5 : index
    %c0_32 = arith.constant 0 : index
    %c0_33 = arith.constant 0 : index
    %143 = vector.load %arg8[%c5_31, %c0_32, %c0_33] : memref<22x8x512xf32, #tpu.memory_space<vmem>>, vector<1x8x512xf32>
    %144 = vector.shape_cast %143 : vector<1x8x512xf32> to vector<8x512xf32>
    %145 = vector.shape_cast %142 : vector<8x512xf32> to vector<1x8x512xf32>
    tpu.vector_store %arg8[%c5_31, %c0_32, %c0_33], %145 {strides = array<i32>} : memref<22x8x512xf32, #tpu.memory_space<vmem>>, vector<1x8x512xf32>,
    %c6 = arith.constant 6 : index
    %c0_34 = arith.constant 0 : index
    %c0_35 = arith.constant 0 : index
    %146 = vector.load %arg1[%c6, %c0_34, %c0_35] : memref<22x8x3xf32, #tpu.memory_space<vmem>>, vector<1x8x3xf32>
    %147 = vector.shape_cast %146 : vector<1x8x3xf32> to vector<8x3xf32>
    %148 = vector.extract_strided_slice %147 {offsets = [0, 0], sizes = [8, 1], strides = [1, 1]} : vector<8x3xf32> to vector<8x1xf32>
    %149 = vector.extract_strided_slice %0 {offsets = [0, 0], sizes = [1, 512], strides = [1, 1]} : vector<3x512xf32> to vector<1x512xf32>
    %150 = vector.broadcast %148 : vector<8x1xf32> to vector<8x512xf32>
    %151 = vector.broadcast %149 : vector<1x512xf32> to vector<8x512xf32>
    %152 = arith.mulf %150, %151 : vector<8x512xf32>
    %153 = vector.broadcast %1 : vector<1x512xf32> to vector<8x512xf32>
    %154 = arith.addf %153, %152 : vector<8x512xf32>
    %155 = vector.extract_strided_slice %147 {offsets = [0, 1], sizes = [8, 1], strides = [1, 1]} : vector<8x3xf32> to vector<8x1xf32>
    %156 = vector.extract_strided_slice %0 {offsets = [1, 0], sizes = [1, 512], strides = [1, 1]} : vector<3x512xf32> to vector<1x512xf32>
    %157 = vector.broadcast %155 : vector<8x1xf32> to vector<8x512xf32>
    %158 = vector.broadcast %156 : vector<1x512xf32> to vector<8x512xf32>
    %159 = arith.mulf %157, %158 : vector<8x512xf32>
    %160 = arith.addf %154, %159 : vector<8x512xf32>
    %161 = vector.extract_strided_slice %147 {offsets = [0, 2], sizes = [8, 1], strides = [1, 1]} : vector<8x3xf32> to vector<8x1xf32>
    %162 = vector.extract_strided_slice %0 {offsets = [2, 0], sizes = [1, 512], strides = [1, 1]} : vector<3x512xf32> to vector<1x512xf32>
    %163 = vector.broadcast %161 : vector<8x1xf32> to vector<8x512xf32>
    %164 = vector.broadcast %162 : vector<1x512xf32> to vector<8x512xf32>
    %165 = arith.mulf %163, %164 : vector<8x512xf32>
    %166 = arith.addf %160, %165 : vector<8x512xf32>
    %c6_36 = arith.constant 6 : index
    %c0_37 = arith.constant 0 : index
    %c0_38 = arith.constant 0 : index
    %167 = vector.load %arg8[%c6_36, %c0_37, %c0_38] : memref<22x8x512xf32, #tpu.memory_space<vmem>>, vector<1x8x512xf32>
    %168 = vector.shape_cast %167 : vector<1x8x512xf32> to vector<8x512xf32>
    %169 = vector.shape_cast %166 : vector<8x512xf32> to vector<1x8x512xf32>
    tpu.vector_store %arg8[%c6_36, %c0_37, %c0_38], %169 {strides = array<i32>} : memref<22x8x512xf32, #tpu.memory_space<vmem>>, vector<1x8x512xf32>,
    %c7 = arith.constant 7 : index
    %c0_39 = arith.constant 0 : index
    %c0_40 = arith.constant 0 : index
    %170 = vector.load %arg1[%c7, %c0_39, %c0_40] : memref<22x8x3xf32, #tpu.memory_space<vmem>>, vector<1x8x3xf32>
    %171 = vector.shape_cast %170 : vector<1x8x3xf32> to vector<8x3xf32>
    %172 = vector.extract_strided_slice %171 {offsets = [0, 0], sizes = [8, 1], strides = [1, 1]} : vector<8x3xf32> to vector<8x1xf32>
    %173 = vector.extract_strided_slice %0 {offsets = [0, 0], sizes = [1, 512], strides = [1, 1]} : vector<3x512xf32> to vector<1x512xf32>
    %174 = vector.broadcast %172 : vector<8x1xf32> to vector<8x512xf32>
    %175 = vector.broadcast %173 : vector<1x512xf32> to vector<8x512xf32>
    %176 = arith.mulf %174, %175 : vector<8x512xf32>
    %177 = vector.broadcast %1 : vector<1x512xf32> to vector<8x512xf32>
    %178 = arith.addf %177, %176 : vector<8x512xf32>
    %179 = vector.extract_strided_slice %171 {offsets = [0, 1], sizes = [8, 1], strides = [1, 1]} : vector<8x3xf32> to vector<8x1xf32>
    %180 = vector.extract_strided_slice %0 {offsets = [1, 0], sizes = [1, 512], strides = [1, 1]} : vector<3x512xf32> to vector<1x512xf32>
    %181 = vector.broadcast %179 : vector<8x1xf32> to vector<8x512xf32>
    %182 = vector.broadcast %180 : vector<1x512xf32> to vector<8x512xf32>
    %183 = arith.mulf %181, %182 : vector<8x512xf32>
    %184 = arith.addf %178, %183 : vector<8x512xf32>
    %185 = vector.extract_strided_slice %171 {offsets = [0, 2], sizes = [8, 1], strides = [1, 1]} : vector<8x3xf32> to vector<8x1xf32>
    %186 = vector.extract_strided_slice %0 {offsets = [2, 0], sizes = [1, 512], strides = [1, 1]} : vector<3x512xf32> to vector<1x512xf32>
    %187 = vector.broadcast %185 : vector<8x1xf32> to vector<8x512xf32>
    %188 = vector.broadcast %186 : vector<1x512xf32> to vector<8x512xf32>
    %189 = arith.mulf %187, %188 : vector<8x512xf32>
    %190 = arith.addf %184, %189 : vector<8x512xf32>
    %c7_41 = arith.constant 7 : index
    %c0_42 = arith.constant 0 : index
    %c0_43 = arith.constant 0 : index
    %191 = vector.load %arg8[%c7_41, %c0_42, %c0_43] : memref<22x8x512xf32, #tpu.memory_space<vmem>>, vector<1x8x512xf32>
    %192 = vector.shape_cast %191 : vector<1x8x512xf32> to vector<8x512xf32>
    %193 = vector.shape_cast %190 : vector<8x512xf32> to vector<1x8x512xf32>
    tpu.vector_store %arg8[%c7_41, %c0_42, %c0_43], %193 {strides = array<i32>} : memref<22x8x512xf32, #tpu.memory_space<vmem>>, vector<1x8x512xf32>,
    %c8 = arith.constant 8 : index
    %c0_44 = arith.constant 0 : index
    %c0_45 = arith.constant 0 : index
    %194 = vector.load %arg1[%c8, %c0_44, %c0_45] : memref<22x8x3xf32, #tpu.memory_space<vmem>>, vector<1x8x3xf32>
    %195 = vector.shape_cast %194 : vector<1x8x3xf32> to vector<8x3xf32>
    %196 = vector.extract_strided_slice %195 {offsets = [0, 0], sizes = [8, 1], strides = [1, 1]} : vector<8x3xf32> to vector<8x1xf32>
    %197 = vector.extract_strided_slice %0 {offsets = [0, 0], sizes = [1, 512], strides = [1, 1]} : vector<3x512xf32> to vector<1x512xf32>
    %198 = vector.broadcast %196 : vector<8x1xf32> to vector<8x512xf32>
    %199 = vector.broadcast %197 : vector<1x512xf32> to vector<8x512xf32>
    %200 = arith.mulf %198, %199 : vector<8x512xf32>
    %201 = vector.broadcast %1 : vector<1x512xf32> to vector<8x512xf32>
    %202 = arith.addf %201, %200 : vector<8x512xf32>
    %203 = vector.extract_strided_slice %195 {offsets = [0, 1], sizes = [8, 1], strides = [1, 1]} : vector<8x3xf32> to vector<8x1xf32>
    %204 = vector.extract_strided_slice %0 {offsets = [1, 0], sizes = [1, 512], strides = [1, 1]} : vector<3x512xf32> to vector<1x512xf32>
    %205 = vector.broadcast %203 : vector<8x1xf32> to vector<8x512xf32>
    %206 = vector.broadcast %204 : vector<1x512xf32> to vector<8x512xf32>
    %207 = arith.mulf %205, %206 : vector<8x512xf32>
    %208 = arith.addf %202, %207 : vector<8x512xf32>
    %209 = vector.extract_strided_slice %195 {offsets = [0, 2], sizes = [8, 1], strides = [1, 1]} : vector<8x3xf32> to vector<8x1xf32>
    %210 = vector.extract_strided_slice %0 {offsets = [2, 0], sizes = [1, 512], strides = [1, 1]} : vector<3x512xf32> to vector<1x512xf32>
    %211 = vector.broadcast %209 : vector<8x1xf32> to vector<8x512xf32>
    %212 = vector.broadcast %210 : vector<1x512xf32> to vector<8x512xf32>
    %213 = arith.mulf %211, %212 : vector<8x512xf32>
    %214 = arith.addf %208, %213 : vector<8x512xf32>
    %c8_46 = arith.constant 8 : index
    %c0_47 = arith.constant 0 : index
    %c0_48 = arith.constant 0 : index
    %215 = vector.load %arg8[%c8_46, %c0_47, %c0_48] : memref<22x8x512xf32, #tpu.memory_space<vmem>>, vector<1x8x512xf32>
    %216 = vector.shape_cast %215 : vector<1x8x512xf32> to vector<8x512xf32>
    %217 = vector.shape_cast %214 : vector<8x512xf32> to vector<1x8x512xf32>
    tpu.vector_store %arg8[%c8_46, %c0_47, %c0_48], %217 {strides = array<i32>} : memref<22x8x512xf32, #tpu.memory_space<vmem>>, vector<1x8x512xf32>,
    %c9 = arith.constant 9 : index
    %c0_49 = arith.constant 0 : index
    %c0_50 = arith.constant 0 : index
    %218 = vector.load %arg1[%c9, %c0_49, %c0_50] : memref<22x8x3xf32, #tpu.memory_space<vmem>>, vector<1x8x3xf32>
    %219 = vector.shape_cast %218 : vector<1x8x3xf32> to vector<8x3xf32>
    %220 = vector.extract_strided_slice %219 {offsets = [0, 0], sizes = [8, 1], strides = [1, 1]} : vector<8x3xf32> to vector<8x1xf32>
    %221 = vector.extract_strided_slice %0 {offsets = [0, 0], sizes = [1, 512], strides = [1, 1]} : vector<3x512xf32> to vector<1x512xf32>
    %222 = vector.broadcast %220 : vector<8x1xf32> to vector<8x512xf32>
    %223 = vector.broadcast %221 : vector<1x512xf32> to vector<8x512xf32>
    %224 = arith.mulf %222, %223 : vector<8x512xf32>
    %225 = vector.broadcast %1 : vector<1x512xf32> to vector<8x512xf32>
    %226 = arith.addf %225, %224 : vector<8x512xf32>
    %227 = vector.extract_strided_slice %219 {offsets = [0, 1], sizes = [8, 1], strides = [1, 1]} : vector<8x3xf32> to vector<8x1xf32>
    %228 = vector.extract_strided_slice %0 {offsets = [1, 0], sizes = [1, 512], strides = [1, 1]} : vector<3x512xf32> to vector<1x512xf32>
    %229 = vector.broadcast %227 : vector<8x1xf32> to vector<8x512xf32>
    %230 = vector.broadcast %228 : vector<1x512xf32> to vector<8x512xf32>
    %231 = arith.mulf %229, %230 : vector<8x512xf32>
    %232 = arith.addf %226, %231 : vector<8x512xf32>
    %233 = vector.extract_strided_slice %219 {offsets = [0, 2], sizes = [8, 1], strides = [1, 1]} : vector<8x3xf32> to vector<8x1xf32>
    %234 = vector.extract_strided_slice %0 {offsets = [2, 0], sizes = [1, 512], strides = [1, 1]} : vector<3x512xf32> to vector<1x512xf32>
    %235 = vector.broadcast %233 : vector<8x1xf32> to vector<8x512xf32>
    %236 = vector.broadcast %234 : vector<1x512xf32> to vector<8x512xf32>
    %237 = arith.mulf %235, %236 : vector<8x512xf32>
    %238 = arith.addf %232, %237 : vector<8x512xf32>
    %c9_51 = arith.constant 9 : index
    %c0_52 = arith.constant 0 : index
    %c0_53 = arith.constant 0 : index
    %239 = vector.load %arg8[%c9_51, %c0_52, %c0_53] : memref<22x8x512xf32, #tpu.memory_space<vmem>>, vector<1x8x512xf32>
    %240 = vector.shape_cast %239 : vector<1x8x512xf32> to vector<8x512xf32>
    %241 = vector.shape_cast %238 : vector<8x512xf32> to vector<1x8x512xf32>
    tpu.vector_store %arg8[%c9_51, %c0_52, %c0_53], %241 {strides = array<i32>} : memref<22x8x512xf32, #tpu.memory_space<vmem>>, vector<1x8x512xf32>,
    %c10 = arith.constant 10 : index
    %c0_54 = arith.constant 0 : index
    %c0_55 = arith.constant 0 : index
    %242 = vector.load %arg1[%c10, %c0_54, %c0_55] : memref<22x8x3xf32, #tpu.memory_space<vmem>>, vector<1x8x3xf32>
    %243 = vector.shape_cast %242 : vector<1x8x3xf32> to vector<8x3xf32>
    %244 = vector.extract_strided_slice %243 {offsets = [0, 0], sizes = [8, 1], strides = [1, 1]} : vector<8x3xf32> to vector<8x1xf32>
    %245 = vector.extract_strided_slice %0 {offsets = [0, 0], sizes = [1, 512], strides = [1, 1]} : vector<3x512xf32> to vector<1x512xf32>
    %246 = vector.broadcast %244 : vector<8x1xf32> to vector<8x512xf32>
    %247 = vector.broadcast %245 : vector<1x512xf32> to vector<8x512xf32>
    %248 = arith.mulf %246, %247 : vector<8x512xf32>
    %249 = vector.broadcast %1 : vector<1x512xf32> to vector<8x512xf32>
    %250 = arith.addf %249, %248 : vector<8x512xf32>
    %251 = vector.extract_strided_slice %243 {offsets = [0, 1], sizes = [8, 1], strides = [1, 1]} : vector<8x3xf32> to vector<8x1xf32>
    %252 = vector.extract_strided_slice %0 {offsets = [1, 0], sizes = [1, 512], strides = [1, 1]} : vector<3x512xf32> to vector<1x512xf32>
    %253 = vector.broadcast %251 : vector<8x1xf32> to vector<8x512xf32>
    %254 = vector.broadcast %252 : vector<1x512xf32> to vector<8x512xf32>
    %255 = arith.mulf %253, %254 : vector<8x512xf32>
    %256 = arith.addf %250, %255 : vector<8x512xf32>
    %257 = vector.extract_strided_slice %243 {offsets = [0, 2], sizes = [8, 1], strides = [1, 1]} : vector<8x3xf32> to vector<8x1xf32>
    %258 = vector.extract_strided_slice %0 {offsets = [2, 0], sizes = [1, 512], strides = [1, 1]} : vector<3x512xf32> to vector<1x512xf32>
    %259 = vector.broadcast %257 : vector<8x1xf32> to vector<8x512xf32>
    %260 = vector.broadcast %258 : vector<1x512xf32> to vector<8x512xf32>
    %261 = arith.mulf %259, %260 : vector<8x512xf32>
    %262 = arith.addf %256, %261 : vector<8x512xf32>
    %c10_56 = arith.constant 10 : index
    %c0_57 = arith.constant 0 : index
    %c0_58 = arith.constant 0 : index
    %263 = vector.load %arg8[%c10_56, %c0_57, %c0_58] : memref<22x8x512xf32, #tpu.memory_space<vmem>>, vector<1x8x512xf32>
    %264 = vector.shape_cast %263 : vector<1x8x512xf32> to vector<8x512xf32>
    %265 = vector.shape_cast %262 : vector<8x512xf32> to vector<1x8x512xf32>
    tpu.vector_store %arg8[%c10_56, %c0_57, %c0_58], %265 {strides = array<i32>} : memref<22x8x512xf32, #tpu.memory_space<vmem>>, vector<1x8x512xf32>,
    %c11 = arith.constant 11 : index
    %c0_59 = arith.constant 0 : index
    %c0_60 = arith.constant 0 : index
    %266 = vector.load %arg1[%c11, %c0_59, %c0_60] : memref<22x8x3xf32, #tpu.memory_space<vmem>>, vector<1x8x3xf32>
    %267 = vector.shape_cast %266 : vector<1x8x3xf32> to vector<8x3xf32>
    %268 = vector.extract_strided_slice %267 {offsets = [0, 0], sizes = [8, 1], strides = [1, 1]} : vector<8x3xf32> to vector<8x1xf32>
    %269 = vector.extract_strided_slice %0 {offsets = [0, 0], sizes = [1, 512], strides = [1, 1]} : vector<3x512xf32> to vector<1x512xf32>
    %270 = vector.broadcast %268 : vector<8x1xf32> to vector<8x512xf32>
    %271 = vector.broadcast %269 : vector<1x512xf32> to vector<8x512xf32>
    %272 = arith.mulf %270, %271 : vector<8x512xf32>
    %273 = vector.broadcast %1 : vector<1x512xf32> to vector<8x512xf32>
    %274 = arith.addf %273, %272 : vector<8x512xf32>
    %275 = vector.extract_strided_slice %267 {offsets = [0, 1], sizes = [8, 1], strides = [1, 1]} : vector<8x3xf32> to vector<8x1xf32>
    %276 = vector.extract_strided_slice %0 {offsets = [1, 0], sizes = [1, 512], strides = [1, 1]} : vector<3x512xf32> to vector<1x512xf32>
    %277 = vector.broadcast %275 : vector<8x1xf32> to vector<8x512xf32>
    %278 = vector.broadcast %276 : vector<1x512xf32> to vector<8x512xf32>
    %279 = arith.mulf %277, %278 : vector<8x512xf32>
    %280 = arith.addf %274, %279 : vector<8x512xf32>
    %281 = vector.extract_strided_slice %267 {offsets = [0, 2], sizes = [8, 1], strides = [1, 1]} : vector<8x3xf32> to vector<8x1xf32>
    %282 = vector.extract_strided_slice %0 {offsets = [2, 0], sizes = [1, 512], strides = [1, 1]} : vector<3x512xf32> to vector<1x512xf32>
    %283 = vector.broadcast %281 : vector<8x1xf32> to vector<8x512xf32>
    %284 = vector.broadcast %282 : vector<1x512xf32> to vector<8x512xf32>
    %285 = arith.mulf %283, %284 : vector<8x512xf32>
    %286 = arith.addf %280, %285 : vector<8x512xf32>
    %c11_61 = arith.constant 11 : index
    %c0_62 = arith.constant 0 : index
    %c0_63 = arith.constant 0 : index
    %287 = vector.load %arg8[%c11_61, %c0_62, %c0_63] : memref<22x8x512xf32, #tpu.memory_space<vmem>>, vector<1x8x512xf32>
    %288 = vector.shape_cast %287 : vector<1x8x512xf32> to vector<8x512xf32>
    %289 = vector.shape_cast %286 : vector<8x512xf32> to vector<1x8x512xf32>
    tpu.vector_store %arg8[%c11_61, %c0_62, %c0_63], %289 {strides = array<i32>} : memref<22x8x512xf32, #tpu.memory_space<vmem>>, vector<1x8x512xf32>,
    %c12 = arith.constant 12 : index
    %c0_64 = arith.constant 0 : index
    %c0_65 = arith.constant 0 : index
    %290 = vector.load %arg1[%c12, %c0_64, %c0_65] : memref<22x8x3xf32, #tpu.memory_space<vmem>>, vector<1x8x3xf32>
    %291 = vector.shape_cast %290 : vector<1x8x3xf32> to vector<8x3xf32>
    %292 = vector.extract_strided_slice %291 {offsets = [0, 0], sizes = [8, 1], strides = [1, 1]} : vector<8x3xf32> to vector<8x1xf32>
    %293 = vector.extract_strided_slice %0 {offsets = [0, 0], sizes = [1, 512], strides = [1, 1]} : vector<3x512xf32> to vector<1x512xf32>
    %294 = vector.broadcast %292 : vector<8x1xf32> to vector<8x512xf32>
    %295 = vector.broadcast %293 : vector<1x512xf32> to vector<8x512xf32>
    %296 = arith.mulf %294, %295 : vector<8x512xf32>
    %297 = vector.broadcast %1 : vector<1x512xf32> to vector<8x512xf32>
    %298 = arith.addf %297, %296 : vector<8x512xf32>
    %299 = vector.extract_strided_slice %291 {offsets = [0, 1], sizes = [8, 1], strides = [1, 1]} : vector<8x3xf32> to vector<8x1xf32>
    %300 = vector.extract_strided_slice %0 {offsets = [1, 0], sizes = [1, 512], strides = [1, 1]} : vector<3x512xf32> to vector<1x512xf32>
    %301 = vector.broadcast %299 : vector<8x1xf32> to vector<8x512xf32>
    %302 = vector.broadcast %300 : vector<1x512xf32> to vector<8x512xf32>
    %303 = arith.mulf %301, %302 : vector<8x512xf32>
    %304 = arith.addf %298, %303 : vector<8x512xf32>
    %305 = vector.extract_strided_slice %291 {offsets = [0, 2], sizes = [8, 1], strides = [1, 1]} : vector<8x3xf32> to vector<8x1xf32>
    %306 = vector.extract_strided_slice %0 {offsets = [2, 0], sizes = [1, 512], strides = [1, 1]} : vector<3x512xf32> to vector<1x512xf32>
    %307 = vector.broadcast %305 : vector<8x1xf32> to vector<8x512xf32>
    %308 = vector.broadcast %306 : vector<1x512xf32> to vector<8x512xf32>
    %309 = arith.mulf %307, %308 : vector<8x512xf32>
    %310 = arith.addf %304, %309 : vector<8x512xf32>
    %c12_66 = arith.constant 12 : index
    %c0_67 = arith.constant 0 : index
    %c0_68 = arith.constant 0 : index
    %311 = vector.load %arg8[%c12_66, %c0_67, %c0_68] : memref<22x8x512xf32, #tpu.memory_space<vmem>>, vector<1x8x512xf32>
    %312 = vector.shape_cast %311 : vector<1x8x512xf32> to vector<8x512xf32>
    %313 = vector.shape_cast %310 : vector<8x512xf32> to vector<1x8x512xf32>
    tpu.vector_store %arg8[%c12_66, %c0_67, %c0_68], %313 {strides = array<i32>} : memref<22x8x512xf32, #tpu.memory_space<vmem>>, vector<1x8x512xf32>,
    %c13 = arith.constant 13 : index
    %c0_69 = arith.constant 0 : index
    %c0_70 = arith.constant 0 : index
    %314 = vector.load %arg1[%c13, %c0_69, %c0_70] : memref<22x8x3xf32, #tpu.memory_space<vmem>>, vector<1x8x3xf32>
    %315 = vector.shape_cast %314 : vector<1x8x3xf32> to vector<8x3xf32>
    %316 = vector.extract_strided_slice %315 {offsets = [0, 0], sizes = [8, 1], strides = [1, 1]} : vector<8x3xf32> to vector<8x1xf32>
    %317 = vector.extract_strided_slice %0 {offsets = [0, 0], sizes = [1, 512], strides = [1, 1]} : vector<3x512xf32> to vector<1x512xf32>
    %318 = vector.broadcast %316 : vector<8x1xf32> to vector<8x512xf32>
    %319 = vector.broadcast %317 : vector<1x512xf32> to vector<8x512xf32>
    %320 = arith.mulf %318, %319 : vector<8x512xf32>
    %321 = vector.broadcast %1 : vector<1x512xf32> to vector<8x512xf32>
    %322 = arith.addf %321, %320 : vector<8x512xf32>
    %323 = vector.extract_strided_slice %315 {offsets = [0, 1], sizes = [8, 1], strides = [1, 1]} : vector<8x3xf32> to vector<8x1xf32>
    %324 = vector.extract_strided_slice %0 {offsets = [1, 0], sizes = [1, 512], strides = [1, 1]} : vector<3x512xf32> to vector<1x512xf32>
    %325 = vector.broadcast %323 : vector<8x1xf32> to vector<8x512xf32>
    %326 = vector.broadcast %324 : vector<1x512xf32> to vector<8x512xf32>
    %327 = arith.mulf %325, %326 : vector<8x512xf32>
    %328 = arith.addf %322, %327 : vector<8x512xf32>
    %329 = vector.extract_strided_slice %315 {offsets = [0, 2], sizes = [8, 1], strides = [1, 1]} : vector<8x3xf32> to vector<8x1xf32>
    %330 = vector.extract_strided_slice %0 {offsets = [2, 0], sizes = [1, 512], strides = [1, 1]} : vector<3x512xf32> to vector<1x512xf32>
    %331 = vector.broadcast %329 : vector<8x1xf32> to vector<8x512xf32>
    %332 = vector.broadcast %330 : vector<1x512xf32> to vector<8x512xf32>
    %333 = arith.mulf %331, %332 : vector<8x512xf32>
    %334 = arith.addf %328, %333 : vector<8x512xf32>
    %c13_71 = arith.constant 13 : index
    %c0_72 = arith.constant 0 : index
    %c0_73 = arith.constant 0 : index
    %335 = vector.load %arg8[%c13_71, %c0_72, %c0_73] : memref<22x8x512xf32, #tpu.memory_space<vmem>>, vector<1x8x512xf32>
    %336 = vector.shape_cast %335 : vector<1x8x512xf32> to vector<8x512xf32>
    %337 = vector.shape_cast %334 : vector<8x512xf32> to vector<1x8x512xf32>
    tpu.vector_store %arg8[%c13_71, %c0_72, %c0_73], %337 {strides = array<i32>} : memref<22x8x512xf32, #tpu.memory_space<vmem>>, vector<1x8x512xf32>,
    %c14 = arith.constant 14 : index
    %c0_74 = arith.constant 0 : index
    %c0_75 = arith.constant 0 : index
    %338 = vector.load %arg1[%c14, %c0_74, %c0_75] : memref<22x8x3xf32, #tpu.memory_space<vmem>>, vector<1x8x3xf32>
    %339 = vector.shape_cast %338 : vector<1x8x3xf32> to vector<8x3xf32>
    %340 = vector.extract_strided_slice %339 {offsets = [0, 0], sizes = [8, 1], strides = [1, 1]} : vector<8x3xf32> to vector<8x1xf32>
    %341 = vector.extract_strided_slice %0 {offsets = [0, 0], sizes = [1, 512], strides = [1, 1]} : vector<3x512xf32> to vector<1x512xf32>
    %342 = vector.broadcast %340 : vector<8x1xf32> to vector<8x512xf32>
    %343 = vector.broadcast %341 : vector<1x512xf32> to vector<8x512xf32>
    %344 = arith.mulf %342, %343 : vector<8x512xf32>
    %345 = vector.broadcast %1 : vector<1x512xf32> to vector<8x512xf32>
    %346 = arith.addf %345, %344 : vector<8x512xf32>
    %347 = vector.extract_strided_slice %339 {offsets = [0, 1], sizes = [8, 1], strides = [1, 1]} : vector<8x3xf32> to vector<8x1xf32>
    %348 = vector.extract_strided_slice %0 {offsets = [1, 0], sizes = [1, 512], strides = [1, 1]} : vector<3x512xf32> to vector<1x512xf32>
    %349 = vector.broadcast %347 : vector<8x1xf32> to vector<8x512xf32>
    %350 = vector.broadcast %348 : vector<1x512xf32> to vector<8x512xf32>
    %351 = arith.mulf %349, %350 : vector<8x512xf32>
    %352 = arith.addf %346, %351 : vector<8x512xf32>
    %353 = vector.extract_strided_slice %339 {offsets = [0, 2], sizes = [8, 1], strides = [1, 1]} : vector<8x3xf32> to vector<8x1xf32>
    %354 = vector.extract_strided_slice %0 {offsets = [2, 0], sizes = [1, 512], strides = [1, 1]} : vector<3x512xf32> to vector<1x512xf32>
    %355 = vector.broadcast %353 : vector<8x1xf32> to vector<8x512xf32>
    %356 = vector.broadcast %354 : vector<1x512xf32> to vector<8x512xf32>
    %357 = arith.mulf %355, %356 : vector<8x512xf32>
    %358 = arith.addf %352, %357 : vector<8x512xf32>
    %c14_76 = arith.constant 14 : index
    %c0_77 = arith.constant 0 : index
    %c0_78 = arith.constant 0 : index
    %359 = vector.load %arg8[%c14_76, %c0_77, %c0_78] : memref<22x8x512xf32, #tpu.memory_space<vmem>>, vector<1x8x512xf32>
    %360 = vector.shape_cast %359 : vector<1x8x512xf32> to vector<8x512xf32>
    %361 = vector.shape_cast %358 : vector<8x512xf32> to vector<1x8x512xf32>
    tpu.vector_store %arg8[%c14_76, %c0_77, %c0_78], %361 {strides = array<i32>} : memref<22x8x512xf32, #tpu.memory_space<vmem>>, vector<1x8x512xf32>,
    %c15 = arith.constant 15 : index
    %c0_79 = arith.constant 0 : index
    %c0_80 = arith.constant 0 : index
    %362 = vector.load %arg1[%c15, %c0_79, %c0_80] : memref<22x8x3xf32, #tpu.memory_space<vmem>>, vector<1x8x3xf32>
    %363 = vector.shape_cast %362 : vector<1x8x3xf32> to vector<8x3xf32>
    %364 = vector.extract_strided_slice %363 {offsets = [0, 0], sizes = [8, 1], strides = [1, 1]} : vector<8x3xf32> to vector<8x1xf32>
    %365 = vector.extract_strided_slice %0 {offsets = [0, 0], sizes = [1, 512], strides = [1, 1]} : vector<3x512xf32> to vector<1x512xf32>
    %366 = vector.broadcast %364 : vector<8x1xf32> to vector<8x512xf32>
    %367 = vector.broadcast %365 : vector<1x512xf32> to vector<8x512xf32>
    %368 = arith.mulf %366, %367 : vector<8x512xf32>
    %369 = vector.broadcast %1 : vector<1x512xf32> to vector<8x512xf32>
    %370 = arith.addf %369, %368 : vector<8x512xf32>
    %371 = vector.extract_strided_slice %363 {offsets = [0, 1], sizes = [8, 1], strides = [1, 1]} : vector<8x3xf32> to vector<8x1xf32>
    %372 = vector.extract_strided_slice %0 {offsets = [1, 0], sizes = [1, 512], strides = [1, 1]} : vector<3x512xf32> to vector<1x512xf32>
    %373 = vector.broadcast %371 : vector<8x1xf32> to vector<8x512xf32>
    %374 = vector.broadcast %372 : vector<1x512xf32> to vector<8x512xf32>
    %375 = arith.mulf %373, %374 : vector<8x512xf32>
    %376 = arith.addf %370, %375 : vector<8x512xf32>
    %377 = vector.extract_strided_slice %363 {offsets = [0, 2], sizes = [8, 1], strides = [1, 1]} : vector<8x3xf32> to vector<8x1xf32>
    %378 = vector.extract_strided_slice %0 {offsets = [2, 0], sizes = [1, 512], strides = [1, 1]} : vector<3x512xf32> to vector<1x512xf32>
    %379 = vector.broadcast %377 : vector<8x1xf32> to vector<8x512xf32>
    %380 = vector.broadcast %378 : vector<1x512xf32> to vector<8x512xf32>
    %381 = arith.mulf %379, %380 : vector<8x512xf32>
    %382 = arith.addf %376, %381 : vector<8x512xf32>
    %c15_81 = arith.constant 15 : index
    %c0_82 = arith.constant 0 : index
    %c0_83 = arith.constant 0 : index
    %383 = vector.load %arg8[%c15_81, %c0_82, %c0_83] : memref<22x8x512xf32, #tpu.memory_space<vmem>>, vector<1x8x512xf32>
    %384 = vector.shape_cast %383 : vector<1x8x512xf32> to vector<8x512xf32>
    %385 = vector.shape_cast %382 : vector<8x512xf32> to vector<1x8x512xf32>
    tpu.vector_store %arg8[%c15_81, %c0_82, %c0_83], %385 {strides = array<i32>} : memref<22x8x512xf32, #tpu.memory_space<vmem>>, vector<1x8x512xf32>,
    %c16 = arith.constant 16 : index
    %c0_84 = arith.constant 0 : index
    %c0_85 = arith.constant 0 : index
    %386 = vector.load %arg1[%c16, %c0_84, %c0_85] : memref<22x8x3xf32, #tpu.memory_space<vmem>>, vector<1x8x3xf32>
    %387 = vector.shape_cast %386 : vector<1x8x3xf32> to vector<8x3xf32>
    %388 = vector.extract_strided_slice %387 {offsets = [0, 0], sizes = [8, 1], strides = [1, 1]} : vector<8x3xf32> to vector<8x1xf32>
    %389 = vector.extract_strided_slice %0 {offsets = [0, 0], sizes = [1, 512], strides = [1, 1]} : vector<3x512xf32> to vector<1x512xf32>
    %390 = vector.broadcast %388 : vector<8x1xf32> to vector<8x512xf32>
    %391 = vector.broadcast %389 : vector<1x512xf32> to vector<8x512xf32>
    %392 = arith.mulf %390, %391 : vector<8x512xf32>
    %393 = vector.broadcast %1 : vector<1x512xf32> to vector<8x512xf32>
    %394 = arith.addf %393, %392 : vector<8x512xf32>
    %395 = vector.extract_strided_slice %387 {offsets = [0, 1], sizes = [8, 1], strides = [1, 1]} : vector<8x3xf32> to vector<8x1xf32>
    %396 = vector.extract_strided_slice %0 {offsets = [1, 0], sizes = [1, 512], strides = [1, 1]} : vector<3x512xf32> to vector<1x512xf32>
    %397 = vector.broadcast %395 : vector<8x1xf32> to vector<8x512xf32>
    %398 = vector.broadcast %396 : vector<1x512xf32> to vector<8x512xf32>
    %399 = arith.mulf %397, %398 : vector<8x512xf32>
    %400 = arith.addf %394, %399 : vector<8x512xf32>
    %401 = vector.extract_strided_slice %387 {offsets = [0, 2], sizes = [8, 1], strides = [1, 1]} : vector<8x3xf32> to vector<8x1xf32>
    %402 = vector.extract_strided_slice %0 {offsets = [2, 0], sizes = [1, 512], strides = [1, 1]} : vector<3x512xf32> to vector<1x512xf32>
    %403 = vector.broadcast %401 : vector<8x1xf32> to vector<8x512xf32>
    %404 = vector.broadcast %402 : vector<1x512xf32> to vector<8x512xf32>
    %405 = arith.mulf %403, %404 : vector<8x512xf32>
    %406 = arith.addf %400, %405 : vector<8x512xf32>
    %c16_86 = arith.constant 16 : index
    %c0_87 = arith.constant 0 : index
    %c0_88 = arith.constant 0 : index
    %407 = vector.load %arg8[%c16_86, %c0_87, %c0_88] : memref<22x8x512xf32, #tpu.memory_space<vmem>>, vector<1x8x512xf32>
    %408 = vector.shape_cast %407 : vector<1x8x512xf32> to vector<8x512xf32>
    %409 = vector.shape_cast %406 : vector<8x512xf32> to vector<1x8x512xf32>
    tpu.vector_store %arg8[%c16_86, %c0_87, %c0_88], %409 {strides = array<i32>} : memref<22x8x512xf32, #tpu.memory_space<vmem>>, vector<1x8x512xf32>,
    %c17 = arith.constant 17 : index
    %c0_89 = arith.constant 0 : index
    %c0_90 = arith.constant 0 : index
    %410 = vector.load %arg1[%c17, %c0_89, %c0_90] : memref<22x8x3xf32, #tpu.memory_space<vmem>>, vector<1x8x3xf32>
    %411 = vector.shape_cast %410 : vector<1x8x3xf32> to vector<8x3xf32>
    %412 = vector.extract_strided_slice %411 {offsets = [0, 0], sizes = [8, 1], strides = [1, 1]} : vector<8x3xf32> to vector<8x1xf32>
    %413 = vector.extract_strided_slice %0 {offsets = [0, 0], sizes = [1, 512], strides = [1, 1]} : vector<3x512xf32> to vector<1x512xf32>
    %414 = vector.broadcast %412 : vector<8x1xf32> to vector<8x512xf32>
    %415 = vector.broadcast %413 : vector<1x512xf32> to vector<8x512xf32>
    %416 = arith.mulf %414, %415 : vector<8x512xf32>
    %417 = vector.broadcast %1 : vector<1x512xf32> to vector<8x512xf32>
    %418 = arith.addf %417, %416 : vector<8x512xf32>
    %419 = vector.extract_strided_slice %411 {offsets = [0, 1], sizes = [8, 1], strides = [1, 1]} : vector<8x3xf32> to vector<8x1xf32>
    %420 = vector.extract_strided_slice %0 {offsets = [1, 0], sizes = [1, 512], strides = [1, 1]} : vector<3x512xf32> to vector<1x512xf32>
    %421 = vector.broadcast %419 : vector<8x1xf32> to vector<8x512xf32>
    %422 = vector.broadcast %420 : vector<1x512xf32> to vector<8x512xf32>
    %423 = arith.mulf %421, %422 : vector<8x512xf32>
    %424 = arith.addf %418, %423 : vector<8x512xf32>
    %425 = vector.extract_strided_slice %411 {offsets = [0, 2], sizes = [8, 1], strides = [1, 1]} : vector<8x3xf32> to vector<8x1xf32>
    %426 = vector.extract_strided_slice %0 {offsets = [2, 0], sizes = [1, 512], strides = [1, 1]} : vector<3x512xf32> to vector<1x512xf32>
    %427 = vector.broadcast %425 : vector<8x1xf32> to vector<8x512xf32>
    %428 = vector.broadcast %426 : vector<1x512xf32> to vector<8x512xf32>
    %429 = arith.mulf %427, %428 : vector<8x512xf32>
    %430 = arith.addf %424, %429 : vector<8x512xf32>
    %c17_91 = arith.constant 17 : index
    %c0_92 = arith.constant 0 : index
    %c0_93 = arith.constant 0 : index
    %431 = vector.load %arg8[%c17_91, %c0_92, %c0_93] : memref<22x8x512xf32, #tpu.memory_space<vmem>>, vector<1x8x512xf32>
    %432 = vector.shape_cast %431 : vector<1x8x512xf32> to vector<8x512xf32>
    %433 = vector.shape_cast %430 : vector<8x512xf32> to vector<1x8x512xf32>
    tpu.vector_store %arg8[%c17_91, %c0_92, %c0_93], %433 {strides = array<i32>} : memref<22x8x512xf32, #tpu.memory_space<vmem>>, vector<1x8x512xf32>,
    %c18 = arith.constant 18 : index
    %c0_94 = arith.constant 0 : index
    %c0_95 = arith.constant 0 : index
    %434 = vector.load %arg1[%c18, %c0_94, %c0_95] : memref<22x8x3xf32, #tpu.memory_space<vmem>>, vector<1x8x3xf32>
    %435 = vector.shape_cast %434 : vector<1x8x3xf32> to vector<8x3xf32>
    %436 = vector.extract_strided_slice %435 {offsets = [0, 0], sizes = [8, 1], strides = [1, 1]} : vector<8x3xf32> to vector<8x1xf32>
    %437 = vector.extract_strided_slice %0 {offsets = [0, 0], sizes = [1, 512], strides = [1, 1]} : vector<3x512xf32> to vector<1x512xf32>
    %438 = vector.broadcast %436 : vector<8x1xf32> to vector<8x512xf32>
    %439 = vector.broadcast %437 : vector<1x512xf32> to vector<8x512xf32>
    %440 = arith.mulf %438, %439 : vector<8x512xf32>
    %441 = vector.broadcast %1 : vector<1x512xf32> to vector<8x512xf32>
    %442 = arith.addf %441, %440 : vector<8x512xf32>
    %443 = vector.extract_strided_slice %435 {offsets = [0, 1], sizes = [8, 1], strides = [1, 1]} : vector<8x3xf32> to vector<8x1xf32>
    %444 = vector.extract_strided_slice %0 {offsets = [1, 0], sizes = [1, 512], strides = [1, 1]} : vector<3x512xf32> to vector<1x512xf32>
    %445 = vector.broadcast %443 : vector<8x1xf32> to vector<8x512xf32>
    %446 = vector.broadcast %444 : vector<1x512xf32> to vector<8x512xf32>
    %447 = arith.mulf %445, %446 : vector<8x512xf32>
    %448 = arith.addf %442, %447 : vector<8x512xf32>
    %449 = vector.extract_strided_slice %435 {offsets = [0, 2], sizes = [8, 1], strides = [1, 1]} : vector<8x3xf32> to vector<8x1xf32>
    %450 = vector.extract_strided_slice %0 {offsets = [2, 0], sizes = [1, 512], strides = [1, 1]} : vector<3x512xf32> to vector<1x512xf32>
    %451 = vector.broadcast %449 : vector<8x1xf32> to vector<8x512xf32>
    %452 = vector.broadcast %450 : vector<1x512xf32> to vector<8x512xf32>
    %453 = arith.mulf %451, %452 : vector<8x512xf32>
    %454 = arith.addf %448, %453 : vector<8x512xf32>
    %c18_96 = arith.constant 18 : index
    %c0_97 = arith.constant 0 : index
    %c0_98 = arith.constant 0 : index
    %455 = vector.load %arg8[%c18_96, %c0_97, %c0_98] : memref<22x8x512xf32, #tpu.memory_space<vmem>>, vector<1x8x512xf32>
    %456 = vector.shape_cast %455 : vector<1x8x512xf32> to vector<8x512xf32>
    %457 = vector.shape_cast %454 : vector<8x512xf32> to vector<1x8x512xf32>
    tpu.vector_store %arg8[%c18_96, %c0_97, %c0_98], %457 {strides = array<i32>} : memref<22x8x512xf32, #tpu.memory_space<vmem>>, vector<1x8x512xf32>,
    %c19 = arith.constant 19 : index
    %c0_99 = arith.constant 0 : index
    %c0_100 = arith.constant 0 : index
    %458 = vector.load %arg1[%c19, %c0_99, %c0_100] : memref<22x8x3xf32, #tpu.memory_space<vmem>>, vector<1x8x3xf32>
    %459 = vector.shape_cast %458 : vector<1x8x3xf32> to vector<8x3xf32>
    %460 = vector.extract_strided_slice %459 {offsets = [0, 0], sizes = [8, 1], strides = [1, 1]} : vector<8x3xf32> to vector<8x1xf32>
    %461 = vector.extract_strided_slice %0 {offsets = [0, 0], sizes = [1, 512], strides = [1, 1]} : vector<3x512xf32> to vector<1x512xf32>
    %462 = vector.broadcast %460 : vector<8x1xf32> to vector<8x512xf32>
    %463 = vector.broadcast %461 : vector<1x512xf32> to vector<8x512xf32>
    %464 = arith.mulf %462, %463 : vector<8x512xf32>
    %465 = vector.broadcast %1 : vector<1x512xf32> to vector<8x512xf32>
    %466 = arith.addf %465, %464 : vector<8x512xf32>
    %467 = vector.extract_strided_slice %459 {offsets = [0, 1], sizes = [8, 1], strides = [1, 1]} : vector<8x3xf32> to vector<8x1xf32>
    %468 = vector.extract_strided_slice %0 {offsets = [1, 0], sizes = [1, 512], strides = [1, 1]} : vector<3x512xf32> to vector<1x512xf32>
    %469 = vector.broadcast %467 : vector<8x1xf32> to vector<8x512xf32>
    %470 = vector.broadcast %468 : vector<1x512xf32> to vector<8x512xf32>
    %471 = arith.mulf %469, %470 : vector<8x512xf32>
    %472 = arith.addf %466, %471 : vector<8x512xf32>
    %473 = vector.extract_strided_slice %459 {offsets = [0, 2], sizes = [8, 1], strides = [1, 1]} : vector<8x3xf32> to vector<8x1xf32>
    %474 = vector.extract_strided_slice %0 {offsets = [2, 0], sizes = [1, 512], strides = [1, 1]} : vector<3x512xf32> to vector<1x512xf32>
    %475 = vector.broadcast %473 : vector<8x1xf32> to vector<8x512xf32>
    %476 = vector.broadcast %474 : vector<1x512xf32> to vector<8x512xf32>
    %477 = arith.mulf %475, %476 : vector<8x512xf32>
    %478 = arith.addf %472, %477 : vector<8x512xf32>
    %c19_101 = arith.constant 19 : index
    %c0_102 = arith.constant 0 : index
    %c0_103 = arith.constant 0 : index
    %479 = vector.load %arg8[%c19_101, %c0_102, %c0_103] : memref<22x8x512xf32, #tpu.memory_space<vmem>>, vector<1x8x512xf32>
    %480 = vector.shape_cast %479 : vector<1x8x512xf32> to vector<8x512xf32>
    %481 = vector.shape_cast %478 : vector<8x512xf32> to vector<1x8x512xf32>
    tpu.vector_store %arg8[%c19_101, %c0_102, %c0_103], %481 {strides = array<i32>} : memref<22x8x512xf32, #tpu.memory_space<vmem>>, vector<1x8x512xf32>,
    %c20 = arith.constant 20 : index
    %c0_104 = arith.constant 0 : index
    %c0_105 = arith.constant 0 : index
    %482 = vector.load %arg1[%c20, %c0_104, %c0_105] : memref<22x8x3xf32, #tpu.memory_space<vmem>>, vector<1x8x3xf32>
    %483 = vector.shape_cast %482 : vector<1x8x3xf32> to vector<8x3xf32>
    %484 = vector.extract_strided_slice %483 {offsets = [0, 0], sizes = [8, 1], strides = [1, 1]} : vector<8x3xf32> to vector<8x1xf32>
    %485 = vector.extract_strided_slice %0 {offsets = [0, 0], sizes = [1, 512], strides = [1, 1]} : vector<3x512xf32> to vector<1x512xf32>
    %486 = vector.broadcast %484 : vector<8x1xf32> to vector<8x512xf32>
    %487 = vector.broadcast %485 : vector<1x512xf32> to vector<8x512xf32>
    %488 = arith.mulf %486, %487 : vector<8x512xf32>
    %489 = vector.broadcast %1 : vector<1x512xf32> to vector<8x512xf32>
    %490 = arith.addf %489, %488 : vector<8x512xf32>
    %491 = vector.extract_strided_slice %483 {offsets = [0, 1], sizes = [8, 1], strides = [1, 1]} : vector<8x3xf32> to vector<8x1xf32>
    %492 = vector.extract_strided_slice %0 {offsets = [1, 0], sizes = [1, 512], strides = [1, 1]} : vector<3x512xf32> to vector<1x512xf32>
    %493 = vector.broadcast %491 : vector<8x1xf32> to vector<8x512xf32>
    %494 = vector.broadcast %492 : vector<1x512xf32> to vector<8x512xf32>
    %495 = arith.mulf %493, %494 : vector<8x512xf32>
    %496 = arith.addf %490, %495 : vector<8x512xf32>
    %497 = vector.extract_strided_slice %483 {offsets = [0, 2], sizes = [8, 1], strides = [1, 1]} : vector<8x3xf32> to vector<8x1xf32>
    %498 = vector.extract_strided_slice %0 {offsets = [2, 0], sizes = [1, 512], strides = [1, 1]} : vector<3x512xf32> to vector<1x512xf32>
    %499 = vector.broadcast %497 : vector<8x1xf32> to vector<8x512xf32>
    %500 = vector.broadcast %498 : vector<1x512xf32> to vector<8x512xf32>
    %501 = arith.mulf %499, %500 : vector<8x512xf32>
    %502 = arith.addf %496, %501 : vector<8x512xf32>
    %c20_106 = arith.constant 20 : index
    %c0_107 = arith.constant 0 : index
    %c0_108 = arith.constant 0 : index
    %503 = vector.load %arg8[%c20_106, %c0_107, %c0_108] : memref<22x8x512xf32, #tpu.memory_space<vmem>>, vector<1x8x512xf32>
    %504 = vector.shape_cast %503 : vector<1x8x512xf32> to vector<8x512xf32>
    %505 = vector.shape_cast %502 : vector<8x512xf32> to vector<1x8x512xf32>
    tpu.vector_store %arg8[%c20_106, %c0_107, %c0_108], %505 {strides = array<i32>} : memref<22x8x512xf32, #tpu.memory_space<vmem>>, vector<1x8x512xf32>,
    %c21 = arith.constant 21 : index
    %c0_109 = arith.constant 0 : index
    %c0_110 = arith.constant 0 : index
    %506 = vector.load %arg1[%c21, %c0_109, %c0_110] : memref<22x8x3xf32, #tpu.memory_space<vmem>>, vector<1x8x3xf32>
    %507 = vector.shape_cast %506 : vector<1x8x3xf32> to vector<8x3xf32>
    %508 = vector.extract_strided_slice %507 {offsets = [0, 0], sizes = [8, 1], strides = [1, 1]} : vector<8x3xf32> to vector<8x1xf32>
    %509 = vector.extract_strided_slice %0 {offsets = [0, 0], sizes = [1, 512], strides = [1, 1]} : vector<3x512xf32> to vector<1x512xf32>
    %510 = vector.broadcast %508 : vector<8x1xf32> to vector<8x512xf32>
    %511 = vector.broadcast %509 : vector<1x512xf32> to vector<8x512xf32>
    %512 = arith.mulf %510, %511 : vector<8x512xf32>
    %513 = vector.broadcast %1 : vector<1x512xf32> to vector<8x512xf32>
    %514 = arith.addf %513, %512 : vector<8x512xf32>
    %515 = vector.extract_strided_slice %507 {offsets = [0, 1], sizes = [8, 1], strides = [1, 1]} : vector<8x3xf32> to vector<8x1xf32>
    %516 = vector.extract_strided_slice %0 {offsets = [1, 0], sizes = [1, 512], strides = [1, 1]} : vector<3x512xf32> to vector<1x512xf32>
    %517 = vector.broadcast %515 : vector<8x1xf32> to vector<8x512xf32>
    %518 = vector.broadcast %516 : vector<1x512xf32> to vector<8x512xf32>
    %519 = arith.mulf %517, %518 : vector<8x512xf32>
    %520 = arith.addf %514, %519 : vector<8x512xf32>
    %521 = vector.extract_strided_slice %507 {offsets = [0, 2], sizes = [8, 1], strides = [1, 1]} : vector<8x3xf32> to vector<8x1xf32>
    %522 = vector.extract_strided_slice %0 {offsets = [2, 0], sizes = [1, 512], strides = [1, 1]} : vector<3x512xf32> to vector<1x512xf32>
    %523 = vector.broadcast %521 : vector<8x1xf32> to vector<8x512xf32>
    %524 = vector.broadcast %522 : vector<1x512xf32> to vector<8x512xf32>
    %525 = arith.mulf %523, %524 : vector<8x512xf32>
    %526 = arith.addf %520, %525 : vector<8x512xf32>
    %c21_111 = arith.constant 21 : index
    %c0_112 = arith.constant 0 : index
    %c0_113 = arith.constant 0 : index
    %527 = vector.load %arg8[%c21_111, %c0_112, %c0_113] : memref<22x8x512xf32, #tpu.memory_space<vmem>>, vector<1x8x512xf32>
    %528 = vector.shape_cast %527 : vector<1x8x512xf32> to vector<8x512xf32>
    %529 = vector.shape_cast %526 : vector<8x512xf32> to vector<1x8x512xf32>
    tpu.vector_store %arg8[%c21_111, %c0_112, %c0_113], %529 {strides = array<i32>} : memref<22x8x512xf32, #tpu.memory_space<vmem>>, vector<1x8x512xf32>,
    %cst = arith.constant 0.000000e+00 : f32
    %530 = vector.broadcast %cst : f32 to vector<8x128xf32>
    %cst_114 = arith.constant 0.000000e+00 : f32
    %531 = vector.broadcast %cst_114 : f32 to vector<8x128xf32>
    %c0_115 = arith.constant 0 : index
    %c0_116 = arith.constant 0 : index
    %c0_117 = arith.constant 0 : index
    %532 = vector.load %arg8[%c0_115, %c0_116, %c0_117] : memref<22x8x512xf32, #tpu.memory_space<vmem>>, vector<1x8x512xf32>
    %533 = vector.shape_cast %532 : vector<1x8x512xf32> to vector<8x512xf32>
    %c0_118 = arith.constant 0 : index
    %c0_119 = arith.constant 0 : index
    %534 = vector.load %arg3[%c0_118, %c0_119] : memref<128x512xf32, #tpu.memory_space<vmem>>, vector<128x512xf32>
    %cst_120 = arith.constant dense<0.000000e+00> : vector<8x512xf32>
    %535 = tpu.matmul %530, %534, %cst_120 {dimension_numbers = #tpu.dot_dimension_numbers<[1], [0], [0], [1], [0, 0, 1, 1], [], []>} : vector<8x128xf32>, vector<128x512xf32>, vector<8x512xf32> -> vector<8x512xf32>
    %536 = arith.addf %533, %535 : vector<8x512xf32>
    %537 = vector.extract_strided_slice %536 {offsets = [0, 0], sizes = [8, 128], strides = [1, 1]} : vector<8x512xf32> to vector<8x128xf32>
    %538 = arith.negf %537 : vector<8x128xf32>
    %539 = math.exp %538 : vector<8x128xf32>
    %cst_121 = arith.constant 1.000000e+00 : f32
    %540 = vector.broadcast %cst_121 : f32 to vector<8x128xf32>
    %541 = arith.addf %540, %539 : vector<8x128xf32>
    %542 = arith.divf %540, %541 : vector<8x128xf32>
    %543 = vector.extract_strided_slice %536 {offsets = [0, 128], sizes = [8, 128], strides = [1, 1]} : vector<8x512xf32> to vector<8x128xf32>
    %544 = arith.negf %543 : vector<8x128xf32>
    %545 = math.exp %544 : vector<8x128xf32>
    %cst_122 = arith.constant 1.000000e+00 : f32
    %546 = vector.broadcast %cst_122 : f32 to vector<8x128xf32>
    %547 = arith.addf %546, %545 : vector<8x128xf32>
    %548 = arith.divf %546, %547 : vector<8x128xf32>
    %549 = vector.extract_strided_slice %536 {offsets = [0, 256], sizes = [8, 128], strides = [1, 1]} : vector<8x512xf32> to vector<8x128xf32>
    %550 = math.tanh %549 : vector<8x128xf32>
    %551 = vector.extract_strided_slice %536 {offsets = [0, 384], sizes = [8, 128], strides = [1, 1]} : vector<8x512xf32> to vector<8x128xf32>
    %552 = arith.negf %551 : vector<8x128xf32>
    %553 = math.exp %552 : vector<8x128xf32>
    %cst_123 = arith.constant 1.000000e+00 : f32
    %554 = vector.broadcast %cst_123 : f32 to vector<8x128xf32>
    %555 = arith.addf %554, %553 : vector<8x128xf32>
    %556 = arith.divf %554, %555 : vector<8x128xf32>
    %557 = arith.mulf %548, %531 : vector<8x128xf32>
    %558 = arith.mulf %542, %550 : vector<8x128xf32>
    %559 = arith.addf %557, %558 : vector<8x128xf32>
    %560 = math.tanh %559 : vector<8x128xf32>
    %561 = arith.mulf %556, %560 : vector<8x128xf32>
    %c0_124 = arith.constant 0 : index
    %c0_125 = arith.constant 0 : index
    %562 = vector.load %arg9[%c0_124, %c0_125] : memref<8x2816xf32, #tpu.memory_space<vmem>>, vector<8x128xf32>
    tpu.vector_store %arg9[%c0_124, %c0_125], %561 {strides = array<i32>} : memref<8x2816xf32, #tpu.memory_space<vmem>>, vector<8x128xf32>,
    %c1_126 = arith.constant 1 : index
    %c0_127 = arith.constant 0 : index
    %c0_128 = arith.constant 0 : index
    %563 = vector.load %arg8[%c1_126, %c0_127, %c0_128] : memref<22x8x512xf32, #tpu.memory_space<vmem>>, vector<1x8x512xf32>
    %564 = vector.shape_cast %563 : vector<1x8x512xf32> to vector<8x512xf32>
    %c0_129 = arith.constant 0 : index
    %c0_130 = arith.constant 0 : index
    %565 = vector.load %arg3[%c0_129, %c0_130] : memref<128x512xf32, #tpu.memory_space<vmem>>, vector<128x512xf32>
    %cst_131 = arith.constant dense<0.000000e+00> : vector<8x512xf32>
    %566 = tpu.matmul %561, %565, %cst_131 {dimension_numbers = #tpu.dot_dimension_numbers<[1], [0], [0], [1], [0, 0, 1, 1], [], []>} : vector<8x128xf32>, vector<128x512xf32>, vector<8x512xf32> -> vector<8x512xf32>
    %567 = arith.addf %564, %566 : vector<8x512xf32>
    %568 = vector.extract_strided_slice %567 {offsets = [0, 0], sizes = [8, 128], strides = [1, 1]} : vector<8x512xf32> to vector<8x128xf32>
    %569 = arith.negf %568 : vector<8x128xf32>
    %570 = math.exp %569 : vector<8x128xf32>
    %cst_132 = arith.constant 1.000000e+00 : f32
    %571 = vector.broadcast %cst_132 : f32 to vector<8x128xf32>
    %572 = arith.addf %571, %570 : vector<8x128xf32>
    %573 = arith.divf %571, %572 : vector<8x128xf32>
    %574 = vector.extract_strided_slice %567 {offsets = [0, 128], sizes = [8, 128], strides = [1, 1]} : vector<8x512xf32> to vector<8x128xf32>
    %575 = arith.negf %574 : vector<8x128xf32>
    %576 = math.exp %575 : vector<8x128xf32>
    %cst_133 = arith.constant 1.000000e+00 : f32
    %577 = vector.broadcast %cst_133 : f32 to vector<8x128xf32>
    %578 = arith.addf %577, %576 : vector<8x128xf32>
    %579 = arith.divf %577, %578 : vector<8x128xf32>
    %580 = vector.extract_strided_slice %567 {offsets = [0, 256], sizes = [8, 128], strides = [1, 1]} : vector<8x512xf32> to vector<8x128xf32>
    %581 = math.tanh %580 : vector<8x128xf32>
    %582 = vector.extract_strided_slice %567 {offsets = [0, 384], sizes = [8, 128], strides = [1, 1]} : vector<8x512xf32> to vector<8x128xf32>
    %583 = arith.negf %582 : vector<8x128xf32>
    %584 = math.exp %583 : vector<8x128xf32>
    %cst_134 = arith.constant 1.000000e+00 : f32
    %585 = vector.broadcast %cst_134 : f32 to vector<8x128xf32>
    %586 = arith.addf %585, %584 : vector<8x128xf32>
    %587 = arith.divf %585, %586 : vector<8x128xf32>
    %588 = arith.mulf %579, %559 : vector<8x128xf32>
    %589 = arith.mulf %573, %581 : vector<8x128xf32>
    %590 = arith.addf %588, %589 : vector<8x128xf32>
    %591 = math.tanh %590 : vector<8x128xf32>
    %592 = arith.mulf %587, %591 : vector<8x128xf32>
    %c0_135 = arith.constant 0 : index
    %c128 = arith.constant 128 : index
    %593 = vector.load %arg9[%c0_135, %c128] : memref<8x2816xf32, #tpu.memory_space<vmem>>, vector<8x128xf32>
    tpu.vector_store %arg9[%c0_135, %c128], %592 {strides = array<i32>} : memref<8x2816xf32, #tpu.memory_space<vmem>>, vector<8x128xf32>,
    %c2_136 = arith.constant 2 : index
    %c0_137 = arith.constant 0 : index
    %c0_138 = arith.constant 0 : index
    %594 = vector.load %arg8[%c2_136, %c0_137, %c0_138] : memref<22x8x512xf32, #tpu.memory_space<vmem>>, vector<1x8x512xf32>
    %595 = vector.shape_cast %594 : vector<1x8x512xf32> to vector<8x512xf32>
    %c0_139 = arith.constant 0 : index
    %c0_140 = arith.constant 0 : index
    %596 = vector.load %arg3[%c0_139, %c0_140] : memref<128x512xf32, #tpu.memory_space<vmem>>, vector<128x512xf32>
    %cst_141 = arith.constant dense<0.000000e+00> : vector<8x512xf32>
    %597 = tpu.matmul %592, %596, %cst_141 {dimension_numbers = #tpu.dot_dimension_numbers<[1], [0], [0], [1], [0, 0, 1, 1], [], []>} : vector<8x128xf32>, vector<128x512xf32>, vector<8x512xf32> -> vector<8x512xf32>
    %598 = arith.addf %595, %597 : vector<8x512xf32>
    %599 = vector.extract_strided_slice %598 {offsets = [0, 0], sizes = [8, 128], strides = [1, 1]} : vector<8x512xf32> to vector<8x128xf32>
    %600 = arith.negf %599 : vector<8x128xf32>
    %601 = math.exp %600 : vector<8x128xf32>
    %cst_142 = arith.constant 1.000000e+00 : f32
    %602 = vector.broadcast %cst_142 : f32 to vector<8x128xf32>
    %603 = arith.addf %602, %601 : vector<8x128xf32>
    %604 = arith.divf %602, %603 : vector<8x128xf32>
    %605 = vector.extract_strided_slice %598 {offsets = [0, 128], sizes = [8, 128], strides = [1, 1]} : vector<8x512xf32> to vector<8x128xf32>
    %606 = arith.negf %605 : vector<8x128xf32>
    %607 = math.exp %606 : vector<8x128xf32>
    %cst_143 = arith.constant 1.000000e+00 : f32
    %608 = vector.broadcast %cst_143 : f32 to vector<8x128xf32>
    %609 = arith.addf %608, %607 : vector<8x128xf32>
    %610 = arith.divf %608, %609 : vector<8x128xf32>
    %611 = vector.extract_strided_slice %598 {offsets = [0, 256], sizes = [8, 128], strides = [1, 1]} : vector<8x512xf32> to vector<8x128xf32>
    %612 = math.tanh %611 : vector<8x128xf32>
    %613 = vector.extract_strided_slice %598 {offsets = [0, 384], sizes = [8, 128], strides = [1, 1]} : vector<8x512xf32> to vector<8x128xf32>
    %614 = arith.negf %613 : vector<8x128xf32>
    %615 = math.exp %614 : vector<8x128xf32>
    %cst_144 = arith.constant 1.000000e+00 : f32
    %616 = vector.broadcast %cst_144 : f32 to vector<8x128xf32>
    %617 = arith.addf %616, %615 : vector<8x128xf32>
    %618 = arith.divf %616, %617 : vector<8x128xf32>
    %619 = arith.mulf %610, %590 : vector<8x128xf32>
    %620 = arith.mulf %604, %612 : vector<8x128xf32>
    %621 = arith.addf %619, %620 : vector<8x128xf32>
    %622 = math.tanh %621 : vector<8x128xf32>
    %623 = arith.mulf %618, %622 : vector<8x128xf32>
    %c0_145 = arith.constant 0 : index
    %c256 = arith.constant 256 : index
    %624 = vector.load %arg9[%c0_145, %c256] : memref<8x2816xf32, #tpu.memory_space<vmem>>, vector<8x128xf32>
    tpu.vector_store %arg9[%c0_145, %c256], %623 {strides = array<i32>} : memref<8x2816xf32, #tpu.memory_space<vmem>>, vector<8x128xf32>,
    %c3_146 = arith.constant 3 : index
    %c0_147 = arith.constant 0 : index
    %c0_148 = arith.constant 0 : index
    %625 = vector.load %arg8[%c3_146, %c0_147, %c0_148] : memref<22x8x512xf32, #tpu.memory_space<vmem>>, vector<1x8x512xf32>
    %626 = vector.shape_cast %625 : vector<1x8x512xf32> to vector<8x512xf32>
    %c0_149 = arith.constant 0 : index
    %c0_150 = arith.constant 0 : index
    %627 = vector.load %arg3[%c0_149, %c0_150] : memref<128x512xf32, #tpu.memory_space<vmem>>, vector<128x512xf32>
    %cst_151 = arith.constant dense<0.000000e+00> : vector<8x512xf32>
    %628 = tpu.matmul %623, %627, %cst_151 {dimension_numbers = #tpu.dot_dimension_numbers<[1], [0], [0], [1], [0, 0, 1, 1], [], []>} : vector<8x128xf32>, vector<128x512xf32>, vector<8x512xf32> -> vector<8x512xf32>
    %629 = arith.addf %626, %628 : vector<8x512xf32>
    %630 = vector.extract_strided_slice %629 {offsets = [0, 0], sizes = [8, 128], strides = [1, 1]} : vector<8x512xf32> to vector<8x128xf32>
    %631 = arith.negf %630 : vector<8x128xf32>
    %632 = math.exp %631 : vector<8x128xf32>
    %cst_152 = arith.constant 1.000000e+00 : f32
    %633 = vector.broadcast %cst_152 : f32 to vector<8x128xf32>
    %634 = arith.addf %633, %632 : vector<8x128xf32>
    %635 = arith.divf %633, %634 : vector<8x128xf32>
    %636 = vector.extract_strided_slice %629 {offsets = [0, 128], sizes = [8, 128], strides = [1, 1]} : vector<8x512xf32> to vector<8x128xf32>
    %637 = arith.negf %636 : vector<8x128xf32>
    %638 = math.exp %637 : vector<8x128xf32>
    %cst_153 = arith.constant 1.000000e+00 : f32
    %639 = vector.broadcast %cst_153 : f32 to vector<8x128xf32>
    %640 = arith.addf %639, %638 : vector<8x128xf32>
    %641 = arith.divf %639, %640 : vector<8x128xf32>
    %642 = vector.extract_strided_slice %629 {offsets = [0, 256], sizes = [8, 128], strides = [1, 1]} : vector<8x512xf32> to vector<8x128xf32>
    %643 = math.tanh %642 : vector<8x128xf32>
    %644 = vector.extract_strided_slice %629 {offsets = [0, 384], sizes = [8, 128], strides = [1, 1]} : vector<8x512xf32> to vector<8x128xf32>
    %645 = arith.negf %644 : vector<8x128xf32>
    %646 = math.exp %645 : vector<8x128xf32>
    %cst_154 = arith.constant 1.000000e+00 : f32
    %647 = vector.broadcast %cst_154 : f32 to vector<8x128xf32>
    %648 = arith.addf %647, %646 : vector<8x128xf32>
    %649 = arith.divf %647, %648 : vector<8x128xf32>
    %650 = arith.mulf %641, %621 : vector<8x128xf32>
    %651 = arith.mulf %635, %643 : vector<8x128xf32>
    %652 = arith.addf %650, %651 : vector<8x128xf32>
    %653 = math.tanh %652 : vector<8x128xf32>
    %654 = arith.mulf %649, %653 : vector<8x128xf32>
    %c0_155 = arith.constant 0 : index
    %c384 = arith.constant 384 : index
    %655 = vector.load %arg9[%c0_155, %c384] : memref<8x2816xf32, #tpu.memory_space<vmem>>, vector<8x128xf32>
    tpu.vector_store %arg9[%c0_155, %c384], %654 {strides = array<i32>} : memref<8x2816xf32, #tpu.memory_space<vmem>>, vector<8x128xf32>,
    %c4_156 = arith.constant 4 : index
    %c0_157 = arith.constant 0 : index
    %c0_158 = arith.constant 0 : index
    %656 = vector.load %arg8[%c4_156, %c0_157, %c0_158] : memref<22x8x512xf32, #tpu.memory_space<vmem>>, vector<1x8x512xf32>
    %657 = vector.shape_cast %656 : vector<1x8x512xf32> to vector<8x512xf32>
    %c0_159 = arith.constant 0 : index
    %c0_160 = arith.constant 0 : index
    %658 = vector.load %arg3[%c0_159, %c0_160] : memref<128x512xf32, #tpu.memory_space<vmem>>, vector<128x512xf32>
    %cst_161 = arith.constant dense<0.000000e+00> : vector<8x512xf32>
    %659 = tpu.matmul %654, %658, %cst_161 {dimension_numbers = #tpu.dot_dimension_numbers<[1], [0], [0], [1], [0, 0, 1, 1], [], []>} : vector<8x128xf32>, vector<128x512xf32>, vector<8x512xf32> -> vector<8x512xf32>
    %660 = arith.addf %657, %659 : vector<8x512xf32>
    %661 = vector.extract_strided_slice %660 {offsets = [0, 0], sizes = [8, 128], strides = [1, 1]} : vector<8x512xf32> to vector<8x128xf32>
    %662 = arith.negf %661 : vector<8x128xf32>
    %663 = math.exp %662 : vector<8x128xf32>
    %cst_162 = arith.constant 1.000000e+00 : f32
    %664 = vector.broadcast %cst_162 : f32 to vector<8x128xf32>
    %665 = arith.addf %664, %663 : vector<8x128xf32>
    %666 = arith.divf %664, %665 : vector<8x128xf32>
    %667 = vector.extract_strided_slice %660 {offsets = [0, 128], sizes = [8, 128], strides = [1, 1]} : vector<8x512xf32> to vector<8x128xf32>
    %668 = arith.negf %667 : vector<8x128xf32>
    %669 = math.exp %668 : vector<8x128xf32>
    %cst_163 = arith.constant 1.000000e+00 : f32
    %670 = vector.broadcast %cst_163 : f32 to vector<8x128xf32>
    %671 = arith.addf %670, %669 : vector<8x128xf32>
    %672 = arith.divf %670, %671 : vector<8x128xf32>
    %673 = vector.extract_strided_slice %660 {offsets = [0, 256], sizes = [8, 128], strides = [1, 1]} : vector<8x512xf32> to vector<8x128xf32>
    %674 = math.tanh %673 : vector<8x128xf32>
    %675 = vector.extract_strided_slice %660 {offsets = [0, 384], sizes = [8, 128], strides = [1, 1]} : vector<8x512xf32> to vector<8x128xf32>
    %676 = arith.negf %675 : vector<8x128xf32>
    %677 = math.exp %676 : vector<8x128xf32>
    %cst_164 = arith.constant 1.000000e+00 : f32
    %678 = vector.broadcast %cst_164 : f32 to vector<8x128xf32>
    %679 = arith.addf %678, %677 : vector<8x128xf32>
    %680 = arith.divf %678, %679 : vector<8x128xf32>
    %681 = arith.mulf %672, %652 : vector<8x128xf32>
    %682 = arith.mulf %666, %674 : vector<8x128xf32>
    %683 = arith.addf %681, %682 : vector<8x128xf32>
    %684 = math.tanh %683 : vector<8x128xf32>
    %685 = arith.mulf %680, %684 : vector<8x128xf32>
    %c0_165 = arith.constant 0 : index
    %c512 = arith.constant 512 : index
    %686 = vector.load %arg9[%c0_165, %c512] : memref<8x2816xf32, #tpu.memory_space<vmem>>, vector<8x128xf32>
    tpu.vector_store %arg9[%c0_165, %c512], %685 {strides = array<i32>} : memref<8x2816xf32, #tpu.memory_space<vmem>>, vector<8x128xf32>,
    %c5_166 = arith.constant 5 : index
    %c0_167 = arith.constant 0 : index
    %c0_168 = arith.constant 0 : index
    %687 = vector.load %arg8[%c5_166, %c0_167, %c0_168] : memref<22x8x512xf32, #tpu.memory_space<vmem>>, vector<1x8x512xf32>
    %688 = vector.shape_cast %687 : vector<1x8x512xf32> to vector<8x512xf32>
    %c0_169 = arith.constant 0 : index
    %c0_170 = arith.constant 0 : index
    %689 = vector.load %arg3[%c0_169, %c0_170] : memref<128x512xf32, #tpu.memory_space<vmem>>, vector<128x512xf32>
    %cst_171 = arith.constant dense<0.000000e+00> : vector<8x512xf32>
    %690 = tpu.matmul %685, %689, %cst_171 {dimension_numbers = #tpu.dot_dimension_numbers<[1], [0], [0], [1], [0, 0, 1, 1], [], []>} : vector<8x128xf32>, vector<128x512xf32>, vector<8x512xf32> -> vector<8x512xf32>
    %691 = arith.addf %688, %690 : vector<8x512xf32>
    %692 = vector.extract_strided_slice %691 {offsets = [0, 0], sizes = [8, 128], strides = [1, 1]} : vector<8x512xf32> to vector<8x128xf32>
    %693 = arith.negf %692 : vector<8x128xf32>
    %694 = math.exp %693 : vector<8x128xf32>
    %cst_172 = arith.constant 1.000000e+00 : f32
    %695 = vector.broadcast %cst_172 : f32 to vector<8x128xf32>
    %696 = arith.addf %695, %694 : vector<8x128xf32>
    %697 = arith.divf %695, %696 : vector<8x128xf32>
    %698 = vector.extract_strided_slice %691 {offsets = [0, 128], sizes = [8, 128], strides = [1, 1]} : vector<8x512xf32> to vector<8x128xf32>
    %699 = arith.negf %698 : vector<8x128xf32>
    %700 = math.exp %699 : vector<8x128xf32>
    %cst_173 = arith.constant 1.000000e+00 : f32
    %701 = vector.broadcast %cst_173 : f32 to vector<8x128xf32>
    %702 = arith.addf %701, %700 : vector<8x128xf32>
    %703 = arith.divf %701, %702 : vector<8x128xf32>
    %704 = vector.extract_strided_slice %691 {offsets = [0, 256], sizes = [8, 128], strides = [1, 1]} : vector<8x512xf32> to vector<8x128xf32>
    %705 = math.tanh %704 : vector<8x128xf32>
    %706 = vector.extract_strided_slice %691 {offsets = [0, 384], sizes = [8, 128], strides = [1, 1]} : vector<8x512xf32> to vector<8x128xf32>
    %707 = arith.negf %706 : vector<8x128xf32>
    %708 = math.exp %707 : vector<8x128xf32>
    %cst_174 = arith.constant 1.000000e+00 : f32
    %709 = vector.broadcast %cst_174 : f32 to vector<8x128xf32>
    %710 = arith.addf %709, %708 : vector<8x128xf32>
    %711 = arith.divf %709, %710 : vector<8x128xf32>
    %712 = arith.mulf %703, %683 : vector<8x128xf32>
    %713 = arith.mulf %697, %705 : vector<8x128xf32>
    %714 = arith.addf %712, %713 : vector<8x128xf32>
    %715 = math.tanh %714 : vector<8x128xf32>
    %716 = arith.mulf %711, %715 : vector<8x128xf32>
    %c0_175 = arith.constant 0 : index
    %c640 = arith.constant 640 : index
    %717 = vector.load %arg9[%c0_175, %c640] : memref<8x2816xf32, #tpu.memory_space<vmem>>, vector<8x128xf32>
    tpu.vector_store %arg9[%c0_175, %c640], %716 {strides = array<i32>} : memref<8x2816xf32, #tpu.memory_space<vmem>>, vector<8x128xf32>,
    %c6_176 = arith.constant 6 : index
    %c0_177 = arith.constant 0 : index
    %c0_178 = arith.constant 0 : index
    %718 = vector.load %arg8[%c6_176, %c0_177, %c0_178] : memref<22x8x512xf32, #tpu.memory_space<vmem>>, vector<1x8x512xf32>
    %719 = vector.shape_cast %718 : vector<1x8x512xf32> to vector<8x512xf32>
    %c0_179 = arith.constant 0 : index
    %c0_180 = arith.constant 0 : index
    %720 = vector.load %arg3[%c0_179, %c0_180] : memref<128x512xf32, #tpu.memory_space<vmem>>, vector<128x512xf32>
    %cst_181 = arith.constant dense<0.000000e+00> : vector<8x512xf32>
    %721 = tpu.matmul %716, %720, %cst_181 {dimension_numbers = #tpu.dot_dimension_numbers<[1], [0], [0], [1], [0, 0, 1, 1], [], []>} : vector<8x128xf32>, vector<128x512xf32>, vector<8x512xf32> -> vector<8x512xf32>
    %722 = arith.addf %719, %721 : vector<8x512xf32>
    %723 = vector.extract_strided_slice %722 {offsets = [0, 0], sizes = [8, 128], strides = [1, 1]} : vector<8x512xf32> to vector<8x128xf32>
    %724 = arith.negf %723 : vector<8x128xf32>
    %725 = math.exp %724 : vector<8x128xf32>
    %cst_182 = arith.constant 1.000000e+00 : f32
    %726 = vector.broadcast %cst_182 : f32 to vector<8x128xf32>
    %727 = arith.addf %726, %725 : vector<8x128xf32>
    %728 = arith.divf %726, %727 : vector<8x128xf32>
    %729 = vector.extract_strided_slice %722 {offsets = [0, 128], sizes = [8, 128], strides = [1, 1]} : vector<8x512xf32> to vector<8x128xf32>
    %730 = arith.negf %729 : vector<8x128xf32>
    %731 = math.exp %730 : vector<8x128xf32>
    %cst_183 = arith.constant 1.000000e+00 : f32
    %732 = vector.broadcast %cst_183 : f32 to vector<8x128xf32>
    %733 = arith.addf %732, %731 : vector<8x128xf32>
    %734 = arith.divf %732, %733 : vector<8x128xf32>
    %735 = vector.extract_strided_slice %722 {offsets = [0, 256], sizes = [8, 128], strides = [1, 1]} : vector<8x512xf32> to vector<8x128xf32>
    %736 = math.tanh %735 : vector<8x128xf32>
    %737 = vector.extract_strided_slice %722 {offsets = [0, 384], sizes = [8, 128], strides = [1, 1]} : vector<8x512xf32> to vector<8x128xf32>
    %738 = arith.negf %737 : vector<8x128xf32>
    %739 = math.exp %738 : vector<8x128xf32>
    %cst_184 = arith.constant 1.000000e+00 : f32
    %740 = vector.broadcast %cst_184 : f32 to vector<8x128xf32>
    %741 = arith.addf %740, %739 : vector<8x128xf32>
    %742 = arith.divf %740, %741 : vector<8x128xf32>
    %743 = arith.mulf %734, %714 : vector<8x128xf32>
    %744 = arith.mulf %728, %736 : vector<8x128xf32>
    %745 = arith.addf %743, %744 : vector<8x128xf32>
    %746 = math.tanh %745 : vector<8x128xf32>
    %747 = arith.mulf %742, %746 : vector<8x128xf32>
    %c0_185 = arith.constant 0 : index
    %c768 = arith.constant 768 : index
    %748 = vector.load %arg9[%c0_185, %c768] : memref<8x2816xf32, #tpu.memory_space<vmem>>, vector<8x128xf32>
    tpu.vector_store %arg9[%c0_185, %c768], %747 {strides = array<i32>} : memref<8x2816xf32, #tpu.memory_space<vmem>>, vector<8x128xf32>,
    %c7_186 = arith.constant 7 : index
    %c0_187 = arith.constant 0 : index
    %c0_188 = arith.constant 0 : index
    %749 = vector.load %arg8[%c7_186, %c0_187, %c0_188] : memref<22x8x512xf32, #tpu.memory_space<vmem>>, vector<1x8x512xf32>
    %750 = vector.shape_cast %749 : vector<1x8x512xf32> to vector<8x512xf32>
    %c0_189 = arith.constant 0 : index
    %c0_190 = arith.constant 0 : index
    %751 = vector.load %arg3[%c0_189, %c0_190] : memref<128x512xf32, #tpu.memory_space<vmem>>, vector<128x512xf32>
    %cst_191 = arith.constant dense<0.000000e+00> : vector<8x512xf32>
    %752 = tpu.matmul %747, %751, %cst_191 {dimension_numbers = #tpu.dot_dimension_numbers<[1], [0], [0], [1], [0, 0, 1, 1], [], []>} : vector<8x128xf32>, vector<128x512xf32>, vector<8x512xf32> -> vector<8x512xf32>
    %753 = arith.addf %750, %752 : vector<8x512xf32>
    %754 = vector.extract_strided_slice %753 {offsets = [0, 0], sizes = [8, 128], strides = [1, 1]} : vector<8x512xf32> to vector<8x128xf32>
    %755 = arith.negf %754 : vector<8x128xf32>
    %756 = math.exp %755 : vector<8x128xf32>
    %cst_192 = arith.constant 1.000000e+00 : f32
    %757 = vector.broadcast %cst_192 : f32 to vector<8x128xf32>
    %758 = arith.addf %757, %756 : vector<8x128xf32>
    %759 = arith.divf %757, %758 : vector<8x128xf32>
    %760 = vector.extract_strided_slice %753 {offsets = [0, 128], sizes = [8, 128], strides = [1, 1]} : vector<8x512xf32> to vector<8x128xf32>
    %761 = arith.negf %760 : vector<8x128xf32>
    %762 = math.exp %761 : vector<8x128xf32>
    %cst_193 = arith.constant 1.000000e+00 : f32
    %763 = vector.broadcast %cst_193 : f32 to vector<8x128xf32>
    %764 = arith.addf %763, %762 : vector<8x128xf32>
    %765 = arith.divf %763, %764 : vector<8x128xf32>
    %766 = vector.extract_strided_slice %753 {offsets = [0, 256], sizes = [8, 128], strides = [1, 1]} : vector<8x512xf32> to vector<8x128xf32>
    %767 = math.tanh %766 : vector<8x128xf32>
    %768 = vector.extract_strided_slice %753 {offsets = [0, 384], sizes = [8, 128], strides = [1, 1]} : vector<8x512xf32> to vector<8x128xf32>
    %769 = arith.negf %768 : vector<8x128xf32>
    %770 = math.exp %769 : vector<8x128xf32>
    %cst_194 = arith.constant 1.000000e+00 : f32
    %771 = vector.broadcast %cst_194 : f32 to vector<8x128xf32>
    %772 = arith.addf %771, %770 : vector<8x128xf32>
    %773 = arith.divf %771, %772 : vector<8x128xf32>
    %774 = arith.mulf %765, %745 : vector<8x128xf32>
    %775 = arith.mulf %759, %767 : vector<8x128xf32>
    %776 = arith.addf %774, %775 : vector<8x128xf32>
    %777 = math.tanh %776 : vector<8x128xf32>
    %778 = arith.mulf %773, %777 : vector<8x128xf32>
    %c0_195 = arith.constant 0 : index
    %c896 = arith.constant 896 : index
    %779 = vector.load %arg9[%c0_195, %c896] : memref<8x2816xf32, #tpu.memory_space<vmem>>, vector<8x128xf32>
    tpu.vector_store %arg9[%c0_195, %c896], %778 {strides = array<i32>} : memref<8x2816xf32, #tpu.memory_space<vmem>>, vector<8x128xf32>,
    %c8_196 = arith.constant 8 : index
    %c0_197 = arith.constant 0 : index
    %c0_198 = arith.constant 0 : index
    %780 = vector.load %arg8[%c8_196, %c0_197, %c0_198] : memref<22x8x512xf32, #tpu.memory_space<vmem>>, vector<1x8x512xf32>
    %781 = vector.shape_cast %780 : vector<1x8x512xf32> to vector<8x512xf32>
    %c0_199 = arith.constant 0 : index
    %c0_200 = arith.constant 0 : index
    %782 = vector.load %arg3[%c0_199, %c0_200] : memref<128x512xf32, #tpu.memory_space<vmem>>, vector<128x512xf32>
    %cst_201 = arith.constant dense<0.000000e+00> : vector<8x512xf32>
    %783 = tpu.matmul %778, %782, %cst_201 {dimension_numbers = #tpu.dot_dimension_numbers<[1], [0], [0], [1], [0, 0, 1, 1], [], []>} : vector<8x128xf32>, vector<128x512xf32>, vector<8x512xf32> -> vector<8x512xf32>
    %784 = arith.addf %781, %783 : vector<8x512xf32>
    %785 = vector.extract_strided_slice %784 {offsets = [0, 0], sizes = [8, 128], strides = [1, 1]} : vector<8x512xf32> to vector<8x128xf32>
    %786 = arith.negf %785 : vector<8x128xf32>
    %787 = math.exp %786 : vector<8x128xf32>
    %cst_202 = arith.constant 1.000000e+00 : f32
    %788 = vector.broadcast %cst_202 : f32 to vector<8x128xf32>
    %789 = arith.addf %788, %787 : vector<8x128xf32>
    %790 = arith.divf %788, %789 : vector<8x128xf32>
    %791 = vector.extract_strided_slice %784 {offsets = [0, 128], sizes = [8, 128], strides = [1, 1]} : vector<8x512xf32> to vector<8x128xf32>
    %792 = arith.negf %791 : vector<8x128xf32>
    %793 = math.exp %792 : vector<8x128xf32>
    %cst_203 = arith.constant 1.000000e+00 : f32
    %794 = vector.broadcast %cst_203 : f32 to vector<8x128xf32>
    %795 = arith.addf %794, %793 : vector<8x128xf32>
    %796 = arith.divf %794, %795 : vector<8x128xf32>
    %797 = vector.extract_strided_slice %784 {offsets = [0, 256], sizes = [8, 128], strides = [1, 1]} : vector<8x512xf32> to vector<8x128xf32>
    %798 = math.tanh %797 : vector<8x128xf32>
    %799 = vector.extract_strided_slice %784 {offsets = [0, 384], sizes = [8, 128], strides = [1, 1]} : vector<8x512xf32> to vector<8x128xf32>
    %800 = arith.negf %799 : vector<8x128xf32>
    %801 = math.exp %800 : vector<8x128xf32>
    %cst_204 = arith.constant 1.000000e+00 : f32
    %802 = vector.broadcast %cst_204 : f32 to vector<8x128xf32>
    %803 = arith.addf %802, %801 : vector<8x128xf32>
    %804 = arith.divf %802, %803 : vector<8x128xf32>
    %805 = arith.mulf %796, %776 : vector<8x128xf32>
    %806 = arith.mulf %790, %798 : vector<8x128xf32>
    %807 = arith.addf %805, %806 : vector<8x128xf32>
    %808 = math.tanh %807 : vector<8x128xf32>
    %809 = arith.mulf %804, %808 : vector<8x128xf32>
    %c0_205 = arith.constant 0 : index
    %c1024 = arith.constant 1024 : index
    %810 = vector.load %arg9[%c0_205, %c1024] : memref<8x2816xf32, #tpu.memory_space<vmem>>, vector<8x128xf32>
    tpu.vector_store %arg9[%c0_205, %c1024], %809 {strides = array<i32>} : memref<8x2816xf32, #tpu.memory_space<vmem>>, vector<8x128xf32>,
    %c9_206 = arith.constant 9 : index
    %c0_207 = arith.constant 0 : index
    %c0_208 = arith.constant 0 : index
    %811 = vector.load %arg8[%c9_206, %c0_207, %c0_208] : memref<22x8x512xf32, #tpu.memory_space<vmem>>, vector<1x8x512xf32>
    %812 = vector.shape_cast %811 : vector<1x8x512xf32> to vector<8x512xf32>
    %c0_209 = arith.constant 0 : index
    %c0_210 = arith.constant 0 : index
    %813 = vector.load %arg3[%c0_209, %c0_210] : memref<128x512xf32, #tpu.memory_space<vmem>>, vector<128x512xf32>
    %cst_211 = arith.constant dense<0.000000e+00> : vector<8x512xf32>
    %814 = tpu.matmul %809, %813, %cst_211 {dimension_numbers = #tpu.dot_dimension_numbers<[1], [0], [0], [1], [0, 0, 1, 1], [], []>} : vector<8x128xf32>, vector<128x512xf32>, vector<8x512xf32> -> vector<8x512xf32>
    %815 = arith.addf %812, %814 : vector<8x512xf32>
    %816 = vector.extract_strided_slice %815 {offsets = [0, 0], sizes = [8, 128], strides = [1, 1]} : vector<8x512xf32> to vector<8x128xf32>
    %817 = arith.negf %816 : vector<8x128xf32>
    %818 = math.exp %817 : vector<8x128xf32>
    %cst_212 = arith.constant 1.000000e+00 : f32
    %819 = vector.broadcast %cst_212 : f32 to vector<8x128xf32>
    %820 = arith.addf %819, %818 : vector<8x128xf32>
    %821 = arith.divf %819, %820 : vector<8x128xf32>
    %822 = vector.extract_strided_slice %815 {offsets = [0, 128], sizes = [8, 128], strides = [1, 1]} : vector<8x512xf32> to vector<8x128xf32>
    %823 = arith.negf %822 : vector<8x128xf32>
    %824 = math.exp %823 : vector<8x128xf32>
    %cst_213 = arith.constant 1.000000e+00 : f32
    %825 = vector.broadcast %cst_213 : f32 to vector<8x128xf32>
    %826 = arith.addf %825, %824 : vector<8x128xf32>
    %827 = arith.divf %825, %826 : vector<8x128xf32>
    %828 = vector.extract_strided_slice %815 {offsets = [0, 256], sizes = [8, 128], strides = [1, 1]} : vector<8x512xf32> to vector<8x128xf32>
    %829 = math.tanh %828 : vector<8x128xf32>
    %830 = vector.extract_strided_slice %815 {offsets = [0, 384], sizes = [8, 128], strides = [1, 1]} : vector<8x512xf32> to vector<8x128xf32>
    %831 = arith.negf %830 : vector<8x128xf32>
    %832 = math.exp %831 : vector<8x128xf32>
    %cst_214 = arith.constant 1.000000e+00 : f32
    %833 = vector.broadcast %cst_214 : f32 to vector<8x128xf32>
    %834 = arith.addf %833, %832 : vector<8x128xf32>
    %835 = arith.divf %833, %834 : vector<8x128xf32>
    %836 = arith.mulf %827, %807 : vector<8x128xf32>
    %837 = arith.mulf %821, %829 : vector<8x128xf32>
    %838 = arith.addf %836, %837 : vector<8x128xf32>
    %839 = math.tanh %838 : vector<8x128xf32>
    %840 = arith.mulf %835, %839 : vector<8x128xf32>
    %c0_215 = arith.constant 0 : index
    %c1152 = arith.constant 1152 : index
    %841 = vector.load %arg9[%c0_215, %c1152] : memref<8x2816xf32, #tpu.memory_space<vmem>>, vector<8x128xf32>
    tpu.vector_store %arg9[%c0_215, %c1152], %840 {strides = array<i32>} : memref<8x2816xf32, #tpu.memory_space<vmem>>, vector<8x128xf32>,
    %c10_216 = arith.constant 10 : index
    %c0_217 = arith.constant 0 : index
    %c0_218 = arith.constant 0 : index
    %842 = vector.load %arg8[%c10_216, %c0_217, %c0_218] : memref<22x8x512xf32, #tpu.memory_space<vmem>>, vector<1x8x512xf32>
    %843 = vector.shape_cast %842 : vector<1x8x512xf32> to vector<8x512xf32>
    %c0_219 = arith.constant 0 : index
    %c0_220 = arith.constant 0 : index
    %844 = vector.load %arg3[%c0_219, %c0_220] : memref<128x512xf32, #tpu.memory_space<vmem>>, vector<128x512xf32>
    %cst_221 = arith.constant dense<0.000000e+00> : vector<8x512xf32>
    %845 = tpu.matmul %840, %844, %cst_221 {dimension_numbers = #tpu.dot_dimension_numbers<[1], [0], [0], [1], [0, 0, 1, 1], [], []>} : vector<8x128xf32>, vector<128x512xf32>, vector<8x512xf32> -> vector<8x512xf32>
    %846 = arith.addf %843, %845 : vector<8x512xf32>
    %847 = vector.extract_strided_slice %846 {offsets = [0, 0], sizes = [8, 128], strides = [1, 1]} : vector<8x512xf32> to vector<8x128xf32>
    %848 = arith.negf %847 : vector<8x128xf32>
    %849 = math.exp %848 : vector<8x128xf32>
    %cst_222 = arith.constant 1.000000e+00 : f32
    %850 = vector.broadcast %cst_222 : f32 to vector<8x128xf32>
    %851 = arith.addf %850, %849 : vector<8x128xf32>
    %852 = arith.divf %850, %851 : vector<8x128xf32>
    %853 = vector.extract_strided_slice %846 {offsets = [0, 128], sizes = [8, 128], strides = [1, 1]} : vector<8x512xf32> to vector<8x128xf32>
    %854 = arith.negf %853 : vector<8x128xf32>
    %855 = math.exp %854 : vector<8x128xf32>
    %cst_223 = arith.constant 1.000000e+00 : f32
    %856 = vector.broadcast %cst_223 : f32 to vector<8x128xf32>
    %857 = arith.addf %856, %855 : vector<8x128xf32>
    %858 = arith.divf %856, %857 : vector<8x128xf32>
    %859 = vector.extract_strided_slice %846 {offsets = [0, 256], sizes = [8, 128], strides = [1, 1]} : vector<8x512xf32> to vector<8x128xf32>
    %860 = math.tanh %859 : vector<8x128xf32>
    %861 = vector.extract_strided_slice %846 {offsets = [0, 384], sizes = [8, 128], strides = [1, 1]} : vector<8x512xf32> to vector<8x128xf32>
    %862 = arith.negf %861 : vector<8x128xf32>
    %863 = math.exp %862 : vector<8x128xf32>
    %cst_224 = arith.constant 1.000000e+00 : f32
    %864 = vector.broadcast %cst_224 : f32 to vector<8x128xf32>
    %865 = arith.addf %864, %863 : vector<8x128xf32>
    %866 = arith.divf %864, %865 : vector<8x128xf32>
    %867 = arith.mulf %858, %838 : vector<8x128xf32>
    %868 = arith.mulf %852, %860 : vector<8x128xf32>
    %869 = arith.addf %867, %868 : vector<8x128xf32>
    %870 = math.tanh %869 : vector<8x128xf32>
    %871 = arith.mulf %866, %870 : vector<8x128xf32>
    %c0_225 = arith.constant 0 : index
    %c1280 = arith.constant 1280 : index
    %872 = vector.load %arg9[%c0_225, %c1280] : memref<8x2816xf32, #tpu.memory_space<vmem>>, vector<8x128xf32>
    tpu.vector_store %arg9[%c0_225, %c1280], %871 {strides = array<i32>} : memref<8x2816xf32, #tpu.memory_space<vmem>>, vector<8x128xf32>,
    %c11_226 = arith.constant 11 : index
    %c0_227 = arith.constant 0 : index
    %c0_228 = arith.constant 0 : index
    %873 = vector.load %arg8[%c11_226, %c0_227, %c0_228] : memref<22x8x512xf32, #tpu.memory_space<vmem>>, vector<1x8x512xf32>
    %874 = vector.shape_cast %873 : vector<1x8x512xf32> to vector<8x512xf32>
    %c0_229 = arith.constant 0 : index
    %c0_230 = arith.constant 0 : index
    %875 = vector.load %arg3[%c0_229, %c0_230] : memref<128x512xf32, #tpu.memory_space<vmem>>, vector<128x512xf32>
    %cst_231 = arith.constant dense<0.000000e+00> : vector<8x512xf32>
    %876 = tpu.matmul %871, %875, %cst_231 {dimension_numbers = #tpu.dot_dimension_numbers<[1], [0], [0], [1], [0, 0, 1, 1], [], []>} : vector<8x128xf32>, vector<128x512xf32>, vector<8x512xf32> -> vector<8x512xf32>
    %877 = arith.addf %874, %876 : vector<8x512xf32>
    %878 = vector.extract_strided_slice %877 {offsets = [0, 0], sizes = [8, 128], strides = [1, 1]} : vector<8x512xf32> to vector<8x128xf32>
    %879 = arith.negf %878 : vector<8x128xf32>
    %880 = math.exp %879 : vector<8x128xf32>
    %cst_232 = arith.constant 1.000000e+00 : f32
    %881 = vector.broadcast %cst_232 : f32 to vector<8x128xf32>
    %882 = arith.addf %881, %880 : vector<8x128xf32>
    %883 = arith.divf %881, %882 : vector<8x128xf32>
    %884 = vector.extract_strided_slice %877 {offsets = [0, 128], sizes = [8, 128], strides = [1, 1]} : vector<8x512xf32> to vector<8x128xf32>
    %885 = arith.negf %884 : vector<8x128xf32>
    %886 = math.exp %885 : vector<8x128xf32>
    %cst_233 = arith.constant 1.000000e+00 : f32
    %887 = vector.broadcast %cst_233 : f32 to vector<8x128xf32>
    %888 = arith.addf %887, %886 : vector<8x128xf32>
    %889 = arith.divf %887, %888 : vector<8x128xf32>
    %890 = vector.extract_strided_slice %877 {offsets = [0, 256], sizes = [8, 128], strides = [1, 1]} : vector<8x512xf32> to vector<8x128xf32>
    %891 = math.tanh %890 : vector<8x128xf32>
    %892 = vector.extract_strided_slice %877 {offsets = [0, 384], sizes = [8, 128], strides = [1, 1]} : vector<8x512xf32> to vector<8x128xf32>
    %893 = arith.negf %892 : vector<8x128xf32>
    %894 = math.exp %893 : vector<8x128xf32>
    %cst_234 = arith.constant 1.000000e+00 : f32
    %895 = vector.broadcast %cst_234 : f32 to vector<8x128xf32>
    %896 = arith.addf %895, %894 : vector<8x128xf32>
    %897 = arith.divf %895, %896 : vector<8x128xf32>
    %898 = arith.mulf %889, %869 : vector<8x128xf32>
    %899 = arith.mulf %883, %891 : vector<8x128xf32>
    %900 = arith.addf %898, %899 : vector<8x128xf32>
    %901 = math.tanh %900 : vector<8x128xf32>
    %902 = arith.mulf %897, %901 : vector<8x128xf32>
    %c0_235 = arith.constant 0 : index
    %c1408 = arith.constant 1408 : index
    %903 = vector.load %arg9[%c0_235, %c1408] : memref<8x2816xf32, #tpu.memory_space<vmem>>, vector<8x128xf32>
    tpu.vector_store %arg9[%c0_235, %c1408], %902 {strides = array<i32>} : memref<8x2816xf32, #tpu.memory_space<vmem>>, vector<8x128xf32>,
    %c12_236 = arith.constant 12 : index
    %c0_237 = arith.constant 0 : index
    %c0_238 = arith.constant 0 : index
    %904 = vector.load %arg8[%c12_236, %c0_237, %c0_238] : memref<22x8x512xf32, #tpu.memory_space<vmem>>, vector<1x8x512xf32>
    %905 = vector.shape_cast %904 : vector<1x8x512xf32> to vector<8x512xf32>
    %c0_239 = arith.constant 0 : index
    %c0_240 = arith.constant 0 : index
    %906 = vector.load %arg3[%c0_239, %c0_240] : memref<128x512xf32, #tpu.memory_space<vmem>>, vector<128x512xf32>
    %cst_241 = arith.constant dense<0.000000e+00> : vector<8x512xf32>
    %907 = tpu.matmul %902, %906, %cst_241 {dimension_numbers = #tpu.dot_dimension_numbers<[1], [0], [0], [1], [0, 0, 1, 1], [], []>} : vector<8x128xf32>, vector<128x512xf32>, vector<8x512xf32> -> vector<8x512xf32>
    %908 = arith.addf %905, %907 : vector<8x512xf32>
    %909 = vector.extract_strided_slice %908 {offsets = [0, 0], sizes = [8, 128], strides = [1, 1]} : vector<8x512xf32> to vector<8x128xf32>
    %910 = arith.negf %909 : vector<8x128xf32>
    %911 = math.exp %910 : vector<8x128xf32>
    %cst_242 = arith.constant 1.000000e+00 : f32
    %912 = vector.broadcast %cst_242 : f32 to vector<8x128xf32>
    %913 = arith.addf %912, %911 : vector<8x128xf32>
    %914 = arith.divf %912, %913 : vector<8x128xf32>
    %915 = vector.extract_strided_slice %908 {offsets = [0, 128], sizes = [8, 128], strides = [1, 1]} : vector<8x512xf32> to vector<8x128xf32>
    %916 = arith.negf %915 : vector<8x128xf32>
    %917 = math.exp %916 : vector<8x128xf32>
    %cst_243 = arith.constant 1.000000e+00 : f32
    %918 = vector.broadcast %cst_243 : f32 to vector<8x128xf32>
    %919 = arith.addf %918, %917 : vector<8x128xf32>
    %920 = arith.divf %918, %919 : vector<8x128xf32>
    %921 = vector.extract_strided_slice %908 {offsets = [0, 256], sizes = [8, 128], strides = [1, 1]} : vector<8x512xf32> to vector<8x128xf32>
    %922 = math.tanh %921 : vector<8x128xf32>
    %923 = vector.extract_strided_slice %908 {offsets = [0, 384], sizes = [8, 128], strides = [1, 1]} : vector<8x512xf32> to vector<8x128xf32>
    %924 = arith.negf %923 : vector<8x128xf32>
    %925 = math.exp %924 : vector<8x128xf32>
    %cst_244 = arith.constant 1.000000e+00 : f32
    %926 = vector.broadcast %cst_244 : f32 to vector<8x128xf32>
    %927 = arith.addf %926, %925 : vector<8x128xf32>
    %928 = arith.divf %926, %927 : vector<8x128xf32>
    %929 = arith.mulf %920, %900 : vector<8x128xf32>
    %930 = arith.mulf %914, %922 : vector<8x128xf32>
    %931 = arith.addf %929, %930 : vector<8x128xf32>
    %932 = math.tanh %931 : vector<8x128xf32>
    %933 = arith.mulf %928, %932 : vector<8x128xf32>
    %c0_245 = arith.constant 0 : index
    %c1536 = arith.constant 1536 : index
    %934 = vector.load %arg9[%c0_245, %c1536] : memref<8x2816xf32, #tpu.memory_space<vmem>>, vector<8x128xf32>
    tpu.vector_store %arg9[%c0_245, %c1536], %933 {strides = array<i32>} : memref<8x2816xf32, #tpu.memory_space<vmem>>, vector<8x128xf32>,
    %c13_246 = arith.constant 13 : index
    %c0_247 = arith.constant 0 : index
    %c0_248 = arith.constant 0 : index
    %935 = vector.load %arg8[%c13_246, %c0_247, %c0_248] : memref<22x8x512xf32, #tpu.memory_space<vmem>>, vector<1x8x512xf32>
    %936 = vector.shape_cast %935 : vector<1x8x512xf32> to vector<8x512xf32>
    %c0_249 = arith.constant 0 : index
    %c0_250 = arith.constant 0 : index
    %937 = vector.load %arg3[%c0_249, %c0_250] : memref<128x512xf32, #tpu.memory_space<vmem>>, vector<128x512xf32>
    %cst_251 = arith.constant dense<0.000000e+00> : vector<8x512xf32>
    %938 = tpu.matmul %933, %937, %cst_251 {dimension_numbers = #tpu.dot_dimension_numbers<[1], [0], [0], [1], [0, 0, 1, 1], [], []>} : vector<8x128xf32>, vector<128x512xf32>, vector<8x512xf32> -> vector<8x512xf32>
    %939 = arith.addf %936, %938 : vector<8x512xf32>
    %940 = vector.extract_strided_slice %939 {offsets = [0, 0], sizes = [8, 128], strides = [1, 1]} : vector<8x512xf32> to vector<8x128xf32>
    %941 = arith.negf %940 : vector<8x128xf32>
    %942 = math.exp %941 : vector<8x128xf32>
    %cst_252 = arith.constant 1.000000e+00 : f32
    %943 = vector.broadcast %cst_252 : f32 to vector<8x128xf32>
    %944 = arith.addf %943, %942 : vector<8x128xf32>
    %945 = arith.divf %943, %944 : vector<8x128xf32>
    %946 = vector.extract_strided_slice %939 {offsets = [0, 128], sizes = [8, 128], strides = [1, 1]} : vector<8x512xf32> to vector<8x128xf32>
    %947 = arith.negf %946 : vector<8x128xf32>
    %948 = math.exp %947 : vector<8x128xf32>
    %cst_253 = arith.constant 1.000000e+00 : f32
    %949 = vector.broadcast %cst_253 : f32 to vector<8x128xf32>
    %950 = arith.addf %949, %948 : vector<8x128xf32>
    %951 = arith.divf %949, %950 : vector<8x128xf32>
    %952 = vector.extract_strided_slice %939 {offsets = [0, 256], sizes = [8, 128], strides = [1, 1]} : vector<8x512xf32> to vector<8x128xf32>
    %953 = math.tanh %952 : vector<8x128xf32>
    %954 = vector.extract_strided_slice %939 {offsets = [0, 384], sizes = [8, 128], strides = [1, 1]} : vector<8x512xf32> to vector<8x128xf32>
    %955 = arith.negf %954 : vector<8x128xf32>
    %956 = math.exp %955 : vector<8x128xf32>
    %cst_254 = arith.constant 1.000000e+00 : f32
    %957 = vector.broadcast %cst_254 : f32 to vector<8x128xf32>
    %958 = arith.addf %957, %956 : vector<8x128xf32>
    %959 = arith.divf %957, %958 : vector<8x128xf32>
    %960 = arith.mulf %951, %931 : vector<8x128xf32>
    %961 = arith.mulf %945, %953 : vector<8x128xf32>
    %962 = arith.addf %960, %961 : vector<8x128xf32>
    %963 = math.tanh %962 : vector<8x128xf32>
    %964 = arith.mulf %959, %963 : vector<8x128xf32>
    %c0_255 = arith.constant 0 : index
    %c1664 = arith.constant 1664 : index
    %965 = vector.load %arg9[%c0_255, %c1664] : memref<8x2816xf32, #tpu.memory_space<vmem>>, vector<8x128xf32>
    tpu.vector_store %arg9[%c0_255, %c1664], %964 {strides = array<i32>} : memref<8x2816xf32, #tpu.memory_space<vmem>>, vector<8x128xf32>,
    %c14_256 = arith.constant 14 : index
    %c0_257 = arith.constant 0 : index
    %c0_258 = arith.constant 0 : index
    %966 = vector.load %arg8[%c14_256, %c0_257, %c0_258] : memref<22x8x512xf32, #tpu.memory_space<vmem>>, vector<1x8x512xf32>
    %967 = vector.shape_cast %966 : vector<1x8x512xf32> to vector<8x512xf32>
    %c0_259 = arith.constant 0 : index
    %c0_260 = arith.constant 0 : index
    %968 = vector.load %arg3[%c0_259, %c0_260] : memref<128x512xf32, #tpu.memory_space<vmem>>, vector<128x512xf32>
    %cst_261 = arith.constant dense<0.000000e+00> : vector<8x512xf32>
    %969 = tpu.matmul %964, %968, %cst_261 {dimension_numbers = #tpu.dot_dimension_numbers<[1], [0], [0], [1], [0, 0, 1, 1], [], []>} : vector<8x128xf32>, vector<128x512xf32>, vector<8x512xf32> -> vector<8x512xf32>
    %970 = arith.addf %967, %969 : vector<8x512xf32>
    %971 = vector.extract_strided_slice %970 {offsets = [0, 0], sizes = [8, 128], strides = [1, 1]} : vector<8x512xf32> to vector<8x128xf32>
    %972 = arith.negf %971 : vector<8x128xf32>
    %973 = math.exp %972 : vector<8x128xf32>
    %cst_262 = arith.constant 1.000000e+00 : f32
    %974 = vector.broadcast %cst_262 : f32 to vector<8x128xf32>
    %975 = arith.addf %974, %973 : vector<8x128xf32>
    %976 = arith.divf %974, %975 : vector<8x128xf32>
    %977 = vector.extract_strided_slice %970 {offsets = [0, 128], sizes = [8, 128], strides = [1, 1]} : vector<8x512xf32> to vector<8x128xf32>
    %978 = arith.negf %977 : vector<8x128xf32>
    %979 = math.exp %978 : vector<8x128xf32>
    %cst_263 = arith.constant 1.000000e+00 : f32
    %980 = vector.broadcast %cst_263 : f32 to vector<8x128xf32>
    %981 = arith.addf %980, %979 : vector<8x128xf32>
    %982 = arith.divf %980, %981 : vector<8x128xf32>
    %983 = vector.extract_strided_slice %970 {offsets = [0, 256], sizes = [8, 128], strides = [1, 1]} : vector<8x512xf32> to vector<8x128xf32>
    %984 = math.tanh %983 : vector<8x128xf32>
    %985 = vector.extract_strided_slice %970 {offsets = [0, 384], sizes = [8, 128], strides = [1, 1]} : vector<8x512xf32> to vector<8x128xf32>
    %986 = arith.negf %985 : vector<8x128xf32>
    %987 = math.exp %986 : vector<8x128xf32>
    %cst_264 = arith.constant 1.000000e+00 : f32
    %988 = vector.broadcast %cst_264 : f32 to vector<8x128xf32>
    %989 = arith.addf %988, %987 : vector<8x128xf32>
    %990 = arith.divf %988, %989 : vector<8x128xf32>
    %991 = arith.mulf %982, %962 : vector<8x128xf32>
    %992 = arith.mulf %976, %984 : vector<8x128xf32>
    %993 = arith.addf %991, %992 : vector<8x128xf32>
    %994 = math.tanh %993 : vector<8x128xf32>
    %995 = arith.mulf %990, %994 : vector<8x128xf32>
    %c0_265 = arith.constant 0 : index
    %c1792 = arith.constant 1792 : index
    %996 = vector.load %arg9[%c0_265, %c1792] : memref<8x2816xf32, #tpu.memory_space<vmem>>, vector<8x128xf32>
    tpu.vector_store %arg9[%c0_265, %c1792], %995 {strides = array<i32>} : memref<8x2816xf32, #tpu.memory_space<vmem>>, vector<8x128xf32>,
    %c15_266 = arith.constant 15 : index
    %c0_267 = arith.constant 0 : index
    %c0_268 = arith.constant 0 : index
    %997 = vector.load %arg8[%c15_266, %c0_267, %c0_268] : memref<22x8x512xf32, #tpu.memory_space<vmem>>, vector<1x8x512xf32>
    %998 = vector.shape_cast %997 : vector<1x8x512xf32> to vector<8x512xf32>
    %c0_269 = arith.constant 0 : index
    %c0_270 = arith.constant 0 : index
    %999 = vector.load %arg3[%c0_269, %c0_270] : memref<128x512xf32, #tpu.memory_space<vmem>>, vector<128x512xf32>
    %cst_271 = arith.constant dense<0.000000e+00> : vector<8x512xf32>
    %1000 = tpu.matmul %995, %999, %cst_271 {dimension_numbers = #tpu.dot_dimension_numbers<[1], [0], [0], [1], [0, 0, 1, 1], [], []>} : vector<8x128xf32>, vector<128x512xf32>, vector<8x512xf32> -> vector<8x512xf32>
    %1001 = arith.addf %998, %1000 : vector<8x512xf32>
    %1002 = vector.extract_strided_slice %1001 {offsets = [0, 0], sizes = [8, 128], strides = [1, 1]} : vector<8x512xf32> to vector<8x128xf32>
    %1003 = arith.negf %1002 : vector<8x128xf32>
    %1004 = math.exp %1003 : vector<8x128xf32>
    %cst_272 = arith.constant 1.000000e+00 : f32
    %1005 = vector.broadcast %cst_272 : f32 to vector<8x128xf32>
    %1006 = arith.addf %1005, %1004 : vector<8x128xf32>
    %1007 = arith.divf %1005, %1006 : vector<8x128xf32>
    %1008 = vector.extract_strided_slice %1001 {offsets = [0, 128], sizes = [8, 128], strides = [1, 1]} : vector<8x512xf32> to vector<8x128xf32>
    %1009 = arith.negf %1008 : vector<8x128xf32>
    %1010 = math.exp %1009 : vector<8x128xf32>
    %cst_273 = arith.constant 1.000000e+00 : f32
    %1011 = vector.broadcast %cst_273 : f32 to vector<8x128xf32>
    %1012 = arith.addf %1011, %1010 : vector<8x128xf32>
    %1013 = arith.divf %1011, %1012 : vector<8x128xf32>
    %1014 = vector.extract_strided_slice %1001 {offsets = [0, 256], sizes = [8, 128], strides = [1, 1]} : vector<8x512xf32> to vector<8x128xf32>
    %1015 = math.tanh %1014 : vector<8x128xf32>
    %1016 = vector.extract_strided_slice %1001 {offsets = [0, 384], sizes = [8, 128], strides = [1, 1]} : vector<8x512xf32> to vector<8x128xf32>
    %1017 = arith.negf %1016 : vector<8x128xf32>
    %1018 = math.exp %1017 : vector<8x128xf32>
    %cst_274 = arith.constant 1.000000e+00 : f32
    %1019 = vector.broadcast %cst_274 : f32 to vector<8x128xf32>
    %1020 = arith.addf %1019, %1018 : vector<8x128xf32>
    %1021 = arith.divf %1019, %1020 : vector<8x128xf32>
    %1022 = arith.mulf %1013, %993 : vector<8x128xf32>
    %1023 = arith.mulf %1007, %1015 : vector<8x128xf32>
    %1024 = arith.addf %1022, %1023 : vector<8x128xf32>
    %1025 = math.tanh %1024 : vector<8x128xf32>
    %1026 = arith.mulf %1021, %1025 : vector<8x128xf32>
    %c0_275 = arith.constant 0 : index
    %c1920 = arith.constant 1920 : index
    %1027 = vector.load %arg9[%c0_275, %c1920] : memref<8x2816xf32, #tpu.memory_space<vmem>>, vector<8x128xf32>
    tpu.vector_store %arg9[%c0_275, %c1920], %1026 {strides = array<i32>} : memref<8x2816xf32, #tpu.memory_space<vmem>>, vector<8x128xf32>,
    %c16_276 = arith.constant 16 : index
    %c0_277 = arith.constant 0 : index
    %c0_278 = arith.constant 0 : index
    %1028 = vector.load %arg8[%c16_276, %c0_277, %c0_278] : memref<22x8x512xf32, #tpu.memory_space<vmem>>, vector<1x8x512xf32>
    %1029 = vector.shape_cast %1028 : vector<1x8x512xf32> to vector<8x512xf32>
    %c0_279 = arith.constant 0 : index
    %c0_280 = arith.constant 0 : index
    %1030 = vector.load %arg3[%c0_279, %c0_280] : memref<128x512xf32, #tpu.memory_space<vmem>>, vector<128x512xf32>
    %cst_281 = arith.constant dense<0.000000e+00> : vector<8x512xf32>
    %1031 = tpu.matmul %1026, %1030, %cst_281 {dimension_numbers = #tpu.dot_dimension_numbers<[1], [0], [0], [1], [0, 0, 1, 1], [], []>} : vector<8x128xf32>, vector<128x512xf32>, vector<8x512xf32> -> vector<8x512xf32>
    %1032 = arith.addf %1029, %1031 : vector<8x512xf32>
    %1033 = vector.extract_strided_slice %1032 {offsets = [0, 0], sizes = [8, 128], strides = [1, 1]} : vector<8x512xf32> to vector<8x128xf32>
    %1034 = arith.negf %1033 : vector<8x128xf32>
    %1035 = math.exp %1034 : vector<8x128xf32>
    %cst_282 = arith.constant 1.000000e+00 : f32
    %1036 = vector.broadcast %cst_282 : f32 to vector<8x128xf32>
    %1037 = arith.addf %1036, %1035 : vector<8x128xf32>
    %1038 = arith.divf %1036, %1037 : vector<8x128xf32>
    %1039 = vector.extract_strided_slice %1032 {offsets = [0, 128], sizes = [8, 128], strides = [1, 1]} : vector<8x512xf32> to vector<8x128xf32>
    %1040 = arith.negf %1039 : vector<8x128xf32>
    %1041 = math.exp %1040 : vector<8x128xf32>
    %cst_283 = arith.constant 1.000000e+00 : f32
    %1042 = vector.broadcast %cst_283 : f32 to vector<8x128xf32>
    %1043 = arith.addf %1042, %1041 : vector<8x128xf32>
    %1044 = arith.divf %1042, %1043 : vector<8x128xf32>
    %1045 = vector.extract_strided_slice %1032 {offsets = [0, 256], sizes = [8, 128], strides = [1, 1]} : vector<8x512xf32> to vector<8x128xf32>
    %1046 = math.tanh %1045 : vector<8x128xf32>
    %1047 = vector.extract_strided_slice %1032 {offsets = [0, 384], sizes = [8, 128], strides = [1, 1]} : vector<8x512xf32> to vector<8x128xf32>
    %1048 = arith.negf %1047 : vector<8x128xf32>
    %1049 = math.exp %1048 : vector<8x128xf32>
    %cst_284 = arith.constant 1.000000e+00 : f32
    %1050 = vector.broadcast %cst_284 : f32 to vector<8x128xf32>
    %1051 = arith.addf %1050, %1049 : vector<8x128xf32>
    %1052 = arith.divf %1050, %1051 : vector<8x128xf32>
    %1053 = arith.mulf %1044, %1024 : vector<8x128xf32>
    %1054 = arith.mulf %1038, %1046 : vector<8x128xf32>
    %1055 = arith.addf %1053, %1054 : vector<8x128xf32>
    %1056 = math.tanh %1055 : vector<8x128xf32>
    %1057 = arith.mulf %1052, %1056 : vector<8x128xf32>
    %c0_285 = arith.constant 0 : index
    %c2048 = arith.constant 2048 : index
    %1058 = vector.load %arg9[%c0_285, %c2048] : memref<8x2816xf32, #tpu.memory_space<vmem>>, vector<8x128xf32>
    tpu.vector_store %arg9[%c0_285, %c2048], %1057 {strides = array<i32>} : memref<8x2816xf32, #tpu.memory_space<vmem>>, vector<8x128xf32>,
    %c17_286 = arith.constant 17 : index
    %c0_287 = arith.constant 0 : index
    %c0_288 = arith.constant 0 : index
    %1059 = vector.load %arg8[%c17_286, %c0_287, %c0_288] : memref<22x8x512xf32, #tpu.memory_space<vmem>>, vector<1x8x512xf32>
    %1060 = vector.shape_cast %1059 : vector<1x8x512xf32> to vector<8x512xf32>
    %c0_289 = arith.constant 0 : index
    %c0_290 = arith.constant 0 : index
    %1061 = vector.load %arg3[%c0_289, %c0_290] : memref<128x512xf32, #tpu.memory_space<vmem>>, vector<128x512xf32>
    %cst_291 = arith.constant dense<0.000000e+00> : vector<8x512xf32>
    %1062 = tpu.matmul %1057, %1061, %cst_291 {dimension_numbers = #tpu.dot_dimension_numbers<[1], [0], [0], [1], [0, 0, 1, 1], [], []>} : vector<8x128xf32>, vector<128x512xf32>, vector<8x512xf32> -> vector<8x512xf32>
    %1063 = arith.addf %1060, %1062 : vector<8x512xf32>
    %1064 = vector.extract_strided_slice %1063 {offsets = [0, 0], sizes = [8, 128], strides = [1, 1]} : vector<8x512xf32> to vector<8x128xf32>
    %1065 = arith.negf %1064 : vector<8x128xf32>
    %1066 = math.exp %1065 : vector<8x128xf32>
    %cst_292 = arith.constant 1.000000e+00 : f32
    %1067 = vector.broadcast %cst_292 : f32 to vector<8x128xf32>
    %1068 = arith.addf %1067, %1066 : vector<8x128xf32>
    %1069 = arith.divf %1067, %1068 : vector<8x128xf32>
    %1070 = vector.extract_strided_slice %1063 {offsets = [0, 128], sizes = [8, 128], strides = [1, 1]} : vector<8x512xf32> to vector<8x128xf32>
    %1071 = arith.negf %1070 : vector<8x128xf32>
    %1072 = math.exp %1071 : vector<8x128xf32>
    %cst_293 = arith.constant 1.000000e+00 : f32
    %1073 = vector.broadcast %cst_293 : f32 to vector<8x128xf32>
    %1074 = arith.addf %1073, %1072 : vector<8x128xf32>
    %1075 = arith.divf %1073, %1074 : vector<8x128xf32>
    %1076 = vector.extract_strided_slice %1063 {offsets = [0, 256], sizes = [8, 128], strides = [1, 1]} : vector<8x512xf32> to vector<8x128xf32>
    %1077 = math.tanh %1076 : vector<8x128xf32>
    %1078 = vector.extract_strided_slice %1063 {offsets = [0, 384], sizes = [8, 128], strides = [1, 1]} : vector<8x512xf32> to vector<8x128xf32>
    %1079 = arith.negf %1078 : vector<8x128xf32>
    %1080 = math.exp %1079 : vector<8x128xf32>
    %cst_294 = arith.constant 1.000000e+00 : f32
    %1081 = vector.broadcast %cst_294 : f32 to vector<8x128xf32>
    %1082 = arith.addf %1081, %1080 : vector<8x128xf32>
    %1083 = arith.divf %1081, %1082 : vector<8x128xf32>
    %1084 = arith.mulf %1075, %1055 : vector<8x128xf32>
    %1085 = arith.mulf %1069, %1077 : vector<8x128xf32>
    %1086 = arith.addf %1084, %1085 : vector<8x128xf32>
    %1087 = math.tanh %1086 : vector<8x128xf32>
    %1088 = arith.mulf %1083, %1087 : vector<8x128xf32>
    %c0_295 = arith.constant 0 : index
    %c2176 = arith.constant 2176 : index
    %1089 = vector.load %arg9[%c0_295, %c2176] : memref<8x2816xf32, #tpu.memory_space<vmem>>, vector<8x128xf32>
    tpu.vector_store %arg9[%c0_295, %c2176], %1088 {strides = array<i32>} : memref<8x2816xf32, #tpu.memory_space<vmem>>, vector<8x128xf32>,
    %c18_296 = arith.constant 18 : index
    %c0_297 = arith.constant 0 : index
    %c0_298 = arith.constant 0 : index
    %1090 = vector.load %arg8[%c18_296, %c0_297, %c0_298] : memref<22x8x512xf32, #tpu.memory_space<vmem>>, vector<1x8x512xf32>
    %1091 = vector.shape_cast %1090 : vector<1x8x512xf32> to vector<8x512xf32>
    %c0_299 = arith.constant 0 : index
    %c0_300 = arith.constant 0 : index
    %1092 = vector.load %arg3[%c0_299, %c0_300] : memref<128x512xf32, #tpu.memory_space<vmem>>, vector<128x512xf32>
    %cst_301 = arith.constant dense<0.000000e+00> : vector<8x512xf32>
    %1093 = tpu.matmul %1088, %1092, %cst_301 {dimension_numbers = #tpu.dot_dimension_numbers<[1], [0], [0], [1], [0, 0, 1, 1], [], []>} : vector<8x128xf32>, vector<128x512xf32>, vector<8x512xf32> -> vector<8x512xf32>
    %1094 = arith.addf %1091, %1093 : vector<8x512xf32>
    %1095 = vector.extract_strided_slice %1094 {offsets = [0, 0], sizes = [8, 128], strides = [1, 1]} : vector<8x512xf32> to vector<8x128xf32>
    %1096 = arith.negf %1095 : vector<8x128xf32>
    %1097 = math.exp %1096 : vector<8x128xf32>
    %cst_302 = arith.constant 1.000000e+00 : f32
    %1098 = vector.broadcast %cst_302 : f32 to vector<8x128xf32>
    %1099 = arith.addf %1098, %1097 : vector<8x128xf32>
    %1100 = arith.divf %1098, %1099 : vector<8x128xf32>
    %1101 = vector.extract_strided_slice %1094 {offsets = [0, 128], sizes = [8, 128], strides = [1, 1]} : vector<8x512xf32> to vector<8x128xf32>
    %1102 = arith.negf %1101 : vector<8x128xf32>
    %1103 = math.exp %1102 : vector<8x128xf32>
    %cst_303 = arith.constant 1.000000e+00 : f32
    %1104 = vector.broadcast %cst_303 : f32 to vector<8x128xf32>
    %1105 = arith.addf %1104, %1103 : vector<8x128xf32>
    %1106 = arith.divf %1104, %1105 : vector<8x128xf32>
    %1107 = vector.extract_strided_slice %1094 {offsets = [0, 256], sizes = [8, 128], strides = [1, 1]} : vector<8x512xf32> to vector<8x128xf32>
    %1108 = math.tanh %1107 : vector<8x128xf32>
    %1109 = vector.extract_strided_slice %1094 {offsets = [0, 384], sizes = [8, 128], strides = [1, 1]} : vector<8x512xf32> to vector<8x128xf32>
    %1110 = arith.negf %1109 : vector<8x128xf32>
    %1111 = math.exp %1110 : vector<8x128xf32>
    %cst_304 = arith.constant 1.000000e+00 : f32
    %1112 = vector.broadcast %cst_304 : f32 to vector<8x128xf32>
    %1113 = arith.addf %1112, %1111 : vector<8x128xf32>
    %1114 = arith.divf %1112, %1113 : vector<8x128xf32>
    %1115 = arith.mulf %1106, %1086 : vector<8x128xf32>
    %1116 = arith.mulf %1100, %1108 : vector<8x128xf32>
    %1117 = arith.addf %1115, %1116 : vector<8x128xf32>
    %1118 = math.tanh %1117 : vector<8x128xf32>
    %1119 = arith.mulf %1114, %1118 : vector<8x128xf32>
    %c0_305 = arith.constant 0 : index
    %c2304 = arith.constant 2304 : index
    %1120 = vector.load %arg9[%c0_305, %c2304] : memref<8x2816xf32, #tpu.memory_space<vmem>>, vector<8x128xf32>
    tpu.vector_store %arg9[%c0_305, %c2304], %1119 {strides = array<i32>} : memref<8x2816xf32, #tpu.memory_space<vmem>>, vector<8x128xf32>,
    %c19_306 = arith.constant 19 : index
    %c0_307 = arith.constant 0 : index
    %c0_308 = arith.constant 0 : index
    %1121 = vector.load %arg8[%c19_306, %c0_307, %c0_308] : memref<22x8x512xf32, #tpu.memory_space<vmem>>, vector<1x8x512xf32>
    %1122 = vector.shape_cast %1121 : vector<1x8x512xf32> to vector<8x512xf32>
    %c0_309 = arith.constant 0 : index
    %c0_310 = arith.constant 0 : index
    %1123 = vector.load %arg3[%c0_309, %c0_310] : memref<128x512xf32, #tpu.memory_space<vmem>>, vector<128x512xf32>
    %cst_311 = arith.constant dense<0.000000e+00> : vector<8x512xf32>
    %1124 = tpu.matmul %1119, %1123, %cst_311 {dimension_numbers = #tpu.dot_dimension_numbers<[1], [0], [0], [1], [0, 0, 1, 1], [], []>} : vector<8x128xf32>, vector<128x512xf32>, vector<8x512xf32> -> vector<8x512xf32>
    %1125 = arith.addf %1122, %1124 : vector<8x512xf32>
    %1126 = vector.extract_strided_slice %1125 {offsets = [0, 0], sizes = [8, 128], strides = [1, 1]} : vector<8x512xf32> to vector<8x128xf32>
    %1127 = arith.negf %1126 : vector<8x128xf32>
    %1128 = math.exp %1127 : vector<8x128xf32>
    %cst_312 = arith.constant 1.000000e+00 : f32
    %1129 = vector.broadcast %cst_312 : f32 to vector<8x128xf32>
    %1130 = arith.addf %1129, %1128 : vector<8x128xf32>
    %1131 = arith.divf %1129, %1130 : vector<8x128xf32>
    %1132 = vector.extract_strided_slice %1125 {offsets = [0, 128], sizes = [8, 128], strides = [1, 1]} : vector<8x512xf32> to vector<8x128xf32>
    %1133 = arith.negf %1132 : vector<8x128xf32>
    %1134 = math.exp %1133 : vector<8x128xf32>
    %cst_313 = arith.constant 1.000000e+00 : f32
    %1135 = vector.broadcast %cst_313 : f32 to vector<8x128xf32>
    %1136 = arith.addf %1135, %1134 : vector<8x128xf32>
    %1137 = arith.divf %1135, %1136 : vector<8x128xf32>
    %1138 = vector.extract_strided_slice %1125 {offsets = [0, 256], sizes = [8, 128], strides = [1, 1]} : vector<8x512xf32> to vector<8x128xf32>
    %1139 = math.tanh %1138 : vector<8x128xf32>
    %1140 = vector.extract_strided_slice %1125 {offsets = [0, 384], sizes = [8, 128], strides = [1, 1]} : vector<8x512xf32> to vector<8x128xf32>
    %1141 = arith.negf %1140 : vector<8x128xf32>
    %1142 = math.exp %1141 : vector<8x128xf32>
    %cst_314 = arith.constant 1.000000e+00 : f32
    %1143 = vector.broadcast %cst_314 : f32 to vector<8x128xf32>
    %1144 = arith.addf %1143, %1142 : vector<8x128xf32>
    %1145 = arith.divf %1143, %1144 : vector<8x128xf32>
    %1146 = arith.mulf %1137, %1117 : vector<8x128xf32>
    %1147 = arith.mulf %1131, %1139 : vector<8x128xf32>
    %1148 = arith.addf %1146, %1147 : vector<8x128xf32>
    %1149 = math.tanh %1148 : vector<8x128xf32>
    %1150 = arith.mulf %1145, %1149 : vector<8x128xf32>
    %c0_315 = arith.constant 0 : index
    %c2432 = arith.constant 2432 : index
    %1151 = vector.load %arg9[%c0_315, %c2432] : memref<8x2816xf32, #tpu.memory_space<vmem>>, vector<8x128xf32>
    tpu.vector_store %arg9[%c0_315, %c2432], %1150 {strides = array<i32>} : memref<8x2816xf32, #tpu.memory_space<vmem>>, vector<8x128xf32>,
    %c20_316 = arith.constant 20 : index
    %c0_317 = arith.constant 0 : index
    %c0_318 = arith.constant 0 : index
    %1152 = vector.load %arg8[%c20_316, %c0_317, %c0_318] : memref<22x8x512xf32, #tpu.memory_space<vmem>>, vector<1x8x512xf32>
    %1153 = vector.shape_cast %1152 : vector<1x8x512xf32> to vector<8x512xf32>
    %c0_319 = arith.constant 0 : index
    %c0_320 = arith.constant 0 : index
    %1154 = vector.load %arg3[%c0_319, %c0_320] : memref<128x512xf32, #tpu.memory_space<vmem>>, vector<128x512xf32>
    %cst_321 = arith.constant dense<0.000000e+00> : vector<8x512xf32>
    %1155 = tpu.matmul %1150, %1154, %cst_321 {dimension_numbers = #tpu.dot_dimension_numbers<[1], [0], [0], [1], [0, 0, 1, 1], [], []>} : vector<8x128xf32>, vector<128x512xf32>, vector<8x512xf32> -> vector<8x512xf32>
    %1156 = arith.addf %1153, %1155 : vector<8x512xf32>
    %1157 = vector.extract_strided_slice %1156 {offsets = [0, 0], sizes = [8, 128], strides = [1, 1]} : vector<8x512xf32> to vector<8x128xf32>
    %1158 = arith.negf %1157 : vector<8x128xf32>
    %1159 = math.exp %1158 : vector<8x128xf32>
    %cst_322 = arith.constant 1.000000e+00 : f32
    %1160 = vector.broadcast %cst_322 : f32 to vector<8x128xf32>
    %1161 = arith.addf %1160, %1159 : vector<8x128xf32>
    %1162 = arith.divf %1160, %1161 : vector<8x128xf32>
    %1163 = vector.extract_strided_slice %1156 {offsets = [0, 128], sizes = [8, 128], strides = [1, 1]} : vector<8x512xf32> to vector<8x128xf32>
    %1164 = arith.negf %1163 : vector<8x128xf32>
    %1165 = math.exp %1164 : vector<8x128xf32>
    %cst_323 = arith.constant 1.000000e+00 : f32
    %1166 = vector.broadcast %cst_323 : f32 to vector<8x128xf32>
    %1167 = arith.addf %1166, %1165 : vector<8x128xf32>
    %1168 = arith.divf %1166, %1167 : vector<8x128xf32>
    %1169 = vector.extract_strided_slice %1156 {offsets = [0, 256], sizes = [8, 128], strides = [1, 1]} : vector<8x512xf32> to vector<8x128xf32>
    %1170 = math.tanh %1169 : vector<8x128xf32>
    %1171 = vector.extract_strided_slice %1156 {offsets = [0, 384], sizes = [8, 128], strides = [1, 1]} : vector<8x512xf32> to vector<8x128xf32>
    %1172 = arith.negf %1171 : vector<8x128xf32>
    %1173 = math.exp %1172 : vector<8x128xf32>
    %cst_324 = arith.constant 1.000000e+00 : f32
    %1174 = vector.broadcast %cst_324 : f32 to vector<8x128xf32>
    %1175 = arith.addf %1174, %1173 : vector<8x128xf32>
    %1176 = arith.divf %1174, %1175 : vector<8x128xf32>
    %1177 = arith.mulf %1168, %1148 : vector<8x128xf32>
    %1178 = arith.mulf %1162, %1170 : vector<8x128xf32>
    %1179 = arith.addf %1177, %1178 : vector<8x128xf32>
    %1180 = math.tanh %1179 : vector<8x128xf32>
    %1181 = arith.mulf %1176, %1180 : vector<8x128xf32>
    %c0_325 = arith.constant 0 : index
    %c2560 = arith.constant 2560 : index
    %1182 = vector.load %arg9[%c0_325, %c2560] : memref<8x2816xf32, #tpu.memory_space<vmem>>, vector<8x128xf32>
    tpu.vector_store %arg9[%c0_325, %c2560], %1181 {strides = array<i32>} : memref<8x2816xf32, #tpu.memory_space<vmem>>, vector<8x128xf32>,
    %c21_326 = arith.constant 21 : index
    %c0_327 = arith.constant 0 : index
    %c0_328 = arith.constant 0 : index
    %1183 = vector.load %arg8[%c21_326, %c0_327, %c0_328] : memref<22x8x512xf32, #tpu.memory_space<vmem>>, vector<1x8x512xf32>
    %1184 = vector.shape_cast %1183 : vector<1x8x512xf32> to vector<8x512xf32>
    %c0_329 = arith.constant 0 : index
    %c0_330 = arith.constant 0 : index
    %1185 = vector.load %arg3[%c0_329, %c0_330] : memref<128x512xf32, #tpu.memory_space<vmem>>, vector<128x512xf32>
    %cst_331 = arith.constant dense<0.000000e+00> : vector<8x512xf32>
    %1186 = tpu.matmul %1181, %1185, %cst_331 {dimension_numbers = #tpu.dot_dimension_numbers<[1], [0], [0], [1], [0, 0, 1, 1], [], []>} : vector<8x128xf32>, vector<128x512xf32>, vector<8x512xf32> -> vector<8x512xf32>
    %1187 = arith.addf %1184, %1186 : vector<8x512xf32>
    %1188 = vector.extract_strided_slice %1187 {offsets = [0, 0], sizes = [8, 128], strides = [1, 1]} : vector<8x512xf32> to vector<8x128xf32>
    %1189 = arith.negf %1188 : vector<8x128xf32>
    %1190 = math.exp %1189 : vector<8x128xf32>
    %cst_332 = arith.constant 1.000000e+00 : f32
    %1191 = vector.broadcast %cst_332 : f32 to vector<8x128xf32>
    %1192 = arith.addf %1191, %1190 : vector<8x128xf32>
    %1193 = arith.divf %1191, %1192 : vector<8x128xf32>
    %1194 = vector.extract_strided_slice %1187 {offsets = [0, 128], sizes = [8, 128], strides = [1, 1]} : vector<8x512xf32> to vector<8x128xf32>
    %1195 = arith.negf %1194 : vector<8x128xf32>
    %1196 = math.exp %1195 : vector<8x128xf32>
    %cst_333 = arith.constant 1.000000e+00 : f32
    %1197 = vector.broadcast %cst_333 : f32 to vector<8x128xf32>
    %1198 = arith.addf %1197, %1196 : vector<8x128xf32>
    %1199 = arith.divf %1197, %1198 : vector<8x128xf32>
    %1200 = vector.extract_strided_slice %1187 {offsets = [0, 256], sizes = [8, 128], strides = [1, 1]} : vector<8x512xf32> to vector<8x128xf32>
    %1201 = math.tanh %1200 : vector<8x128xf32>
    %1202 = vector.extract_strided_slice %1187 {offsets = [0, 384], sizes = [8, 128], strides = [1, 1]} : vector<8x512xf32> to vector<8x128xf32>
    %1203 = arith.negf %1202 : vector<8x128xf32>
    %1204 = math.exp %1203 : vector<8x128xf32>
    %cst_334 = arith.constant 1.000000e+00 : f32
    %1205 = vector.broadcast %cst_334 : f32 to vector<8x128xf32>
    %1206 = arith.addf %1205, %1204 : vector<8x128xf32>
    %1207 = arith.divf %1205, %1206 : vector<8x128xf32>
    %1208 = arith.mulf %1199, %1179 : vector<8x128xf32>
    %1209 = arith.mulf %1193, %1201 : vector<8x128xf32>
    %1210 = arith.addf %1208, %1209 : vector<8x128xf32>
    %1211 = math.tanh %1210 : vector<8x128xf32>
    %1212 = arith.mulf %1207, %1211 : vector<8x128xf32>
    %c0_335 = arith.constant 0 : index
    %c2688 = arith.constant 2688 : index
    %1213 = vector.load %arg9[%c0_335, %c2688] : memref<8x2816xf32, #tpu.memory_space<vmem>>, vector<8x128xf32>
    tpu.vector_store %arg9[%c0_335, %c2688], %1212 {strides = array<i32>} : memref<8x2816xf32, #tpu.memory_space<vmem>>, vector<8x128xf32>,
    %c0_336 = arith.constant 0 : index
    %c0_337 = arith.constant 0 : index
    %1214 = vector.load %arg9[%c0_336, %c0_337] : memref<8x2816xf32, #tpu.memory_space<vmem>>, vector<8x2816xf32>
    %c0_338 = arith.constant 0 : index
    %c0_339 = arith.constant 0 : index
    %1215 = vector.load %arg5[%c0_338, %c0_339] : memref<2816x128xf32, #tpu.memory_space<vmem>>, vector<2816x128xf32>
    %cst_340 = arith.constant dense<0.000000e+00> : vector<8x128xf32>
    %1216 = tpu.matmul %1214, %1215, %cst_340 {dimension_numbers = #tpu.dot_dimension_numbers<[1], [0], [0], [1], [0, 0, 1, 1], [], []>} : vector<8x2816xf32>, vector<2816x128xf32>, vector<8x128xf32> -> vector<8x128xf32>
    %c0_341 = arith.constant 0 : index
    %c0_342 = arith.constant 0 : index
    %1217 = vector.load %arg6[%c0_341, %c0_342] : memref<1x128xf32, #tpu.memory_space<vmem>>, vector<1x128xf32>
    %1218 = vector.broadcast %1217 : vector<1x128xf32> to vector<8x128xf32>
    %1219 = arith.addf %1216, %1218 : vector<8x128xf32>
    %cst_343 = arith.constant dense<0xFF800000> : vector<8xf32>
    %1220 = vector.multi_reduction <maximumf>, %1219, %cst_343 [1] : vector<8x128xf32> to vector<8xf32>
    %1221 = vector.shape_cast %1220 : vector<8xf32> to vector<8x1xf32>
    %1222 = vector.broadcast %1221 : vector<8x1xf32> to vector<8x128xf32>
    %1223 = arith.subf %1219, %1222 : vector<8x128xf32>
    %1224 = math.exp %1223 : vector<8x128xf32>
    %cst_344 = arith.constant dense<0.000000e+00> : vector<8xf32>
    %1225 = vector.multi_reduction <add>, %1224, %cst_344 [1] : vector<8x128xf32> to vector<8xf32>
    %1226 = vector.shape_cast %1225 : vector<8xf32> to vector<8x1xf32>
    %1227 = math.log %1226 : vector<8x1xf32>
    %1228 = vector.broadcast %1227 : vector<8x1xf32> to vector<8x128xf32>
    %1229 = arith.subf %1223, %1228 : vector<8x128xf32>
    %c0_345 = arith.constant 0 : index
    %c0_346 = arith.constant 0 : index
    %1230 = vector.load %arg7[%c0_345, %c0_346] : memref<8x128xf32, #tpu.memory_space<vmem>>, vector<8x128xf32>
    tpu.vector_store %arg7[%c0_345, %c0_346], %1229 {strides = array<i32>} : memref<8x128xf32, #tpu.memory_space<vmem>>, vector<8x128xf32>,
    return
  }
  func.func @transform_0(%arg0: i32) -> (i32, i32, i32) {
    %c0_i32 = arith.constant 0 : i32
    %c0_i32_0 = arith.constant 0 : i32
    %c0_i32_1 = arith.constant 0 : i32
    return %c0_i32, %arg0, %c0_i32_0 : i32, i32, i32
  }
  func.func @transform_1(%arg0: i32) -> (i32, i32) {
    %c0_i32 = arith.constant 0 : i32
    %c0_i32_0 = arith.constant 0 : i32
    %c0_i32_1 = arith.constant 0 : i32
    return %c0_i32, %c0_i32_0 : i32, i32
  }
  func.func @transform_2(%arg0: i32) -> (i32, i32) {
    %c0_i32 = arith.constant 0 : i32
    %c0_i32_0 = arith.constant 0 : i32
    %c0_i32_1 = arith.constant 0 : i32
    return %c0_i32, %c0_i32_0 : i32, i32
  }
  func.func @transform_3(%arg0: i32) -> (i32, i32) {
    %c0_i32 = arith.constant 0 : i32
    %c0_i32_0 = arith.constant 0 : i32
    %c0_i32_1 = arith.constant 0 : i32
    return %c0_i32, %c0_i32_0 : i32, i32
  }
  func.func @transform_4(%arg0: i32) -> (i32, i32) {
    %c0_i32 = arith.constant 0 : i32
    %c0_i32_0 = arith.constant 0 : i32
    %c0_i32_1 = arith.constant 0 : i32
    return %c0_i32, %c0_i32_0 : i32, i32
  }
  func.func @transform_5(%arg0: i32) -> (i32, i32) {
    %c0_i32 = arith.constant 0 : i32
    %c0_i32_0 = arith.constant 0 : i32
    %c0_i32_1 = arith.constant 0 : i32
    return %c0_i32, %c0_i32_0 : i32, i32
  }
  func.func @transform_6(%arg0: i32) -> (i32, i32) {
    %c0_i32 = arith.constant 0 : i32
    %c0_i32_0 = arith.constant 0 : i32
    return %arg0, %c0_i32 : i32, i32
  }
}

</mosaic_0001>

<llo_original>
// kernel: ultra_gloves_forward.1
$region0: #{ultra_gloves_forward.1}
  #allocation0 [shape = 'u32[]', space=smem, size = 0x4, offset = 0x4, fixed_abs, tag = 'smem constant byte address 0x4 - core index']
  #allocation1 [shape = 'u32[144,128]{1,0:T(1,128)}', space=vmem, size = 0x12000, scoped, tag = 'internal scratch']
  #allocation2 [shape = 'f32[22,8,512]{2,1,0:T(8,128)}', space=vmem, size = 0x58000, scoped, tag = 'scratch operand']
  #allocation3 [shape = 'f32[8,2816]{1,0:T(8,128)}', space=vmem, size = 0x16000, scoped, tag = 'scratch operand']
  %s0 = inlined_call_operand.vmem [shape: f32[22,8,3], index: 0, kind: input, shape index: {}]
  %s1 = inlined_call_operand.hbm [shape: f32[3,512], index: 1, kind: input, shape index: {}]
  %s2 = inlined_call_operand.hbm [shape: f32[128,512], index: 2, kind: input, shape index: {}]
  %s3 = inlined_call_operand.hbm [shape: f32[1,512], index: 3, kind: input, shape index: {}]
  %s4 = inlined_call_operand.hbm [shape: f32[2816,128], index: 4, kind: input, shape index: {}]
  %s5 = inlined_call_operand.hbm [shape: f32[1,128], index: 5, kind: input, shape index: {}]
  %s6 = inlined_call_operand.hbm [shape: f32[8,128], index: 6, kind: output, shape index: {}]
  %s7 = sld [smem:[#allocation0]]
  $region54: #{ultra_gloves_forward.1} parent=0
    _
  %s9 = ssub.s32 1, %s7
  %s10 = scalar_select 0, %s9, %s7
  $region1: #{ultra_gloves_forward.1} parent=0
    #allocation4 [shape = 'u8[8192]{0}', space=vmem, size = 0x2000, scoped, tag = 'input window, operand 1, single buffered']
    #allocation5 [shape = 's32[1]{0}', space=sflag, size = 0x4, scoped, tag = 'scoped memory for ultra_gloves_forward.1']
    #allocation6 [shape = 's32[1]{0}', space=sflag, size = 0x4, scoped, tag = 'scoped memory for ultra_gloves_forward.1']
    #allocation7 [shape = 'u8[262144]{0}', space=vmem, size = 0x40000, scoped, tag = 'input window, operand 2, single buffered']
    #allocation8 [shape = 's32[1]{0}', space=sflag, size = 0x4, scoped, tag = 'scoped memory for ultra_gloves_forward.1']
    #allocation9 [shape = 'u8[2048]{0}', space=vmem, size = 0x800, scoped, tag = 'input window, operand 3, single buffered']
    #allocation10 [shape = 'u8[1441792]{0}', space=vmem, size = 0x160000, scoped, tag = 'input window, operand 4, single buffered']
    #allocation11 [shape = 's32[1]{0}', space=sflag, size = 0x4, scoped, tag = 'scoped memory for ultra_gloves_forward.1']
    #allocation12 [shape = 'u8[512]{0}', space=vmem, size = 0x400, scoped, tag = 'input window, operand 5, single buffered']
    #allocation13 [shape = 'u8[4096]{0}', space=vmem, size = 0x1000, scoped, tag = 'output window, operand 0, single buffered']
    %11 = vsyncpa [#allocation5], 0
    %12 = vsyncpa [#allocation8], 0
    %13 = vsyncpa [#allocation11], 0
    %14 = vsyncpa [#allocation6], 0
    // Predicated region
    $region2: #{ultra_gloves_forward.1} parent=1 // pred_check
      _
    $region3: #{ultra_gloves_forward.1} parent=1 // pred_check_branch
      %16 = sbr.rel (0) target = $region5
    $region4: #{ultra_gloves_forward.1} parent=1 // pred_region
      _
    $region5: #{ultra_gloves_forward.1} parent=1 // pred_fallthru
      _
    // Predicated region
    $region6: #{ultra_gloves_forward.1} parent=1 // pred_check
      _
    $region7: #{ultra_gloves_forward.1} parent=1 // pred_check_branch
      %18 = sbr.rel (0) target = $region9
    $region8: #{ultra_gloves_forward.1} parent=1 // pred_region
      %s20 = ssub.s32 256, 256
      %21 = vsyncadd [#allocation5], %s20
      %s23 = sshll.u32 [#allocation4], 4
      %s24 = int_to_ptr.vmem [resolvable:$true] %s23
      %26 = dma.hbm_to_vmem [thread:$0]  %s1, 256, %s24, [#allocation5]
    $region9: #{ultra_gloves_forward.1} parent=1 // pred_fallthru
      _
    // Predicated region
    $region10: #{ultra_gloves_forward.1} parent=1 // pred_check
      _
    $region11: #{ultra_gloves_forward.1} parent=1 // pred_check_branch
      %28 = sbr.rel (0) target = $region13
    $region12: #{ultra_gloves_forward.1} parent=1 // pred_region
      %s30 = ssub.s32 8192, 8192
      %31 = vsyncadd [#allocation8], %s30
      %s32 = sshll.u32 [#allocation7], 4
      %s33 = int_to_ptr.vmem [resolvable:$true] %s32
      %38 = dma.hbm_to_vmem [thread:$0]  %s2, 8192, %s33, [#allocation8], 512, 512, 32
    $region13: #{ultra_gloves_forward.1} parent=1 // pred_fallthru
      _
    // Predicated region
    $region14: #{ultra_gloves_forward.1} parent=1 // pred_check
      _
    $region15: #{ultra_gloves_forward.1} parent=1 // pred_check_branch
      %40 = sbr.rel (0) target = $region17
    $region16: #{ultra_gloves_forward.1} parent=1 // pred_region
      %s42 = ssub.s32 64, 64
      %43 = vsyncadd [#allocation8], %s42
      %s45 = sshll.u32 [#allocation9], 4
      %s46 = int_to_ptr.vmem [resolvable:$true] %s45
      %48 = dma.hbm_to_vmem [thread:$0]  %s3, 64, %s46, [#allocation8]
    $region17: #{ultra_gloves_forward.1} parent=1 // pred_fallthru
      _
    // Predicated region
    $region18: #{ultra_gloves_forward.1} parent=1 // pred_check
      _
    $region19: #{ultra_gloves_forward.1} parent=1 // pred_check_branch
      %50 = sbr.rel (0) target = $region21
    $region20: #{ultra_gloves_forward.1} parent=1 // pred_region
      %s52 = ssub.s32 45056, 45056
      %53 = vsyncadd [#allocation11], %s52
      %s54 = sshll.u32 [#allocation10], 4
      %s55 = int_to_ptr.vmem [resolvable:$true] %s54
      %60 = dma.hbm_to_vmem [thread:$0]  %s4, 45056, %s55, [#allocation11], 128, 128, 8
    $region21: #{ultra_gloves_forward.1} parent=1 // pred_fallthru
      _
    // Predicated region
    $region22: #{ultra_gloves_forward.1} parent=1 // pred_check
      _
    $region23: #{ultra_gloves_forward.1} parent=1 // pred_check_branch
      %62 = sbr.rel (0) target = $region25
    $region24: #{ultra_gloves_forward.1} parent=1 // pred_region
      %s64 = ssub.s32 16, 16
      %65 = vsyncadd [#allocation11], %s64
      %s67 = sshll.u32 [#allocation12], 4
      %s68 = int_to_ptr.vmem [resolvable:$true] %s67
      %70 = dma.hbm_to_vmem [thread:$0]  %s5, 16, %s68, [#allocation11]
    $region25: #{ultra_gloves_forward.1} parent=1 // pred_fallthru
      _
    // Predicated region
    $region26: #{ultra_gloves_forward.1} parent=1 // pred_check
      _
    $region27: #{ultra_gloves_forward.1} parent=1 // pred_check_branch
      %72 = sbr.rel (0) target = $region29
    $region28: #{ultra_gloves_forward.1} parent=1 // pred_region
      %73 = dma.done [#allocation5], 256
    $region29: #{ultra_gloves_forward.1} parent=1 // pred_fallthru
      _
    // Predicated region
    $region30: #{ultra_gloves_forward.1} parent=1 // pred_check
      _
    $region31: #{ultra_gloves_forward.1} parent=1 // pred_check_branch
      %75 = sbr.rel (0) target = $region33
    $region32: #{ultra_gloves_forward.1} parent=1 // pred_region
      %76 = dma.done [#allocation8], 8192
    $region33: #{ultra_gloves_forward.1} parent=1 // pred_fallthru
      _
    // Predicated region
    $region34: #{ultra_gloves_forward.1} parent=1 // pred_check
      _
    $region35: #{ultra_gloves_forward.1} parent=1 // pred_check_branch
      %78 = sbr.rel (0) target = $region37
    $region36: #{ultra_gloves_forward.1} parent=1 // pred_region
      %79 = dma.done [#allocation8], 64
    $region37: #{ultra_gloves_forward.1} parent=1 // pred_fallthru
      _
    // Predicated region
    $region38: #{ultra_gloves_forward.1} parent=1 // pred_check
      _
    $region39: #{ultra_gloves_forward.1} parent=1 // pred_check_branch
      %81 = sbr.rel (0) target = $region41
    $region40: #{ultra_gloves_forward.1} parent=1 // pred_region
      %82 = dma.done [#allocation11], 45056
    $region41: #{ultra_gloves_forward.1} parent=1 // pred_fallthru
      _
    // Predicated region
    $region42: #{ultra_gloves_forward.1} parent=1 // pred_check
      _
    $region43: #{ultra_gloves_forward.1} parent=1 // pred_check_branch
      %84 = sbr.rel (0) target = $region45
    $region44: #{ultra_gloves_forward.1} parent=1 // pred_region
      %85 = dma.done [#allocation11], 16
    $region45: #{ultra_gloves_forward.1} parent=1 // pred_fallthru
      _
    %v86 = vld [vmem:[#allocation4] sm:$0x77]
    %v87 = vld [vmem:[#allocation4 + $0x8] sm:$0x77]
    %v88 = vld [vmem:[#allocation9] sm:$0xf]
    %v89 = vld [vmem:[%s0] sm:$0xff]
    %91 = vset.pattern.permute.xlu0 0
    %92 = vperm.xlu0 %91, %v89
    %v93 = vpop.permute.xlu0 %92
    %v97 = vlaneseq
    %v98 = vshrl.u32 %v97, 7
    %v99 = vsub.s32 0, %v98
    %v100 = vrot.slane %v86, %v99
    %v101 = vlaneseq
    %v102 = vshrl.u32 %v101, 7
    %v103 = vsub.s32 4, %v102
    %v104 = vrot.slane %v86, %v103
    %v105 = vlaneseq
    %v106 = vshrl.u32 %v105, 7
    %v107 = vsub.s32 0, %v106
    %v108 = vrot.slane %v87, %v107
    %v109 = vlaneseq
    %v110 = vshrl.u32 %v109, 7
    %v111 = vsub.s32 4, %v110
    %v112 = vrot.slane %v87, %v111
    %v117 = vlaneseq
    %v118 = vshrl.u32 %v117, 7
    %v119 = vsub.s32 0, %v118
    %v120 = vrot.slane %v100, %v119
    %v121 = vlaneseq
    %v122 = vshrl.u32 %v121, 7
    %v123 = vsub.s32 0, %v122
    %v124 = vrot.slane %v104, %v123
    %v125 = vlaneseq
    %v126 = vshrl.u32 %v125, 7
    %v127 = vsub.s32 0, %v126
    %v128 = vrot.slane %v108, %v127
    %v129 = vlaneseq
    %v130 = vshrl.u32 %v129, 7
    %v131 = vsub.s32 0, %v130
    %v132 = vrot.slane %v112, %v131
    %v133 = vmul.f32 %v93, %v120
    %v134 = vmul.f32 %v93, %v124
    %v135 = vmul.f32 %v93, %v128
    %v136 = vmul.f32 %v93, %v132
    %v138 = vlaneseq
    %v139 = vshrl.u32 %v138, 7
    %v140 = vsub.s32 0, %v139
    %v141 = vrot.slane %v88, %v140
    %v142 = vlaneseq
    %v143 = vshrl.u32 %v142, 7
    %v144 = vsub.s32 1, %v143
    %v145 = vrot.slane %v88, %v144
    %v146 = vlaneseq
    %v147 = vshrl.u32 %v146, 7
    %v148 = vsub.s32 2, %v147
    %v149 = vrot.slane %v88, %v148
    %v150 = vlaneseq
    %v151 = vshrl.u32 %v150, 7
    %v152 = vsub.s32 3, %v151
    %v153 = vrot.slane %v88, %v152
    %v158 = vadd.f32 %v141, %v133
    %v159 = vadd.f32 %v145, %v134
    %v160 = vadd.f32 %v149, %v135
    %v161 = vadd.f32 %v153, %v136
    %162 = vset.pattern.permute.xlu0 1
    %163 = vperm.xlu0 %162, %v89
    %v164 = vpop.permute.xlu0 %163
    %v166 = vlaneseq
    %v167 = vshrl.u32 %v166, 7
    %v168 = vsub.s32 1, %v167
    %v169 = vrot.slane %v86, %v168
    %v170 = vlaneseq
    %v171 = vshrl.u32 %v170, 7
    %v172 = vsub.s32 5, %v171
    %v173 = vrot.slane %v86, %v172
    %v174 = vlaneseq
    %v175 = vshrl.u32 %v174, 7
    %v176 = vsub.s32 1, %v175
    %v177 = vrot.slane %v87, %v176
    %v178 = vlaneseq
    %v179 = vshrl.u32 %v178, 7
    %v180 = vsub.s32 5, %v179
    %v181 = vrot.slane %v87, %v180
    %v186 = vlaneseq
    %v187 = vshrl.u32 %v186, 7
    %v188 = vsub.s32 1, %v187
    %v189 = vrot.slane %v169, %v188
    %v190 = vlaneseq
    %v191 = vshrl.u32 %v190, 7
    %v192 = vsub.s32 1, %v191
    %v193 = vrot.slane %v173, %v192
    %v194 = vlaneseq
    %v195 = vshrl.u32 %v194, 7
    %v196 = vsub.s32 1, %v195
    %v197 = vrot.slane %v177, %v196
    %v198 = vlaneseq
    %v199 = vshrl.u32 %v198, 7
    %v200 = vsub.s32 1, %v199
    %v201 = vrot.slane %v181, %v200
    %v202 = vmul.f32 %v164, %v189
    %v203 = vmul.f32 %v164, %v193
    %v204 = vmul.f32 %v164, %v197
    %v205 = vmul.f32 %v164, %v201
    %v206 = vadd.f32 %v158, %v202
    %v207 = vadd.f32 %v159, %v203
    %v208 = vadd.f32 %v160, %v204
    %v209 = vadd.f32 %v161, %v205
    %210 = vset.pattern.permute.xlu0 2
    %211 = vperm.xlu0 %210, %v89
    %v212 = vpop.permute.xlu0 %211
    %v214 = vlaneseq
    %v215 = vshrl.u32 %v214, 7
    %v216 = vsub.s32 2, %v215
    %v217 = vrot.slane %v86, %v216
    %v218 = vlaneseq
    %v219 = vshrl.u32 %v218, 7
    %v220 = vsub.s32 6, %v219
    %v221 = vrot.slane %v86, %v220
    %v222 = vlaneseq
    %v223 = vshrl.u32 %v222, 7
    %v224 = vsub.s32 2, %v223
    %v225 = vrot.slane %v87, %v224
    %v226 = vlaneseq
    %v227 = vshrl.u32 %v226, 7
    %v228 = vsub.s32 6, %v227
    %v229 = vrot.slane %v87, %v228
    %v234 = vlaneseq
    %v235 = vshrl.u32 %v234, 7
    %v236 = vsub.s32 2, %v235
    %v237 = vrot.slane %v217, %v236
    %v238 = vlaneseq
    %v239 = vshrl.u32 %v238, 7
    %v240 = vsub.s32 2, %v239
    %v241 = vrot.slane %v221, %v240
    %v242 = vlaneseq
    %v243 = vshrl.u32 %v242, 7
    %v244 = vsub.s32 2, %v243
    %v245 = vrot.slane %v225, %v244
    %v246 = vlaneseq
    %v247 = vshrl.u32 %v246, 7
    %v248 = vsub.s32 2, %v247
    %v249 = vrot.slane %v229, %v248
    %v250 = vmul.f32 %v212, %v237
    %v251 = vmul.f32 %v212, %v241
    %v252 = vmul.f32 %v212, %v245
    %v253 = vmul.f32 %v212, %v249
    %v254 = vadd.f32 %v206, %v250
    %v255 = vadd.f32 %v207, %v251
    %v256 = vadd.f32 %v208, %v252
    %v257 = vadd.f32 %v209, %v253
    %258 = vst [vmem:[#allocation2] sm:$0xff] %v254
    %259 = vst [vmem:[#allocation2 + $0x8] sm:$0xff] %v255
    %260 = vst [vmem:[#allocation2 + $0x10] sm:$0xff] %v256
    %261 = vst [vmem:[#allocation2 + $0x18] sm:$0xff] %v257
    %s262 = scalar_lea.vmem %s0, 8
    %v263 = vld [vmem:[%s262] sm:$0xff]
    %265 = vset.pattern.permute.xlu0 0
    %266 = vperm.xlu0 %265, %v263
    %v267 = vpop.permute.xlu0 %266
    %v269 = vmul.f32 %v267, %v120
    %v270 = vmul.f32 %v267, %v124
    %v271 = vmul.f32 %v267, %v128
    %v272 = vmul.f32 %v267, %v132
    %v273 = vadd.f32 %v141, %v269
    %v274 = vadd.f32 %v145, %v270
    %v275 = vadd.f32 %v149, %v271
    %v276 = vadd.f32 %v153, %v272
    %277 = vset.pattern.permute.xlu0 1
    %278 = vperm.xlu0 %277, %v263
    %v279 = vpop.permute.xlu0 %278
    %v281 = vmul.f32 %v279, %v189
    %v282 = vmul.f32 %v279, %v193
    %v283 = vmul.f32 %v279, %v197
    %v284 = vmul.f32 %v279, %v201
    %v285 = vadd.f32 %v273, %v281
    %v286 = vadd.f32 %v274, %v282
    %v287 = vadd.f32 %v275, %v283
    %v288 = vadd.f32 %v276, %v284
    %289 = vset.pattern.permute.xlu0 2
    %290 = vperm.xlu0 %289, %v263
    %v291 = vpop.permute.xlu0 %290
    %v293 = vmul.f32 %v291, %v237
    %v294 = vmul.f32 %v291, %v241
    %v295 = vmul.f32 %v291, %v245
    %v296 = vmul.f32 %v291, %v249
    %v297 = vadd.f32 %v285, %v293
    %v298 = vadd.f32 %v286, %v294
    %v299 = vadd.f32 %v287, %v295
    %v300 = vadd.f32 %v288, %v296
    %s301 = scalar_lea.vmem [#allocation2], 32
    %302 = vst [vmem:[%s301] sm:$0xff] %v297
    %303 = vst [vmem:[%s301 + $0x8] sm:$0xff] %v298
    %304 = vst [vmem:[%s301 + $0x10] sm:$0xff] %v299
    %305 = vst [vmem:[%s301 + $0x18] sm:$0xff] %v300
    %s306 = scalar_lea.vmem %s0, 16
    %v307 = vld [vmem:[%s306] sm:$0xff]
    %309 = vset.pattern.permute.xlu0 0
    %310 = vperm.xlu0 %309, %v307
    %v311 = vpop.permute.xlu0 %310
    %v313 = vmul.f32 %v311, %v120
    %v314 = vmul.f32 %v311, %v124
    %v315 = vmul.f32 %v311, %v128
    %v316 = vmul.f32 %v311, %v132
    %v317 = vadd.f32 %v141, %v313
    %v318 = vadd.f32 %v145, %v314
    %v319 = vadd.f32 %v149, %v315
    %v320 = vadd.f32 %v153, %v316
    %321 = vset.pattern.permute.xlu0 1
    %322 = vperm.xlu0 %321, %v307
    %v323 = vpop.permute.xlu0 %322
    %v325 = vmul.f32 %v323, %v189
    %v326 = vmul.f32 %v323, %v193
    %v327 = vmul.f32 %v323, %v197
    %v328 = vmul.f32 %v323, %v201
    %v329 = vadd.f32 %v317, %v325
    %v330 = vadd.f32 %v318, %v326
    %v331 = vadd.f32 %v319, %v327
    %v332 = vadd.f32 %v320, %v328
    %333 = vset.pattern.permute.xlu0 2
    %334 = vperm.xlu0 %333, %v307
    %v335 = vpop.permute.xlu0 %334
    %v337 = vmul.f32 %v335, %v237
    %v338 = vmul.f32 %v335, %v241
    %v339 = vmul.f32 %v335, %v245
    %v340 = vmul.f32 %v335, %v249
    %v341 = vadd.f32 %v329, %v337
    %v342 = vadd.f32 %v330, %v338
    %v343 = vadd.f32 %v331, %v339
    %v344 = vadd.f32 %v332, %v340
    %s345 = scalar_lea.vmem [#allocation2], 64
    %346 = vst [vmem:[%s345] sm:$0xff] %v341
    %347 = vst [vmem:[%s345 + $0x8] sm:$0xff] %v342
    %348 = vst [vmem:[%s345 + $0x10] sm:$0xff] %v343
    %349 = vst [vmem:[%s345 + $0x18] sm:$0xff] %v344
    %s350 = scalar_lea.vmem %s0, 24
    %v351 = vld [vmem:[%s350] sm:$0xff]
    %353 = vset.pattern.permute.xlu0 0
    %354 = vperm.xlu0 %353, %v351
    %v355 = vpop.permute.xlu0 %354
    %v357 = vmul.f32 %v355, %v120
    %v358 = vmul.f32 %v355, %v124
    %v359 = vmul.f32 %v355, %v128
    %v360 = vmul.f32 %v355, %v132
    %v361 = vadd.f32 %v141, %v357
    %v362 = vadd.f32 %v145, %v358
    %v363 = vadd.f32 %v149, %v359
    %v364 = vadd.f32 %v153, %v360
    %365 = vset.pattern.permute.xlu0 1
    %366 = vperm.xlu0 %365, %v351
    %v367 = vpop.permute.xlu0 %366
    %v369 = vmul.f32 %v367, %v189
    %v370 = vmul.f32 %v367, %v193
    %v371 = vmul.f32 %v367, %v197
    %v372 = vmul.f32 %v367, %v201
    %v373 = vadd.f32 %v361, %v369
    %v374 = vadd.f32 %v362, %v370
    %v375 = vadd.f32 %v363, %v371
    %v376 = vadd.f32 %v364, %v372
    %377 = vset.pattern.permute.xlu0 2
    %378 = vperm.xlu0 %377, %v351
    %v379 = vpop.permute.xlu0 %378
    %v381 = vmul.f32 %v379, %v237
    %v382 = vmul.f32 %v379, %v241
    %v383 = vmul.f32 %v379, %v245
    %v384 = vmul.f32 %v379, %v249
    %v385 = vadd.f32 %v373, %v381
    %v386 = vadd.f32 %v374, %v382
    %v387 = vadd.f32 %v375, %v383
    %v388 = vadd.f32 %v376, %v384
    %s389 = scalar_lea.vmem [#allocation2], 96
    %390 = vst [vmem:[%s389] sm:$0xff] %v385
    %391 = vst [vmem:[%s389 + $0x8] sm:$0xff] %v386
    %392 = vst [vmem:[%s389 + $0x10] sm:$0xff] %v387
    %393 = vst [vmem:[%s389 + $0x18] sm:$0xff] %v388
    %s394 = scalar_lea.vmem %s0, 32
    %v395 = vld [vmem:[%s394] sm:$0xff]
    %397 = vset.pattern.permute.xlu0 0
    %398 = vperm.xlu0 %397, %v395
    %v399 = vpop.permute.xlu0 %398
    %v401 = vmul.f32 %v399, %v120
    %v402 = vmul.f32 %v399, %v124
    %v403 = vmul.f32 %v399, %v128
    %v404 = vmul.f32 %v399, %v132
    %v405 = vadd.f32 %v141, %v401
    %v406 = vadd.f32 %v145, %v402
    %v407 = vadd.f32 %v149, %v403
    %v408 = vadd.f32 %v153, %v404
    %409 = vset.pattern.permute.xlu0 1
    %410 = vperm.xlu0 %409, %v395
    %v411 = vpop.permute.xlu0 %410
    %v413 = vmul.f32 %v411, %v189
    %v414 = vmul.f32 %v411, %v193
    %v415 = vmul.f32 %v411, %v197
    %v416 = vmul.f32 %v411, %v201
    %v417 = vadd.f32 %v405, %v413
    %v418 = vadd.f32 %v406, %v414
    %v419 = vadd.f32 %v407, %v415
    %v420 = vadd.f32 %v408, %v416
    %421 = vset.pattern.permute.xlu0 2
    %422 = vperm.xlu0 %421, %v395
    %v423 = vpop.permute.xlu0 %422
    %v425 = vmul.f32 %v423, %v237
    %v426 = vmul.f32 %v423, %v241
    %v427 = vmul.f32 %v423, %v245
    %v428 = vmul.f32 %v423, %v249
    %v429 = vadd.f32 %v417, %v425
    %v430 = vadd.f32 %v418, %v426
    %v431 = vadd.f32 %v419, %v427
    %v432 = vadd.f32 %v420, %v428
    %s433 = scalar_lea.vmem [#allocation2], 128
    %434 = vst [vmem:[%s433] sm:$0xff] %v429
    %435 = vst [vmem:[%s433 + $0x8] sm:$0xff] %v430
    %436 = vst [vmem:[%s433 + $0x10] sm:$0xff] %v431
    %437 = vst [vmem:[%s433 + $0x18] sm:$0xff] %v432
    %s438 = scalar_lea.vmem %s0, 40
    %v439 = vld [vmem:[%s438] sm:$0xff]
    %441 = vset.pattern.permute.xlu0 0
    %442 = vperm.xlu0 %441, %v439
    %v443 = vpop.permute.xlu0 %442
    %v445 = vmul.f32 %v443, %v120
    %v446 = vmul.f32 %v443, %v124
    %v447 = vmul.f32 %v443, %v128
    %v448 = vmul.f32 %v443, %v132
    %v449 = vadd.f32 %v141, %v445
    %v450 = vadd.f32 %v145, %v446
    %v451 = vadd.f32 %v149, %v447
    %v452 = vadd.f32 %v153, %v448
    %453 = vset.pattern.permute.xlu0 1
    %454 = vperm.xlu0 %453, %v439
    %v455 = vpop.permute.xlu0 %454
    %v457 = vmul.f32 %v455, %v189
    %v458 = vmul.f32 %v455, %v193
    %v459 = vmul.f32 %v455, %v197
    %v460 = vmul.f32 %v455, %v201
    %v461 = vadd.f32 %v449, %v457
    %v462 = vadd.f32 %v450, %v458
    %v463 = vadd.f32 %v451, %v459
    %v464 = vadd.f32 %v452, %v460
    %465 = vset.pattern.permute.xlu0 2
    %466 = vperm.xlu0 %465, %v439
    %v467 = vpop.permute.xlu0 %466
    %v469 = vmul.f32 %v467, %v237
    %v470 = vmul.f32 %v467, %v241
    %v471 = vmul.f32 %v467, %v245
    %v472 = vmul.f32 %v467, %v249
    %v473 = vadd.f32 %v461, %v469
    %v474 = vadd.f32 %v462, %v470
    %v475 = vadd.f32 %v463, %v471
    %v476 = vadd.f32 %v464, %v472
    %s477 = scalar_lea.vmem [#allocation2], 160
    %478 = vst [vmem:[%s477] sm:$0xff] %v473
    %479 = vst [vmem:[%s477 + $0x8] sm:$0xff] %v474
    %480 = vst [vmem:[%s477 + $0x10] sm:$0xff] %v475
    %481 = vst [vmem:[%s477 + $0x18] sm:$0xff] %v476
    %s482 = scalar_lea.vmem %s0, 48
    %v483 = vld [vmem:[%s482] sm:$0xff]
    %485 = vset.pattern.permute.xlu0 0
    %486 = vperm.xlu0 %485, %v483
    %v487 = vpop.permute.xlu0 %486
    %v489 = vmul.f32 %v487, %v120
    %v490 = vmul.f32 %v487, %v124
    %v491 = vmul.f32 %v487, %v128
    %v492 = vmul.f32 %v487, %v132
    %v493 = vadd.f32 %v141, %v489
    %v494 = vadd.f32 %v145, %v490
    %v495 = vadd.f32 %v149, %v491
    %v496 = vadd.f32 %v153, %v492
    %497 = vset.pattern.permute.xlu0 1
    %498 = vperm.xlu0 %497, %v483
    %v499 = vpop.permute.xlu0 %498
    %v501 = vmul.f32 %v499, %v189
    %v502 = vmul.f32 %v499, %v193
    %v503 = vmul.f32 %v499, %v197
    %v504 = vmul.f32 %v499, %v201
    %v505 = vadd.f32 %v493, %v501
    %v506 = vadd.f32 %v494, %v502
    %v507 = vadd.f32 %v495, %v503
    %v508 = vadd.f32 %v496, %v504
    %509 = vset.pattern.permute.xlu0 2
    %510 = vperm.xlu0 %509, %v483
    %v511 = vpop.permute.xlu0 %510
    %v513 = vmul.f32 %v511, %v237
    %v514 = vmul.f32 %v511, %v241
    %v515 = vmul.f32 %v511, %v245
    %v516 = vmul.f32 %v511, %v249
    %v517 = vadd.f32 %v505, %v513
    %v518 = vadd.f32 %v506, %v514
    %v519 = vadd.f32 %v507, %v515
    %v520 = vadd.f32 %v508, %v516
    %s521 = scalar_lea.vmem [#allocation2], 192
    %522 = vst [vmem:[%s521] sm:$0xff] %v517
    %523 = vst [vmem:[%s521 + $0x8] sm:$0xff] %v518
    %524 = vst [vmem:[%s521 + $0x10] sm:$0xff] %v519
    %525 = vst [vmem:[%s521 + $0x18] sm:$0xff] %v520
    %s526 = scalar_lea.vmem %s0, 56
    %v527 = vld [vmem:[%s526] sm:$0xff]
    %529 = vset.pattern.permute.xlu0 0
    %530 = vperm.xlu0 %529, %v527
    %v531 = vpop.permute.xlu0 %530
    %v533 = vmul.f32 %v531, %v120
    %v534 = vmul.f32 %v531, %v124
    %v535 = vmul.f32 %v531, %v128
    %v536 = vmul.f32 %v531, %v132
    %v537 = vadd.f32 %v141, %v533
    %v538 = vadd.f32 %v145, %v534
    %v539 = vadd.f32 %v149, %v535
    %v540 = vadd.f32 %v153, %v536
    %541 = vset.pattern.permute.xlu0 1
    %542 = vperm.xlu0 %541, %v527
    %v543 = vpop.permute.xlu0 %542
    %v545 = vmul.f32 %v543, %v189
    %v546 = vmul.f32 %v543, %v193
    %v547 = vmul.f32 %v543, %v197
    %v548 = vmul.f32 %v543, %v201
    %v549 = vadd.f32 %v537, %v545
    %v550 = vadd.f32 %v538, %v546
    %v551 = vadd.f32 %v539, %v547
    %v552 = vadd.f32 %v540, %v548
    %553 = vset.pattern.permute.xlu0 2
    %554 = vperm.xlu0 %553, %v527
    %v555 = vpop.permute.xlu0 %554
    %v557 = vmul.f32 %v555, %v237
    %v558 = vmul.f32 %v555, %v241
    %v559 = vmul.f32 %v555, %v245
    %v560 = vmul.f32 %v555, %v249
    %v561 = vadd.f32 %v549, %v557
    %v562 = vadd.f32 %v550, %v558
    %v563 = vadd.f32 %v551, %v559
    %v564 = vadd.f32 %v552, %v560
    %s565 = scalar_lea.vmem [#allocation2], 224
    %566 = vst [vmem:[%s565] sm:$0xff] %v561
    %567 = vst [vmem:[%s565 + $0x8] sm:$0xff] %v562
    %568 = vst [vmem:[%s565 + $0x10] sm:$0xff] %v563
    %569 = vst [vmem:[%s565 + $0x18] sm:$0xff] %v564
    %s570 = scalar_lea.vmem %s0, 64
    %v571 = vld [vmem:[%s570] sm:$0xff]
    %573 = vset.pattern.permute.xlu0 0
    %574 = vperm.xlu0 %573, %v571
    %v575 = vpop.permute.xlu0 %574
    %v577 = vmul.f32 %v575, %v120
    %v578 = vmul.f32 %v575, %v124
    %v579 = vmul.f32 %v575, %v128
    %v580 = vmul.f32 %v575, %v132
    %v581 = vadd.f32 %v141, %v577
    %v582 = vadd.f32 %v145, %v578
    %v583 = vadd.f32 %v149, %v579
    %v584 = vadd.f32 %v153, %v580
    %585 = vset.pattern.permute.xlu0 1
    %586 = vperm.xlu0 %585, %v571
    %v587 = vpop.permute.xlu0 %586
    %v589 = vmul.f32 %v587, %v189
    %v590 = vmul.f32 %v587, %v193
    %v591 = vmul.f32 %v587, %v197
    %v592 = vmul.f32 %v587, %v201
    %v593 = vadd.f32 %v581, %v589
    %v594 = vadd.f32 %v582, %v590
    %v595 = vadd.f32 %v583, %v591
    %v596 = vadd.f32 %v584, %v592
    %597 = vset.pattern.permute.xlu0 2
    %598 = vperm.xlu0 %597, %v571
    %v599 = vpop.permute.xlu0 %598
    %v601 = vmul.f32 %v599, %v237
    %v602 = vmul.f32 %v599, %v241
    %v603 = vmul.f32 %v599, %v245
    %v604 = vmul.f32 %v599, %v249
    %v605 = vadd.f32 %v593, %v601
    %v606 = vadd.f32 %v594, %v602
    %v607 = vadd.f32 %v595, %v603
    %v608 = vadd.f32 %v596, %v604
    %s609 = scalar_lea.vmem [#allocation2], 256
    %610 = vst [vmem:[%s609] sm:$0xff] %v605
    %611 = vst [vmem:[%s609 + $0x8] sm:$0xff] %v606
    %612 = vst [vmem:[%s609 + $0x10] sm:$0xff] %v607
    %613 = vst [vmem:[%s609 + $0x18] sm:$0xff] %v608
    %s614 = scalar_lea.vmem %s0, 72
    %v615 = vld [vmem:[%s614] sm:$0xff]
    %617 = vset.pattern.permute.xlu0 0
    %618 = vperm.xlu0 %617, %v615
    %v619 = vpop.permute.xlu0 %618
    %v621 = vmul.f32 %v619, %v120
    %v622 = vmul.f32 %v619, %v124
    %v623 = vmul.f32 %v619, %v128
    %v624 = vmul.f32 %v619, %v132
    %v625 = vadd.f32 %v141, %v621
    %v626 = vadd.f32 %v145, %v622
    %v627 = vadd.f32 %v149, %v623
    %v628 = vadd.f32 %v153, %v624
    %629 = vset.pattern.permute.xlu0 1
    %630 = vperm.xlu0 %629, %v615
    %v631 = vpop.permute.xlu0 %630
    %v633 = vmul.f32 %v631, %v189
    %v634 = vmul.f32 %v631, %v193
    %v635 = vmul.f32 %v631, %v197
    %v636 = vmul.f32 %v631, %v201
    %v637 = vadd.f32 %v625, %v633
    %v638 = vadd.f32 %v626, %v634
    %v639 = vadd.f32 %v627, %v635
    %v640 = vadd.f32 %v628, %v636
    %641 = vset.pattern.permute.xlu0 2
    %642 = vperm.xlu0 %641, %v615
    %v643 = vpop.permute.xlu0 %642
    %v645 = vmul.f32 %v643, %v237
    %v646 = vmul.f32 %v643, %v241
    %v647 = vmul.f32 %v643, %v245
    %v648 = vmul.f32 %v643, %v249
    %v649 = vadd.f32 %v637, %v645
    %v650 = vadd.f32 %v638, %v646
    %v651 = vadd.f32 %v639, %v647
    %v652 = vadd.f32 %v640, %v648
    %s653 = scalar_lea.vmem [#allocation2], 288
    %654 = vst [vmem:[%s653] sm:$0xff] %v649
    %655 = vst [vmem:[%s653 + $0x8] sm:$0xff] %v650
    %656 = vst [vmem:[%s653 + $0x10] sm:$0xff] %v651
    %657 = vst [vmem:[%s653 + $0x18] sm:$0xff] %v652
    %s658 = scalar_lea.vmem %s0, 80
    %v659 = vld [vmem:[%s658] sm:$0xff]
    %661 = vset.pattern.permute.xlu0 0
    %662 = vperm.xlu0 %661, %v659
    %v663 = vpop.permute.xlu0 %662
    %v665 = vmul.f32 %v663, %v120
    %v666 = vmul.f32 %v663, %v124
    %v667 = vmul.f32 %v663, %v128
    %v668 = vmul.f32 %v663, %v132
    %v669 = vadd.f32 %v141, %v665
    %v670 = vadd.f32 %v145, %v666
    %v671 = vadd.f32 %v149, %v667
    %v672 = vadd.f32 %v153, %v668
    %673 = vset.pattern.permute.xlu0 1
    %674 = vperm.xlu0 %673, %v659
    %v675 = vpop.permute.xlu0 %674
    %v677 = vmul.f32 %v675, %v189
    %v678 = vmul.f32 %v675, %v193
    %v679 = vmul.f32 %v675, %v197
    %v680 = vmul.f32 %v675, %v201
    %v681 = vadd.f32 %v669, %v677
    %v682 = vadd.f32 %v670, %v678
    %v683 = vadd.f32 %v671, %v679
    %v684 = vadd.f32 %v672, %v680
    %685 = vset.pattern.permute.xlu0 2
    %686 = vperm.xlu0 %685, %v659
    %v687 = vpop.permute.xlu0 %686
    %v689 = vmul.f32 %v687, %v237
    %v690 = vmul.f32 %v687, %v241
    %v691 = vmul.f32 %v687, %v245
    %v692 = vmul.f32 %v687, %v249
    %v693 = vadd.f32 %v681, %v689
    %v694 = vadd.f32 %v682, %v690
    %v695 = vadd.f32 %v683, %v691
    %v696 = vadd.f32 %v684, %v692
    %s697 = scalar_lea.vmem [#allocation2], 320
    %698 = vst [vmem:[%s697] sm:$0xff] %v693
    %699 = vst [vmem:[%s697 + $0x8] sm:$0xff] %v694
    %700 = vst [vmem:[%s697 + $0x10] sm:$0xff] %v695
    %701 = vst [vmem:[%s697 + $0x18] sm:$0xff] %v696
    %s702 = scalar_lea.vmem %s0, 88
    %v703 = vld [vmem:[%s702] sm:$0xff]
    %705 = vset.pattern.permute.xlu0 0
    %706 = vperm.xlu0 %705, %v703
    %v707 = vpop.permute.xlu0 %706
    %v709 = vmul.f32 %v707, %v120
    %v710 = vmul.f32 %v707, %v124
    %v711 = vmul.f32 %v707, %v128
    %v712 = vmul.f32 %v707, %v132
    %v713 = vadd.f32 %v141, %v709
    %v714 = vadd.f32 %v145, %v710
    %v715 = vadd.f32 %v149, %v711
    %v716 = vadd.f32 %v153, %v712
    %717 = vset.pattern.permute.xlu0 1
    %718 = vperm.xlu0 %717, %v703
    %v719 = vpop.permute.xlu0 %718
    %v721 = vmul.f32 %v719, %v189
    %v722 = vmul.f32 %v719, %v193
    %v723 = vmul.f32 %v719, %v197
    %v724 = vmul.f32 %v719, %v201
    %v725 = vadd.f32 %v713, %v721
    %v726 = vadd.f32 %v714, %v722
    %v727 = vadd.f32 %v715, %v723
    %v728 = vadd.f32 %v716, %v724
    %729 = vset.pattern.permute.xlu0 2
    %730 = vperm.xlu0 %729, %v703
    %v731 = vpop.permute.xlu0 %730
    %v733 = vmul.f32 %v731, %v237
    %v734 = vmul.f32 %v731, %v241
    %v735 = vmul.f32 %v731, %v245
    %v736 = vmul.f32 %v731, %v249
    %v737 = vadd.f32 %v725, %v733
    %v738 = vadd.f32 %v726, %v734
    %v739 = vadd.f32 %v727, %v735
    %v740 = vadd.f32 %v728, %v736
    %s741 = scalar_lea.vmem [#allocation2], 352
    %742 = vst [vmem:[%s741] sm:$0xff] %v737
    %743 = vst [vmem:[%s741 + $0x8] sm:$0xff] %v738
    %744 = vst [vmem:[%s741 + $0x10] sm:$0xff] %v739
    %745 = vst [vmem:[%s741 + $0x18] sm:$0xff] %v740
    %s746 = scalar_lea.vmem %s0, 96
    %v747 = vld [vmem:[%s746] sm:$0xff]
    %749 = vset.pattern.permute.xlu0 0
    %750 = vperm.xlu0 %749, %v747
    %v751 = vpop.permute.xlu0 %750
    %v753 = vmul.f32 %v751, %v120
    %v754 = vmul.f32 %v751, %v124
    %v755 = vmul.f32 %v751, %v128
    %v756 = vmul.f32 %v751, %v132
    %v757 = vadd.f32 %v141, %v753
    %v758 = vadd.f32 %v145, %v754
    %v759 = vadd.f32 %v149, %v755
    %v760 = vadd.f32 %v153, %v756
    %761 = vset.pattern.permute.xlu0 1
    %762 = vperm.xlu0 %761, %v747
    %v763 = vpop.permute.xlu0 %762
    %v765 = vmul.f32 %v763, %v189
    %v766 = vmul.f32 %v763, %v193
    %v767 = vmul.f32 %v763, %v197
    %v768 = vmul.f32 %v763, %v201
    %v769 = vadd.f32 %v757, %v765
    %v770 = vadd.f32 %v758, %v766
    %v771 = vadd.f32 %v759, %v767
    %v772 = vadd.f32 %v760, %v768
    %773 = vset.pattern.permute.xlu0 2
    %774 = vperm.xlu0 %773, %v747
    %v775 = vpop.permute.xlu0 %774
    %v777 = vmul.f32 %v775, %v237
    %v778 = vmul.f32 %v775, %v241
    %v779 = vmul.f32 %v775, %v245
    %v780 = vmul.f32 %v775, %v249
    %v781 = vadd.f32 %v769, %v777
    %v782 = vadd.f32 %v770, %v778
    %v783 = vadd.f32 %v771, %v779
    %v784 = vadd.f32 %v772, %v780
    %s785 = scalar_lea.vmem [#allocation2], 384
    %786 = vst [vmem:[%s785] sm:$0xff] %v781
    %787 = vst [vmem:[%s785 + $0x8] sm:$0xff] %v782
    %788 = vst [vmem:[%s785 + $0x10] sm:$0xff] %v783
    %789 = vst [vmem:[%s785 + $0x18] sm:$0xff] %v784
    %s790 = scalar_lea.vmem %s0, 104
    %v791 = vld [vmem:[%s790] sm:$0xff]
    %793 = vset.pattern.permute.xlu0 0
    %794 = vperm.xlu0 %793, %v791
    %v795 = vpop.permute.xlu0 %794
    %v797 = vmul.f32 %v795, %v120
    %v798 = vmul.f32 %v795, %v124
    %v799 = vmul.f32 %v795, %v128
    %v800 = vmul.f32 %v795, %v132
    %v801 = vadd.f32 %v141, %v797
    %v802 = vadd.f32 %v145, %v798
    %v803 = vadd.f32 %v149, %v799
    %v804 = vadd.f32 %v153, %v800
    %805 = vset.pattern.permute.xlu0 1
    %806 = vperm.xlu0 %805, %v791
    %v807 = vpop.permute.xlu0 %806
    %v809 = vmul.f32 %v807, %v189
    %v810 = vmul.f32 %v807, %v193
    %v811 = vmul.f32 %v807, %v197
    %v812 = vmul.f32 %v807, %v201
    %v813 = vadd.f32 %v801, %v809
    %v814 = vadd.f32 %v802, %v810
    %v815 = vadd.f32 %v803, %v811
    %v816 = vadd.f32 %v804, %v812
    %817 = vset.pattern.permute.xlu0 2
    %818 = vperm.xlu0 %817, %v791
    %v819 = vpop.permute.xlu0 %818
    %v821 = vmul.f32 %v819, %v237
    %v822 = vmul.f32 %v819, %v241
    %v823 = vmul.f32 %v819, %v245
    %v824 = vmul.f32 %v819, %v249
    %v825 = vadd.f32 %v813, %v821
    %v826 = vadd.f32 %v814, %v822
    %v827 = vadd.f32 %v815, %v823
    %v828 = vadd.f32 %v816, %v824
    %s829 = scalar_lea.vmem [#allocation2], 416
    %830 = vst [vmem:[%s829] sm:$0xff] %v825
    %831 = vst [vmem:[%s829 + $0x8] sm:$0xff] %v826
    %832 = vst [vmem:[%s829 + $0x10] sm:$0xff] %v827
    %833 = vst [vmem:[%s829 + $0x18] sm:$0xff] %v828
    %s834 = scalar_lea.vmem %s0, 112
    %v835 = vld [vmem:[%s834] sm:$0xff]
    %837 = vset.pattern.permute.xlu0 0
    %838 = vperm.xlu0 %837, %v835
    %v839 = vpop.permute.xlu0 %838
    %v841 = vmul.f32 %v839, %v120
    %v842 = vmul.f32 %v839, %v124
    %v843 = vmul.f32 %v839, %v128
    %v844 = vmul.f32 %v839, %v132
    %v845 = vadd.f32 %v141, %v841
    %v846 = vadd.f32 %v145, %v842
    %v847 = vadd.f32 %v149, %v843
    %v848 = vadd.f32 %v153, %v844
    %849 = vset.pattern.permute.xlu0 1
    %850 = vperm.xlu0 %849, %v835
    %v851 = vpop.permute.xlu0 %850
    %v853 = vmul.f32 %v851, %v189
    %v854 = vmul.f32 %v851, %v193
    %v855 = vmul.f32 %v851, %v197
    %v856 = vmul.f32 %v851, %v201
    %v857 = vadd.f32 %v845, %v853
    %v858 = vadd.f32 %v846, %v854
    %v859 = vadd.f32 %v847, %v855
    %v860 = vadd.f32 %v848, %v856
    %861 = vset.pattern.permute.xlu0 2
    %862 = vperm.xlu0 %861, %v835
    %v863 = vpop.permute.xlu0 %862
    %v865 = vmul.f32 %v863, %v237
    %v866 = vmul.f32 %v863, %v241
    %v867 = vmul.f32 %v863, %v245
    %v868 = vmul.f32 %v863, %v249
    %v869 = vadd.f32 %v857, %v865
    %v870 = vadd.f32 %v858, %v866
    %v871 = vadd.f32 %v859, %v867
    %v872 = vadd.f32 %v860, %v868
    %s873 = scalar_lea.vmem [#allocation2], 448
    %874 = vst [vmem:[%s873] sm:$0xff] %v869
    %875 = vst [vmem:[%s873 + $0x8] sm:$0xff] %v870
    %876 = vst [vmem:[%s873 + $0x10] sm:$0xff] %v871
    %877 = vst [vmem:[%s873 + $0x18] sm:$0xff] %v872
    %s878 = scalar_lea.vmem %s0, 120
    %v879 = vld [vmem:[%s878] sm:$0xff]
    %881 = vset.pattern.permute.xlu0 0
    %882 = vperm.xlu0 %881, %v879
    %v883 = vpop.permute.xlu0 %882
    %v885 = vmul.f32 %v883, %v120
    %v886 = vmul.f32 %v883, %v124
    %v887 = vmul.f32 %v883, %v128
    %v888 = vmul.f32 %v883, %v132
    %v889 = vadd.f32 %v141, %v885
    %v890 = vadd.f32 %v145, %v886
    %v891 = vadd.f32 %v149, %v887
    %v892 = vadd.f32 %v153, %v888
    %893 = vset.pattern.permute.xlu0 1
    %894 = vperm.xlu0 %893, %v879
    %v895 = vpop.permute.xlu0 %894
    %v897 = vmul.f32 %v895, %v189
    %v898 = vmul.f32 %v895, %v193
    %v899 = vmul.f32 %v895, %v197
    %v900 = vmul.f32 %v895, %v201
    %v901 = vadd.f32 %v889, %v897
    %v902 = vadd.f32 %v890, %v898
    %v903 = vadd.f32 %v891, %v899
    %v904 = vadd.f32 %v892, %v900
    %905 = vset.pattern.permute.xlu0 2
    %906 = vperm.xlu0 %905, %v879
    %v907 = vpop.permute.xlu0 %906
    %v909 = vmul.f32 %v907, %v237
    %v910 = vmul.f32 %v907, %v241
    %v911 = vmul.f32 %v907, %v245
    %v912 = vmul.f32 %v907, %v249
    %v913 = vadd.f32 %v901, %v909
    %v914 = vadd.f32 %v902, %v910
    %v915 = vadd.f32 %v903, %v911
    %v916 = vadd.f32 %v904, %v912
    %s917 = scalar_lea.vmem [#allocation2], 480
    %918 = vst [vmem:[%s917] sm:$0xff] %v913
    %919 = vst [vmem:[%s917 + $0x8] sm:$0xff] %v914
    %920 = vst [vmem:[%s917 + $0x10] sm:$0xff] %v915
    %921 = vst [vmem:[%s917 + $0x18] sm:$0xff] %v916
    %s922 = scalar_lea.vmem %s0, 128
    %v923 = vld [vmem:[%s922] sm:$0xff]
    %925 = vset.pattern.permute.xlu0 0
    %926 = vperm.xlu0 %925, %v923
    %v927 = vpop.permute.xlu0 %926
    %v929 = vmul.f32 %v927, %v120
    %v930 = vmul.f32 %v927, %v124
    %v931 = vmul.f32 %v927, %v128
    %v932 = vmul.f32 %v927, %v132
    %v933 = vadd.f32 %v141, %v929
    %v934 = vadd.f32 %v145, %v930
    %v935 = vadd.f32 %v149, %v931
    %v936 = vadd.f32 %v153, %v932
    %937 = vset.pattern.permute.xlu0 1
    %938 = vperm.xlu0 %937, %v923
    %v939 = vpop.permute.xlu0 %938
    %v941 = vmul.f32 %v939, %v189
    %v942 = vmul.f32 %v939, %v193
    %v943 = vmul.f32 %v939, %v197
    %v944 = vmul.f32 %v939, %v201
    %v945 = vadd.f32 %v933, %v941
    %v946 = vadd.f32 %v934, %v942
    %v947 = vadd.f32 %v935, %v943
    %v948 = vadd.f32 %v936, %v944
    %949 = vset.pattern.permute.xlu0 2
    %950 = vperm.xlu0 %949, %v923
    %v951 = vpop.permute.xlu0 %950
    %v953 = vmul.f32 %v951, %v237
    %v954 = vmul.f32 %v951, %v241
    %v955 = vmul.f32 %v951, %v245
    %v956 = vmul.f32 %v951, %v249
    %v957 = vadd.f32 %v945, %v953
    %v958 = vadd.f32 %v946, %v954
    %v959 = vadd.f32 %v947, %v955
    %v960 = vadd.f32 %v948, %v956
    %s961 = scalar_lea.vmem [#allocation2], 512
    %962 = vst [vmem:[%s961] sm:$0xff] %v957
    %963 = vst [vmem:[%s961 + $0x8] sm:$0xff] %v958
    %964 = vst [vmem:[%s961 + $0x10] sm:$0xff] %v959
    %965 = vst [vmem:[%s961 + $0x18] sm:$0xff] %v960
    %s966 = scalar_lea.vmem %s0, 136
    %v967 = vld [vmem:[%s966] sm:$0xff]
    %969 = vset.pattern.permute.xlu0 0
    %970 = vperm.xlu0 %969, %v967
    %v971 = vpop.permute.xlu0 %970
    %v973 = vmul.f32 %v971, %v120
    %v974 = vmul.f32 %v971, %v124
    %v975 = vmul.f32 %v971, %v128
    %v976 = vmul.f32 %v971, %v132
    %v977 = vadd.f32 %v141, %v973
    %v978 = vadd.f32 %v145, %v974
    %v979 = vadd.f32 %v149, %v975
    %v980 = vadd.f32 %v153, %v976
    %981 = vset.pattern.permute.xlu0 1
    %982 = vperm.xlu0 %981, %v967
    %v983 = vpop.permute.xlu0 %982
    %v985 = vmul.f32 %v983, %v189
    %v986 = vmul.f32 %v983, %v193
    %v987 = vmul.f32 %v983, %v197
    %v988 = vmul.f32 %v983, %v201
    %v989 = vadd.f32 %v977, %v985
    %v990 = vadd.f32 %v978, %v986
    %v991 = vadd.f32 %v979, %v987
    %v992 = vadd.f32 %v980, %v988
    %993 = vset.pattern.permute.xlu0 2
    %994 = vperm.xlu0 %993, %v967
    %v995 = vpop.permute.xlu0 %994
    %v997 = vmul.f32 %v995, %v237
    %v998 = vmul.f32 %v995, %v241
    %v999 = vmul.f32 %v995, %v245
    %v1000 = vmul.f32 %v995, %v249
    %v1001 = vadd.f32 %v989, %v997
    %v1002 = vadd.f32 %v990, %v998
    %v1003 = vadd.f32 %v991, %v999
    %v1004 = vadd.f32 %v992, %v1000
    %s1005 = scalar_lea.vmem [#allocation2], 544
    %1006 = vst [vmem:[%s1005] sm:$0xff] %v1001
    %1007 = vst [vmem:[%s1005 + $0x8] sm:$0xff] %v1002
    %1008 = vst [vmem:[%s1005 + $0x10] sm:$0xff] %v1003
    %1009 = vst [vmem:[%s1005 + $0x18] sm:$0xff] %v1004
    %s1010 = scalar_lea.vmem %s0, 144
    %v1011 = vld [vmem:[%s1010] sm:$0xff]
    %1013 = vset.pattern.permute.xlu0 0
    %1014 = vperm.xlu0 %1013, %v1011
    %v1015 = vpop.permute.xlu0 %1014
    %v1017 = vmul.f32 %v1015, %v120
    %v1018 = vmul.f32 %v1015, %v124
    %v1019 = vmul.f32 %v1015, %v128
    %v1020 = vmul.f32 %v1015, %v132
    %v1021 = vadd.f32 %v141, %v1017
    %v1022 = vadd.f32 %v145, %v1018
    %v1023 = vadd.f32 %v149, %v1019
    %v1024 = vadd.f32 %v153, %v1020
    %1025 = vset.pattern.permute.xlu0 1
    %1026 = vperm.xlu0 %1025, %v1011
    %v1027 = vpop.permute.xlu0 %1026
    %v1029 = vmul.f32 %v1027, %v189
    %v1030 = vmul.f32 %v1027, %v193
    %v1031 = vmul.f32 %v1027, %v197
    %v1032 = vmul.f32 %v1027, %v201
    %v1033 = vadd.f32 %v1021, %v1029
    %v1034 = vadd.f32 %v1022, %v1030
    %v1035 = vadd.f32 %v1023, %v1031
    %v1036 = vadd.f32 %v1024, %v1032
    %1037 = vset.pattern.permute.xlu0 2
    %1038 = vperm.xlu0 %1037, %v1011
    %v1039 = vpop.permute.xlu0 %1038
    %v1041 = vmul.f32 %v1039, %v237
    %v1042 = vmul.f32 %v1039, %v241
    %v1043 = vmul.f32 %v1039, %v245
    %v1044 = vmul.f32 %v1039, %v249
    %v1045 = vadd.f32 %v1033, %v1041
    %v1046 = vadd.f32 %v1034, %v1042
    %v1047 = vadd.f32 %v1035, %v1043
    %v1048 = vadd.f32 %v1036, %v1044
    %s1049 = scalar_lea.vmem [#allocation2], 576
    %1050 = vst [vmem:[%s1049] sm:$0xff] %v1045
    %1051 = vst [vmem:[%s1049 + $0x8] sm:$0xff] %v1046
    %1052 = vst [vmem:[%s1049 + $0x10] sm:$0xff] %v1047
    %1053 = vst [vmem:[%s1049 + $0x18] sm:$0xff] %v1048
    %s1054 = scalar_lea.vmem %s0, 152
    %v1055 = vld [vmem:[%s1054] sm:$0xff]
    %1057 = vset.pattern.permute.xlu0 0
    %1058 = vperm.xlu0 %1057, %v1055
    %v1059 = vpop.permute.xlu0 %1058
    %v1061 = vmul.f32 %v1059, %v120
    %v1062 = vmul.f32 %v1059, %v124
    %v1063 = vmul.f32 %v1059, %v128
    %v1064 = vmul.f32 %v1059, %v132
    %v1065 = vadd.f32 %v141, %v1061
    %v1066 = vadd.f32 %v145, %v1062
    %v1067 = vadd.f32 %v149, %v1063
    %v1068 = vadd.f32 %v153, %v1064
    %1069 = vset.pattern.permute.xlu0 1
    %1070 = vperm.xlu0 %1069, %v1055
    %v1071 = vpop.permute.xlu0 %1070
    %v1073 = vmul.f32 %v1071, %v189
    %v1074 = vmul.f32 %v1071, %v193
    %v1075 = vmul.f32 %v1071, %v197
    %v1076 = vmul.f32 %v1071, %v201
    %v1077 = vadd.f32 %v1065, %v1073
    %v1078 = vadd.f32 %v1066, %v1074
    %v1079 = vadd.f32 %v1067, %v1075
    %v1080 = vadd.f32 %v1068, %v1076
    %1081 = vset.pattern.permute.xlu0 2
    %1082 = vperm.xlu0 %1081, %v1055
    %v1083 = vpop.permute.xlu0 %1082
    %v1085 = vmul.f32 %v1083, %v237
    %v1086 = vmul.f32 %v1083, %v241
    %v1087 = vmul.f32 %v1083, %v245
    %v1088 = vmul.f32 %v1083, %v249
    %v1089 = vadd.f32 %v1077, %v1085
    %v1090 = vadd.f32 %v1078, %v1086
    %v1091 = vadd.f32 %v1079, %v1087
    %v1092 = vadd.f32 %v1080, %v1088
    %s1093 = scalar_lea.vmem [#allocation2], 608
    %1094 = vst [vmem:[%s1093] sm:$0xff] %v1089
    %1095 = vst [vmem:[%s1093 + $0x8] sm:$0xff] %v1090
    %1096 = vst [vmem:[%s1093 + $0x10] sm:$0xff] %v1091
    %1097 = vst [vmem:[%s1093 + $0x18] sm:$0xff] %v1092
    %s1098 = scalar_lea.vmem %s0, 160
    %v1099 = vld [vmem:[%s1098] sm:$0xff]
    %1101 = vset.pattern.permute.xlu0 0
    %1102 = vperm.xlu0 %1101, %v1099
    %v1103 = vpop.permute.xlu0 %1102
    %v1105 = vmul.f32 %v1103, %v120
    %v1106 = vmul.f32 %v1103, %v124
    %v1107 = vmul.f32 %v1103, %v128
    %v1108 = vmul.f32 %v1103, %v132
    %v1109 = vadd.f32 %v141, %v1105
    %v1110 = vadd.f32 %v145, %v1106
    %v1111 = vadd.f32 %v149, %v1107
    %v1112 = vadd.f32 %v153, %v1108
    %1113 = vset.pattern.permute.xlu0 1
    %1114 = vperm.xlu0 %1113, %v1099
    %v1115 = vpop.permute.xlu0 %1114
    %v1117 = vmul.f32 %v1115, %v189
    %v1118 = vmul.f32 %v1115, %v193
    %v1119 = vmul.f32 %v1115, %v197
    %v1120 = vmul.f32 %v1115, %v201
    %v1121 = vadd.f32 %v1109, %v1117
    %v1122 = vadd.f32 %v1110, %v1118
    %v1123 = vadd.f32 %v1111, %v1119
    %v1124 = vadd.f32 %v1112, %v1120
    %1125 = vset.pattern.permute.xlu0 2
    %1126 = vperm.xlu0 %1125, %v1099
    %v1127 = vpop.permute.xlu0 %1126
    %v1129 = vmul.f32 %v1127, %v237
    %v1130 = vmul.f32 %v1127, %v241
    %v1131 = vmul.f32 %v1127, %v245
    %v1132 = vmul.f32 %v1127, %v249
    %v1133 = vadd.f32 %v1121, %v1129
    %v1134 = vadd.f32 %v1122, %v1130
    %v1135 = vadd.f32 %v1123, %v1131
    %v1136 = vadd.f32 %v1124, %v1132
    %s1137 = scalar_lea.vmem [#allocation2], 640
    %1138 = vst [vmem:[%s1137] sm:$0xff] %v1133
    %1139 = vst [vmem:[%s1137 + $0x8] sm:$0xff] %v1134
    %1140 = vst [vmem:[%s1137 + $0x10] sm:$0xff] %v1135
    %1141 = vst [vmem:[%s1137 + $0x18] sm:$0xff] %v1136
    %s1142 = scalar_lea.vmem %s0, 168
    %v1143 = vld [vmem:[%s1142] sm:$0xff]
    %1145 = vset.pattern.permute.xlu0 0
    %1146 = vperm.xlu0 %1145, %v1143
    %v1147 = vpop.permute.xlu0 %1146
    %v1149 = vmul.f32 %v1147, %v120
    %v1150 = vmul.f32 %v1147, %v124
    %v1151 = vmul.f32 %v1147, %v128
    %v1152 = vmul.f32 %v1147, %v132
    %v1153 = vadd.f32 %v141, %v1149
    %v1154 = vadd.f32 %v145, %v1150
    %v1155 = vadd.f32 %v149, %v1151
    %v1156 = vadd.f32 %v153, %v1152
    %1157 = vset.pattern.permute.xlu0 1
    %1158 = vperm.xlu0 %1157, %v1143
    %v1159 = vpop.permute.xlu0 %1158
    %v1161 = vmul.f32 %v1159, %v189
    %v1162 = vmul.f32 %v1159, %v193
    %v1163 = vmul.f32 %v1159, %v197
    %v1164 = vmul.f32 %v1159, %v201
    %v1165 = vadd.f32 %v1153, %v1161
    %v1166 = vadd.f32 %v1154, %v1162
    %v1167 = vadd.f32 %v1155, %v1163
    %v1168 = vadd.f32 %v1156, %v1164
    %1169 = vset.pattern.permute.xlu0 2
    %1170 = vperm.xlu0 %1169, %v1143
    %v1171 = vpop.permute.xlu0 %1170
    %v1173 = vmul.f32 %v1171, %v237
    %v1174 = vmul.f32 %v1171, %v241
    %v1175 = vmul.f32 %v1171, %v245
    %v1176 = vmul.f32 %v1171, %v249
    %v1177 = vadd.f32 %v1165, %v1173
    %v1178 = vadd.f32 %v1166, %v1174
    %v1179 = vadd.f32 %v1167, %v1175
    %v1180 = vadd.f32 %v1168, %v1176
    %s1181 = scalar_lea.vmem [#allocation2], 672
    %1182 = vst [vmem:[%s1181] sm:$0xff] %v1177
    %1183 = vst [vmem:[%s1181 + $0x8] sm:$0xff] %v1178
    %1184 = vst [vmem:[%s1181 + $0x10] sm:$0xff] %v1179
    %1185 = vst [vmem:[%s1181 + $0x18] sm:$0xff] %v1180
    %v1186 = vld [vmem:[#allocation2] sm:$0xff]
    %v1187 = vld [vmem:[#allocation2 + $0x8] sm:$0xff]
    %v1188 = vld [vmem:[#allocation2 + $0x10] sm:$0xff]
    %v1189 = vld [vmem:[#allocation2 + $0x18] sm:$0xff]
    %v1190 = vld [vmem:[#allocation7] sm:$0xff]
    %v1191 = vld [vmem:[#allocation7 + $0x8] sm:$0xff]
    %v1192 = vld [vmem:[#allocation7 + $0x10] sm:$0xff]
    %v1193 = vld [vmem:[#allocation7 + $0x18] sm:$0xff]
    %v1194 = vld [vmem:[#allocation7 + $0x20] sm:$0xff]
    %v1195 = vld [vmem:[#allocation7 + $0x28] sm:$0xff]
    %v1196 = vld [vmem:[#allocation7 + $0x30] sm:$0xff]
    %v1197 = vld [vmem:[#allocation7 + $0x38] sm:$0xff]
    %v1198 = vld [vmem:[#allocation7 + $0x40] sm:$0xff]
    %v1199 = vld [vmem:[#allocation7 + $0x48] sm:$0xff]
    %v1200 = vld [vmem:[#allocation7 + $0x50] sm:$0xff]
    %v1201 = vld [vmem:[#allocation7 + $0x58] sm:$0xff]
    %v1202 = vld [vmem:[#allocation7 + $0x60] sm:$0xff]
    %v1203 = vld [vmem:[#allocation7 + $0x68] sm:$0xff]
    %v1204 = vld [vmem:[#allocation7 + $0x70] sm:$0xff]
    %v1205 = vld [vmem:[#allocation7 + $0x78] sm:$0xff]
    %v1206 = vld [vmem:[#allocation7 + $0x80] sm:$0xff]
    %v1207 = vld [vmem:[#allocation7 + $0x88] sm:$0xff]
    %v1208 = vld [vmem:[#allocation7 + $0x90] sm:$0xff]
    %v1209 = vld [vmem:[#allocation7 + $0x98] sm:$0xff]
    %v1210 = vld [vmem:[#allocation7 + $0xa0] sm:$0xff]
    %v1211 = vld [vmem:[#allocation7 + $0xa8] sm:$0xff]
    %v1212 = vld [vmem:[#allocation7 + $0xb0] sm:$0xff]
    %v1213 = vld [vmem:[#allocation7 + $0xb8] sm:$0xff]
    %v1214 = vld [vmem:[#allocation7 + $0xc0] sm:$0xff]
    %v1215 = vld [vmem:[#allocation7 + $0xc8] sm:$0xff]
    %v1216 = vld [vmem:[#allocation7 + $0xd0] sm:$0xff]
    %v1217 = vld [vmem:[#allocation7 + $0xd8] sm:$0xff]
    %v1218 = vld [vmem:[#allocation7 + $0xe0] sm:$0xff]
    %v1219 = vld [vmem:[#allocation7 + $0xe8] sm:$0xff]
    %v1220 = vld [vmem:[#allocation7 + $0xf0] sm:$0xff]
    %v1221 = vld [vmem:[#allocation7 + $0xf8] sm:$0xff]
    %v1222 = vld [vmem:[#allocation7 + $0x100] sm:$0xff]
    %v1223 = vld [vmem:[#allocation7 + $0x108] sm:$0xff]
    %v1224 = vld [vmem:[#allocation7 + $0x110] sm:$0xff]
    %v1225 = vld [vmem:[#allocation7 + $0x118] sm:$0xff]
    %v1226 = vld [vmem:[#allocation7 + $0x120] sm:$0xff]
    %v1227 = vld [vmem:[#allocation7 + $0x128] sm:$0xff]
    %v1228 = vld [vmem:[#allocation7 + $0x130] sm:$0xff]
    %v1229 = vld [vmem:[#allocation7 + $0x138] sm:$0xff]
    %v1230 = vld [vmem:[#allocation7 + $0x140] sm:$0xff]
    %v1231 = vld [vmem:[#allocation7 + $0x148] sm:$0xff]
    %v1232 = vld [vmem:[#allocation7 + $0x150] sm:$0xff]
    %v1233 = vld [vmem:[#allocation7 + $0x158] sm:$0xff]
    %v1234 = vld [vmem:[#allocation7 + $0x160] sm:$0xff]
    %v1235 = vld [vmem:[#allocation7 + $0x168] sm:$0xff]
    %v1236 = vld [vmem:[#allocation7 + $0x170] sm:$0xff]
    %v1237 = vld [vmem:[#allocation7 + $0x178] sm:$0xff]
    %v1238 = vld [vmem:[#allocation7 + $0x180] sm:$0xff]
    %v1239 = vld [vmem:[#allocation7 + $0x188] sm:$0xff]
    %v1240 = vld [vmem:[#allocation7 + $0x190] sm:$0xff]
    %v1241 = vld [vmem:[#allocation7 + $0x198] sm:$0xff]
    %v1242 = vld [vmem:[#allocation7 + $0x1a0] sm:$0xff]
    %v1243 = vld [vmem:[#allocation7 + $0x1a8] sm:$0xff]
    %v1244 = vld [vmem:[#allocation7 + $0x1b0] sm:$0xff]
    %v1245 = vld [vmem:[#allocation7 + $0x1b8] sm:$0xff]
    %v1246 = vld [vmem:[#allocation7 + $0x1c0] sm:$0xff]
    %v1247 = vld [vmem:[#allocation7 + $0x1c8] sm:$0xff]
    %v1248 = vld [vmem:[#allocation7 + $0x1d0] sm:$0xff]
    %v1249 = vld [vmem:[#allocation7 + $0x1d8] sm:$0xff]
    %v1250 = vld [vmem:[#allocation7 + $0x1e0] sm:$0xff]
    %v1251 = vld [vmem:[#allocation7 + $0x1e8] sm:$0xff]
    %v1252 = vld [vmem:[#allocation7 + $0x1f0] sm:$0xff]
    %v1253 = vld [vmem:[#allocation7 + $0x1f8] sm:$0xff]
    %1254 = vmatprep.subr.mxu0 %v1191
    %1255 = vmatpush1.msra.mxu0 %v1190
    %1256 = vmatprep.subr.mxu0 %v1195
    %1257 = vmatpush1.msra.mxu0 %v1194
    %1258 = vmatprep.subr.mxu0 %v1199
    %1259 = vmatpush1.msra.mxu0 %v1198
    %1260 = vmatprep.subr.mxu0 %v1203
    %1261 = vmatpush1.msra.mxu0 %v1202
    %1262 = vmatprep.subr.mxu0 %v1207
    %1263 = vmatpush1.msra.mxu0 %v1206
    %1264 = vmatprep.subr.mxu0 %v1211
    %1265 = vmatpush1.msra.mxu0 %v1210
    %1266 = vmatprep.subr.mxu0 %v1215
    %1267 = vmatpush1.msra.mxu0 %v1214
    %1268 = vmatprep.subr.mxu0 %v1219
    %1269 = vmatpush1.msra.mxu0 %v1218
    %1270 = vmatprep.subr.mxu0 %v1223
    %1271 = vmatpush1.msra.mxu0 %v1222
    %1272 = vmatprep.subr.mxu0 %v1227
    %1273 = vmatpush1.msra.mxu0 %v1226
    %1274 = vmatprep.subr.mxu0 %v1231
    %1275 = vmatpush1.msra.mxu0 %v1230
    %1276 = vmatprep.subr.mxu0 %v1235
    %1277 = vmatpush1.msra.mxu0 %v1234
    %1278 = vmatprep.subr.mxu0 %v1239
    %1279 = vmatpush1.msra.mxu0 %v1238
    %1280 = vmatprep.subr.mxu0 %v1243
    %1281 = vmatpush1.msra.mxu0 %v1242
    %1282 = vmatprep.subr.mxu0 %v1247
    %1283 = vmatpush1.msra.mxu0 %v1246
    %1284 = vmatprep.subr.mxu0 %v1251
    %1285 = vmatpush1.msra.mxu0 %v1250
    %1286 = vmatprep.subr.mxu0 0.0
    %1287 = vmatpush1.msra.mxu0 0.0
    %1288 = vmatprep.subr.mxu0 0.0
    %1289 = vmatpush1.msra.mxu0 0.0
    %1290 = vmatprep.subr.mxu0 0.0
    %1291 = vmatpush1.msra.mxu0 0.0
    %1292 = vmatprep.subr.mxu0 0.0
    %1293 = vmatpush1.msra.mxu0 0.0
    %1294 = vmatprep.subr.mxu0 0.0
    %1295 = vmatpush1.msra.mxu0 0.0
    %1296 = vmatprep.subr.mxu0 0.0
    %1297 = vmatpush1.msra.mxu0 0.0
    %1298 = vmatprep.subr.mxu0 0.0
    %1299 = vmatpush1.msra.mxu0 0.0
    %1300 = vmatprep.subr.mxu0 0.0
    %1301 = vmatpush1.msra.mxu0 0.0
    %1302 = vmatprep.subr.mxu0 0.0
    %1303 = vmatpush1.msra.mxu0 0.0
    %1304 = vmatprep.subr.mxu0 0.0
    %1305 = vmatpush1.msra.mxu0 0.0
    %1306 = vmatprep.subr.mxu0 0.0
    %1307 = vmatpush1.msra.mxu0 0.0
    %1308 = vmatprep.subr.mxu0 0.0
    %1309 = vmatpush1.msra.mxu0 0.0
    %1310 = vmatprep.subr.mxu0 0.0
    %1311 = vmatpush1.msra.mxu0 0.0
    %1312 = vmatprep.subr.mxu0 0.0
    %1313 = vmatpush1.msra.mxu0 0.0
    %1314 = vmatprep.subr.mxu0 0.0
    %1315 = vmatpush1.msra.mxu0 0.0
    %1316 = vmatprep.subr.mxu0 0.0
    %1317 = vmatpush1.msra.mxu0 0.0
    %1318 = vmatprep.mubr.f32.mxu0 0.0
    %1319 = vmatmul.mubr.f32.gmra.mrb[0].mxu0 0.0
    %v1320 = vpop.f32.mrb[0].mxu0
    %v1321 = vadd.f32 0.0, %v1320
    %v1322 = vpop.f32.mrb[0].mxu0
    %v1323 = vadd.f32 0.0, %v1322
    %1324 = vdwg.mxu0
    %1325 = vmatprep.subr.mxu0 %v1193
    %1326 = vmatpush1.msra.mxu0 %v1192
    %1327 = vmatprep.subr.mxu0 %v1197
    %1328 = vmatpush1.msra.mxu0 %v1196
    %1329 = vmatprep.subr.mxu0 %v1201
    %1330 = vmatpush1.msra.mxu0 %v1200
    %1331 = vmatprep.subr.mxu0 %v1205
    %1332 = vmatpush1.msra.mxu0 %v1204
    %1333 = vmatprep.subr.mxu0 %v1209
    %1334 = vmatpush1.msra.mxu0 %v1208
    %1335 = vmatprep.subr.mxu0 %v1213
    %1336 = vmatpush1.msra.mxu0 %v1212
    %1337 = vmatprep.subr.mxu0 %v1217
    %1338 = vmatpush1.msra.mxu0 %v1216
    %1339 = vmatprep.subr.mxu0 %v1221
    %1340 = vmatpush1.msra.mxu0 %v1220
    %1341 = vmatprep.subr.mxu0 %v1225
    %1342 = vmatpush1.msra.mxu0 %v1224
    %1343 = vmatprep.subr.mxu0 %v1229
    %1344 = vmatpush1.msra.mxu0 %v1228
    %1345 = vmatprep.subr.mxu0 %v1233
    %1346 = vmatpush1.msra.mxu0 %v1232
    %1347 = vmatprep.subr.mxu0 %v1237
    %1348 = vmatpush1.msra.mxu0 %v1236
    %1349 = vmatprep.subr.mxu0 %v1241
    %1350 = vmatpush1.msra.mxu0 %v1240
    %1351 = vmatprep.subr.mxu0 %v1245
    %1352 = vmatpush1.msra.mxu0 %v1244
    %1353 = vmatprep.subr.mxu0 %v1249
    %1354 = vmatpush1.msra.mxu0 %v1248
    %1355 = vmatprep.subr.mxu0 %v1253
    %1356 = vmatpush1.msra.mxu0 %v1252
    %1357 = vmatprep.subr.mxu0 0.0
    %1358 = vmatpush1.msra.mxu0 0.0
    %1359 = vmatprep.subr.mxu0 0.0
    %1360 = vmatpush1.msra.mxu0 0.0
    %1361 = vmatprep.subr.mxu0 0.0
    %1362 = vmatpush1.msra.mxu0 0.0
    %1363 = vmatprep.subr.mxu0 0.0
    %1364 = vmatpush1.msra.mxu0 0.0
    %1365 = vmatprep.subr.mxu0 0.0
    %1366 = vmatpush1.msra.mxu0 0.0
    %1367 = vmatprep.subr.mxu0 0.0
    %1368 = vmatpush1.msra.mxu0 0.0
    %1369 = vmatprep.subr.mxu0 0.0
    %1370 = vmatpush1.msra.mxu0 0.0
    %1371 = vmatprep.subr.mxu0 0.0
    %1372 = vmatpush1.msra.mxu0 0.0
    %1373 = vmatprep.subr.mxu0 0.0
    %1374 = vmatpush1.msra.mxu0 0.0
    %1375 = vmatprep.subr.mxu0 0.0
    %1376 = vmatpush1.msra.mxu0 0.0
    %1377 = vmatprep.subr.mxu0 0.0
    %1378 = vmatpush1.msra.mxu0 0.0
    %1379 = vmatprep.subr.mxu0 0.0
    %1380 = vmatpush1.msra.mxu0 0.0
    %1381 = vmatprep.subr.mxu0 0.0
    %1382 = vmatpush1.msra.mxu0 0.0
    %1383 = vmatprep.subr.mxu0 0.0
    %1384 = vmatpush1.msra.mxu0 0.0
    %1385 = vmatprep.subr.mxu0 0.0
    %1386 = vmatpush1.msra.mxu0 0.0
    %1387 = vmatprep.subr.mxu0 0.0
    %1388 = vmatpush1.msra.mxu0 0.0
    %1389 = vmatprep.mubr.f32.mxu0 0.0
    %1390 = vmatmul.mubr.f32.gmra.mrb[0].mxu0 0.0
    %v1391 = vpop.f32.mrb[0].mxu0
    %v1392 = vadd.f32 0.0, %v1391
    %v1393 = vpop.f32.mrb[0].mxu0
    %v1394 = vadd.f32 0.0, %v1393
    %1395 = vdwg.mxu0
    %v1396 = vadd.f32 %v1186, %v1321
    %v1397 = vadd.f32 %v1187, %v1323
    %v1398 = vadd.f32 %v1188, %v1392
    %v1399 = vadd.f32 %v1189, %v1394
    %v1400 = vxor.u32 %v1396, 2147483648
    %v1401 = vmul.f32 %v1400, 1.442695
    %v1402 = vpow.pop %v1401
    %v1403 = vadd.f32 %v1402, 1.0
    %v1404 = vrcp.pop %v1403
    %v1405 = vmul.f32 1.0, %v1404
    %v1406 = vxor.u32 %v1397, 2147483648
    %v1407 = vmul.f32 %v1406, 1.442695
    %v1408 = vpow.pop %v1407
    %v1409 = vadd.f32 %v1408, 1.0
    %v1410 = vrcp.pop %v1409
    %v1411 = vmul.f32 1.0, %v1410
    %v1412 = vtanh.pop %v1398
    %v1413 = vxor.u32 %v1399, 2147483648
    %v1414 = vmul.f32 %v1413, 1.442695
    %v1415 = vpow.pop %v1414
    %v1416 = vadd.f32 %v1415, 1.0
    %v1417 = vrcp.pop %v1416
    %v1418 = vmul.f32 1.0, %v1417
    %v1419 = vmul.f32 %v1411, 0.0
    %v1420 = vmul.f32 %v1405, %v1412
    %v1421 = vadd.f32 %v1419, %v1420
    %v1422 = vtanh.pop %v1421
    %v1423 = vmul.f32 %v1418, %v1422
    %1424 = vst [vmem:[#allocation3] sm:$0xff] %v1423
    %v1425 = vld [vmem:[%s301] sm:$0xff]
    %v1426 = vld [vmem:[%s301 + $0x8] sm:$0xff]
    %v1427 = vld [vmem:[%s301 + $0x10] sm:$0xff]
    %v1428 = vld [vmem:[%s301 + $0x18] sm:$0xff]
    %v1429 = vld [vmem:[#allocation7] sm:$0xff]
    %v1430 = vld [vmem:[#allocation7 + $0x8] sm:$0xff]
    %v1431 = vld [vmem:[#allocation7 + $0x10] sm:$0xff]
    %v1432 = vld [vmem:[#allocation7 + $0x18] sm:$0xff]
    %v1433 = vld [vmem:[#allocation7 + $0x20] sm:$0xff]
    %v1434 = vld [vmem:[#allocation7 + $0x28] sm:$0xff]
    %v1435 = vld [vmem:[#allocation7 + $0x30] sm:$0xff]
    %v1436 = vld [vmem:[#allocation7 + $0x38] sm:$0xff]
    %v1437 = vld [vmem:[#allocation7 + $0x40] sm:$0xff]
    %v1438 = vld [vmem:[#allocation7 + $0x48] sm:$0xff]
    %v1439 = vld [vmem:[#allocation7 + $0x50] sm:$0xff]
    %v1440 = vld [vmem:[#allocation7 + $0x58] sm:$0xff]
    %v1441 = vld [vmem:[#allocation7 + $0x60] sm:$0xff]
    %v1442 = vld [vmem:[#allocation7 + $0x68] sm:$0xff]
    %v1443 = vld [vmem:[#allocation7 + $0x70] sm:$0xff]
    %v1444 = vld [vmem:[#allocation7 + $0x78] sm:$0xff]
    %v1445 = vld [vmem:[#allocation7 + $0x80] sm:$0xff]
    %v1446 = vld [vmem:[#allocation7 + $0x88] sm:$0xff]
    %v1447 = vld [vmem:[#allocation7 + $0x90] sm:$0xff]
    %v1448 = vld [vmem:[#allocation7 + $0x98] sm:$0xff]
    %v1449 = vld [vmem:[#allocation7 + $0xa0] sm:$0xff]
    %v1450 = vld [vmem:[#allocation7 + $0xa8] sm:$0xff]
    %v1451 = vld [vmem:[#allocation7 + $0xb0] sm:$0xff]
    %v1452 = vld [vmem:[#allocation7 + $0xb8] sm:$0xff]
    %v1453 = vld [vmem:[#allocation7 + $0xc0] sm:$0xff]
    %v1454 = vld [vmem:[#allocation7 + $0xc8] sm:$0xff]
    %v1455 = vld [vmem:[#allocation7 + $0xd0] sm:$0xff]
    %v1456 = vld [vmem:[#allocation7 + $0xd8] sm:$0xff]
    %v1457 = vld [vmem:[#allocation7 + $0xe0] sm:$0xff]
    %v1458 = vld [vmem:[#allocation7 + $0xe8] sm:$0xff]
    %v1459 = vld [vmem:[#allocation7 + $0xf0] sm:$0xff]
    %v1460 = vld [vmem:[#allocation7 + $0xf8] sm:$0xff]
    %v1461 = vld [vmem:[#allocation7 + $0x100] sm:$0xff]
    %v1462 = vld [vmem:[#allocation7 + $0x108] sm:$0xff]
    %v1463 = vld [vmem:[#allocation7 + $0x110] sm:$0xff]
    %v1464 = vld [vmem:[#allocation7 + $0x118] sm:$0xff]
    %v1465 = vld [vmem:[#allocation7 + $0x120] sm:$0xff]
    %v1466 = vld [vmem:[#allocation7 + $0x128] sm:$0xff]
    %v1467 = vld [vmem:[#allocation7 + $0x130] sm:$0xff]
    %v1468 = vld [vmem:[#allocation7 + $0x138] sm:$0xff]
    %v1469 = vld [vmem:[#allocation7 + $0x140] sm:$0xff]
    %v1470 = vld [vmem:[#allocation7 + $0x148] sm:$0xff]
    %v1471 = vld [vmem:[#allocation7 + $0x150] sm:$0xff]
    %v1472 = vld [vmem:[#allocation7 + $0x158] sm:$0xff]
    %v1473 = vld [vmem:[#allocation7 + $0x160] sm:$0xff]
    %v1474 = vld [vmem:[#allocation7 + $0x168] sm:$0xff]
    %v1475 = vld [vmem:[#allocation7 + $0x170] sm:$0xff]
    %v1476 = vld [vmem:[#allocation7 + $0x178] sm:$0xff]
    %v1477 = vld [vmem:[#allocation7 + $0x180] sm:$0xff]
    %v1478 = vld [vmem:[#allocation7 + $0x188] sm:$0xff]
    %v1479 = vld [vmem:[#allocation7 + $0x190] sm:$0xff]
    %v1480 = vld [vmem:[#allocation7 + $0x198] sm:$0xff]
    %v1481 = vld [vmem:[#allocation7 + $0x1a0] sm:$0xff]
    %v1482 = vld [vmem:[#allocation7 + $0x1a8] sm:$0xff]
    %v1483 = vld [vmem:[#allocation7 + $0x1b0] sm:$0xff]
    %v1484 = vld [vmem:[#allocation7 + $0x1b8] sm:$0xff]
    %v1485 = vld [vmem:[#allocation7 + $0x1c0] sm:$0xff]
    %v1486 = vld [vmem:[#allocation7 + $0x1c8] sm:$0xff]
    %v1487 = vld [vmem:[#allocation7 + $0x1d0] sm:$0xff]
    %v1488 = vld [vmem:[#allocation7 + $0x1d8] sm:$0xff]
    %v1489 = vld [vmem:[#allocation7 + $0x1e0] sm:$0xff]
    %v1490 = vld [vmem:[#allocation7 + $0x1e8] sm:$0xff]
    %v1491 = vld [vmem:[#allocation7 + $0x1f0] sm:$0xff]
    %v1492 = vld [vmem:[#allocation7 + $0x1f8] sm:$0xff]
    %1493 = vmatprep.subr.mxu0 %v1430
    %1494 = vmatpush1.msra.mxu0 %v1429
    %1495 = vmatprep.subr.mxu0 %v1434
    %1496 = vmatpush1.msra.mxu0 %v1433
    %1497 = vmatprep.subr.mxu0 %v1438
    %1498 = vmatpush1.msra.mxu0 %v1437
    %1499 = vmatprep.subr.mxu0 %v1442
    %1500 = vmatpush1.msra.mxu0 %v1441
    %1501 = vmatprep.subr.mxu0 %v1446
    %1502 = vmatpush1.msra.mxu0 %v1445
    %1503 = vmatprep.subr.mxu0 %v1450
    %1504 = vmatpush1.msra.mxu0 %v1449
    %1505 = vmatprep.subr.mxu0 %v1454
    %1506 = vmatpush1.msra.mxu0 %v1453
    %1507 = vmatprep.subr.mxu0 %v1458
    %1508 = vmatpush1.msra.mxu0 %v1457
    %1509 = vmatprep.subr.mxu0 %v1462
    %1510 = vmatpush1.msra.mxu0 %v1461
    %1511 = vmatprep.subr.mxu0 %v1466
    %1512 = vmatpush1.msra.mxu0 %v1465
    %1513 = vmatprep.subr.mxu0 %v1470
    %1514 = vmatpush1.msra.mxu0 %v1469
    %1515 = vmatprep.subr.mxu0 %v1474
    %1516 = vmatpush1.msra.mxu0 %v1473
    %1517 = vmatprep.subr.mxu0 %v1478
    %1518 = vmatpush1.msra.mxu0 %v1477
    %1519 = vmatprep.subr.mxu0 %v1482
    %1520 = vmatpush1.msra.mxu0 %v1481
    %1521 = vmatprep.subr.mxu0 %v1486
    %1522 = vmatpush1.msra.mxu0 %v1485
    %1523 = vmatprep.subr.mxu0 %v1490
    %1524 = vmatpush1.msra.mxu0 %v1489
    %1525 = vmatprep.subr.mxu0 0.0
    %1526 = vmatpush1.msra.mxu0 0.0
    %1527 = vmatprep.subr.mxu0 0.0
    %1528 = vmatpush1.msra.mxu0 0.0
    %1529 = vmatprep.subr.mxu0 0.0
    %1530 = vmatpush1.msra.mxu0 0.0
    %1531 = vmatprep.subr.mxu0 0.0
    %1532 = vmatpush1.msra.mxu0 0.0
    %1533 = vmatprep.subr.mxu0 0.0
    %1534 = vmatpush1.msra.mxu0 0.0
    %1535 = vmatprep.subr.mxu0 0.0
    %1536 = vmatpush1.msra.mxu0 0.0
    %1537 = vmatprep.subr.mxu0 0.0
    %1538 = vmatpush1.msra.mxu0 0.0
    %1539 = vmatprep.subr.mxu0 0.0
    %1540 = vmatpush1.msra.mxu0 0.0
    %1541 = vmatprep.subr.mxu0 0.0
    %1542 = vmatpush1.msra.mxu0 0.0
    %1543 = vmatprep.subr.mxu0 0.0
    %1544 = vmatpush1.msra.mxu0 0.0
    %1545 = vmatprep.subr.mxu0 0.0
    %1546 = vmatpush1.msra.mxu0 0.0
    %1547 = vmatprep.subr.mxu0 0.0
    %1548 = vmatpush1.msra.mxu0 0.0
    %1549 = vmatprep.subr.mxu0 0.0
    %1550 = vmatpush1.msra.mxu0 0.0
    %1551 = vmatprep.subr.mxu0 0.0
    %1552 = vmatpush1.msra.mxu0 0.0
    %1553 = vmatprep.subr.mxu0 0.0
    %1554 = vmatpush1.msra.mxu0 0.0
    %1555 = vmatprep.subr.mxu0 0.0
    %1556 = vmatpush1.msra.mxu0 0.0
    %1557 = vmatprep.mubr.f32.mxu0 0.0
    %1558 = vmatmul.mubr.f32.gmra.mrb[0].mxu0 %v1423
    %v1559 = vpop.f32.mrb[0].mxu0
    %v1560 = vadd.f32 0.0, %v1559
    %v1561 = vpop.f32.mrb[0].mxu0
    %v1562 = vadd.f32 0.0, %v1561
    %1563 = vdwg.mxu0
    %1564 = vmatprep.subr.mxu0 %v1432
    %1565 = vmatpush1.msra.mxu0 %v1431
    %1566 = vmatprep.subr.mxu0 %v1436
    %1567 = vmatpush1.msra.mxu0 %v1435
    %1568 = vmatprep.subr.mxu0 %v1440
    %1569 = vmatpush1.msra.mxu0 %v1439
    %1570 = vmatprep.subr.mxu0 %v1444
    %1571 = vmatpush1.msra.mxu0 %v1443
    %1572 = vmatprep.subr.mxu0 %v1448
    %1573 = vmatpush1.msra.mxu0 %v1447
    %1574 = vmatprep.subr.mxu0 %v1452
    %1575 = vmatpush1.msra.mxu0 %v1451
    %1576 = vmatprep.subr.mxu0 %v1456
    %1577 = vmatpush1.msra.mxu0 %v1455
    %1578 = vmatprep.subr.mxu0 %v1460
    %1579 = vmatpush1.msra.mxu0 %v1459
    %1580 = vmatprep.subr.mxu0 %v1464
    %1581 = vmatpush1.msra.mxu0 %v1463
    %1582 = vmatprep.subr.mxu0 %v1468
    %1583 = vmatpush1.msra.mxu0 %v1467
    %1584 = vmatprep.subr.mxu0 %v1472
    %1585 = vmatpush1.msra.mxu0 %v1471
    %1586 = vmatprep.subr.mxu0 %v1476
    %1587 = vmatpush1.msra.mxu0 %v1475
    %1588 = vmatprep.subr.mxu0 %v1480
    %1589 = vmatpush1.msra.mxu0 %v1479
    %1590 = vmatprep.subr.mxu0 %v1484
    %1591 = vmatpush1.msra.mxu0 %v1483
    %1592 = vmatprep.subr.mxu0 %v1488
    %1593 = vmatpush1.msra.mxu0 %v1487
    %1594 = vmatprep.subr.mxu0 %v1492
    %1595 = vmatpush1.msra.mxu0 %v1491
    %1596 = vmatprep.subr.mxu0 0.0
    %1597 = vmatpush1.msra.mxu0 0.0
    %1598 = vmatprep.subr.mxu0 0.0
    %1599 = vmatpush1.msra.mxu0 0.0
    %1600 = vmatprep.subr.mxu0 0.0
    %1601 = vmatpush1.msra.mxu0 0.0
    %1602 = vmatprep.subr.mxu0 0.0
    %1603 = vmatpush1.msra.mxu0 0.0
    %1604 = vmatprep.subr.mxu0 0.0
    %1605 = vmatpush1.msra.mxu0 0.0
    %1606 = vmatprep.subr.mxu0 0.0
    %1607 = vmatpush1.msra.mxu0 0.0
    %1608 = vmatprep.subr.mxu0 0.0
    %1609 = vmatpush1.msra.mxu0 0.0
    %1610 = vmatprep.subr.mxu0 0.0
    %1611 = vmatpush1.msra.mxu0 0.0
    %1612 = vmatprep.subr.mxu0 0.0
    %1613 = vmatpush1.msra.mxu0 0.0
    %1614 = vmatprep.subr.mxu0 0.0
    %1615 = vmatpush1.msra.mxu0 0.0
    %1616 = vmatprep.subr.mxu0 0.0
    %1617 = vmatpush1.msra.mxu0 0.0
    %1618 = vmatprep.subr.mxu0 0.0
    %1619 = vmatpush1.msra.mxu0 0.0
    %1620 = vmatprep.subr.mxu0 0.0
    %1621 = vmatpush1.msra.mxu0 0.0
    %1622 = vmatprep.subr.mxu0 0.0
    %1623 = vmatpush1.msra.mxu0 0.0
    %1624 = vmatprep.subr.mxu0 0.0
    %1625 = vmatpush1.msra.mxu0 0.0
    %1626 = vmatprep.subr.mxu0 0.0
    %1627 = vmatpush1.msra.mxu0 0.0
    %1628 = vmatprep.mubr.f32.mxu0 0.0
    %1629 = vmatmul.mubr.f32.gmra.mrb[0].mxu0 %v1423
    %v1630 = vpop.f32.mrb[0].mxu0
    %v1631 = vadd.f32 0.0, %v1630
    %v1632 = vpop.f32.mrb[0].mxu0
    %v1633 = vadd.f32 0.0, %v1632
    %1634 = vdwg.mxu0
    %v1635 = vadd.f32 %v1425, %v1560
    %v1636 = vadd.f32 %v1426, %v1562
    %v1637 = vadd.f32 %v1427, %v1631
    %v1638 = vadd.f32 %v1428, %v1633
    %v1639 = vxor.u32 %v1635, 2147483648
    %v1640 = vmul.f32 %v1639, 1.442695
    %v1641 = vpow.pop %v1640
    %v1642 = vadd.f32 %v1641, 1.0
    %v1643 = vrcp.pop %v1642
    %v1644 = vmul.f32 1.0, %v1643
    %v1645 = vxor.u32 %v1636, 2147483648
    %v1646 = vmul.f32 %v1645, 1.442695
    %v1647 = vpow.pop %v1646
    %v1648 = vadd.f32 %v1647, 1.0
    %v1649 = vrcp.pop %v1648
    %v1650 = vmul.f32 1.0, %v1649
    %v1651 = vtanh.pop %v1637
    %v1652 = vxor.u32 %v1638, 2147483648
    %v1653 = vmul.f32 %v1652, 1.442695
    %v1654 = vpow.pop %v1653
    %v1655 = vadd.f32 %v1654, 1.0
    %v1656 = vrcp.pop %v1655
    %v1657 = vmul.f32 1.0, %v1656
    %v1658 = vmul.f32 %v1650, %v1421
    %v1659 = vmul.f32 %v1644, %v1651
    %v1660 = vadd.f32 %v1658, %v1659
    %v1661 = vtanh.pop %v1660
    %v1662 = vmul.f32 %v1657, %v1661
    %1663 = vst [vmem:[#allocation3 + $0x8] sm:$0xff] %v1662
    %v1664 = vld [vmem:[%s345] sm:$0xff]
    %v1665 = vld [vmem:[%s345 + $0x8] sm:$0xff]
    %v1666 = vld [vmem:[%s345 + $0x10] sm:$0xff]
    %v1667 = vld [vmem:[%s345 + $0x18] sm:$0xff]
    %v1668 = vld [vmem:[#allocation7] sm:$0xff]
    %v1669 = vld [vmem:[#allocation7 + $0x8] sm:$0xff]
    %v1670 = vld [vmem:[#allocation7 + $0x10] sm:$0xff]
    %v1671 = vld [vmem:[#allocation7 + $0x18] sm:$0xff]
    %v1672 = vld [vmem:[#allocation7 + $0x20] sm:$0xff]
    %v1673 = vld [vmem:[#allocation7 + $0x28] sm:$0xff]
    %v1674 = vld [vmem:[#allocation7 + $0x30] sm:$0xff]
    %v1675 = vld [vmem:[#allocation7 + $0x38] sm:$0xff]
    %v1676 = vld [vmem:[#allocation7 + $0x40] sm:$0xff]
    %v1677 = vld [vmem:[#allocation7 + $0x48] sm:$0xff]
    %v1678 = vld [vmem:[#allocation7 + $0x50] sm:$0xff]
    %v1679 = vld [vmem:[#allocation7 + $0x58] sm:$0xff]
    %v1680 = vld [vmem:[#allocation7 + $0x60] sm:$0xff]
    %v1681 = vld [vmem:[#allocation7 + $0x68] sm:$0xff]
    %v1682 = vld [vmem:[#allocation7 + $0x70] sm:$0xff]
    %v1683 = vld [vmem:[#allocation7 + $0x78] sm:$0xff]
    %v1684 = vld [vmem:[#allocation7 + $0x80] sm:$0xff]
    %v1685 = vld [vmem:[#allocation7 + $0x88] sm:$0xff]
    %v1686 = vld [vmem:[#allocation7 + $0x90] sm:$0xff]
    %v1687 = vld [vmem:[#allocation7 + $0x98] sm:$0xff]
    %v1688 = vld [vmem:[#allocation7 + $0xa0] sm:$0xff]
    %v1689 = vld [vmem:[#allocation7 + $0xa8] sm:$0xff]
    %v1690 = vld [vmem:[#allocation7 + $0xb0] sm:$0xff]
    %v1691 = vld [vmem:[#allocation7 + $0xb8] sm:$0xff]
    %v1692 = vld [vmem:[#allocation7 + $0xc0] sm:$0xff]
    %v1693 = vld [vmem:[#allocation7 + $0xc8] sm:$0xff]
    %v1694 = vld [vmem:[#allocation7 + $0xd0] sm:$0xff]
    %v1695 = vld [vmem:[#allocation7 + $0xd8] sm:$0xff]
    %v1696 = vld [vmem:[#allocation7 + $0xe0] sm:$0xff]
    %v1697 = vld [vmem:[#allocation7 + $0xe8] sm:$0xff]
    %v1698 = vld [vmem:[#allocation7 + $0xf0] sm:$0xff]
    %v1699 = vld [vmem:[#allocation7 + $0xf8] sm:$0xff]
    %v1700 = vld [vmem:[#allocation7 + $0x100] sm:$0xff]
    %v1701 = vld [vmem:[#allocation7 + $0x108] sm:$0xff]
    %v1702 = vld [vmem:[#allocation7 + $0x110] sm:$0xff]
    %v1703 = vld [vmem:[#allocation7 + $0x118] sm:$0xff]
    %v1704 = vld [vmem:[#allocation7 + $0x120] sm:$0xff]
    %v1705 = vld [vmem:[#allocation7 + $0x128] sm:$0xff]
    %v1706 = vld [vmem:[#allocation7 + $0x130] sm:$0xff]
    %v1707 = vld [vmem:[#allocation7 + $0x138] sm:$0xff]
    %v1708 = vld [vmem:[#allocation7 + $0x140] sm:$0xff]
    %v1709 = vld [vmem:[#allocation7 + $0x148] sm:$0xff]
    %v1710 = vld [vmem:[#allocation7 + $0x150] sm:$0xff]
    %v1711 = vld [vmem:[#allocation7 + $0x158] sm:$0xff]
    %v1712 = vld [vmem:[#allocation7 + $0x160] sm:$0xff]
    %v1713 = vld [vmem:[#allocation7 + $0x168] sm:$0xff]
    %v1714 = vld [vmem:[#allocation7 + $0x170] sm:$0xff]
    %v1715 = vld [vmem:[#allocation7 + $0x178] sm:$0xff]
    %v1716 = vld [vmem:[#allocation7 + $0x180] sm:$0xff]
    %v1717 = vld [vmem:[#allocation7 + $0x188] sm:$0xff]
    %v1718 = vld [vmem:[#allocation7 + $0x190] sm:$0xff]
    %v1719 = vld [vmem:[#allocation7 + $0x198] sm:$0xff]
    %v1720 = vld [vmem:[#allocation7 + $0x1a0] sm:$0xff]
    %v1721 = vld [vmem:[#allocation7 + $0x1a8] sm:$0xff]
    %v1722 = vld [vmem:[#allocation7 + $0x1b0] sm:$0xff]
    %v1723 = vld [vmem:[#allocation7 + $0x1b8] sm:$0xff]
    %v1724 = vld [vmem:[#allocation7 + $0x1c0] sm:$0xff]
    %v1725 = vld [vmem:[#allocation7 + $0x1c8] sm:$0xff]
    %v1726 = vld [vmem:[#allocation7 + $0x1d0] sm:$0xff]
    %v1727 = vld [vmem:[#allocation7 + $0x1d8] sm:$0xff]
    %v1728 = vld [vmem:[#allocation7 + $0x1e0] sm:$0xff]
    %v1729 = vld [vmem:[#allocation7 + $0x1e8] sm:$0xff]
    %v1730 = vld [vmem:[#allocation7 + $0x1f0] sm:$0xff]
    %v1731 = vld [vmem:[#allocation7 + $0x1f8] sm:$0xff]
    %1732 = vmatprep.subr.mxu0 %v1669
    %1733 = vmatpush1.msra.mxu0 %v1668
    %1734 = vmatprep.subr.mxu0 %v1673
    %1735 = vmatpush1.msra.mxu0 %v1672
    %1736 = vmatprep.subr.mxu0 %v1677
    %1737 = vmatpush1.msra.mxu0 %v1676
    %1738 = vmatprep.subr.mxu0 %v1681
    %1739 = vmatpush1.msra.mxu0 %v1680
    %1740 = vmatprep.subr.mxu0 %v1685
    %1741 = vmatpush1.msra.mxu0 %v1684
    %1742 = vmatprep.subr.mxu0 %v1689
    %1743 = vmatpush1.msra.mxu0 %v1688
    %1744 = vmatprep.subr.mxu0 %v1693
    %1745 = vmatpush1.msra.mxu0 %v1692
    %1746 = vmatprep.subr.mxu0 %v1697
    %1747 = vmatpush1.msra.mxu0 %v1696
    %1748 = vmatprep.subr.mxu0 %v1701
    %1749 = vmatpush1.msra.mxu0 %v1700
    %1750 = vmatprep.subr.mxu0 %v1705
    %1751 = vmatpush1.msra.mxu0 %v1704
    %1752 = vmatprep.subr.mxu0 %v1709
    %1753 = vmatpush1.msra.mxu0 %v1708
    %1754 = vmatprep.subr.mxu0 %v1713
    %1755 = vmatpush1.msra.mxu0 %v1712
    %1756 = vmatprep.subr.mxu0 %v1717
    %1757 = vmatpush1.msra.mxu0 %v1716
    %1758 = vmatprep.subr.mxu0 %v1721
    %1759 = vmatpush1.msra.mxu0 %v1720
    %1760 = vmatprep.subr.mxu0 %v1725
    %1761 = vmatpush1.msra.mxu0 %v1724
    %1762 = vmatprep.subr.mxu0 %v1729
    %1763 = vmatpush1.msra.mxu0 %v1728
    %1764 = vmatprep.subr.mxu0 0.0
    %1765 = vmatpush1.msra.mxu0 0.0
    %1766 = vmatprep.subr.mxu0 0.0
    %1767 = vmatpush1.msra.mxu0 0.0
    %1768 = vmatprep.subr.mxu0 0.0
    %1769 = vmatpush1.msra.mxu0 0.0
    %1770 = vmatprep.subr.mxu0 0.0
    %1771 = vmatpush1.msra.mxu0 0.0
    %1772 = vmatprep.subr.mxu0 0.0
    %1773 = vmatpush1.msra.mxu0 0.0
    %1774 = vmatprep.subr.mxu0 0.0
    %1775 = vmatpush1.msra.mxu0 0.0
    %1776 = vmatprep.subr.mxu0 0.0
    %1777 = vmatpush1.msra.mxu0 0.0
    %1778 = vmatprep.subr.mxu0 0.0
    %1779 = vmatpush1.msra.mxu0 0.0
    %1780 = vmatprep.subr.mxu0 0.0
    %1781 = vmatpush1.msra.mxu0 0.0
    %1782 = vmatprep.subr.mxu0 0.0
    %1783 = vmatpush1.msra.mxu0 0.0
    %1784 = vmatprep.subr.mxu0 0.0
    %1785 = vmatpush1.msra.mxu0 0.0
    %1786 = vmatprep.subr.mxu0 0.0
    %1787 = vmatpush1.msra.mxu0 0.0
    %1788 = vmatprep.subr.mxu0 0.0
    %1789 = vmatpush1.msra.mxu0 0.0
    %1790 = vmatprep.subr.mxu0 0.0
    %1791 = vmatpush1.msra.mxu0 0.0
    %1792 = vmatprep.subr.mxu0 0.0
    %1793 = vmatpush1.msra.mxu0 0.0
    %1794 = vmatprep.subr.mxu0 0.0
    %1795 = vmatpush1.msra.mxu0 0.0
    %1796 = vmatprep.mubr.f32.mxu0 0.0
    %1797 = vmatmul.mubr.f32.gmra.mrb[0].mxu0 %v1662
    %v1798 = vpop.f32.mrb[0].mxu0
    %v1799 = vadd.f32 0.0, %v1798
    %v1800 = vpop.f32.mrb[0].mxu0
    %v1801 = vadd.f32 0.0, %v1800
    %1802 = vdwg.mxu0
    %1803 = vmatprep.subr.mxu0 %v1671
    %1804 = vmatpush1.msra.mxu0 %v1670
    %1805 = vmatprep.subr.mxu0 %v1675
    %1806 = vmatpush1.msra.mxu0 %v1674
    %1807 = vmatprep.subr.mxu0 %v1679
    %1808 = vmatpush1.msra.mxu0 %v1678
    %1809 = vmatprep.subr.mxu0 %v1683
    %1810 = vmatpush1.msra.mxu0 %v1682
    %1811 = vmatprep.subr.mxu0 %v1687
    %1812 = vmatpush1.msra.mxu0 %v1686
    %1813 = vmatprep.subr.mxu0 %v1691
    %1814 = vmatpush1.msra.mxu0 %v1690
    %1815 = vmatprep.subr.mxu0 %v1695
    %1816 = vmatpush1.msra.mxu0 %v1694
    %1817 = vmatprep.subr.mxu0 %v1699
    %1818 = vmatpush1.msra.mxu0 %v1698
    %1819 = vmatprep.subr.mxu0 %v1703
    %1820 = vmatpush1.msra.mxu0 %v1702
    %1821 = vmatprep.subr.mxu0 %v1707
    %1822 = vmatpush1.msra.mxu0 %v1706
    %1823 = vmatprep.subr.mxu0 %v1711
    %1824 = vmatpush1.msra.mxu0 %v1710
    %1825 = vmatprep.subr.mxu0 %v1715
    %1826 = vmatpush1.msra.mxu0 %v1714
    %1827 = vmatprep.subr.mxu0 %v1719
    %1828 = vmatpush1.msra.mxu0 %v1718
    %1829 = vmatprep.subr.mxu0 %v1723
    %1830 = vmatpush1.msra.mxu0 %v1722
    %1831 = vmatprep.subr.mxu0 %v1727
    %1832 = vmatpush1.msra.mxu0 %v1726
    %1833 = vmatprep.subr.mxu0 %v1731
    %1834 = vmatpush1.msra.mxu0 %v1730
    %1835 = vmatprep.subr.mxu0 0.0
    %1836 = vmatpush1.msra.mxu0 0.0
    %1837 = vmatprep.subr.mxu0 0.0
    %1838 = vmatpush1.msra.mxu0 0.0
    %1839 = vmatprep.subr.mxu0 0.0
    %1840 = vmatpush1.msra.mxu0 0.0
    %1841 = vmatprep.subr.mxu0 0.0
    %1842 = vmatpush1.msra.mxu0 0.0
    %1843 = vmatprep.subr.mxu0 0.0
    %1844 = vmatpush1.msra.mxu0 0.0
    %1845 = vmatprep.subr.mxu0 0.0
    %1846 = vmatpush1.msra.mxu0 0.0
    %1847 = vmatprep.subr.mxu0 0.0
    %1848 = vmatpush1.msra.mxu0 0.0
    %1849 = vmatprep.subr.mxu0 0.0
    %1850 = vmatpush1.msra.mxu0 0.0
    %1851 = vmatprep.subr.mxu0 0.0
    %1852 = vmatpush1.msra.mxu0 0.0
    %1853 = vmatprep.subr.mxu0 0.0
    %1854 = vmatpush1.msra.mxu0 0.0
    %1855 = vmatprep.subr.mxu0 0.0
    %1856 = vmatpush1.msra.mxu0 0.0
    %1857 = vmatprep.subr.mxu0 0.0
    %1858 = vmatpush1.msra.mxu0 0.0
    %1859 = vmatprep.subr.mxu0 0.0
    %1860 = vmatpush1.msra.mxu0 0.0
    %1861 = vmatprep.subr.mxu0 0.0
    %1862 = vmatpush1.msra.mxu0 0.0
    %1863 = vmatprep.subr.mxu0 0.0
    %1864 = vmatpush1.msra.mxu0 0.0
    %1865 = vmatprep.subr.mxu0 0.0
    %1866 = vmatpush1.msra.mxu0 0.0
    %1867 = vmatprep.mubr.f32.mxu0 0.0
    %1868 = vmatmul.mubr.f32.gmra.mrb[0].mxu0 %v1662
    %v1869 = vpop.f32.mrb[0].mxu0
    %v1870 = vadd.f32 0.0, %v1869
    %v1871 = vpop.f32.mrb[0].mxu0
    %v1872 = vadd.f32 0.0, %v1871
    %1873 = vdwg.mxu0
    %v1874 = vadd.f32 %v1664, %v1799
    %v1875 = vadd.f32 %v1665, %v1801
    %v1876 = vadd.f32 %v1666, %v1870
    %v1877 = vadd.f32 %v1667, %v1872
    %v1878 = vxor.u32 %v1874, 2147483648
    %v1879 = vmul.f32 %v1878, 1.442695
    %v1880 = vpow.pop %v1879
    %v1881 = vadd.f32 %v1880, 1.0
    %v1882 = vrcp.pop %v1881
    %v1883 = vmul.f32 1.0, %v1882
    %v1884 = vxor.u32 %v1875, 2147483648
    %v1885 = vmul.f32 %v1884, 1.442695
    %v1886 = vpow.pop %v1885
    %v1887 = vadd.f32 %v1886, 1.0
    %v1888 = vrcp.pop %v1887
    %v1889 = vmul.f32 1.0, %v1888
    %v1890 = vtanh.pop %v1876
    %v1891 = vxor.u32 %v1877, 2147483648
    %v1892 = vmul.f32 %v1891, 1.442695
    %v1893 = vpow.pop %v1892
    %v1894 = vadd.f32 %v1893, 1.0
    %v1895 = vrcp.pop %v1894
    %v1896 = vmul.f32 1.0, %v1895
    %v1897 = vmul.f32 %v1889, %v1660
    %v1898 = vmul.f32 %v1883, %v1890
    %v1899 = vadd.f32 %v1897, %v1898
    %v1900 = vtanh.pop %v1899
    %v1901 = vmul.f32 %v1896, %v1900
    %1902 = vst [vmem:[#allocation3 + $0x10] sm:$0xff] %v1901
    %v1903 = vld [vmem:[%s389] sm:$0xff]
    %v1904 = vld [vmem:[%s389 + $0x8] sm:$0xff]
    %v1905 = vld [vmem:[%s389 + $0x10] sm:$0xff]
    %v1906 = vld [vmem:[%s389 + $0x18] sm:$0xff]
    %v1907 = vld [vmem:[#allocation7] sm:$0xff]
    %v1908 = vld [vmem:[#allocation7 + $0x8] sm:$0xff]
    %v1909 = vld [vmem:[#allocation7 + $0x10] sm:$0xff]
    %v1910 = vld [vmem:[#allocation7 + $0x18] sm:$0xff]
    %v1911 = vld [vmem:[#allocation7 + $0x20] sm:$0xff]
    %v1912 = vld [vmem:[#allocation7 + $0x28] sm:$0xff]
    %v1913 = vld [vmem:[#allocation7 + $0x30] sm:$0xff]
    %v1914 = vld [vmem:[#allocation7 + $0x38] sm:$0xff]
    %v1915 = vld [vmem:[#allocation7 + $0x40] sm:$0xff]
    %v1916 = vld [vmem:[#allocation7 + $0x48] sm:$0xff]
    %v1917 = vld [vmem:[#allocation7 + $0x50] sm:$0xff]
    %v1918 = vld [vmem:[#allocation7 + $0x58] sm:$0xff]
    %v1919 = vld [vmem:[#allocation7 + $0x60] sm:$0xff]
    %v1920 = vld [vmem:[#allocation7 + $0x68] sm:$0xff]
    %v1921 = vld [vmem:[#allocation7 + $0x70] sm:$0xff]
    %v1922 = vld [vmem:[#allocation7 + $0x78] sm:$0xff]
    %v1923 = vld [vmem:[#allocation7 + $0x80] sm:$0xff]
    %v1924 = vld [vmem:[#allocation7 + $0x88] sm:$0xff]
    %v1925 = vld [vmem:[#allocation7 + $0x90] sm:$0xff]
    %v1926 = vld [vmem:[#allocation7 + $0x98] sm:$0xff]
    %v1927 = vld [vmem:[#allocation7 + $0xa0] sm:$0xff]
    %v1928 = vld [vmem:[#allocation7 + $0xa8] sm:$0xff]
    %v1929 = vld [vmem:[#allocation7 + $0xb0] sm:$0xff]
    %v1930 = vld [vmem:[#allocation7 + $0xb8] sm:$0xff]
    %v1931 = vld [vmem:[#allocation7 + $0xc0] sm:$0xff]
    %v1932 = vld [vmem:[#allocation7 + $0xc8] sm:$0xff]
    %v1933 = vld [vmem:[#allocation7 + $0xd0] sm:$0xff]
    %v1934 = vld [vmem:[#allocation7 + $0xd8] sm:$0xff]
    %v1935 = vld [vmem:[#allocation7 + $0xe0] sm:$0xff]
    %v1936 = vld [vmem:[#allocation7 + $0xe8] sm:$0xff]
    %v1937 = vld [vmem:[#allocation7 + $0xf0] sm:$0xff]
    %v1938 = vld [vmem:[#allocation7 + $0xf8] sm:$0xff]
    %v1939 = vld [vmem:[#allocation7 + $0x100] sm:$0xff]
    %v1940 = vld [vmem:[#allocation7 + $0x108] sm:$0xff]
    %v1941 = vld [vmem:[#allocation7 + $0x110] sm:$0xff]
    %v1942 = vld [vmem:[#allocation7 + $0x118] sm:$0xff]
    %v1943 = vld [vmem:[#allocation7 + $0x120] sm:$0xff]
    %v1944 = vld [vmem:[#allocation7 + $0x128] sm:$0xff]
    %v1945 = vld [vmem:[#allocation7 + $0x130] sm:$0xff]
    %v1946 = vld [vmem:[#allocation7 + $0x138] sm:$0xff]
    %v1947 = vld [vmem:[#allocation7 + $0x140] sm:$0xff]
    %v1948 = vld [vmem:[#allocation7 + $0x148] sm:$0xff]
    %v1949 = vld [vmem:[#allocation7 + $0x150] sm:$0xff]
    %v1950 = vld [vmem:[#allocation7 + $0x158] sm:$0xff]
    %v1951 = vld [vmem:[#allocation7 + $0x160] sm:$0xff]
    %v1952 = vld [vmem:[#allocation7 + $0x168] sm:$0xff]
    %v1953 = vld [vmem:[#allocation7 + $0x170] sm:$0xff]
    %v1954 = vld [vmem:[#allocation7 + $0x178] sm:$0xff]
    %v1955 = vld [vmem:[#allocation7 + $0x180] sm:$0xff]
    %v1956 = vld [vmem:[#allocation7 + $0x188] sm:$0xff]
    %v1957 = vld [vmem:[#allocation7 + $0x190] sm:$0xff]
    %v1958 = vld [vmem:[#allocation7 + $0x198] sm:$0xff]
    %v1959 = vld [vmem:[#allocation7 + $0x1a0] sm:$0xff]
    %v1960 = vld [vmem:[#allocation7 + $0x1a8] sm:$0xff]
    %v1961 = vld [vmem:[#allocation7 + $0x1b0] sm:$0xff]
    %v1962 = vld [vmem:[#allocation7 + $0x1b8] sm:$0xff]
    %v1963 = vld [vmem:[#allocation7 + $0x1c0] sm:$0xff]
    %v1964 = vld [vmem:[#allocation7 + $0x1c8] sm:$0xff]
    %v1965 = vld [vmem:[#allocation7 + $0x1d0] sm:$0xff]
    %v1966 = vld [vmem:[#allocation7 + $0x1d8] sm:$0xff]
    %v1967 = vld [vmem:[#allocation7 + $0x1e0] sm:$0xff]
    %v1968 = vld [vmem:[#allocation7 + $0x1e8] sm:$0xff]
    %v1969 = vld [vmem:[#allocation7 + $0x1f0] sm:$0xff]
    %v1970 = vld [vmem:[#allocation7 + $0x1f8] sm:$0xff]
    %1971 = vmatprep.subr.mxu0 %v1908
    %1972 = vmatpush1.msra.mxu0 %v1907
    %1973 = vmatprep.subr.mxu0 %v1912
    %1974 = vmatpush1.msra.mxu0 %v1911
    %1975 = vmatprep.subr.mxu0 %v1916
    %1976 = vmatpush1.msra.mxu0 %v1915
    %1977 = vmatprep.subr.mxu0 %v1920
    %1978 = vmatpush1.msra.mxu0 %v1919
    %1979 = vmatprep.subr.mxu0 %v1924
    %1980 = vmatpush1.msra.mxu0 %v1923
    %1981 = vmatprep.subr.mxu0 %v1928
    %1982 = vmatpush1.msra.mxu0 %v1927
    %1983 = vmatprep.subr.mxu0 %v1932
    %1984 = vmatpush1.msra.mxu0 %v1931
    %1985 = vmatprep.subr.mxu0 %v1936
    %1986 = vmatpush1.msra.mxu0 %v1935
    %1987 = vmatprep.subr.mxu0 %v1940
    %1988 = vmatpush1.msra.mxu0 %v1939
    %1989 = vmatprep.subr.mxu0 %v1944
    %1990 = vmatpush1.msra.mxu0 %v1943
    %1991 = vmatprep.subr.mxu0 %v1948
    %1992 = vmatpush1.msra.mxu0 %v1947
    %1993 = vmatprep.subr.mxu0 %v1952
    %1994 = vmatpush1.msra.mxu0 %v1951
    %1995 = vmatprep.subr.mxu0 %v1956
    %1996 = vmatpush1.msra.mxu0 %v1955
    %1997 = vmatprep.subr.mxu0 %v1960
    %1998 = vmatpush1.msra.mxu0 %v1959
    %1999 = vmatprep.subr.mxu0 %v1964
    %2000 = vmatpush1.msra.mxu0 %v1963
    %2001 = vmatprep.subr.mxu0 %v1968
    %2002 = vmatpush1.msra.mxu0 %v1967
    %2003 = vmatprep.subr.mxu0 0.0
    %2004 = vmatpush1.msra.mxu0 0.0
    %2005 = vmatprep.subr.mxu0 0.0
    %2006 = vmatpush1.msra.mxu0 0.0
    %2007 = vmatprep.subr.mxu0 0.0
    %2008 = vmatpush1.msra.mxu0 0.0
    %2009 = vmatprep.subr.mxu0 0.0
    %2010 = vmatpush1.msra.mxu0 0.0
    %2011 = vmatprep.subr.mxu0 0.0
    %2012 = vmatpush1.msra.mxu0 0.0
    %2013 = vmatprep.subr.mxu0 0.0
    %2014 = vmatpush1.msra.mxu0 0.0
    %2015 = vmatprep.subr.mxu0 0.0
    %2016 = vmatpush1.msra.mxu0 0.0
    %2017 = vmatprep.subr.mxu0 0.0
    %2018 = vmatpush1.msra.mxu0 0.0
    %2019 = vmatprep.subr.mxu0 0.0
    %2020 = vmatpush1.msra.mxu0 0.0
    %2021 = vmatprep.subr.mxu0 0.0
    %2022 = vmatpush1.msra.mxu0 0.0
    %2023 = vmatprep.subr.mxu0 0.0
    %2024 = vmatpush1.msra.mxu0 0.0
    %2025 = vmatprep.subr.mxu0 0.0
    %2026 = vmatpush1.msra.mxu0 0.0
    %2027 = vmatprep.subr.mxu0 0.0
    %2028 = vmatpush1.msra.mxu0 0.0
    %2029 = vmatprep.subr.mxu0 0.0
    %2030 = vmatpush1.msra.mxu0 0.0
    %2031 = vmatprep.subr.mxu0 0.0
    %2032 = vmatpush1.msra.mxu0 0.0
    %2033 = vmatprep.subr.mxu0 0.0
    %2034 = vmatpush1.msra.mxu0 0.0
    %2035 = vmatprep.mubr.f32.mxu0 0.0
    %2036 = vmatmul.mubr.f32.gmra.mrb[0].mxu0 %v1901
    %v2037 = vpop.f32.mrb[0].mxu0
    %v2038 = vadd.f32 0.0, %v2037
    %v2039 = vpop.f32.mrb[0].mxu0
    %v2040 = vadd.f32 0.0, %v2039
    %2041 = vdwg.mxu0
    %2042 = vmatprep.subr.mxu0 %v1910
    %2043 = vmatpush1.msra.mxu0 %v1909
    %2044 = vmatprep.subr.mxu0 %v1914
    %2045 = vmatpush1.msra.mxu0 %v1913
    %2046 = vmatprep.subr.mxu0 %v1918
    %2047 = vmatpush1.msra.mxu0 %v1917
    %2048 = vmatprep.subr.mxu0 %v1922
    %2049 = vmatpush1.msra.mxu0 %v1921
    %2050 = vmatprep.subr.mxu0 %v1926
    %2051 = vmatpush1.msra.mxu0 %v1925
    %2052 = vmatprep.subr.mxu0 %v1930
    %2053 = vmatpush1.msra.mxu0 %v1929
    %2054 = vmatprep.subr.mxu0 %v1934
    %2055 = vmatpush1.msra.mxu0 %v1933
    %2056 = vmatprep.subr.mxu0 %v1938
    %2057 = vmatpush1.msra.mxu0 %v1937
    %2058 = vmatprep.subr.mxu0 %v1942
    %2059 = vmatpush1.msra.mxu0 %v1941
    %2060 = vmatprep.subr.mxu0 %v1946
    %2061 = vmatpush1.msra.mxu0 %v1945
    %2062 = vmatprep.subr.mxu0 %v1950
    %2063 = vmatpush1.msra.mxu0 %v1949
    %2064 = vmatprep.subr.mxu0 %v1954
    %2065 = vmatpush1.msra.mxu0 %v1953
    %2066 = vmatprep.subr.mxu0 %v1958
    %2067 = vmatpush1.msra.mxu0 %v1957
    %2068 = vmatprep.subr.mxu0 %v1962
    %2069 = vmatpush1.msra.mxu0 %v1961
    %2070 = vmatprep.subr.mxu0 %v1966
    %2071 = vmatpush1.msra.mxu0 %v1965
    %2072 = vmatprep.subr.mxu0 %v1970
    %2073 = vmatpush1.msra.mxu0 %v1969
    %2074 = vmatprep.subr.mxu0 0.0
    %2075 = vmatpush1.msra.mxu0 0.0
    %2076 = vmatprep.subr.mxu0 0.0
    %2077 = vmatpush1.msra.mxu0 0.0
    %2078 = vmatprep.subr.mxu0 0.0
    %2079 = vmatpush1.msra.mxu0 0.0
    %2080 = vmatprep.subr.mxu0 0.0
    %2081 = vmatpush1.msra.mxu0 0.0
    %2082 = vmatprep.subr.mxu0 0.0
    %2083 = vmatpush1.msra.mxu0 0.0
    %2084 = vmatprep.subr.mxu0 0.0
    %2085 = vmatpush1.msra.mxu0 0.0
    %2086 = vmatprep.subr.mxu0 0.0
    %2087 = vmatpush1.msra.mxu0 0.0
    %2088 = vmatprep.subr.mxu0 0.0
    %2089 = vmatpush1.msra.mxu0 0.0
    %2090 = vmatprep.subr.mxu0 0.0
    %2091 = vmatpush1.msra.mxu0 0.0
    %2092 = vmatprep.subr.mxu0 0.0
    %2093 = vmatpush1.msra.mxu0 0.0
    %2094 = vmatprep.subr.mxu0 0.0
    %2095 = vmatpush1.msra.mxu0 0.0
    %2096 = vmatprep.subr.mxu0 0.0
    %2097 = vmatpush1.msra.mxu0 0.0
    %2098 = vmatprep.subr.mxu0 0.0
    %2099 = vmatpush1.msra.mxu0 0.0
    %2100 = vmatprep.subr.mxu0 0.0
    %2101 = vmatpush1.msra.mxu0 0.0
    %2102 = vmatprep.subr.mxu0 0.0
    %2103 = vmatpush1.msra.mxu0 0.0
    %2104 = vmatprep.subr.mxu0 0.0
    %2105 = vmatpush1.msra.mxu0 0.0
    %2106 = vmatprep.mubr.f32.mxu0 0.0
    %2107 = vmatmul.mubr.f32.gmra.mrb[0].mxu0 %v1901
    %v2108 = vpop.f32.mrb[0].mxu0
    %v2109 = vadd.f32 0.0, %v2108
    %v2110 = vpop.f32.mrb[0].mxu0
    %v2111 = vadd.f32 0.0, %v2110
    %2112 = vdwg.mxu0
    %v2113 = vadd.f32 %v1903, %v2038
    %v2114 = vadd.f32 %v1904, %v2040
    %v2115 = vadd.f32 %v1905, %v2109
    %v2116 = vadd.f32 %v1906, %v2111
    %v2117 = vxor.u32 %v2113, 2147483648
    %v2118 = vmul.f32 %v2117, 1.442695
    %v2119 = vpow.pop %v2118
    %v2120 = vadd.f32 %v2119, 1.0
    %v2121 = vrcp.pop %v2120
    %v2122 = vmul.f32 1.0, %v2121
    %v2123 = vxor.u32 %v2114, 2147483648
    %v2124 = vmul.f32 %v2123, 1.442695
    %v2125 = vpow.pop %v2124
    %v2126 = vadd.f32 %v2125, 1.0
    %v2127 = vrcp.pop %v2126
    %v2128 = vmul.f32 1.0, %v2127
    %v2129 = vtanh.pop %v2115
    %v2130 = vxor.u32 %v2116, 2147483648
    %v2131 = vmul.f32 %v2130, 1.442695
    %v2132 = vpow.pop %v2131
    %v2133 = vadd.f32 %v2132, 1.0
    %v2134 = vrcp.pop %v2133
    %v2135 = vmul.f32 1.0, %v2134
    %v2136 = vmul.f32 %v2128, %v1899
    %v2137 = vmul.f32 %v2122, %v2129
    %v2138 = vadd.f32 %v2136, %v2137
    %v2139 = vtanh.pop %v2138
    %v2140 = vmul.f32 %v2135, %v2139
    %2141 = vst [vmem:[#allocation3 + $0x18] sm:$0xff] %v2140
    %v2142 = vld [vmem:[%s433] sm:$0xff]
    %v2143 = vld [vmem:[%s433 + $0x8] sm:$0xff]
    %v2144 = vld [vmem:[%s433 + $0x10] sm:$0xff]
    %v2145 = vld [vmem:[%s433 + $0x18] sm:$0xff]
    %v2146 = vld [vmem:[#allocation7] sm:$0xff]
    %v2147 = vld [vmem:[#allocation7 + $0x8] sm:$0xff]
    %v2148 = vld [vmem:[#allocation7 + $0x10] sm:$0xff]
    %v2149 = vld [vmem:[#allocation7 + $0x18] sm:$0xff]
    %v2150 = vld [vmem:[#allocation7 + $0x20] sm:$0xff]
    %v2151 = vld [vmem:[#allocation7 + $0x28] sm:$0xff]
    %v2152 = vld [vmem:[#allocation7 + $0x30] sm:$0xff]
    %v2153 = vld [vmem:[#allocation7 + $0x38] sm:$0xff]
    %v2154 = vld [vmem:[#allocation7 + $0x40] sm:$0xff]
    %v2155 = vld [vmem:[#allocation7 + $0x48] sm:$0xff]
    %v2156 = vld [vmem:[#allocation7 + $0x50] sm:$0xff]
    %v2157 = vld [vmem:[#allocation7 + $0x58] sm:$0xff]
    %v2158 = vld [vmem:[#allocation7 + $0x60] sm:$0xff]
    %v2159 = vld [vmem:[#allocation7 + $0x68] sm:$0xff]
    %v2160 = vld [vmem:[#allocation7 + $0x70] sm:$0xff]
    %v2161 = vld [vmem:[#allocation7 + $0x78] sm:$0xff]
    %v2162 = vld [vmem:[#allocation7 + $0x80] sm:$0xff]
    %v2163 = vld [vmem:[#allocation7 + $0x88] sm:$0xff]
    %v2164 = vld [vmem:[#allocation7 + $0x90] sm:$0xff]
    %v2165 = vld [vmem:[#allocation7 + $0x98] sm:$0xff]
    %v2166 = vld [vmem:[#allocation7 + $0xa0] sm:$0xff]
    %v2167 = vld [vmem:[#allocation7 + $0xa8] sm:$0xff]
    %v2168 = vld [vmem:[#allocation7 + $0xb0] sm:$0xff]
    %v2169 = vld [vmem:[#allocation7 + $0xb8] sm:$0xff]
    %v2170 = vld [vmem:[#allocation7 + $0xc0] sm:$0xff]
    %v2171 = vld [vmem:[#allocation7 + $0xc8] sm:$0xff]
    %v2172 = vld [vmem:[#allocation7 + $0xd0] sm:$0xff]
    %v2173 = vld [vmem:[#allocation7 + $0xd8] sm:$0xff]
    %v2174 = vld [vmem:[#allocation7 + $0xe0] sm:$0xff]
    %v2175 = vld [vmem:[#allocation7 + $0xe8] sm:$0xff]
    %v2176 = vld [vmem:[#allocation7 + $0xf0] sm:$0xff]
    %v2177 = vld [vmem:[#allocation7 + $0xf8] sm:$0xff]
    %v2178 = vld [vmem:[#allocation7 + $0x100] sm:$0xff]
    %v2179 = vld [vmem:[#allocation7 + $0x108] sm:$0xff]
    %v2180 = vld [vmem:[#allocation7 + $0x110] sm:$0xff]
    %v2181 = vld [vmem:[#allocation7 + $0x118] sm:$0xff]
    %v2182 = vld [vmem:[#allocation7 + $0x120] sm:$0xff]
    %v2183 = vld [vmem:[#allocation7 + $0x128] sm:$0xff]
    %v2184 = vld [vmem:[#allocation7 + $0x130] sm:$0xff]
    %v2185 = vld [vmem:[#allocation7 + $0x138] sm:$0xff]
    %v2186 = vld [vmem:[#allocation7 + $0x140] sm:$0xff]
    %v2187 = vld [vmem:[#allocation7 + $0x148] sm:$0xff]
    %v2188 = vld [vmem:[#allocation7 + $0x150] sm:$0xff]
    %v2189 = vld [vmem:[#allocation7 + $0x158] sm:$0xff]
    %v2190 = vld [vmem:[#allocation7 + $0x160] sm:$0xff]
    %v2191 = vld [vmem:[#allocation7 + $0x168] sm:$0xff]
    %v2192 = vld [vmem:[#allocation7 + $0x170] sm:$0xff]
    %v2193 = vld [vmem:[#allocation7 + $0x178] sm:$0xff]
    %v2194 = vld [vmem:[#allocation7 + $0x180] sm:$0xff]
    %v2195 = vld [vmem:[#allocation7 + $0x188] sm:$0xff]
    %v2196 = vld [vmem:[#allocation7 + $0x190] sm:$0xff]
    %v2197 = vld [vmem:[#allocation7 + $0x198] sm:$0xff]
    %v2198 = vld [vmem:[#allocation7 + $0x1a0] sm:$0xff]
    %v2199 = vld [vmem:[#allocation7 + $0x1a8] sm:$0xff]
    %v2200 = vld [vmem:[#allocation7 + $0x1b0] sm:$0xff]
    %v2201 = vld [vmem:[#allocation7 + $0x1b8] sm:$0xff]
    %v2202 = vld [vmem:[#allocation7 + $0x1c0] sm:$0xff]
    %v2203 = vld [vmem:[#allocation7 + $0x1c8] sm:$0xff]
    %v2204 = vld [vmem:[#allocation7 + $0x1d0] sm:$0xff]
    %v2205 = vld [vmem:[#allocation7 + $0x1d8] sm:$0xff]
    %v2206 = vld [vmem:[#allocation7 + $0x1e0] sm:$0xff]
    %v2207 = vld [vmem:[#allocation7 + $0x1e8] sm:$0xff]
    %v2208 = vld [vmem:[#allocation7 + $0x1f0] sm:$0xff]
    %v2209 = vld [vmem:[#allocation7 + $0x1f8] sm:$0xff]
    %2210 = vmatprep.subr.mxu0 %v2147
    %2211 = vmatpush1.msra.mxu0 %v2146
    %2212 = vmatprep.subr.mxu0 %v2151
    %2213 = vmatpush1.msra.mxu0 %v2150
    %2214 = vmatprep.subr.mxu0 %v2155
    %2215 = vmatpush1.msra.mxu0 %v2154
    %2216 = vmatprep.subr.mxu0 %v2159
    %2217 = vmatpush1.msra.mxu0 %v2158
    %2218 = vmatprep.subr.mxu0 %v2163
    %2219 = vmatpush1.msra.mxu0 %v2162
    %2220 = vmatprep.subr.mxu0 %v2167
    %2221 = vmatpush1.msra.mxu0 %v2166
    %2222 = vmatprep.subr.mxu0 %v2171
    %2223 = vmatpush1.msra.mxu0 %v2170
    %2224 = vmatprep.subr.mxu0 %v2175
    %2225 = vmatpush1.msra.mxu0 %v2174
    %2226 = vmatprep.subr.mxu0 %v2179
    %2227 = vmatpush1.msra.mxu0 %v2178
    %2228 = vmatprep.subr.mxu0 %v2183
    %2229 = vmatpush1.msra.mxu0 %v2182
    %2230 = vmatprep.subr.mxu0 %v2187
    %2231 = vmatpush1.msra.mxu0 %v2186
    %2232 = vmatprep.subr.mxu0 %v2191
    %2233 = vmatpush1.msra.mxu0 %v2190
    %2234 = vmatprep.subr.mxu0 %v2195
    %2235 = vmatpush1.msra.mxu0 %v2194
    %2236 = vmatprep.subr.mxu0 %v2199
    %2237 = vmatpush1.msra.mxu0 %v2198
    %2238 = vmatprep.subr.mxu0 %v2203
    %2239 = vmatpush1.msra.mxu0 %v2202
    %2240 = vmatprep.subr.mxu0 %v2207
    %2241 = vmatpush1.msra.mxu0 %v2206
    %2242 = vmatprep.subr.mxu0 0.0
    %2243 = vmatpush1.msra.mxu0 0.0
    %2244 = vmatprep.subr.mxu0 0.0
    %2245 = vmatpush1.msra.mxu0 0.0
    %2246 = vmatprep.subr.mxu0 0.0
    %2247 = vmatpush1.msra.mxu0 0.0
    %2248 = vmatprep.subr.mxu0 0.0
    %2249 = vmatpush1.msra.mxu0 0.0
    %2250 = vmatprep.subr.mxu0 0.0
    %2251 = vmatpush1.msra.mxu0 0.0
    %2252 = vmatprep.subr.mxu0 0.0
    %2253 = vmatpush1.msra.mxu0 0.0
    %2254 = vmatprep.subr.mxu0 0.0
    %2255 = vmatpush1.msra.mxu0 0.0
    %2256 = vmatprep.subr.mxu0 0.0
    %2257 = vmatpush1.msra.mxu0 0.0
    %2258 = vmatprep.subr.mxu0 0.0
    %2259 = vmatpush1.msra.mxu0 0.0
    %2260 = vmatprep.subr.mxu0 0.0
    %2261 = vmatpush1.msra.mxu0 0.0
    %2262 = vmatprep.subr.mxu0 0.0
    %2263 = vmatpush1.msra.mxu0 0.0
    %2264 = vmatprep.subr.mxu0 0.0
    %2265 = vmatpush1.msra.mxu0 0.0
    %2266 = vmatprep.subr.mxu0 0.0
    %2267 = vmatpush1.msra.mxu0 0.0
    %2268 = vmatprep.subr.mxu0 0.0
    %2269 = vmatpush1.msra.mxu0 0.0
    %2270 = vmatprep.subr.mxu0 0.0
    %2271 = vmatpush1.msra.mxu0 0.0
    %2272 = vmatprep.subr.mxu0 0.0
    %2273 = vmatpush1.msra.mxu0 0.0
    %2274 = vmatprep.mubr.f32.mxu0 0.0
    %2275 = vmatmul.mubr.f32.gmra.mrb[0].mxu0 %v2140
    %v2276 = vpop.f32.mrb[0].mxu0
    %v2277 = vadd.f32 0.0, %v2276
    %v2278 = vpop.f32.mrb[0].mxu0
    %v2279 = vadd.f32 0.0, %v2278
    %2280 = vdwg.mxu0
    %2281 = vmatprep.subr.mxu0 %v2149
    %2282 = vmatpush1.msra.mxu0 %v2148
    %2283 = vmatprep.subr.mxu0 %v2153
    %2284 = vmatpush1.msra.mxu0 %v2152
    %2285 = vmatprep.subr.mxu0 %v2157
    %2286 = vmatpush1.msra.mxu0 %v2156
    %2287 = vmatprep.subr.mxu0 %v2161
    %2288 = vmatpush1.msra.mxu0 %v2160
    %2289 = vmatprep.subr.mxu0 %v2165
    %2290 = vmatpush1.msra.mxu0 %v2164
    %2291 = vmatprep.subr.mxu0 %v2169
    %2292 = vmatpush1.msra.mxu0 %v2168
    %2293 = vmatprep.subr.mxu0 %v2173
    %2294 = vmatpush1.msra.mxu0 %v2172
    %2295 = vmatprep.subr.mxu0 %v2177
    %2296 = vmatpush1.msra.mxu0 %v2176
    %2297 = vmatprep.subr.mxu0 %v2181
    %2298 = vmatpush1.msra.mxu0 %v2180
    %2299 = vmatprep.subr.mxu0 %v2185
    %2300 = vmatpush1.msra.mxu0 %v2184
    %2301 = vmatprep.subr.mxu0 %v2189
    %2302 = vmatpush1.msra.mxu0 %v2188
    %2303 = vmatprep.subr.mxu0 %v2193
    %2304 = vmatpush1.msra.mxu0 %v2192
    %2305 = vmatprep.subr.mxu0 %v2197
    %2306 = vmatpush1.msra.mxu0 %v2196
    %2307 = vmatprep.subr.mxu0 %v2201
    %2308 = vmatpush1.msra.mxu0 %v2200
    %2309 = vmatprep.subr.mxu0 %v2205
    %2310 = vmatpush1.msra.mxu0 %v2204
    %2311 = vmatprep.subr.mxu0 %v2209
    %2312 = vmatpush1.msra.mxu0 %v2208
    %2313 = vmatprep.subr.mxu0 0.0
    %2314 = vmatpush1.msra.mxu0 0.0
    %2315 = vmatprep.subr.mxu0 0.0
    %2316 = vmatpush1.msra.mxu0 0.0
    %2317 = vmatprep.subr.mxu0 0.0
    %2318 = vmatpush1.msra.mxu0 0.0
    %2319 = vmatprep.subr.mxu0 0.0
    %2320 = vmatpush1.msra.mxu0 0.0
    %2321 = vmatprep.subr.mxu0 0.0
    %2322 = vmatpush1.msra.mxu0 0.0
    %2323 = vmatprep.subr.mxu0 0.0
    %2324 = vmatpush1.msra.mxu0 0.0
    %2325 = vmatprep.subr.mxu0 0.0
    %2326 = vmatpush1.msra.mxu0 0.0
    %2327 = vmatprep.subr.mxu0 0.0
    %2328 = vmatpush1.msra.mxu0 0.0
    %2329 = vmatprep.subr.mxu0 0.0
    %2330 = vmatpush1.msra.mxu0 0.0
    %2331 = vmatprep.subr.mxu0 0.0
    %2332 = vmatpush1.msra.mxu0 0.0
    %2333 = vmatprep.subr.mxu0 0.0
    %2334 = vmatpush1.msra.mxu0 0.0
    %2335 = vmatprep.subr.mxu0 0.0
    %2336 = vmatpush1.msra.mxu0 0.0
    %2337 = vmatprep.subr.mxu0 0.0
    %2338 = vmatpush1.msra.mxu0 0.0
    %2339 = vmatprep.subr.mxu0 0.0
    %2340 = vmatpush1.msra.mxu0 0.0
    %2341 = vmatprep.subr.mxu0 0.0
    %2342 = vmatpush1.msra.mxu0 0.0
    %2343 = vmatprep.subr.mxu0 0.0
    %2344 = vmatpush1.msra.mxu0 0.0
    %2345 = vmatprep.mubr.f32.mxu0 0.0
    %2346 = vmatmul.mubr.f32.gmra.mrb[0].mxu0 %v2140
    %v2347 = vpop.f32.mrb[0].mxu0
    %v2348 = vadd.f32 0.0, %v2347
    %v2349 = vpop.f32.mrb[0].mxu0
    %v2350 = vadd.f32 0.0, %v2349
    %2351 = vdwg.mxu0
    %v2352 = vadd.f32 %v2142, %v2277
    %v2353 = vadd.f32 %v2143, %v2279
    %v2354 = vadd.f32 %v2144, %v2348
    %v2355 = vadd.f32 %v2145, %v2350
    %v2356 = vxor.u32 %v2352, 2147483648
    %v2357 = vmul.f32 %v2356, 1.442695
    %v2358 = vpow.pop %v2357
    %v2359 = vadd.f32 %v2358, 1.0
    %v2360 = vrcp.pop %v2359
    %v2361 = vmul.f32 1.0, %v2360
    %v2362 = vxor.u32 %v2353, 2147483648
    %v2363 = vmul.f32 %v2362, 1.442695
    %v2364 = vpow.pop %v2363
    %v2365 = vadd.f32 %v2364, 1.0
    %v2366 = vrcp.pop %v2365
    %v2367 = vmul.f32 1.0, %v2366
    %v2368 = vtanh.pop %v2354
    %v2369 = vxor.u32 %v2355, 2147483648
    %v2370 = vmul.f32 %v2369, 1.442695
    %v2371 = vpow.pop %v2370
    %v2372 = vadd.f32 %v2371, 1.0
    %v2373 = vrcp.pop %v2372
    %v2374 = vmul.f32 1.0, %v2373
    %v2375 = vmul.f32 %v2367, %v2138
    %v2376 = vmul.f32 %v2361, %v2368
    %v2377 = vadd.f32 %v2375, %v2376
    %v2378 = vtanh.pop %v2377
    %v2379 = vmul.f32 %v2374, %v2378
    %2380 = vst [vmem:[#allocation3 + $0x20] sm:$0xff] %v2379
    %v2381 = vld [vmem:[%s477] sm:$0xff]
    %v2382 = vld [vmem:[%s477 + $0x8] sm:$0xff]
    %v2383 = vld [vmem:[%s477 + $0x10] sm:$0xff]
    %v2384 = vld [vmem:[%s477 + $0x18] sm:$0xff]
    %v2385 = vld [vmem:[#allocation7] sm:$0xff]
    %v2386 = vld [vmem:[#allocation7 + $0x8] sm:$0xff]
    %v2387 = vld [vmem:[#allocation7 + $0x10] sm:$0xff]
    %v2388 = vld [vmem:[#allocation7 + $0x18] sm:$0xff]
    %v2389 = vld [vmem:[#allocation7 + $0x20] sm:$0xff]
    %v2390 = vld [vmem:[#allocation7 + $0x28] sm:$0xff]
    %v2391 = vld [vmem:[#allocation7 + $0x30] sm:$0xff]
    %v2392 = vld [vmem:[#allocation7 + $0x38] sm:$0xff]
    %v2393 = vld [vmem:[#allocation7 + $0x40] sm:$0xff]
    %v2394 = vld [vmem:[#allocation7 + $0x48] sm:$0xff]
    %v2395 = vld [vmem:[#allocation7 + $0x50] sm:$0xff]
    %v2396 = vld [vmem:[#allocation7 + $0x58] sm:$0xff]
    %v2397 = vld [vmem:[#allocation7 + $0x60] sm:$0xff]
    %v2398 = vld [vmem:[#allocation7 + $0x68] sm:$0xff]
    %v2399 = vld [vmem:[#allocation7 + $0x70] sm:$0xff]
    %v2400 = vld [vmem:[#allocation7 + $0x78] sm:$0xff]
    %v2401 = vld [vmem:[#allocation7 + $0x80] sm:$0xff]
    %v2402 = vld [vmem:[#allocation7 + $0x88] sm:$0xff]
    %v2403 = vld [vmem:[#allocation7 + $0x90] sm:$0xff]
    %v2404 = vld [vmem:[#allocation7 + $0x98] sm:$0xff]
    %v2405 = vld [vmem:[#allocation7 + $0xa0] sm:$0xff]
    %v2406 = vld [vmem:[#allocation7 + $0xa8] sm:$0xff]
    %v2407 = vld [vmem:[#allocation7 + $0xb0] sm:$0xff]
    %v2408 = vld [vmem:[#allocation7 + $0xb8] sm:$0xff]
    %v2409 = vld [vmem:[#allocation7 + $0xc0] sm:$0xff]
    %v2410 = vld [vmem:[#allocation7 + $0xc8] sm:$0xff]
    %v2411 = vld [vmem:[#allocation7 + $0xd0] sm:$0xff]
    %v2412 = vld [vmem:[#allocation7 + $0xd8] sm:$0xff]
    %v2413 = vld [vmem:[#allocation7 + $0xe0] sm:$0xff]
    %v2414 = vld [vmem:[#allocation7 + $0xe8] sm:$0xff]
    %v2415 = vld [vmem:[#allocation7 + $0xf0] sm:$0xff]
    %v2416 = vld [vmem:[#allocation7 + $0xf8] sm:$0xff]
    %v2417 = vld [vmem:[#allocation7 + $0x100] sm:$0xff]
    %v2418 = vld [vmem:[#allocation7 + $0x108] sm:$0xff]
    %v2419 = vld [vmem:[#allocation7 + $0x110] sm:$0xff]
    %v2420 = vld [vmem:[#allocation7 + $0x118] sm:$0xff]
    %v2421 = vld [vmem:[#allocation7 + $0x120] sm:$0xff]
    %v2422 = vld [vmem:[#allocation7 + $0x128] sm:$0xff]
    %v2423 = vld [vmem:[#allocation7 + $0x130] sm:$0xff]
    %v2424 = vld [vmem:[#allocation7 + $0x138] sm:$0xff]
    %v2425 = vld [vmem:[#allocation7 + $0x140] sm:$0xff]
    %v2426 = vld [vmem:[#allocation7 + $0x148] sm:$0xff]
    %v2427 = vld [vmem:[#allocation7 + $0x150] sm:$0xff]
    %v2428 = vld [vmem:[#allocation7 + $0x158] sm:$0xff]
    %v2429 = vld [vmem:[#allocation7 + $0x160] sm:$0xff]
    %v2430 = vld [vmem:[#allocation7 + $0x168] sm:$0xff]
    %v2431 = vld [vmem:[#allocation7 + $0x170] sm:$0xff]
    %v2432 = vld [vmem:[#allocation7 + $0x178] sm:$0xff]
    %v2433 = vld [vmem:[#allocation7 + $0x180] sm:$0xff]
    %v2434 = vld [vmem:[#allocation7 + $0x188] sm:$0xff]
    %v2435 = vld [vmem:[#allocation7 + $0x190] sm:$0xff]
    %v2436 = vld [vmem:[#allocation7 + $0x198] sm:$0xff]
    %v2437 = vld [vmem:[#allocation7 + $0x1a0] sm:$0xff]
    %v2438 = vld [vmem:[#allocation7 + $0x1a8] sm:$0xff]
    %v2439 = vld [vmem:[#allocation7 + $0x1b0] sm:$0xff]
    %v2440 = vld [vmem:[#allocation7 + $0x1b8] sm:$0xff]
    %v2441 = vld [vmem:[#allocation7 + $0x1c0] sm:$0xff]
    %v2442 = vld [vmem:[#allocation7 + $0x1c8] sm:$0xff]
    %v2443 = vld [vmem:[#allocation7 + $0x1d0] sm:$0xff]
    %v2444 = vld [vmem:[#allocation7 + $0x1d8] sm:$0xff]
    %v2445 = vld [vmem:[#allocation7 + $0x1e0] sm:$0xff]
    %v2446 = vld [vmem:[#allocation7 + $0x1e8] sm:$0xff]
    %v2447 = vld [vmem:[#allocation7 + $0x1f0] sm:$0xff]
    %v2448 = vld [vmem:[#allocation7 + $0x1f8] sm:$0xff]
    %2449 = vmatprep.subr.mxu0 %v2386
    %2450 = vmatpush1.msra.mxu0 %v2385
    %2451 = vmatprep.subr.mxu0 %v2390
    %2452 = vmatpush1.msra.mxu0 %v2389
    %2453 = vmatprep.subr.mxu0 %v2394
    %2454 = vmatpush1.msra.mxu0 %v2393
    %2455 = vmatprep.subr.mxu0 %v2398
    %2456 = vmatpush1.msra.mxu0 %v2397
    %2457 = vmatprep.subr.mxu0 %v2402
    %2458 = vmatpush1.msra.mxu0 %v2401
    %2459 = vmatprep.subr.mxu0 %v2406
    %2460 = vmatpush1.msra.mxu0 %v2405
    %2461 = vmatprep.subr.mxu0 %v2410
    %2462 = vmatpush1.msra.mxu0 %v2409
    %2463 = vmatprep.subr.mxu0 %v2414
    %2464 = vmatpush1.msra.mxu0 %v2413
    %2465 = vmatprep.subr.mxu0 %v2418
    %2466 = vmatpush1.msra.mxu0 %v2417
    %2467 = vmatprep.subr.mxu0 %v2422
    %2468 = vmatpush1.msra.mxu0 %v2421
    %2469 = vmatprep.subr.mxu0 %v2426
    %2470 = vmatpush1.msra.mxu0 %v2425
    %2471 = vmatprep.subr.mxu0 %v2430
    %2472 = vmatpush1.msra.mxu0 %v2429
    %2473 = vmatprep.subr.mxu0 %v2434
    %2474 = vmatpush1.msra.mxu0 %v2433
    %2475 = vmatprep.subr.mxu0 %v2438
    %2476 = vmatpush1.msra.mxu0 %v2437
    %2477 = vmatprep.subr.mxu0 %v2442
    %2478 = vmatpush1.msra.mxu0 %v2441
    %2479 = vmatprep.subr.mxu0 %v2446
    %2480 = vmatpush1.msra.mxu0 %v2445
    %2481 = vmatprep.subr.mxu0 0.0
    %2482 = vmatpush1.msra.mxu0 0.0
    %2483 = vmatprep.subr.mxu0 0.0
    %2484 = vmatpush1.msra.mxu0 0.0
    %2485 = vmatprep.subr.mxu0 0.0
    %2486 = vmatpush1.msra.mxu0 0.0
    %2487 = vmatprep.subr.mxu0 0.0
    %2488 = vmatpush1.msra.mxu0 0.0
    %2489 = vmatprep.subr.mxu0 0.0
    %2490 = vmatpush1.msra.mxu0 0.0
    %2491 = vmatprep.subr.mxu0 0.0
    %2492 = vmatpush1.msra.mxu0 0.0
    %2493 = vmatprep.subr.mxu0 0.0
    %2494 = vmatpush1.msra.mxu0 0.0
    %2495 = vmatprep.subr.mxu0 0.0
    %2496 = vmatpush1.msra.mxu0 0.0
    %2497 = vmatprep.subr.mxu0 0.0
    %2498 = vmatpush1.msra.mxu0 0.0
    %2499 = vmatprep.subr.mxu0 0.0
    %2500 = vmatpush1.msra.mxu0 0.0
    %2501 = vmatprep.subr.mxu0 0.0
    %2502 = vmatpush1.msra.mxu0 0.0
    %2503 = vmatprep.subr.mxu0 0.0
    %2504 = vmatpush1.msra.mxu0 0.0
    %2505 = vmatprep.subr.mxu0 0.0
    %2506 = vmatpush1.msra.mxu0 0.0
    %2507 = vmatprep.subr.mxu0 0.0
    %2508 = vmatpush1.msra.mxu0 0.0
    %2509 = vmatprep.subr.mxu0 0.0
    %2510 = vmatpush1.msra.mxu0 0.0
    %2511 = vmatprep.subr.mxu0 0.0
    %2512 = vmatpush1.msra.mxu0 0.0
    %2513 = vmatprep.mubr.f32.mxu0 0.0
    %2514 = vmatmul.mubr.f32.gmra.mrb[0].mxu0 %v2379
    %v2515 = vpop.f32.mrb[0].mxu0
    %v2516 = vadd.f32 0.0, %v2515
    %v2517 = vpop.f32.mrb[0].mxu0
    %v2518 = vadd.f32 0.0, %v2517
    %2519 = vdwg.mxu0
    %2520 = vmatprep.subr.mxu0 %v2388
    %2521 = vmatpush1.msra.mxu0 %v2387
    %2522 = vmatprep.subr.mxu0 %v2392
    %2523 = vmatpush1.msra.mxu0 %v2391
    %2524 = vmatprep.subr.mxu0 %v2396
    %2525 = vmatpush1.msra.mxu0 %v2395
    %2526 = vmatprep.subr.mxu0 %v2400
    %2527 = vmatpush1.msra.mxu0 %v2399
    %2528 = vmatprep.subr.mxu0 %v2404
    %2529 = vmatpush1.msra.mxu0 %v2403
    %2530 = vmatprep.subr.mxu0 %v2408
    %2531 = vmatpush1.msra.mxu0 %v2407
    %2532 = vmatprep.subr.mxu0 %v2412
    %2533 = vmatpush1.msra.mxu0 %v2411
    %2534 = vmatprep.subr.mxu0 %v2416
    %2535 = vmatpush1.msra.mxu0 %v2415
    %2536 = vmatprep.subr.mxu0 %v2420
    %2537 = vmatpush1.msra.mxu0 %v2419
    %2538 = vmatprep.subr.mxu0 %v2424
    %2539 = vmatpush1.msra.mxu0 %v2423
    %2540 = vmatprep.subr.mxu0 %v2428
    %2541 = vmatpush1.msra.mxu0 %v2427
    %2542 = vmatprep.subr.mxu0 %v2432
    %2543 = vmatpush1.msra.mxu0 %v2431
    %2544 = vmatprep.subr.mxu0 %v2436
    %2545 = vmatpush1.msra.mxu0 %v2435
    %2546 = vmatprep.subr.mxu0 %v2440
    %2547 = vmatpush1.msra.mxu0 %v2439
    %2548 = vmatprep.subr.mxu0 %v2444
    %2549 = vmatpush1.msra.mxu0 %v2443
    %2550 = vmatprep.subr.mxu0 %v2448
    %2551 = vmatpush1.msra.mxu0 %v2447
    %2552 = vmatprep.subr.mxu0 0.0
    %2553 = vmatpush1.msra.mxu0 0.0
    %2554 = vmatprep.subr.mxu0 0.0
    %2555 = vmatpush1.msra.mxu0 0.0
    %2556 = vmatprep.subr.mxu0 0.0
    %2557 = vmatpush1.msra.mxu0 0.0
    %2558 = vmatprep.subr.mxu0 0.0
    %2559 = vmatpush1.msra.mxu0 0.0
    %2560 = vmatprep.subr.mxu0 0.0
    %2561 = vmatpush1.msra.mxu0 0.0
    %2562 = vmatprep.subr.mxu0 0.0
    %2563 = vmatpush1.msra.mxu0 0.0
    %2564 = vmatprep.subr.mxu0 0.0
    %2565 = vmatpush1.msra.mxu0 0.0
    %2566 = vmatprep.subr.mxu0 0.0
    %2567 = vmatpush1.msra.mxu0 0.0
    %2568 = vmatprep.subr.mxu0 0.0
    %2569 = vmatpush1.msra.mxu0 0.0
    %2570 = vmatprep.subr.mxu0 0.0
    %2571 = vmatpush1.msra.mxu0 0.0
    %2572 = vmatprep.subr.mxu0 0.0
    %2573 = vmatpush1.msra.mxu0 0.0
    %2574 = vmatprep.subr.mxu0 0.0
    %2575 = vmatpush1.msra.mxu0 0.0
    %2576 = vmatprep.subr.mxu0 0.0
    %2577 = vmatpush1.msra.mxu0 0.0
    %2578 = vmatprep.subr.mxu0 0.0
    %2579 = vmatpush1.msra.mxu0 0.0
    %2580 = vmatprep.subr.mxu0 0.0
    %2581 = vmatpush1.msra.mxu0 0.0
    %2582 = vmatprep.subr.mxu0 0.0
    %2583 = vmatpush1.msra.mxu0 0.0
    %2584 = vmatprep.mubr.f32.mxu0 0.0
    %2585 = vmatmul.mubr.f32.gmra.mrb[0].mxu0 %v2379
    %v2586 = vpop.f32.mrb[0].mxu0
    %v2587 = vadd.f32 0.0, %v2586
    %v2588 = vpop.f32.mrb[0].mxu0
    %v2589 = vadd.f32 0.0, %v2588
    %2590 = vdwg.mxu0
    %v2591 = vadd.f32 %v2381, %v2516
    %v2592 = vadd.f32 %v2382, %v2518
    %v2593 = vadd.f32 %v2383, %v2587
    %v2594 = vadd.f32 %v2384, %v2589
    %v2595 = vxor.u32 %v2591, 2147483648
    %v2596 = vmul.f32 %v2595, 1.442695
    %v2597 = vpow.pop %v2596
    %v2598 = vadd.f32 %v2597, 1.0
    %v2599 = vrcp.pop %v2598
    %v2600 = vmul.f32 1.0, %v2599
    %v2601 = vxor.u32 %v2592, 2147483648
    %v2602 = vmul.f32 %v2601, 1.442695
    %v2603 = vpow.pop %v2602
    %v2604 = vadd.f32 %v2603, 1.0
    %v2605 = vrcp.pop %v2604
    %v2606 = vmul.f32 1.0, %v2605
    %v2607 = vtanh.pop %v2593
    %v2608 = vxor.u32 %v2594, 2147483648
    %v2609 = vmul.f32 %v2608, 1.442695
    %v2610 = vpow.pop %v2609
    %v2611 = vadd.f32 %v2610, 1.0
    %v2612 = vrcp.pop %v2611
    %v2613 = vmul.f32 1.0, %v2612
    %v2614 = vmul.f32 %v2606, %v2377
    %v2615 = vmul.f32 %v2600, %v2607
    %v2616 = vadd.f32 %v2614, %v2615
    %v2617 = vtanh.pop %v2616
    %v2618 = vmul.f32 %v2613, %v2617
    %2619 = vst [vmem:[#allocation3 + $0x28] sm:$0xff] %v2618
    %v2620 = vld [vmem:[%s521] sm:$0xff]
    %v2621 = vld [vmem:[%s521 + $0x8] sm:$0xff]
    %v2622 = vld [vmem:[%s521 + $0x10] sm:$0xff]
    %v2623 = vld [vmem:[%s521 + $0x18] sm:$0xff]
    %v2624 = vld [vmem:[#allocation7] sm:$0xff]
    %v2625 = vld [vmem:[#allocation7 + $0x8] sm:$0xff]
    %v2626 = vld [vmem:[#allocation7 + $0x10] sm:$0xff]
    %v2627 = vld [vmem:[#allocation7 + $0x18] sm:$0xff]
    %v2628 = vld [vmem:[#allocation7 + $0x20] sm:$0xff]
    %v2629 = vld [vmem:[#allocation7 + $0x28] sm:$0xff]
    %v2630 = vld [vmem:[#allocation7 + $0x30] sm:$0xff]
    %v2631 = vld [vmem:[#allocation7 + $0x38] sm:$0xff]
    %v2632 = vld [vmem:[#allocation7 + $0x40] sm:$0xff]
    %v2633 = vld [vmem:[#allocation7 + $0x48] sm:$0xff]
    %v2634 = vld [vmem:[#allocation7 + $0x50] sm:$0xff]
    %v2635 = vld [vmem:[#allocation7 + $0x58] sm:$0xff]
    %v2636 = vld [vmem:[#allocation7 + $0x60] sm:$0xff]
    %v2637 = vld [vmem:[#allocation7 + $0x68] sm:$0xff]
    %v2638 = vld [vmem:[#allocation7 + $0x70] sm:$0xff]
    %v2639 = vld [vmem:[#allocation7 + $0x78] sm:$0xff]
    %v2640 = vld [vmem:[#allocation7 + $0x80] sm:$0xff]
    %v2641 = vld [vmem:[#allocation7 + $0x88] sm:$0xff]
    %v2642 = vld [vmem:[#allocation7 + $0x90] sm:$0xff]
    %v2643 = vld [vmem:[#allocation7 + $0x98] sm:$0xff]
    %v2644 = vld [vmem:[#allocation7 + $0xa0] sm:$0xff]
    %v2645 = vld [vmem:[#allocation7 + $0xa8] sm:$0xff]
    %v2646 = vld [vmem:[#allocation7 + $0xb0] sm:$0xff]
    %v2647 = vld [vmem:[#allocation7 + $0xb8] sm:$0xff]
    %v2648 = vld [vmem:[#allocation7 + $0xc0] sm:$0xff]
    %v2649 = vld [vmem:[#allocation7 + $0xc8] sm:$0xff]
    %v2650 = vld [vmem:[#allocation7 + $0xd0] sm:$0xff]
    %v2651 = vld [vmem:[#allocation7 + $0xd8] sm:$0xff]
    %v2652 = vld [vmem:[#allocation7 + $0xe0] sm:$0xff]
    %v2653 = vld [vmem:[#allocation7 + $0xe8] sm:$0xff]
    %v2654 = vld [vmem:[#allocation7 + $0xf0] sm:$0xff]
    %v2655 = vld [vmem:[#allocation7 + $0xf8] sm:$0xff]
    %v2656 = vld [vmem:[#allocation7 + $0x100] sm:$0xff]
    %v2657 = vld [vmem:[#allocation7 + $0x108] sm:$0xff]
    %v2658 = vld [vmem:[#allocation7 + $0x110] sm:$0xff]
    %v2659 = vld [vmem:[#allocation7 + $0x118] sm:$0xff]
    %v2660 = vld [vmem:[#allocation7 + $0x120] sm:$0xff]
    %v2661 = vld [vmem:[#allocation7 + $0x128] sm:$0xff]
    %v2662 = vld [vmem:[#allocation7 + $0x130] sm:$0xff]
    %v2663 = vld [vmem:[#allocation7 + $0x138] sm:$0xff]
    %v2664 = vld [vmem:[#allocation7 + $0x140] sm:$0xff]
    %v2665 = vld [vmem:[#allocation7 + $0x148] sm:$0xff]
    %v2666 = vld [vmem:[#allocation7 + $0x150] sm:$0xff]
    %v2667 = vld [vmem:[#allocation7 + $0x158] sm:$0xff]
    %v2668 = vld [vmem:[#allocation7 + $0x160] sm:$0xff]
    %v2669 = vld [vmem:[#allocation7 + $0x168] sm:$0xff]
    %v2670 = vld [vmem:[#allocation7 + $0x170] sm:$0xff]
    %v2671 = vld [vmem:[#allocation7 + $0x178] sm:$0xff]
    %v2672 = vld [vmem:[#allocation7 + $0x180] sm:$0xff]
    %v2673 = vld [vmem:[#allocation7 + $0x188] sm:$0xff]
    %v2674 = vld [vmem:[#allocation7 + $0x190] sm:$0xff]
    %v2675 = vld [vmem:[#allocation7 + $0x198] sm:$0xff]
    %v2676 = vld [vmem:[#allocation7 + $0x1a0] sm:$0xff]
    %v2677 = vld [vmem:[#allocation7 + $0x1a8] sm:$0xff]
    %v2678 = vld [vmem:[#allocation7 + $0x1b0] sm:$0xff]
    %v2679 = vld [vmem:[#allocation7 + $0x1b8] sm:$0xff]
    %v2680 = vld [vmem:[#allocation7 + $0x1c0] sm:$0xff]
    %v2681 = vld [vmem:[#allocation7 + $0x1c8] sm:$0xff]
    %v2682 = vld [vmem:[#allocation7 + $0x1d0] sm:$0xff]
    %v2683 = vld [vmem:[#allocation7 + $0x1d8] sm:$0xff]
    %v2684 = vld [vmem:[#allocation7 + $0x1e0] sm:$0xff]
    %v2685 = vld [vmem:[#allocation7 + $0x1e8] sm:$0xff]
    %v2686 = vld [vmem:[#allocation7 + $0x1f0] sm:$0xff]
    %v2687 = vld [vmem:[#allocation7 + $0x1f8] sm:$0xff]
    %2688 = vmatprep.subr.mxu0 %v2625
    %2689 = vmatpush1.msra.mxu0 %v2624
    %2690 = vmatprep.subr.mxu0 %v2629
    %2691 = vmatpush1.msra.mxu0 %v2628
    %2692 = vmatprep.subr.mxu0 %v2633
    %2693 = vmatpush1.msra.mxu0 %v2632
    %2694 = vmatprep.subr.mxu0 %v2637
    %2695 = vmatpush1.msra.mxu0 %v2636
    %2696 = vmatprep.subr.mxu0 %v2641
    %2697 = vmatpush1.msra.mxu0 %v2640
    %2698 = vmatprep.subr.mxu0 %v2645
    %2699 = vmatpush1.msra.mxu0 %v2644
    %2700 = vmatprep.subr.mxu0 %v2649
    %2701 = vmatpush1.msra.mxu0 %v2648
    %2702 = vmatprep.subr.mxu0 %v2653
    %2703 = vmatpush1.msra.mxu0 %v2652
    %2704 = vmatprep.subr.mxu0 %v2657
    %2705 = vmatpush1.msra.mxu0 %v2656
    %2706 = vmatprep.subr.mxu0 %v2661
    %2707 = vmatpush1.msra.mxu0 %v2660
    %2708 = vmatprep.subr.mxu0 %v2665
    %2709 = vmatpush1.msra.mxu0 %v2664
    %2710 = vmatprep.subr.mxu0 %v2669
    %2711 = vmatpush1.msra.mxu0 %v2668
    %2712 = vmatprep.subr.mxu0 %v2673
    %2713 = vmatpush1.msra.mxu0 %v2672
    %2714 = vmatprep.subr.mxu0 %v2677
    %2715 = vmatpush1.msra.mxu0 %v2676
    %2716 = vmatprep.subr.mxu0 %v2681
    %2717 = vmatpush1.msra.mxu0 %v2680
    %2718 = vmatprep.subr.mxu0 %v2685
    %2719 = vmatpush1.msra.mxu0 %v2684
    %2720 = vmatprep.subr.mxu0 0.0
    %2721 = vmatpush1.msra.mxu0 0.0
    %2722 = vmatprep.subr.mxu0 0.0
    %2723 = vmatpush1.msra.mxu0 0.0
    %2724 = vmatprep.subr.mxu0 0.0
    %2725 = vmatpush1.msra.mxu0 0.0
    %2726 = vmatprep.subr.mxu0 0.0
    %2727 = vmatpush1.msra.mxu0 0.0
    %2728 = vmatprep.subr.mxu0 0.0
    %2729 = vmatpush1.msra.mxu0 0.0
    %2730 = vmatprep.subr.mxu0 0.0
    %2731 = vmatpush1.msra.mxu0 0.0
    %2732 = vmatprep.subr.mxu0 0.0
    %2733 = vmatpush1.msra.mxu0 0.0
    %2734 = vmatprep.subr.mxu0 0.0
    %2735 = vmatpush1.msra.mxu0 0.0
    %2736 = vmatprep.subr.mxu0 0.0
    %2737 = vmatpush1.msra.mxu0 0.0
    %2738 = vmatprep.subr.mxu0 0.0
    %2739 = vmatpush1.msra.mxu0 0.0
    %2740 = vmatprep.subr.mxu0 0.0
    %2741 = vmatpush1.msra.mxu0 0.0
    %2742 = vmatprep.subr.mxu0 0.0
    %2743 = vmatpush1.msra.mxu0 0.0
    %2744 = vmatprep.subr.mxu0 0.0
    %2745 = vmatpush1.msra.mxu0 0.0
    %2746 = vmatprep.subr.mxu0 0.0
    %2747 = vmatpush1.msra.mxu0 0.0
    %2748 = vmatprep.subr.mxu0 0.0
    %2749 = vmatpush1.msra.mxu0 0.0
    %2750 = vmatprep.subr.mxu0 0.0
    %2751 = vmatpush1.msra.mxu0 0.0
    %2752 = vmatprep.mubr.f32.mxu0 0.0
    %2753 = vmatmul.mubr.f32.gmra.mrb[0].mxu0 %v2618
    %v2754 = vpop.f32.mrb[0].mxu0
    %v2755 = vadd.f32 0.0, %v2754
    %v2756 = vpop.f32.mrb[0].mxu0
    %v2757 = vadd.f32 0.0, %v2756
    %2758 = vdwg.mxu0
    %2759 = vmatprep.subr.mxu0 %v2627
    %2760 = vmatpush1.msra.mxu0 %v2626
    %2761 = vmatprep.subr.mxu0 %v2631
    %2762 = vmatpush1.msra.mxu0 %v2630
    %2763 = vmatprep.subr.mxu0 %v2635
    %2764 = vmatpush1.msra.mxu0 %v2634
    %2765 = vmatprep.subr.mxu0 %v2639
    %2766 = vmatpush1.msra.mxu0 %v2638
    %2767 = vmatprep.subr.mxu0 %v2643
    %2768 = vmatpush1.msra.mxu0 %v2642
    %2769 = vmatprep.subr.mxu0 %v2647
    %2770 = vmatpush1.msra.mxu0 %v2646
    %2771 = vmatprep.subr.mxu0 %v2651
    %2772 = vmatpush1.msra.mxu0 %v2650
    %2773 = vmatprep.subr.mxu0 %v2655
    %2774 = vmatpush1.msra.mxu0 %v2654
    %2775 = vmatprep.subr.mxu0 %v2659
    %2776 = vmatpush1.msra.mxu0 %v2658
    %2777 = vmatprep.subr.mxu0 %v2663
    %2778 = vmatpush1.msra.mxu0 %v2662
    %2779 = vmatprep.subr.mxu0 %v2667
    %2780 = vmatpush1.msra.mxu0 %v2666
    %2781 = vmatprep.subr.mxu0 %v2671
    %2782 = vmatpush1.msra.mxu0 %v2670
    %2783 = vmatprep.subr.mxu0 %v2675
    %2784 = vmatpush1.msra.mxu0 %v2674
    %2785 = vmatprep.subr.mxu0 %v2679
    %2786 = vmatpush1.msra.mxu0 %v2678
    %2787 = vmatprep.subr.mxu0 %v2683
    %2788 = vmatpush1.msra.mxu0 %v2682
    %2789 = vmatprep.subr.mxu0 %v2687
    %2790 = vmatpush1.msra.mxu0 %v2686
    %2791 = vmatprep.subr.mxu0 0.0
    %2792 = vmatpush1.msra.mxu0 0.0
    %2793 = vmatprep.subr.mxu0 0.0
    %2794 = vmatpush1.msra.mxu0 0.0
    %2795 = vmatprep.subr.mxu0 0.0
    %2796 = vmatpush1.msra.mxu0 0.0
    %2797 = vmatprep.subr.mxu0 0.0
    %2798 = vmatpush1.msra.mxu0 0.0
    %2799 = vmatprep.subr.mxu0 0.0
    %2800 = vmatpush1.msra.mxu0 0.0
    %2801 = vmatprep.subr.mxu0 0.0
    %2802 = vmatpush1.msra.mxu0 0.0
    %2803 = vmatprep.subr.mxu0 0.0
    %2804 = vmatpush1.msra.mxu0 0.0
    %2805 = vmatprep.subr.mxu0 0.0
    %2806 = vmatpush1.msra.mxu0 0.0
    %2807 = vmatprep.subr.mxu0 0.0
    %2808 = vmatpush1.msra.mxu0 0.0
    %2809 = vmatprep.subr.mxu0 0.0
    %2810 = vmatpush1.msra.mxu0 0.0
    %2811 = vmatprep.subr.mxu0 0.0
    %2812 = vmatpush1.msra.mxu0 0.0
    %2813 = vmatprep.subr.mxu0 0.0
    %2814 = vmatpush1.msra.mxu0 0.0
    %2815 = vmatprep.subr.mxu0 0.0
    %2816 = vmatpush1.msra.mxu0 0.0
    %2817 = vmatprep.subr.mxu0 0.0
    %2818 = vmatpush1.msra.mxu0 0.0
    %2819 = vmatprep.subr.mxu0 0.0
    %2820 = vmatpush1.msra.mxu0 0.0
    %2821 = vmatprep.subr.mxu0 0.0
    %2822 = vmatpush1.msra.mxu0 0.0
    %2823 = vmatprep.mubr.f32.mxu0 0.0
    %2824 = vmatmul.mubr.f32.gmra.mrb[0].mxu0 %v2618
    %v2825 = vpop.f32.mrb[0].mxu0
    %v2826 = vadd.f32 0.0, %v2825
    %v2827 = vpop.f32.mrb[0].mxu0
    %v2828 = vadd.f32 0.0, %v2827
    %2829 = vdwg.mxu0
    %v2830 = vadd.f32 %v2620, %v2755
    %v2831 = vadd.f32 %v2621, %v2757
    %v2832 = vadd.f32 %v2622, %v2826
    %v2833 = vadd.f32 %v2623, %v2828
    %v2834 = vxor.u32 %v2830, 2147483648
    %v2835 = vmul.f32 %v2834, 1.442695
    %v2836 = vpow.pop %v2835
    %v2837 = vadd.f32 %v2836, 1.0
    %v2838 = vrcp.pop %v2837
    %v2839 = vmul.f32 1.0, %v2838
    %v2840 = vxor.u32 %v2831, 2147483648
    %v2841 = vmul.f32 %v2840, 1.442695
    %v2842 = vpow.pop %v2841
    %v2843 = vadd.f32 %v2842, 1.0
    %v2844 = vrcp.pop %v2843
    %v2845 = vmul.f32 1.0, %v2844
    %v2846 = vtanh.pop %v2832
    %v2847 = vxor.u32 %v2833, 2147483648
    %v2848 = vmul.f32 %v2847, 1.442695
    %v2849 = vpow.pop %v2848
    %v2850 = vadd.f32 %v2849, 1.0
    %v2851 = vrcp.pop %v2850
    %v2852 = vmul.f32 1.0, %v2851
    %v2853 = vmul.f32 %v2845, %v2616
    %v2854 = vmul.f32 %v2839, %v2846
    %v2855 = vadd.f32 %v2853, %v2854
    %v2856 = vtanh.pop %v2855
    %v2857 = vmul.f32 %v2852, %v2856
    %2858 = vst [vmem:[#allocation3 + $0x30] sm:$0xff] %v2857
    %v2859 = vld [vmem:[%s565] sm:$0xff]
    %v2860 = vld [vmem:[%s565 + $0x8] sm:$0xff]
    %v2861 = vld [vmem:[%s565 + $0x10] sm:$0xff]
    %v2862 = vld [vmem:[%s565 + $0x18] sm:$0xff]
    %v2863 = vld [vmem:[#allocation7] sm:$0xff]
    %v2864 = vld [vmem:[#allocation7 + $0x8] sm:$0xff]
    %v2865 = vld [vmem:[#allocation7 + $0x10] sm:$0xff]
    %v2866 = vld [vmem:[#allocation7 + $0x18] sm:$0xff]
    %v2867 = vld [vmem:[#allocation7 + $0x20] sm:$0xff]
    %v2868 = vld [vmem:[#allocation7 + $0x28] sm:$0xff]
    %v2869 = vld [vmem:[#allocation7 + $0x30] sm:$0xff]
    %v2870 = vld [vmem:[#allocation7 + $0x38] sm:$0xff]
    %v2871 = vld [vmem:[#allocation7 + $0x40] sm:$0xff]
    %v2872 = vld [vmem:[#allocation7 + $0x48] sm:$0xff]
    %v2873 = vld [vmem:[#allocation7 + $0x50] sm:$0xff]
    %v2874 = vld [vmem:[#allocation7 + $0x58] sm:$0xff]
    %v2875 = vld [vmem:[#allocation7 + $0x60] sm:$0xff]
    %v2876 = vld [vmem:[#allocation7 + $0x68] sm:$0xff]
    %v2877 = vld [vmem:[#allocation7 + $0x70] sm:$0xff]
    %v2878 = vld [vmem:[#allocation7 + $0x78] sm:$0xff]
    %v2879 = vld [vmem:[#allocation7 + $0x80] sm:$0xff]
    %v2880 = vld [vmem:[#allocation7 + $0x88] sm:$0xff]
    %v2881 = vld [vmem:[#allocation7 + $0x90] sm:$0xff]
    %v2882 = vld [vmem:[#allocation7 + $0x98] sm:$0xff]
    %v2883 = vld [vmem:[#allocation7 + $0xa0] sm:$0xff]
    %v2884 = vld [vmem:[#allocation7 + $0xa8] sm:$0xff]
    %v2885 = vld [vmem:[#allocation7 + $0xb0] sm:$0xff]
    %v2886 = vld [vmem:[#allocation7 + $0xb8] sm:$0xff]
    %v2887 = vld [vmem:[#allocation7 + $0xc0] sm:$0xff]
    %v2888 = vld [vmem:[#allocation7 + $0xc8] sm:$0xff]
    %v2889 = vld [vmem:[#allocation7 + $0xd0] sm:$0xff]
    %v2890 = vld [vmem:[#allocation7 + $0xd8] sm:$0xff]
    %v2891 = vld [vmem:[#allocation7 + $0xe0] sm:$0xff]
    %v2892 = vld [vmem:[#allocation7 + $0xe8] sm:$0xff]
    %v2893 = vld [vmem:[#allocation7 + $0xf0] sm:$0xff]
    %v2894 = vld [vmem:[#allocation7 + $0xf8] sm:$0xff]
    %v2895 = vld [vmem:[#allocation7 + $0x100] sm:$0xff]
    %v2896 = vld [vmem:[#allocation7 + $0x108] sm:$0xff]
    %v2897 = vld [vmem:[#allocation7 + $0x110] sm:$0xff]
    %v2898 = vld [vmem:[#allocation7 + $0x118] sm:$0xff]
    %v2899 = vld [vmem:[#allocation7 + $0x120] sm:$0xff]
    %v2900 = vld [vmem:[#allocation7 + $0x128] sm:$0xff]
    %v2901 = vld [vmem:[#allocation7 + $0x130] sm:$0xff]
    %v2902 = vld [vmem:[#allocation7 + $0x138] sm:$0xff]
    %v2903 = vld [vmem:[#allocation7 + $0x140] sm:$0xff]
    %v2904 = vld [vmem:[#allocation7 + $0x148] sm:$0xff]
    %v2905 = vld [vmem:[#allocation7 + $0x150] sm:$0xff]
    %v2906 = vld [vmem:[#allocation7 + $0x158] sm:$0xff]
    %v2907 = vld [vmem:[#allocation7 + $0x160] sm:$0xff]
    %v2908 = vld [vmem:[#allocation7 + $0x168] sm:$0xff]
    %v2909 = vld [vmem:[#allocation7 + $0x170] sm:$0xff]
    %v2910 = vld [vmem:[#allocation7 + $0x178] sm:$0xff]
    %v2911 = vld [vmem:[#allocation7 + $0x180] sm:$0xff]
    %v2912 = vld [vmem:[#allocation7 + $0x188] sm:$0xff]
    %v2913 = vld [vmem:[#allocation7 + $0x190] sm:$0xff]
    %v2914 = vld [vmem:[#allocation7 + $0x198] sm:$0xff]
    %v2915 = vld [vmem:[#allocation7 + $0x1a0] sm:$0xff]
    %v2916 = vld [vmem:[#allocation7 + $0x1a8] sm:$0xff]
    %v2917 = vld [vmem:[#allocation7 + $0x1b0] sm:$0xff]
    %v2918 = vld [vmem:[#allocation7 + $0x1b8] sm:$0xff]
    %v2919 = vld [vmem:[#allocation7 + $0x1c0] sm:$0xff]
    %v2920 = vld [vmem:[#allocation7 + $0x1c8] sm:$0xff]
    %v2921 = vld [vmem:[#allocation7 + $0x1d0] sm:$0xff]
    %v2922 = vld [vmem:[#allocation7 + $0x1d8] sm:$0xff]
    %v2923 = vld [vmem:[#allocation7 + $0x1e0] sm:$0xff]
    %v2924 = vld [vmem:[#allocation7 + $0x1e8] sm:$0xff]
    %v2925 = vld [vmem:[#allocation7 + $0x1f0] sm:$0xff]
    %v2926 = vld [vmem:[#allocation7 + $0x1f8] sm:$0xff]
    %2927 = vmatprep.subr.mxu0 %v2864
    %2928 = vmatpush1.msra.mxu0 %v2863
    %2929 = vmatprep.subr.mxu0 %v2868
    %2930 = vmatpush1.msra.mxu0 %v2867
    %2931 = vmatprep.subr.mxu0 %v2872
    %2932 = vmatpush1.msra.mxu0 %v2871
    %2933 = vmatprep.subr.mxu0 %v2876
    %2934 = vmatpush1.msra.mxu0 %v2875
    %2935 = vmatprep.subr.mxu0 %v2880
    %2936 = vmatpush1.msra.mxu0 %v2879
    %2937 = vmatprep.subr.mxu0 %v2884
    %2938 = vmatpush1.msra.mxu0 %v2883
    %2939 = vmatprep.subr.mxu0 %v2888
    %2940 = vmatpush1.msra.mxu0 %v2887
    %2941 = vmatprep.subr.mxu0 %v2892
    %2942 = vmatpush1.msra.mxu0 %v2891
    %2943 = vmatprep.subr.mxu0 %v2896
    %2944 = vmatpush1.msra.mxu0 %v2895
    %2945 = vmatprep.subr.mxu0 %v2900
    %2946 = vmatpush1.msra.mxu0 %v2899
    %2947 = vmatprep.subr.mxu0 %v2904
    %2948 = vmatpush1.msra.mxu0 %v2903
    %2949 = vmatprep.subr.mxu0 %v2908
    %2950 = vmatpush1.msra.mxu0 %v2907
    %2951 = vmatprep.subr.mxu0 %v2912
    %2952 = vmatpush1.msra.mxu0 %v2911
    %2953 = vmatprep.subr.mxu0 %v2916
    %2954 = vmatpush1.msra.mxu0 %v2915
    %2955 = vmatprep.subr.mxu0 %v2920
    %2956 = vmatpush1.msra.mxu0 %v2919
    %2957 = vmatprep.subr.mxu0 %v2924
    %2958 = vmatpush1.msra.mxu0 %v2923
    %2959 = vmatprep.subr.mxu0 0.0
    %2960 = vmatpush1.msra.mxu0 0.0
    %2961 = vmatprep.subr.mxu0 0.0
    %2962 = vmatpush1.msra.mxu0 0.0
    %2963 = vmatprep.subr.mxu0 0.0
    %2964 = vmatpush1.msra.mxu0 0.0
    %2965 = vmatprep.subr.mxu0 0.0
    %2966 = vmatpush1.msra.mxu0 0.0
    %2967 = vmatprep.subr.mxu0 0.0
    %2968 = vmatpush1.msra.mxu0 0.0
    %2969 = vmatprep.subr.mxu0 0.0
    %2970 = vmatpush1.msra.mxu0 0.0
    %2971 = vmatprep.subr.mxu0 0.0
    %2972 = vmatpush1.msra.mxu0 0.0
    %2973 = vmatprep.subr.mxu0 0.0
    %2974 = vmatpush1.msra.mxu0 0.0
    %2975 = vmatprep.subr.mxu0 0.0
    %2976 = vmatpush1.msra.mxu0 0.0
    %2977 = vmatprep.subr.mxu0 0.0
    %2978 = vmatpush1.msra.mxu0 0.0
    %2979 = vmatprep.subr.mxu0 0.0
    %2980 = vmatpush1.msra.mxu0 0.0
    %2981 = vmatprep.subr.mxu0 0.0
    %2982 = vmatpush1.msra.mxu0 0.0
    %2983 = vmatprep.subr.mxu0 0.0
    %2984 = vmatpush1.msra.mxu0 0.0
    %2985 = vmatprep.subr.mxu0 0.0
    %2986 = vmatpush1.msra.mxu0 0.0
    %2987 = vmatprep.subr.mxu0 0.0
    %2988 = vmatpush1.msra.mxu0 0.0
    %2989 = vmatprep.subr.mxu0 0.0
    %2990 = vmatpush1.msra.mxu0 0.0
    %2991 = vmatprep.mubr.f32.mxu0 0.0
    %2992 = vmatmul.mubr.f32.gmra.mrb[0].mxu0 %v2857
    %v2993 = vpop.f32.mrb[0].mxu0
    %v2994 = vadd.f32 0.0, %v2993
    %v2995 = vpop.f32.mrb[0].mxu0
    %v2996 = vadd.f32 0.0, %v2995
    %2997 = vdwg.mxu0
    %2998 = vmatprep.subr.mxu0 %v2866
    %2999 = vmatpush1.msra.mxu0 %v2865
    %3000 = vmatprep.subr.mxu0 %v2870
    %3001 = vmatpush1.msra.mxu0 %v2869
    %3002 = vmatprep.subr.mxu0 %v2874
    %3003 = vmatpush1.msra.mxu0 %v2873
    %3004 = vmatprep.subr.mxu0 %v2878
    %3005 = vmatpush1.msra.mxu0 %v2877
    %3006 = vmatprep.subr.mxu0 %v2882
    %3007 = vmatpush1.msra.mxu0 %v2881
    %3008 = vmatprep.subr.mxu0 %v2886
    %3009 = vmatpush1.msra.mxu0 %v2885
    %3010 = vmatprep.subr.mxu0 %v2890
    %3011 = vmatpush1.msra.mxu0 %v2889
    %3012 = vmatprep.subr.mxu0 %v2894
    %3013 = vmatpush1.msra.mxu0 %v2893
    %3014 = vmatprep.subr.mxu0 %v2898
    %3015 = vmatpush1.msra.mxu0 %v2897
    %3016 = vmatprep.subr.mxu0 %v2902
    %3017 = vmatpush1.msra.mxu0 %v2901
    %3018 = vmatprep.subr.mxu0 %v2906
    %3019 = vmatpush1.msra.mxu0 %v2905
    %3020 = vmatprep.subr.mxu0 %v2910
    %3021 = vmatpush1.msra.mxu0 %v2909
    %3022 = vmatprep.subr.mxu0 %v2914
    %3023 = vmatpush1.msra.mxu0 %v2913
    %3024 = vmatprep.subr.mxu0 %v2918
    %3025 = vmatpush1.msra.mxu0 %v2917
    %3026 = vmatprep.subr.mxu0 %v2922
    %3027 = vmatpush1.msra.mxu0 %v2921
    %3028 = vmatprep.subr.mxu0 %v2926
    %3029 = vmatpush1.msra.mxu0 %v2925
    %3030 = vmatprep.subr.mxu0 0.0
    %3031 = vmatpush1.msra.mxu0 0.0
    %3032 = vmatprep.subr.mxu0 0.0
    %3033 = vmatpush1.msra.mxu0 0.0
    %3034 = vmatprep.subr.mxu0 0.0
    %3035 = vmatpush1.msra.mxu0 0.0
    %3036 = vmatprep.subr.mxu0 0.0
    %3037 = vmatpush1.msra.mxu0 0.0
    %3038 = vmatprep.subr.mxu0 0.0
    %3039 = vmatpush1.msra.mxu0 0.0
    %3040 = vmatprep.subr.mxu0 0.0
    %3041 = vmatpush1.msra.mxu0 0.0
    %3042 = vmatprep.subr.mxu0 0.0
    %3043 = vmatpush1.msra.mxu0 0.0
    %3044 = vmatprep.subr.mxu0 0.0
    %3045 = vmatpush1.msra.mxu0 0.0
    %3046 = vmatprep.subr.mxu0 0.0
    %3047 = vmatpush1.msra.mxu0 0.0
    %3048 = vmatprep.subr.mxu0 0.0
    %3049 = vmatpush1.msra.mxu0 0.0
    %3050 = vmatprep.subr.mxu0 0.0
    %3051 = vmatpush1.msra.mxu0 0.0
    %3052 = vmatprep.subr.mxu0 0.0
    %3053 = vmatpush1.msra.mxu0 0.0
    %3054 = vmatprep.subr.mxu0 0.0
    %3055 = vmatpush1.msra.mxu0 0.0
    %3056 = vmatprep.subr.mxu0 0.0
    %3057 = vmatpush1.msra.mxu0 0.0
    %3058 = vmatprep.subr.mxu0 0.0
    %3059 = vmatpush1.msra.mxu0 0.0
    %3060 = vmatprep.subr.mxu0 0.0
    %3061 = vmatpush1.msra.mxu0 0.0
    %3062 = vmatprep.mubr.f32.mxu0 0.0
    %3063 = vmatmul.mubr.f32.gmra.mrb[0].mxu0 %v2857
    %v3064 = vpop.f32.mrb[0].mxu0
    %v3065 = vadd.f32 0.0, %v3064
    %v3066 = vpop.f32.mrb[0].mxu0
    %v3067 = vadd.f32 0.0, %v3066
    %3068 = vdwg.mxu0
    %v3069 = vadd.f32 %v2859, %v2994
    %v3070 = vadd.f32 %v2860, %v2996
    %v3071 = vadd.f32 %v2861, %v3065
    %v3072 = vadd.f32 %v2862, %v3067
    %v3073 = vxor.u32 %v3069, 2147483648
    %v3074 = vmul.f32 %v3073, 1.442695
    %v3075 = vpow.pop %v3074
    %v3076 = vadd.f32 %v3075, 1.0
    %v3077 = vrcp.pop %v3076
    %v3078 = vmul.f32 1.0, %v3077
    %v3079 = vxor.u32 %v3070, 2147483648
    %v3080 = vmul.f32 %v3079, 1.442695
    %v3081 = vpow.pop %v3080
    %v3082 = vadd.f32 %v3081, 1.0
    %v3083 = vrcp.pop %v3082
    %v3084 = vmul.f32 1.0, %v3083
    %v3085 = vtanh.pop %v3071
    %v3086 = vxor.u32 %v3072, 2147483648
    %v3087 = vmul.f32 %v3086, 1.442695
    %v3088 = vpow.pop %v3087
    %v3089 = vadd.f32 %v3088, 1.0
    %v3090 = vrcp.pop %v3089
    %v3091 = vmul.f32 1.0, %v3090
    %v3092 = vmul.f32 %v3084, %v2855
    %v3093 = vmul.f32 %v3078, %v3085
    %v3094 = vadd.f32 %v3092, %v3093
    %v3095 = vtanh.pop %v3094
    %v3096 = vmul.f32 %v3091, %v3095
    %3097 = vst [vmem:[#allocation3 + $0x38] sm:$0xff] %v3096
    %v3098 = vld [vmem:[%s609] sm:$0xff]
    %v3099 = vld [vmem:[%s609 + $0x8] sm:$0xff]
    %v3100 = vld [vmem:[%s609 + $0x10] sm:$0xff]
    %v3101 = vld [vmem:[%s609 + $0x18] sm:$0xff]
    %v3102 = vld [vmem:[#allocation7] sm:$0xff]
    %v3103 = vld [vmem:[#allocation7 + $0x8] sm:$0xff]
    %v3104 = vld [vmem:[#allocation7 + $0x10] sm:$0xff]
    %v3105 = vld [vmem:[#allocation7 + $0x18] sm:$0xff]
    %v3106 = vld [vmem:[#allocation7 + $0x20] sm:$0xff]
    %v3107 = vld [vmem:[#allocation7 + $0x28] sm:$0xff]
    %v3108 = vld [vmem:[#allocation7 + $0x30] sm:$0xff]
    %v3109 = vld [vmem:[#allocation7 + $0x38] sm:$0xff]
    %v3110 = vld [vmem:[#allocation7 + $0x40] sm:$0xff]
    %v3111 = vld [vmem:[#allocation7 + $0x48] sm:$0xff]
    %v3112 = vld [vmem:[#allocation7 + $0x50] sm:$0xff]
    %v3113 = vld [vmem:[#allocation7 + $0x58] sm:$0xff]
    %v3114 = vld [vmem:[#allocation7 + $0x60] sm:$0xff]
    %v3115 = vld [vmem:[#allocation7 + $0x68] sm:$0xff]
    %v3116 = vld [vmem:[#allocation7 + $0x70] sm:$0xff]
    %v3117 = vld [vmem:[#allocation7 + $0x78] sm:$0xff]
    %v3118 = vld [vmem:[#allocation7 + $0x80] sm:$0xff]
    %v3119 = vld [vmem:[#allocation7 + $0x88] sm:$0xff]
    %v3120 = vld [vmem:[#allocation7 + $0x90] sm:$0xff]
    %v3121 = vld [vmem:[#allocation7 + $0x98] sm:$0xff]
    %v3122 = vld [vmem:[#allocation7 + $0xa0] sm:$0xff]
    %v3123 = vld [vmem:[#allocation7 + $0xa8] sm:$0xff]
    %v3124 = vld [vmem:[#allocation7 + $0xb0] sm:$0xff]
    %v3125 = vld [vmem:[#allocation7 + $0xb8] sm:$0xff]
    %v3126 = vld [vmem:[#allocation7 + $0xc0] sm:$0xff]
    %v3127 = vld [vmem:[#allocation7 + $0xc8] sm:$0xff]
    %v3128 = vld [vmem:[#allocation7 + $0xd0] sm:$0xff]
    %v3129 = vld [vmem:[#allocation7 + $0xd8] sm:$0xff]
    %v3130 = vld [vmem:[#allocation7 + $0xe0] sm:$0xff]
    %v3131 = vld [vmem:[#allocation7 + $0xe8] sm:$0xff]
    %v3132 = vld [vmem:[#allocation7 + $0xf0] sm:$0xff]
    %v3133 = vld [vmem:[#allocation7 + $0xf8] sm:$0xff]
    %v3134 = vld [vmem:[#allocation7 + $0x100] sm:$0xff]
    %v3135 = vld [vmem:[#allocation7 + $0x108] sm:$0xff]
    %v3136 = vld [vmem:[#allocation7 + $0x110] sm:$0xff]
    %v3137 = vld [vmem:[#allocation7 + $0x118] sm:$0xff]
    %v3138 = vld [vmem:[#allocation7 + $0x120] sm:$0xff]
    %v3139 = vld [vmem:[#allocation7 + $0x128] sm:$0xff]
    %v3140 = vld [vmem:[#allocation7 + $0x130] sm:$0xff]
    %v3141 = vld [vmem:[#allocation7 + $0x138] sm:$0xff]
    %v3142 = vld [vmem:[#allocation7 + $0x140] sm:$0xff]
    %v3143 = vld [vmem:[#allocation7 + $0x148] sm:$0xff]
    %v3144 = vld [vmem:[#allocation7 + $0x150] sm:$0xff]
    %v3145 = vld [vmem:[#allocation7 + $0x158] sm:$0xff]
    %v3146 = vld [vmem:[#allocation7 + $0x160] sm:$0xff]
    %v3147 = vld [vmem:[#allocation7 + $0x168] sm:$0xff]
    %v3148 = vld [vmem:[#allocation7 + $0x170] sm:$0xff]
    %v3149 = vld [vmem:[#allocation7 + $0x178] sm:$0xff]
    %v3150 = vld [vmem:[#allocation7 + $0x180] sm:$0xff]
    %v3151 = vld [vmem:[#allocation7 + $0x188] sm:$0xff]
    %v3152 = vld [vmem:[#allocation7 + $0x190] sm:$0xff]
    %v3153 = vld [vmem:[#allocation7 + $0x198] sm:$0xff]
    %v3154 = vld [vmem:[#allocation7 + $0x1a0] sm:$0xff]
    %v3155 = vld [vmem:[#allocation7 + $0x1a8] sm:$0xff]
    %v3156 = vld [vmem:[#allocation7 + $0x1b0] sm:$0xff]
    %v3157 = vld [vmem:[#allocation7 + $0x1b8] sm:$0xff]
    %v3158 = vld [vmem:[#allocation7 + $0x1c0] sm:$0xff]
    %v3159 = vld [vmem:[#allocation7 + $0x1c8] sm:$0xff]
    %v3160 = vld [vmem:[#allocation7 + $0x1d0] sm:$0xff]
    %v3161 = vld [vmem:[#allocation7 + $0x1d8] sm:$0xff]
    %v3162 = vld [vmem:[#allocation7 + $0x1e0] sm:$0xff]
    %v3163 = vld [vmem:[#allocation7 + $0x1e8] sm:$0xff]
    %v3164 = vld [vmem:[#allocation7 + $0x1f0] sm:$0xff]
    %v3165 = vld [vmem:[#allocation7 + $0x1f8] sm:$0xff]
    %3166 = vmatprep.subr.mxu0 %v3103
    %3167 = vmatpush1.msra.mxu0 %v3102
    %3168 = vmatprep.subr.mxu0 %v3107
    %3169 = vmatpush1.msra.mxu0 %v3106
    %3170 = vmatprep.subr.mxu0 %v3111
    %3171 = vmatpush1.msra.mxu0 %v3110
    %3172 = vmatprep.subr.mxu0 %v3115
    %3173 = vmatpush1.msra.mxu0 %v3114
    %3174 = vmatprep.subr.mxu0 %v3119
    %3175 = vmatpush1.msra.mxu0 %v3118
    %3176 = vmatprep.subr.mxu0 %v3123
    %3177 = vmatpush1.msra.mxu0 %v3122
    %3178 = vmatprep.subr.mxu0 %v3127
    %3179 = vmatpush1.msra.mxu0 %v3126
    %3180 = vmatprep.subr.mxu0 %v3131
    %3181 = vmatpush1.msra.mxu0 %v3130
    %3182 = vmatprep.subr.mxu0 %v3135
    %3183 = vmatpush1.msra.mxu0 %v3134
    %3184 = vmatprep.subr.mxu0 %v3139
    %3185 = vmatpush1.msra.mxu0 %v3138
    %3186 = vmatprep.subr.mxu0 %v3143
    %3187 = vmatpush1.msra.mxu0 %v3142
    %3188 = vmatprep.subr.mxu0 %v3147
    %3189 = vmatpush1.msra.mxu0 %v3146
    %3190 = vmatprep.subr.mxu0 %v3151
    %3191 = vmatpush1.msra.mxu0 %v3150
    %3192 = vmatprep.subr.mxu0 %v3155
    %3193 = vmatpush1.msra.mxu0 %v3154
    %3194 = vmatprep.subr.mxu0 %v3159
    %3195 = vmatpush1.msra.mxu0 %v3158
    %3196 = vmatprep.subr.mxu0 %v3163
    %3197 = vmatpush1.msra.mxu0 %v3162
    %3198 = vmatprep.subr.mxu0 0.0
    %3199 = vmatpush1.msra.mxu0 0.0
    %3200 = vmatprep.subr.mxu0 0.0
    %3201 = vmatpush1.msra.mxu0 0.0
    %3202 = vmatprep.subr.mxu0 0.0
    %3203 = vmatpush1.msra.mxu0 0.0
    %3204 = vmatprep.subr.mxu0 0.0
    %3205 = vmatpush1.msra.mxu0 0.0
    %3206 = vmatprep.subr.mxu0 0.0
    %3207 = vmatpush1.msra.mxu0 0.0
    %3208 = vmatprep.subr.mxu0 0.0
    %3209 = vmatpush1.msra.mxu0 0.0
    %3210 = vmatprep.subr.mxu0 0.0
    %3211 = vmatpush1.msra.mxu0 0.0
    %3212 = vmatprep.subr.mxu0 0.0
    %3213 = vmatpush1.msra.mxu0 0.0
    %3214 = vmatprep.subr.mxu0 0.0
    %3215 = vmatpush1.msra.mxu0 0.0
    %3216 = vmatprep.subr.mxu0 0.0
    %3217 = vmatpush1.msra.mxu0 0.0
    %3218 = vmatprep.subr.mxu0 0.0
    %3219 = vmatpush1.msra.mxu0 0.0
    %3220 = vmatprep.subr.mxu0 0.0
    %3221 = vmatpush1.msra.mxu0 0.0
    %3222 = vmatprep.subr.mxu0 0.0
    %3223 = vmatpush1.msra.mxu0 0.0
    %3224 = vmatprep.subr.mxu0 0.0
    %3225 = vmatpush1.msra.mxu0 0.0
    %3226 = vmatprep.subr.mxu0 0.0
    %3227 = vmatpush1.msra.mxu0 0.0
    %3228 = vmatprep.subr.mxu0 0.0
    %3229 = vmatpush1.msra.mxu0 0.0
    %3230 = vmatprep.mubr.f32.mxu0 0.0
    %3231 = vmatmul.mubr.f32.gmra.mrb[0].mxu0 %v3096
    %v3232 = vpop.f32.mrb[0].mxu0
    %v3233 = vadd.f32 0.0, %v3232
    %v3234 = vpop.f32.mrb[0].mxu0
    %v3235 = vadd.f32 0.0, %v3234
    %3236 = vdwg.mxu0
    %3237 = vmatprep.subr.mxu0 %v3105
    %3238 = vmatpush1.msra.mxu0 %v3104
    %3239 = vmatprep.subr.mxu0 %v3109
    %3240 = vmatpush1.msra.mxu0 %v3108
    %3241 = vmatprep.subr.mxu0 %v3113
    %3242 = vmatpush1.msra.mxu0 %v3112
    %3243 = vmatprep.subr.mxu0 %v3117
    %3244 = vmatpush1.msra.mxu0 %v3116
    %3245 = vmatprep.subr.mxu0 %v3121
    %3246 = vmatpush1.msra.mxu0 %v3120
    %3247 = vmatprep.subr.mxu0 %v3125
    %3248 = vmatpush1.msra.mxu0 %v3124
    %3249 = vmatprep.subr.mxu0 %v3129
    %3250 = vmatpush1.msra.mxu0 %v3128
    %3251 = vmatprep.subr.mxu0 %v3133
    %3252 = vmatpush1.msra.mxu0 %v3132
    %3253 = vmatprep.subr.mxu0 %v3137
    %3254 = vmatpush1.msra.mxu0 %v3136
    %3255 = vmatprep.subr.mxu0 %v3141
    %3256 = vmatpush1.msra.mxu0 %v3140
    %3257 = vmatprep.subr.mxu0 %v3145
    %3258 = vmatpush1.msra.mxu0 %v3144
    %3259 = vmatprep.subr.mxu0 %v3149
    %3260 = vmatpush1.msra.mxu0 %v3148
    %3261 = vmatprep.subr.mxu0 %v3153
    %3262 = vmatpush1.msra.mxu0 %v3152
    %3263 = vmatprep.subr.mxu0 %v3157
    %3264 = vmatpush1.msra.mxu0 %v3156
    %3265 = vmatprep.subr.mxu0 %v3161
    %3266 = vmatpush1.msra.mxu0 %v3160
    %3267 = vmatprep.subr.mxu0 %v3165
    %3268 = vmatpush1.msra.mxu0 %v3164
    %3269 = vmatprep.subr.mxu0 0.0
    %3270 = vmatpush1.msra.mxu0 0.0
    %3271 = vmatprep.subr.mxu0 0.0
    %3272 = vmatpush1.msra.mxu0 0.0
    %3273 = vmatprep.subr.mxu0 0.0
    %3274 = vmatpush1.msra.mxu0 0.0
    %3275 = vmatprep.subr.mxu0 0.0
    %3276 = vmatpush1.msra.mxu0 0.0
    %3277 = vmatprep.subr.mxu0 0.0
    %3278 = vmatpush1.msra.mxu0 0.0
    %3279 = vmatprep.subr.mxu0 0.0
    %3280 = vmatpush1.msra.mxu0 0.0
    %3281 = vmatprep.subr.mxu0 0.0
    %3282 = vmatpush1.msra.mxu0 0.0
    %3283 = vmatprep.subr.mxu0 0.0
    %3284 = vmatpush1.msra.mxu0 0.0
    %3285 = vmatprep.subr.mxu0 0.0
    %3286 = vmatpush1.msra.mxu0 0.0
    %3287 = vmatprep.subr.mxu0 0.0
    %3288 = vmatpush1.msra.mxu0 0.0
    %3289 = vmatprep.subr.mxu0 0.0
    %3290 = vmatpush1.msra.mxu0 0.0
    %3291 = vmatprep.subr.mxu0 0.0
    %3292 = vmatpush1.msra.mxu0 0.0
    %3293 = vmatprep.subr.mxu0 0.0
    %3294 = vmatpush1.msra.mxu0 0.0
    %3295 = vmatprep.subr.mxu0 0.0
    %3296 = vmatpush1.msra.mxu0 0.0
    %3297 = vmatprep.subr.mxu0 0.0
    %3298 = vmatpush1.msra.mxu0 0.0
    %3299 = vmatprep.subr.mxu0 0.0
    %3300 = vmatpush1.msra.mxu0 0.0
    %3301 = vmatprep.mubr.f32.mxu0 0.0
    %3302 = vmatmul.mubr.f32.gmra.mrb[0].mxu0 %v3096
    %v3303 = vpop.f32.mrb[0].mxu0
    %v3304 = vadd.f32 0.0, %v3303
    %v3305 = vpop.f32.mrb[0].mxu0
    %v3306 = vadd.f32 0.0, %v3305
    %3307 = vdwg.mxu0
    %v3308 = vadd.f32 %v3098, %v3233
    %v3309 = vadd.f32 %v3099, %v3235
    %v3310 = vadd.f32 %v3100, %v3304
    %v3311 = vadd.f32 %v3101, %v3306
    %v3312 = vxor.u32 %v3308, 2147483648
    %v3313 = vmul.f32 %v3312, 1.442695
    %v3314 = vpow.pop %v3313
    %v3315 = vadd.f32 %v3314, 1.0
    %v3316 = vrcp.pop %v3315
    %v3317 = vmul.f32 1.0, %v3316
    %v3318 = vxor.u32 %v3309, 2147483648
    %v3319 = vmul.f32 %v3318, 1.442695
    %v3320 = vpow.pop %v3319
    %v3321 = vadd.f32 %v3320, 1.0
    %v3322 = vrcp.pop %v3321
    %v3323 = vmul.f32 1.0, %v3322
    %v3324 = vtanh.pop %v3310
    %v3325 = vxor.u32 %v3311, 2147483648
    %v3326 = vmul.f32 %v3325, 1.442695
    %v3327 = vpow.pop %v3326
    %v3328 = vadd.f32 %v3327, 1.0
    %v3329 = vrcp.pop %v3328
    %v3330 = vmul.f32 1.0, %v3329
    %v3331 = vmul.f32 %v3323, %v3094
    %v3332 = vmul.f32 %v3317, %v3324
    %v3333 = vadd.f32 %v3331, %v3332
    %v3334 = vtanh.pop %v3333
    %v3335 = vmul.f32 %v3330, %v3334
    %3336 = vst [vmem:[#allocation3 + $0x40] sm:$0xff] %v3335
    %v3337 = vld [vmem:[%s653] sm:$0xff]
    %v3338 = vld [vmem:[%s653 + $0x8] sm:$0xff]
    %v3339 = vld [vmem:[%s653 + $0x10] sm:$0xff]
    %v3340 = vld [vmem:[%s653 + $0x18] sm:$0xff]
    %v3341 = vld [vmem:[#allocation7] sm:$0xff]
    %v3342 = vld [vmem:[#allocation7 + $0x8] sm:$0xff]
    %v3343 = vld [vmem:[#allocation7 + $0x10] sm:$0xff]
    %v3344 = vld [vmem:[#allocation7 + $0x18] sm:$0xff]
    %v3345 = vld [vmem:[#allocation7 + $0x20] sm:$0xff]
    %v3346 = vld [vmem:[#allocation7 + $0x28] sm:$0xff]
    %v3347 = vld [vmem:[#allocation7 + $0x30] sm:$0xff]
    %v3348 = vld [vmem:[#allocation7 + $0x38] sm:$0xff]
    %v3349 = vld [vmem:[#allocation7 + $0x40] sm:$0xff]
    %v3350 = vld [vmem:[#allocation7 + $0x48] sm:$0xff]
    %v3351 = vld [vmem:[#allocation7 + $0x50] sm:$0xff]
    %v3352 = vld [vmem:[#allocation7 + $0x58] sm:$0xff]
    %v3353 = vld [vmem:[#allocation7 + $0x60] sm:$0xff]
    %v3354 = vld [vmem:[#allocation7 + $0x68] sm:$0xff]
    %v3355 = vld [vmem:[#allocation7 + $0x70] sm:$0xff]
    %v3356 = vld [vmem:[#allocation7 + $0x78] sm:$0xff]
    %v3357 = vld [vmem:[#allocation7 + $0x80] sm:$0xff]
    %v3358 = vld [vmem:[#allocation7 + $0x88] sm:$0xff]
    %v3359 = vld [vmem:[#allocation7 + $0x90] sm:$0xff]
    %v3360 = vld [vmem:[#allocation7 + $0x98] sm:$0xff]
    %v3361 = vld [vmem:[#allocation7 + $0xa0] sm:$0xff]
    %v3362 = vld [vmem:[#allocation7 + $0xa8] sm:$0xff]
    %v3363 = vld [vmem:[#allocation7 + $0xb0] sm:$0xff]
    %v3364 = vld [vmem:[#allocation7 + $0xb8] sm:$0xff]
    %v3365 = vld [vmem:[#allocation7 + $0xc0] sm:$0xff]
    %v3366 = vld [vmem:[#allocation7 + $0xc8] sm:$0xff]
    %v3367 = vld [vmem:[#allocation7 + $0xd0] sm:$0xff]
    %v3368 = vld [vmem:[#allocation7 + $0xd8] sm:$0xff]
    %v3369 = vld [vmem:[#allocation7 + $0xe0] sm:$0xff]
    %v3370 = vld [vmem:[#allocation7 + $0xe8] sm:$0xff]
    %v3371 = vld [vmem:[#allocation7 + $0xf0] sm:$0xff]
    %v3372 = vld [vmem:[#allocation7 + $0xf8] sm:$0xff]
    %v3373 = vld [vmem:[#allocation7 + $0x100] sm:$0xff]
    %v3374 = vld [vmem:[#allocation7 + $0x108] sm:$0xff]
    %v3375 = vld [vmem:[#allocation7 + $0x110] sm:$0xff]
    %v3376 = vld [vmem:[#allocation7 + $0x118] sm:$0xff]
    %v3377 = vld [vmem:[#allocation7 + $0x120] sm:$0xff]
    %v3378 = vld [vmem:[#allocation7 + $0x128] sm:$0xff]
    %v3379 = vld [vmem:[#allocation7 + $0x130] sm:$0xff]
    %v3380 = vld [vmem:[#allocation7 + $0x138] sm:$0xff]
    %v3381 = vld [vmem:[#allocation7 + $0x140] sm:$0xff]
    %v3382 = vld [vmem:[#allocation7 + $0x148] sm:$0xff]
    %v3383 = vld [vmem:[#allocation7 + $0x150] sm:$0xff]
    %v3384 = vld [vmem:[#allocation7 + $0x158] sm:$0xff]
    %v3385 = vld [vmem:[#allocation7 + $0x160] sm:$0xff]
    %v3386 = vld [vmem:[#allocation7 + $0x168] sm:$0xff]
    %v3387 = vld [vmem:[#allocation7 + $0x170] sm:$0xff]
    %v3388 = vld [vmem:[#allocation7 + $0x178] sm:$0xff]
    %v3389 = vld [vmem:[#allocation7 + $0x180] sm:$0xff]
    %v3390 = vld [vmem:[#allocation7 + $0x188] sm:$0xff]
    %v3391 = vld [vmem:[#allocation7 + $0x190] sm:$0xff]
    %v3392 = vld [vmem:[#allocation7 + $0x198] sm:$0xff]
    %v3393 = vld [vmem:[#allocation7 + $0x1a0] sm:$0xff]
    %v3394 = vld [vmem:[#allocation7 + $0x1a8] sm:$0xff]
    %v3395 = vld [vmem:[#allocation7 + $0x1b0] sm:$0xff]
    %v3396 = vld [vmem:[#allocation7 + $0x1b8] sm:$0xff]
    %v3397 = vld [vmem:[#allocation7 + $0x1c0] sm:$0xff]
    %v3398 = vld [vmem:[#allocation7 + $0x1c8] sm:$0xff]
    %v3399 = vld [vmem:[#allocation7 + $0x1d0] sm:$0xff]
    %v3400 = vld [vmem:[#allocation7 + $0x1d8] sm:$0xff]
    %v3401 = vld [vmem:[#allocation7 + $0x1e0] sm:$0xff]
    %v3402 = vld [vmem:[#allocation7 + $0x1e8] sm:$0xff]
    %v3403 = vld [vmem:[#allocation7 + $0x1f0] sm:$0xff]
    %v3404 = vld [vmem:[#allocation7 + $0x1f8] sm:$0xff]
    %3405 = vmatprep.subr.mxu0 %v3342
    %3406 = vmatpush1.msra.mxu0 %v3341
    %3407 = vmatprep.subr.mxu0 %v3346
    %3408 = vmatpush1.msra.mxu0 %v3345
    %3409 = vmatprep.subr.mxu0 %v3350
    %3410 = vmatpush1.msra.mxu0 %v3349
    %3411 = vmatprep.subr.mxu0 %v3354
    %3412 = vmatpush1.msra.mxu0 %v3353
    %3413 = vmatprep.subr.mxu0 %v3358
    %3414 = vmatpush1.msra.mxu0 %v3357
    %3415 = vmatprep.subr.mxu0 %v3362
    %3416 = vmatpush1.msra.mxu0 %v3361
    %3417 = vmatprep.subr.mxu0 %v3366
    %3418 = vmatpush1.msra.mxu0 %v3365
    %3419 = vmatprep.subr.mxu0 %v3370
    %3420 = vmatpush1.msra.mxu0 %v3369
    %3421 = vmatprep.subr.mxu0 %v3374
    %3422 = vmatpush1.msra.mxu0 %v3373
    %3423 = vmatprep.subr.mxu0 %v3378
    %3424 = vmatpush1.msra.mxu0 %v3377
    %3425 = vmatprep.subr.mxu0 %v3382
    %3426 = vmatpush1.msra.mxu0 %v3381
    %3427 = vmatprep.subr.mxu0 %v3386
    %3428 = vmatpush1.msra.mxu0 %v3385
    %3429 = vmatprep.subr.mxu0 %v3390
    %3430 = vmatpush1.msra.mxu0 %v3389
    %3431 = vmatprep.subr.mxu0 %v3394
    %3432 = vmatpush1.msra.mxu0 %v3393
    %3433 = vmatprep.subr.mxu0 %v3398
    %3434 = vmatpush1.msra.mxu0 %v3397
    %3435 = vmatprep.subr.mxu0 %v3402
    %3436 = vmatpush1.msra.mxu0 %v3401
    %3437 = vmatprep.subr.mxu0 0.0
    %3438 = vmatpush1.msra.mxu0 0.0
    %3439 = vmatprep.subr.mxu0 0.0
    %3440 = vmatpush1.msra.mxu0 0.0
    %3441 = vmatprep.subr.mxu0 0.0
    %3442 = vmatpush1.msra.mxu0 0.0
    %3443 = vmatprep.subr.mxu0 0.0
    %3444 = vmatpush1.msra.mxu0 0.0
    %3445 = vmatprep.subr.mxu0 0.0
    %3446 = vmatpush1.msra.mxu0 0.0
    %3447 = vmatprep.subr.mxu0 0.0
    %3448 = vmatpush1.msra.mxu0 0.0
    %3449 = vmatprep.subr.mxu0 0.0
    %3450 = vmatpush1.msra.mxu0 0.0
    %3451 = vmatprep.subr.mxu0 0.0
    %3452 = vmatpush1.msra.mxu0 0.0
    %3453 = vmatprep.subr.mxu0 0.0
    %3454 = vmatpush1.msra.mxu0 0.0
    %3455 = vmatprep.subr.mxu0 0.0
    %3456 = vmatpush1.msra.mxu0 0.0
    %3457 = vmatprep.subr.mxu0 0.0
    %3458 = vmatpush1.msra.mxu0 0.0
    %3459 = vmatprep.subr.mxu0 0.0
    %3460 = vmatpush1.msra.mxu0 0.0
    %3461 = vmatprep.subr.mxu0 0.0
    %3462 = vmatpush1.msra.mxu0 0.0
    %3463 = vmatprep.subr.mxu0 0.0
    %3464 = vmatpush1.msra.mxu0 0.0
    %3465 = vmatprep.subr.mxu0 0.0
    %3466 = vmatpush1.msra.mxu0 0.0
    %3467 = vmatprep.subr.mxu0 0.0
    %3468 = vmatpush1.msra.mxu0 0.0
    %3469 = vmatprep.mubr.f32.mxu0 0.0
    %3470 = vmatmul.mubr.f32.gmra.mrb[0].mxu0 %v3335
    %v3471 = vpop.f32.mrb[0].mxu0
    %v3472 = vadd.f32 0.0, %v3471
    %v3473 = vpop.f32.mrb[0].mxu0
    %v3474 = vadd.f32 0.0, %v3473
    %3475 = vdwg.mxu0
    %3476 = vmatprep.subr.mxu0 %v3344
    %3477 = vmatpush1.msra.mxu0 %v3343
    %3478 = vmatprep.subr.mxu0 %v3348
    %3479 = vmatpush1.msra.mxu0 %v3347
    %3480 = vmatprep.subr.mxu0 %v3352
    %3481 = vmatpush1.msra.mxu0 %v3351
    %3482 = vmatprep.subr.mxu0 %v3356
    %3483 = vmatpush1.msra.mxu0 %v3355
    %3484 = vmatprep.subr.mxu0 %v3360
    %3485 = vmatpush1.msra.mxu0 %v3359
    %3486 = vmatprep.subr.mxu0 %v3364
    %3487 = vmatpush1.msra.mxu0 %v3363
    %3488 = vmatprep.subr.mxu0 %v3368
    %3489 = vmatpush1.msra.mxu0 %v3367
    %3490 = vmatprep.subr.mxu0 %v3372
    %3491 = vmatpush1.msra.mxu0 %v3371
    %3492 = vmatprep.subr.mxu0 %v3376
    %3493 = vmatpush1.msra.mxu0 %v3375
    %3494 = vmatprep.subr.mxu0 %v3380
    %3495 = vmatpush1.msra.mxu0 %v3379
    %3496 = vmatprep.subr.mxu0 %v3384
    %3497 = vmatpush1.msra.mxu0 %v3383
    %3498 = vmatprep.subr.mxu0 %v3388
    %3499 = vmatpush1.msra.mxu0 %v3387
    %3500 = vmatprep.subr.mxu0 %v3392
    %3501 = vmatpush1.msra.mxu0 %v3391
    %3502 = vmatprep.subr.mxu0 %v3396
    %3503 = vmatpush1.msra.mxu0 %v3395
    %3504 = vmatprep.subr.mxu0 %v3400
    %3505 = vmatpush1.msra.mxu0 %v3399
    %3506 = vmatprep.subr.mxu0 %v3404
    %3507 = vmatpush1.msra.mxu0 %v3403
    %3508 = vmatprep.subr.mxu0 0.0
    %3509 = vmatpush1.msra.mxu0 0.0
    %3510 = vmatprep.subr.mxu0 0.0
    %3511 = vmatpush1.msra.mxu0 0.0
    %3512 = vmatprep.subr.mxu0 0.0
    %3513 = vmatpush1.msra.mxu0 0.0
    %3514 = vmatprep.subr.mxu0 0.0
    %3515 = vmatpush1.msra.mxu0 0.0
    %3516 = vmatprep.subr.mxu0 0.0
    %3517 = vmatpush1.msra.mxu0 0.0
    %3518 = vmatprep.subr.mxu0 0.0
    %3519 = vmatpush1.msra.mxu0 0.0
    %3520 = vmatprep.subr.mxu0 0.0
    %3521 = vmatpush1.msra.mxu0 0.0
    %3522 = vmatprep.subr.mxu0 0.0
    %3523 = vmatpush1.msra.mxu0 0.0
    %3524 = vmatprep.subr.mxu0 0.0
    %3525 = vmatpush1.msra.mxu0 0.0
    %3526 = vmatprep.subr.mxu0 0.0
    %3527 = vmatpush1.msra.mxu0 0.0
    %3528 = vmatprep.subr.mxu0 0.0
    %3529 = vmatpush1.msra.mxu0 0.0
    %3530 = vmatprep.subr.mxu0 0.0
    %3531 = vmatpush1.msra.mxu0 0.0
    %3532 = vmatprep.subr.mxu0 0.0
    %3533 = vmatpush1.msra.mxu0 0.0
    %3534 = vmatprep.subr.mxu0 0.0
    %3535 = vmatpush1.msra.mxu0 0.0
    %3536 = vmatprep.subr.mxu0 0.0
    %3537 = vmatpush1.msra.mxu0 0.0
    %3538 = vmatprep.subr.mxu0 0.0
    %3539 = vmatpush1.msra.mxu0 0.0
    %3540 = vmatprep.mubr.f32.mxu0 0.0
    %3541 = vmatmul.mubr.f32.gmra.mrb[0].mxu0 %v3335
    %v3542 = vpop.f32.mrb[0].mxu0
    %v3543 = vadd.f32 0.0, %v3542
    %v3544 = vpop.f32.mrb[0].mxu0
    %v3545 = vadd.f32 0.0, %v3544
    %3546 = vdwg.mxu0
    %v3547 = vadd.f32 %v3337, %v3472
    %v3548 = vadd.f32 %v3338, %v3474
    %v3549 = vadd.f32 %v3339, %v3543
    %v3550 = vadd.f32 %v3340, %v3545
    %v3551 = vxor.u32 %v3547, 2147483648
    %v3552 = vmul.f32 %v3551, 1.442695
    %v3553 = vpow.pop %v3552
    %v3554 = vadd.f32 %v3553, 1.0
    %v3555 = vrcp.pop %v3554
    %v3556 = vmul.f32 1.0, %v3555
    %v3557 = vxor.u32 %v3548, 2147483648
    %v3558 = vmul.f32 %v3557, 1.442695
    %v3559 = vpow.pop %v3558
    %v3560 = vadd.f32 %v3559, 1.0
    %v3561 = vrcp.pop %v3560
    %v3562 = vmul.f32 1.0, %v3561
    %v3563 = vtanh.pop %v3549
    %v3564 = vxor.u32 %v3550, 2147483648
    %v3565 = vmul.f32 %v3564, 1.442695
    %v3566 = vpow.pop %v3565
    %v3567 = vadd.f32 %v3566, 1.0
    %v3568 = vrcp.pop %v3567
    %v3569 = vmul.f32 1.0, %v3568
    %v3570 = vmul.f32 %v3562, %v3333
    %v3571 = vmul.f32 %v3556, %v3563
    %v3572 = vadd.f32 %v3570, %v3571
    %v3573 = vtanh.pop %v3572
    %v3574 = vmul.f32 %v3569, %v3573
    %3575 = vst [vmem:[#allocation3 + $0x48] sm:$0xff] %v3574
    %v3576 = vld [vmem:[%s697] sm:$0xff]
    %v3577 = vld [vmem:[%s697 + $0x8] sm:$0xff]
    %v3578 = vld [vmem:[%s697 + $0x10] sm:$0xff]
    %v3579 = vld [vmem:[%s697 + $0x18] sm:$0xff]
    %v3580 = vld [vmem:[#allocation7] sm:$0xff]
    %v3581 = vld [vmem:[#allocation7 + $0x8] sm:$0xff]
    %v3582 = vld [vmem:[#allocation7 + $0x10] sm:$0xff]
    %v3583 = vld [vmem:[#allocation7 + $0x18] sm:$0xff]
    %v3584 = vld [vmem:[#allocation7 + $0x20] sm:$0xff]
    %v3585 = vld [vmem:[#allocation7 + $0x28] sm:$0xff]
    %v3586 = vld [vmem:[#allocation7 + $0x30] sm:$0xff]
    %v3587 = vld [vmem:[#allocation7 + $0x38] sm:$0xff]
    %v3588 = vld [vmem:[#allocation7 + $0x40] sm:$0xff]
    %v3589 = vld [vmem:[#allocation7 + $0x48] sm:$0xff]
    %v3590 = vld [vmem:[#allocation7 + $0x50] sm:$0xff]
    %v3591 = vld [vmem:[#allocation7 + $0x58] sm:$0xff]
    %v3592 = vld [vmem:[#allocation7 + $0x60] sm:$0xff]
    %v3593 = vld [vmem:[#allocation7 + $0x68] sm:$0xff]
    %v3594 = vld [vmem:[#allocation7 + $0x70] sm:$0xff]
    %v3595 = vld [vmem:[#allocation7 + $0x78] sm:$0xff]
    %v3596 = vld [vmem:[#allocation7 + $0x80] sm:$0xff]
    %v3597 = vld [vmem:[#allocation7 + $0x88] sm:$0xff]
    %v3598 = vld [vmem:[#allocation7 + $0x90] sm:$0xff]
    %v3599 = vld [vmem:[#allocation7 + $0x98] sm:$0xff]
    %v3600 = vld [vmem:[#allocation7 + $0xa0] sm:$0xff]
    %v3601 = vld [vmem:[#allocation7 + $0xa8] sm:$0xff]
    %v3602 = vld [vmem:[#allocation7 + $0xb0] sm:$0xff]
    %v3603 = vld [vmem:[#allocation7 + $0xb8] sm:$0xff]
    %v3604 = vld [vmem:[#allocation7 + $0xc0] sm:$0xff]
    %v3605 = vld [vmem:[#allocation7 + $0xc8] sm:$0xff]
    %v3606 = vld [vmem:[#allocation7 + $0xd0] sm:$0xff]
    %v3607 = vld [vmem:[#allocation7 + $0xd8] sm:$0xff]
    %v3608 = vld [vmem:[#allocation7 + $0xe0] sm:$0xff]
    %v3609 = vld [vmem:[#allocation7 + $0xe8] sm:$0xff]
    %v3610 = vld [vmem:[#allocation7 + $0xf0] sm:$0xff]
    %v3611 = vld [vmem:[#allocation7 + $0xf8] sm:$0xff]
    %v3612 = vld [vmem:[#allocation7 + $0x100] sm:$0xff]
    %v3613 = vld [vmem:[#allocation7 + $0x108] sm:$0xff]
    %v3614 = vld [vmem:[#allocation7 + $0x110] sm:$0xff]
    %v3615 = vld [vmem:[#allocation7 + $0x118] sm:$0xff]
    %v3616 = vld [vmem:[#allocation7 + $0x120] sm:$0xff]
    %v3617 = vld [vmem:[#allocation7 + $0x128] sm:$0xff]
    %v3618 = vld [vmem:[#allocation7 + $0x130] sm:$0xff]
    %v3619 = vld [vmem:[#allocation7 + $0x138] sm:$0xff]
    %v3620 = vld [vmem:[#allocation7 + $0x140] sm:$0xff]
    %v3621 = vld [vmem:[#allocation7 + $0x148] sm:$0xff]
    %v3622 = vld [vmem:[#allocation7 + $0x150] sm:$0xff]
    %v3623 = vld [vmem:[#allocation7 + $0x158] sm:$0xff]
    %v3624 = vld [vmem:[#allocation7 + $0x160] sm:$0xff]
    %v3625 = vld [vmem:[#allocation7 + $0x168] sm:$0xff]
    %v3626 = vld [vmem:[#allocation7 + $0x170] sm:$0xff]
    %v3627 = vld [vmem:[#allocation7 + $0x178] sm:$0xff]
    %v3628 = vld [vmem:[#allocation7 + $0x180] sm:$0xff]
    %v3629 = vld [vmem:[#allocation7 + $0x188] sm:$0xff]
    %v3630 = vld [vmem:[#allocation7 + $0x190] sm:$0xff]
    %v3631 = vld [vmem:[#allocation7 + $0x198] sm:$0xff]
    %v3632 = vld [vmem:[#allocation7 + $0x1a0] sm:$0xff]
    %v3633 = vld [vmem:[#allocation7 + $0x1a8] sm:$0xff]
    %v3634 = vld [vmem:[#allocation7 + $0x1b0] sm:$0xff]
    %v3635 = vld [vmem:[#allocation7 + $0x1b8] sm:$0xff]
    %v3636 = vld [vmem:[#allocation7 + $0x1c0] sm:$0xff]
    %v3637 = vld [vmem:[#allocation7 + $0x1c8] sm:$0xff]
    %v3638 = vld [vmem:[#allocation7 + $0x1d0] sm:$0xff]
    %v3639 = vld [vmem:[#allocation7 + $0x1d8] sm:$0xff]
    %v3640 = vld [vmem:[#allocation7 + $0x1e0] sm:$0xff]
    %v3641 = vld [vmem:[#allocation7 + $0x1e8] sm:$0xff]
    %v3642 = vld [vmem:[#allocation7 + $0x1f0] sm:$0xff]
    %v3643 = vld [vmem:[#allocation7 + $0x1f8] sm:$0xff]
    %3644 = vmatprep.subr.mxu0 %v3581
    %3645 = vmatpush1.msra.mxu0 %v3580
    %3646 = vmatprep.subr.mxu0 %v3585
    %3647 = vmatpush1.msra.mxu0 %v3584
    %3648 = vmatprep.subr.mxu0 %v3589
    %3649 = vmatpush1.msra.mxu0 %v3588
    %3650 = vmatprep.subr.mxu0 %v3593
    %3651 = vmatpush1.msra.mxu0 %v3592
    %3652 = vmatprep.subr.mxu0 %v3597
    %3653 = vmatpush1.msra.mxu0 %v3596
    %3654 = vmatprep.subr.mxu0 %v3601
    %3655 = vmatpush1.msra.mxu0 %v3600
    %3656 = vmatprep.subr.mxu0 %v3605
    %3657 = vmatpush1.msra.mxu0 %v3604
    %3658 = vmatprep.subr.mxu0 %v3609
    %3659 = vmatpush1.msra.mxu0 %v3608
    %3660 = vmatprep.subr.mxu0 %v3613
    %3661 = vmatpush1.msra.mxu0 %v3612
    %3662 = vmatprep.subr.mxu0 %v3617
    %3663 = vmatpush1.msra.mxu0 %v3616
    %3664 = vmatprep.subr.mxu0 %v3621
    %3665 = vmatpush1.msra.mxu0 %v3620
    %3666 = vmatprep.subr.mxu0 %v3625
    %3667 = vmatpush1.msra.mxu0 %v3624
    %3668 = vmatprep.subr.mxu0 %v3629
    %3669 = vmatpush1.msra.mxu0 %v3628
    %3670 = vmatprep.subr.mxu0 %v3633
    %3671 = vmatpush1.msra.mxu0 %v3632
    %3672 = vmatprep.subr.mxu0 %v3637
    %3673 = vmatpush1.msra.mxu0 %v3636
    %3674 = vmatprep.subr.mxu0 %v3641
    %3675 = vmatpush1.msra.mxu0 %v3640
    %3676 = vmatprep.subr.mxu0 0.0
    %3677 = vmatpush1.msra.mxu0 0.0
    %3678 = vmatprep.subr.mxu0 0.0
    %3679 = vmatpush1.msra.mxu0 0.0
    %3680 = vmatprep.subr.mxu0 0.0
    %3681 = vmatpush1.msra.mxu0 0.0
    %3682 = vmatprep.subr.mxu0 0.0
    %3683 = vmatpush1.msra.mxu0 0.0
    %3684 = vmatprep.subr.mxu0 0.0
    %3685 = vmatpush1.msra.mxu0 0.0
    %3686 = vmatprep.subr.mxu0 0.0
    %3687 = vmatpush1.msra.mxu0 0.0
    %3688 = vmatprep.subr.mxu0 0.0
    %3689 = vmatpush1.msra.mxu0 0.0
    %3690 = vmatprep.subr.mxu0 0.0
    %3691 = vmatpush1.msra.mxu0 0.0
    %3692 = vmatprep.subr.mxu0 0.0
    %3693 = vmatpush1.msra.mxu0 0.0
    %3694 = vmatprep.subr.mxu0 0.0
    %3695 = vmatpush1.msra.mxu0 0.0
    %3696 = vmatprep.subr.mxu0 0.0
    %3697 = vmatpush1.msra.mxu0 0.0
    %3698 = vmatprep.subr.mxu0 0.0
    %3699 = vmatpush1.msra.mxu0 0.0
    %3700 = vmatprep.subr.mxu0 0.0
    %3701 = vmatpush1.msra.mxu0 0.0
    %3702 = vmatprep.subr.mxu0 0.0
    %3703 = vmatpush1.msra.mxu0 0.0
    %3704 = vmatprep.subr.mxu0 0.0
    %3705 = vmatpush1.msra.mxu0 0.0
    %3706 = vmatprep.subr.mxu0 0.0
    %3707 = vmatpush1.msra.mxu0 0.0
    %3708 = vmatprep.mubr.f32.mxu0 0.0
    %3709 = vmatmul.mubr.f32.gmra.mrb[0].mxu0 %v3574
    %v3710 = vpop.f32.mrb[0].mxu0
    %v3711 = vadd.f32 0.0, %v3710
    %v3712 = vpop.f32.mrb[0].mxu0
    %v3713 = vadd.f32 0.0, %v3712
    %3714 = vdwg.mxu0
    %3715 = vmatprep.subr.mxu0 %v3583
    %3716 = vmatpush1.msra.mxu0 %v3582
    %3717 = vmatprep.subr.mxu0 %v3587
    %3718 = vmatpush1.msra.mxu0 %v3586
    %3719 = vmatprep.subr.mxu0 %v3591
    %3720 = vmatpush1.msra.mxu0 %v3590
    %3721 = vmatprep.subr.mxu0 %v3595
    %3722 = vmatpush1.msra.mxu0 %v3594
    %3723 = vmatprep.subr.mxu0 %v3599
    %3724 = vmatpush1.msra.mxu0 %v3598
    %3725 = vmatprep.subr.mxu0 %v3603
    %3726 = vmatpush1.msra.mxu0 %v3602
    %3727 = vmatprep.subr.mxu0 %v3607
    %3728 = vmatpush1.msra.mxu0 %v3606
    %3729 = vmatprep.subr.mxu0 %v3611
    %3730 = vmatpush1.msra.mxu0 %v3610
    %3731 = vmatprep.subr.mxu0 %v3615
    %3732 = vmatpush1.msra.mxu0 %v3614
    %3733 = vmatprep.subr.mxu0 %v3619
    %3734 = vmatpush1.msra.mxu0 %v3618
    %3735 = vmatprep.subr.mxu0 %v3623
    %3736 = vmatpush1.msra.mxu0 %v3622
    %3737 = vmatprep.subr.mxu0 %v3627
    %3738 = vmatpush1.msra.mxu0 %v3626
    %3739 = vmatprep.subr.mxu0 %v3631
    %3740 = vmatpush1.msra.mxu0 %v3630
    %3741 = vmatprep.subr.mxu0 %v3635
    %3742 = vmatpush1.msra.mxu0 %v3634
    %3743 = vmatprep.subr.mxu0 %v3639
    %3744 = vmatpush1.msra.mxu0 %v3638
    %3745 = vmatprep.subr.mxu0 %v3643
    %3746 = vmatpush1.msra.mxu0 %v3642
    %3747 = vmatprep.subr.mxu0 0.0
    %3748 = vmatpush1.msra.mxu0 0.0
    %3749 = vmatprep.subr.mxu0 0.0
    %3750 = vmatpush1.msra.mxu0 0.0
    %3751 = vmatprep.subr.mxu0 0.0
    %3752 = vmatpush1.msra.mxu0 0.0
    %3753 = vmatprep.subr.mxu0 0.0
    %3754 = vmatpush1.msra.mxu0 0.0
    %3755 = vmatprep.subr.mxu0 0.0
    %3756 = vmatpush1.msra.mxu0 0.0
    %3757 = vmatprep.subr.mxu0 0.0
    %3758 = vmatpush1.msra.mxu0 0.0
    %3759 = vmatprep.subr.mxu0 0.0
    %3760 = vmatpush1.msra.mxu0 0.0
    %3761 = vmatprep.subr.mxu0 0.0
    %3762 = vmatpush1.msra.mxu0 0.0
    %3763 = vmatprep.subr.mxu0 0.0
    %3764 = vmatpush1.msra.mxu0 0.0
    %3765 = vmatprep.subr.mxu0 0.0
    %3766 = vmatpush1.msra.mxu0 0.0
    %3767 = vmatprep.subr.mxu0 0.0
    %3768 = vmatpush1.msra.mxu0 0.0
    %3769 = vmatprep.subr.mxu0 0.0
    %3770 = vmatpush1.msra.mxu0 0.0
    %3771 = vmatprep.subr.mxu0 0.0
    %3772 = vmatpush1.msra.mxu0 0.0
    %3773 = vmatprep.subr.mxu0 0.0
    %3774 = vmatpush1.msra.mxu0 0.0
    %3775 = vmatprep.subr.mxu0 0.0
    %3776 = vmatpush1.msra.mxu0 0.0
    %3777 = vmatprep.subr.mxu0 0.0
    %3778 = vmatpush1.msra.mxu0 0.0
    %3779 = vmatprep.mubr.f32.mxu0 0.0
    %3780 = vmatmul.mubr.f32.gmra.mrb[0].mxu0 %v3574
    %v3781 = vpop.f32.mrb[0].mxu0
    %v3782 = vadd.f32 0.0, %v3781
    %v3783 = vpop.f32.mrb[0].mxu0
    %v3784 = vadd.f32 0.0, %v3783
    %3785 = vdwg.mxu0
    %v3786 = vadd.f32 %v3576, %v3711
    %v3787 = vadd.f32 %v3577, %v3713
    %v3788 = vadd.f32 %v3578, %v3782
    %v3789 = vadd.f32 %v3579, %v3784
    %v3790 = vxor.u32 %v3786, 2147483648
    %v3791 = vmul.f32 %v3790, 1.442695
    %v3792 = vpow.pop %v3791
    %v3793 = vadd.f32 %v3792, 1.0
    %v3794 = vrcp.pop %v3793
    %v3795 = vmul.f32 1.0, %v3794
    %v3796 = vxor.u32 %v3787, 2147483648
    %v3797 = vmul.f32 %v3796, 1.442695
    %v3798 = vpow.pop %v3797
    %v3799 = vadd.f32 %v3798, 1.0
    %v3800 = vrcp.pop %v3799
    %v3801 = vmul.f32 1.0, %v3800
    %v3802 = vtanh.pop %v3788
    %v3803 = vxor.u32 %v3789, 2147483648
    %v3804 = vmul.f32 %v3803, 1.442695
    %v3805 = vpow.pop %v3804
    %v3806 = vadd.f32 %v3805, 1.0
    %v3807 = vrcp.pop %v3806
    %v3808 = vmul.f32 1.0, %v3807
    %v3809 = vmul.f32 %v3801, %v3572
    %v3810 = vmul.f32 %v3795, %v3802
    %v3811 = vadd.f32 %v3809, %v3810
    %v3812 = vtanh.pop %v3811
    %v3813 = vmul.f32 %v3808, %v3812
    %3814 = vst [vmem:[#allocation3 + $0x50] sm:$0xff] %v3813
    %v3815 = vld [vmem:[%s741] sm:$0xff]
    %v3816 = vld [vmem:[%s741 + $0x8] sm:$0xff]
    %v3817 = vld [vmem:[%s741 + $0x10] sm:$0xff]
    %v3818 = vld [vmem:[%s741 + $0x18] sm:$0xff]
    %v3819 = vld [vmem:[#allocation7] sm:$0xff]
    %v3820 = vld [vmem:[#allocation7 + $0x8] sm:$0xff]
    %v3821 = vld [vmem:[#allocation7 + $0x10] sm:$0xff]
    %v3822 = vld [vmem:[#allocation7 + $0x18] sm:$0xff]
    %v3823 = vld [vmem:[#allocation7 + $0x20] sm:$0xff]
    %v3824 = vld [vmem:[#allocation7 + $0x28] sm:$0xff]
    %v3825 = vld [vmem:[#allocation7 + $0x30] sm:$0xff]
    %v3826 = vld [vmem:[#allocation7 + $0x38] sm:$0xff]
    %v3827 = vld [vmem:[#allocation7 + $0x40] sm:$0xff]
    %v3828 = vld [vmem:[#allocation7 + $0x48] sm:$0xff]
    %v3829 = vld [vmem:[#allocation7 + $0x50] sm:$0xff]
    %v3830 = vld [vmem:[#allocation7 + $0x58] sm:$0xff]
    %v3831 = vld [vmem:[#allocation7 + $0x60] sm:$0xff]
    %v3832 = vld [vmem:[#allocation7 + $0x68] sm:$0xff]
    %v3833 = vld [vmem:[#allocation7 + $0x70] sm:$0xff]
    %v3834 = vld [vmem:[#allocation7 + $0x78] sm:$0xff]
    %v3835 = vld [vmem:[#allocation7 + $0x80] sm:$0xff]
    %v3836 = vld [vmem:[#allocation7 + $0x88] sm:$0xff]
    %v3837 = vld [vmem:[#allocation7 + $0x90] sm:$0xff]
    %v3838 = vld [vmem:[#allocation7 + $0x98] sm:$0xff]
    %v3839 = vld [vmem:[#allocation7 + $0xa0] sm:$0xff]
    %v3840 = vld [vmem:[#allocation7 + $0xa8] sm:$0xff]
    %v3841 = vld [vmem:[#allocation7 + $0xb0] sm:$0xff]
    %v3842 = vld [vmem:[#allocation7 + $0xb8] sm:$0xff]
    %v3843 = vld [vmem:[#allocation7 + $0xc0] sm:$0xff]
    %v3844 = vld [vmem:[#allocation7 + $0xc8] sm:$0xff]
    %v3845 = vld [vmem:[#allocation7 + $0xd0] sm:$0xff]
    %v3846 = vld [vmem:[#allocation7 + $0xd8] sm:$0xff]
    %v3847 = vld [vmem:[#allocation7 + $0xe0] sm:$0xff]
    %v3848 = vld [vmem:[#allocation7 + $0xe8] sm:$0xff]
    %v3849 = vld [vmem:[#allocation7 + $0xf0] sm:$0xff]
    %v3850 = vld [vmem:[#allocation7 + $0xf8] sm:$0xff]
    %v3851 = vld [vmem:[#allocation7 + $0x100] sm:$0xff]
    %v3852 = vld [vmem:[#allocation7 + $0x108] sm:$0xff]
    %v3853 = vld [vmem:[#allocation7 + $0x110] sm:$0xff]
    %v3854 = vld [vmem:[#allocation7 + $0x118] sm:$0xff]
    %v3855 = vld [vmem:[#allocation7 + $0x120] sm:$0xff]
    %v3856 = vld [vmem:[#allocation7 + $0x128] sm:$0xff]
    %v3857 = vld [vmem:[#allocation7 + $0x130] sm:$0xff]
    %v3858 = vld [vmem:[#allocation7 + $0x138] sm:$0xff]
    %v3859 = vld [vmem:[#allocation7 + $0x140] sm:$0xff]
    %v3860 = vld [vmem:[#allocation7 + $0x148] sm:$0xff]
    %v3861 = vld [vmem:[#allocation7 + $0x150] sm:$0xff]
    %v3862 = vld [vmem:[#allocation7 + $0x158] sm:$0xff]
    %v3863 = vld [vmem:[#allocation7 + $0x160] sm:$0xff]
    %v3864 = vld [vmem:[#allocation7 + $0x168] sm:$0xff]
    %v3865 = vld [vmem:[#allocation7 + $0x170] sm:$0xff]
    %v3866 = vld [vmem:[#allocation7 + $0x178] sm:$0xff]
    %v3867 = vld [vmem:[#allocation7 + $0x180] sm:$0xff]
    %v3868 = vld [vmem:[#allocation7 + $0x188] sm:$0xff]
    %v3869 = vld [vmem:[#allocation7 + $0x190] sm:$0xff]
    %v3870 = vld [vmem:[#allocation7 + $0x198] sm:$0xff]
    %v3871 = vld [vmem:[#allocation7 + $0x1a0] sm:$0xff]
    %v3872 = vld [vmem:[#allocation7 + $0x1a8] sm:$0xff]
    %v3873 = vld [vmem:[#allocation7 + $0x1b0] sm:$0xff]
    %v3874 = vld [vmem:[#allocation7 + $0x1b8] sm:$0xff]
    %v3875 = vld [vmem:[#allocation7 + $0x1c0] sm:$0xff]
    %v3876 = vld [vmem:[#allocation7 + $0x1c8] sm:$0xff]
    %v3877 = vld [vmem:[#allocation7 + $0x1d0] sm:$0xff]
    %v3878 = vld [vmem:[#allocation7 + $0x1d8] sm:$0xff]
    %v3879 = vld [vmem:[#allocation7 + $0x1e0] sm:$0xff]
    %v3880 = vld [vmem:[#allocation7 + $0x1e8] sm:$0xff]
    %v3881 = vld [vmem:[#allocation7 + $0x1f0] sm:$0xff]
    %v3882 = vld [vmem:[#allocation7 + $0x1f8] sm:$0xff]
    %3883 = vmatprep.subr.mxu0 %v3820
    %3884 = vmatpush1.msra.mxu0 %v3819
    %3885 = vmatprep.subr.mxu0 %v3824
    %3886 = vmatpush1.msra.mxu0 %v3823
    %3887 = vmatprep.subr.mxu0 %v3828
    %3888 = vmatpush1.msra.mxu0 %v3827
    %3889 = vmatprep.subr.mxu0 %v3832
    %3890 = vmatpush1.msra.mxu0 %v3831
    %3891 = vmatprep.subr.mxu0 %v3836
    %3892 = vmatpush1.msra.mxu0 %v3835
    %3893 = vmatprep.subr.mxu0 %v3840
    %3894 = vmatpush1.msra.mxu0 %v3839
    %3895 = vmatprep.subr.mxu0 %v3844
    %3896 = vmatpush1.msra.mxu0 %v3843
    %3897 = vmatprep.subr.mxu0 %v3848
    %3898 = vmatpush1.msra.mxu0 %v3847
    %3899 = vmatprep.subr.mxu0 %v3852
    %3900 = vmatpush1.msra.mxu0 %v3851
    %3901 = vmatprep.subr.mxu0 %v3856
    %3902 = vmatpush1.msra.mxu0 %v3855
    %3903 = vmatprep.subr.mxu0 %v3860
    %3904 = vmatpush1.msra.mxu0 %v3859
    %3905 = vmatprep.subr.mxu0 %v3864
    %3906 = vmatpush1.msra.mxu0 %v3863
    %3907 = vmatprep.subr.mxu0 %v3868
    %3908 = vmatpush1.msra.mxu0 %v3867
    %3909 = vmatprep.subr.mxu0 %v3872
    %3910 = vmatpush1.msra.mxu0 %v3871
    %3911 = vmatprep.subr.mxu0 %v3876
    %3912 = vmatpush1.msra.mxu0 %v3875
    %3913 = vmatprep.subr.mxu0 %v3880
    %3914 = vmatpush1.msra.mxu0 %v3879
    %3915 = vmatprep.subr.mxu0 0.0
    %3916 = vmatpush1.msra.mxu0 0.0
    %3917 = vmatprep.subr.mxu0 0.0
    %3918 = vmatpush1.msra.mxu0 0.0
    %3919 = vmatprep.subr.mxu0 0.0
    %3920 = vmatpush1.msra.mxu0 0.0
    %3921 = vmatprep.subr.mxu0 0.0
    %3922 = vmatpush1.msra.mxu0 0.0
    %3923 = vmatprep.subr.mxu0 0.0
    %3924 = vmatpush1.msra.mxu0 0.0
    %3925 = vmatprep.subr.mxu0 0.0
    %3926 = vmatpush1.msra.mxu0 0.0
    %3927 = vmatprep.subr.mxu0 0.0
    %3928 = vmatpush1.msra.mxu0 0.0
    %3929 = vmatprep.subr.mxu0 0.0
    %3930 = vmatpush1.msra.mxu0 0.0
    %3931 = vmatprep.subr.mxu0 0.0
    %3932 = vmatpush1.msra.mxu0 0.0
    %3933 = vmatprep.subr.mxu0 0.0
    %3934 = vmatpush1.msra.mxu0 0.0
    %3935 = vmatprep.subr.mxu0 0.0
    %3936 = vmatpush1.msra.mxu0 0.0
    %3937 = vmatprep.subr.mxu0 0.0
    %3938 = vmatpush1.msra.mxu0 0.0
    %3939 = vmatprep.subr.mxu0 0.0
    %3940 = vmatpush1.msra.mxu0 0.0
    %3941 = vmatprep.subr.mxu0 0.0
    %3942 = vmatpush1.msra.mxu0 0.0
    %3943 = vmatprep.subr.mxu0 0.0
    %3944 = vmatpush1.msra.mxu0 0.0
    %3945 = vmatprep.subr.mxu0 0.0
    %3946 = vmatpush1.msra.mxu0 0.0
    %3947 = vmatprep.mubr.f32.mxu0 0.0
    %3948 = vmatmul.mubr.f32.gmra.mrb[0].mxu0 %v3813
    %v3949 = vpop.f32.mrb[0].mxu0
    %v3950 = vadd.f32 0.0, %v3949
    %v3951 = vpop.f32.mrb[0].mxu0
    %v3952 = vadd.f32 0.0, %v3951
    %3953 = vdwg.mxu0
    %3954 = vmatprep.subr.mxu0 %v3822
    %3955 = vmatpush1.msra.mxu0 %v3821
    %3956 = vmatprep.subr.mxu0 %v3826
    %3957 = vmatpush1.msra.mxu0 %v3825
    %3958 = vmatprep.subr.mxu0 %v3830
    %3959 = vmatpush1.msra.mxu0 %v3829
    %3960 = vmatprep.subr.mxu0 %v3834
    %3961 = vmatpush1.msra.mxu0 %v3833
    %3962 = vmatprep.subr.mxu0 %v3838
    %3963 = vmatpush1.msra.mxu0 %v3837
    %3964 = vmatprep.subr.mxu0 %v3842
    %3965 = vmatpush1.msra.mxu0 %v3841
    %3966 = vmatprep.subr.mxu0 %v3846
    %3967 = vmatpush1.msra.mxu0 %v3845
    %3968 = vmatprep.subr.mxu0 %v3850
    %3969 = vmatpush1.msra.mxu0 %v3849
    %3970 = vmatprep.subr.mxu0 %v3854
    %3971 = vmatpush1.msra.mxu0 %v3853
    %3972 = vmatprep.subr.mxu0 %v3858
    %3973 = vmatpush1.msra.mxu0 %v3857
    %3974 = vmatprep.subr.mxu0 %v3862
    %3975 = vmatpush1.msra.mxu0 %v3861
    %3976 = vmatprep.subr.mxu0 %v3866
    %3977 = vmatpush1.msra.mxu0 %v3865
    %3978 = vmatprep.subr.mxu0 %v3870
    %3979 = vmatpush1.msra.mxu0 %v3869
    %3980 = vmatprep.subr.mxu0 %v3874
    %3981 = vmatpush1.msra.mxu0 %v3873
    %3982 = vmatprep.subr.mxu0 %v3878
    %3983 = vmatpush1.msra.mxu0 %v3877
    %3984 = vmatprep.subr.mxu0 %v3882
    %3985 = vmatpush1.msra.mxu0 %v3881
    %3986 = vmatprep.subr.mxu0 0.0
    %3987 = vmatpush1.msra.mxu0 0.0
    %3988 = vmatprep.subr.mxu0 0.0
    %3989 = vmatpush1.msra.mxu0 0.0
    %3990 = vmatprep.subr.mxu0 0.0
    %3991 = vmatpush1.msra.mxu0 0.0
    %3992 = vmatprep.subr.mxu0 0.0
    %3993 = vmatpush1.msra.mxu0 0.0
    %3994 = vmatprep.subr.mxu0 0.0
    %3995 = vmatpush1.msra.mxu0 0.0
    %3996 = vmatprep.subr.mxu0 0.0
    %3997 = vmatpush1.msra.mxu0 0.0
    %3998 = vmatprep.subr.mxu0 0.0
    %3999 = vmatpush1.msra.mxu0 0.0
    %4000 = vmatprep.subr.mxu0 0.0
    %4001 = vmatpush1.msra.mxu0 0.0
    %4002 = vmatprep.subr.mxu0 0.0
    %4003 = vmatpush1.msra.mxu0 0.0
    %4004 = vmatprep.subr.mxu0 0.0
    %4005 = vmatpush1.msra.mxu0 0.0
    %4006 = vmatprep.subr.mxu0 0.0
    %4007 = vmatpush1.msra.mxu0 0.0
    %4008 = vmatprep.subr.mxu0 0.0
    %4009 = vmatpush1.msra.mxu0 0.0
    %4010 = vmatprep.subr.mxu0 0.0
    %4011 = vmatpush1.msra.mxu0 0.0
    %4012 = vmatprep.subr.mxu0 0.0
    %4013 = vmatpush1.msra.mxu0 0.0
    %4014 = vmatprep.subr.mxu0 0.0
    %4015 = vmatpush1.msra.mxu0 0.0
    %4016 = vmatprep.subr.mxu0 0.0
    %4017 = vmatpush1.msra.mxu0 0.0
    %4018 = vmatprep.mubr.f32.mxu0 0.0
    %4019 = vmatmul.mubr.f32.gmra.mrb[0].mxu0 %v3813
    %v4020 = vpop.f32.mrb[0].mxu0
    %v4021 = vadd.f32 0.0, %v4020
    %v4022 = vpop.f32.mrb[0].mxu0
    %v4023 = vadd.f32 0.0, %v4022
    %4024 = vdwg.mxu0
    %v4025 = vadd.f32 %v3815, %v3950
    %v4026 = vadd.f32 %v3816, %v3952
    %v4027 = vadd.f32 %v3817, %v4021
    %v4028 = vadd.f32 %v3818, %v4023
    %v4029 = vxor.u32 %v4025, 2147483648
    %v4030 = vmul.f32 %v4029, 1.442695
    %v4031 = vpow.pop %v4030
    %v4032 = vadd.f32 %v4031, 1.0
    %v4033 = vrcp.pop %v4032
    %v4034 = vmul.f32 1.0, %v4033
    %v4035 = vxor.u32 %v4026, 2147483648
    %v4036 = vmul.f32 %v4035, 1.442695
    %v4037 = vpow.pop %v4036
    %v4038 = vadd.f32 %v4037, 1.0
    %v4039 = vrcp.pop %v4038
    %v4040 = vmul.f32 1.0, %v4039
    %v4041 = vtanh.pop %v4027
    %v4042 = vxor.u32 %v4028, 2147483648
    %v4043 = vmul.f32 %v4042, 1.442695
    %v4044 = vpow.pop %v4043
    %v4045 = vadd.f32 %v4044, 1.0
    %v4046 = vrcp.pop %v4045
    %v4047 = vmul.f32 1.0, %v4046
    %v4048 = vmul.f32 %v4040, %v3811
    %v4049 = vmul.f32 %v4034, %v4041
    %v4050 = vadd.f32 %v4048, %v4049
    %v4051 = vtanh.pop %v4050
    %v4052 = vmul.f32 %v4047, %v4051
    %4053 = vst [vmem:[#allocation3 + $0x58] sm:$0xff] %v4052
    %v4054 = vld [vmem:[%s785] sm:$0xff]
    %v4055 = vld [vmem:[%s785 + $0x8] sm:$0xff]
    %v4056 = vld [vmem:[%s785 + $0x10] sm:$0xff]
    %v4057 = vld [vmem:[%s785 + $0x18] sm:$0xff]
    %v4058 = vld [vmem:[#allocation7] sm:$0xff]
    %v4059 = vld [vmem:[#allocation7 + $0x8] sm:$0xff]
    %v4060 = vld [vmem:[#allocation7 + $0x10] sm:$0xff]
    %v4061 = vld [vmem:[#allocation7 + $0x18] sm:$0xff]
    %v4062 = vld [vmem:[#allocation7 + $0x20] sm:$0xff]
    %v4063 = vld [vmem:[#allocation7 + $0x28] sm:$0xff]
    %v4064 = vld [vmem:[#allocation7 + $0x30] sm:$0xff]
    %v4065 = vld [vmem:[#allocation7 + $0x38] sm:$0xff]
    %v4066 = vld [vmem:[#allocation7 + $0x40] sm:$0xff]
    %v4067 = vld [vmem:[#allocation7 + $0x48] sm:$0xff]
    %v4068 = vld [vmem:[#allocation7 + $0x50] sm:$0xff]
    %v4069 = vld [vmem:[#allocation7 + $0x58] sm:$0xff]
    %v4070 = vld [vmem:[#allocation7 + $0x60] sm:$0xff]
    %v4071 = vld [vmem:[#allocation7 + $0x68] sm:$0xff]
    %v4072 = vld [vmem:[#allocation7 + $0x70] sm:$0xff]
    %v4073 = vld [vmem:[#allocation7 + $0x78] sm:$0xff]
    %v4074 = vld [vmem:[#allocation7 + $0x80] sm:$0xff]
    %v4075 = vld [vmem:[#allocation7 + $0x88] sm:$0xff]
    %v4076 = vld [vmem:[#allocation7 + $0x90] sm:$0xff]
    %v4077 = vld [vmem:[#allocation7 + $0x98] sm:$0xff]
    %v4078 = vld [vmem:[#allocation7 + $0xa0] sm:$0xff]
    %v4079 = vld [vmem:[#allocation7 + $0xa8] sm:$0xff]
    %v4080 = vld [vmem:[#allocation7 + $0xb0] sm:$0xff]
    %v4081 = vld [vmem:[#allocation7 + $0xb8] sm:$0xff]
    %v4082 = vld [vmem:[#allocation7 + $0xc0] sm:$0xff]
    %v4083 = vld [vmem:[#allocation7 + $0xc8] sm:$0xff]
    %v4084 = vld [vmem:[#allocation7 + $0xd0] sm:$0xff]
    %v4085 = vld [vmem:[#allocation7 + $0xd8] sm:$0xff]
    %v4086 = vld [vmem:[#allocation7 + $0xe0] sm:$0xff]
    %v4087 = vld [vmem:[#allocation7 + $0xe8] sm:$0xff]
    %v4088 = vld [vmem:[#allocation7 + $0xf0] sm:$0xff]
    %v4089 = vld [vmem:[#allocation7 + $0xf8] sm:$0xff]
    %v4090 = vld [vmem:[#allocation7 + $0x100] sm:$0xff]
    %v4091 = vld [vmem:[#allocation7 + $0x108] sm:$0xff]
    %v4092 = vld [vmem:[#allocation7 + $0x110] sm:$0xff]
    %v4093 = vld [vmem:[#allocation7 + $0x118] sm:$0xff]
    %v4094 = vld [vmem:[#allocation7 + $0x120] sm:$0xff]
    %v4095 = vld [vmem:[#allocation7 + $0x128] sm:$0xff]
    %v4096 = vld [vmem:[#allocation7 + $0x130] sm:$0xff]
    %v4097 = vld [vmem:[#allocation7 + $0x138] sm:$0xff]
    %v4098 = vld [vmem:[#allocation7 + $0x140] sm:$0xff]
    %v4099 = vld [vmem:[#allocation7 + $0x148] sm:$0xff]
    %v4100 = vld [vmem:[#allocation7 + $0x150] sm:$0xff]
    %v4101 = vld [vmem:[#allocation7 + $0x158] sm:$0xff]
    %v4102 = vld [vmem:[#allocation7 + $0x160] sm:$0xff]
    %v4103 = vld [vmem:[#allocation7 + $0x168] sm:$0xff]
    %v4104 = vld [vmem:[#allocation7 + $0x170] sm:$0xff]
    %v4105 = vld [vmem:[#allocation7 + $0x178] sm:$0xff]
    %v4106 = vld [vmem:[#allocation7 + $0x180] sm:$0xff]
    %v4107 = vld [vmem:[#allocation7 + $0x188] sm:$0xff]
    %v4108 = vld [vmem:[#allocation7 + $0x190] sm:$0xff]
    %v4109 = vld [vmem:[#allocation7 + $0x198] sm:$0xff]
    %v4110 = vld [vmem:[#allocation7 + $0x1a0] sm:$0xff]
    %v4111 = vld [vmem:[#allocation7 + $0x1a8] sm:$0xff]
    %v4112 = vld [vmem:[#allocation7 + $0x1b0] sm:$0xff]
    %v4113 = vld [vmem:[#allocation7 + $0x1b8] sm:$0xff]
    %v4114 = vld [vmem:[#allocation7 + $0x1c0] sm:$0xff]
    %v4115 = vld [vmem:[#allocation7 + $0x1c8] sm:$0xff]
    %v4116 = vld [vmem:[#allocation7 + $0x1d0] sm:$0xff]
    %v4117 = vld [vmem:[#allocation7 + $0x1d8] sm:$0xff]
    %v4118 = vld [vmem:[#allocation7 + $0x1e0] sm:$0xff]
    %v4119 = vld [vmem:[#allocation7 + $0x1e8] sm:$0xff]
    %v4120 = vld [vmem:[#allocation7 + $0x1f0] sm:$0xff]
    %v4121 = vld [vmem:[#allocation7 + $0x1f8] sm:$0xff]
    %4122 = vmatprep.subr.mxu0 %v4059
    %4123 = vmatpush1.msra.mxu0 %v4058
    %4124 = vmatprep.subr.mxu0 %v4063
    %4125 = vmatpush1.msra.mxu0 %v4062
    %4126 = vmatprep.subr.mxu0 %v4067
    %4127 = vmatpush1.msra.mxu0 %v4066
    %4128 = vmatprep.subr.mxu0 %v4071
    %4129 = vmatpush1.msra.mxu0 %v4070
    %4130 = vmatprep.subr.mxu0 %v4075
    %4131 = vmatpush1.msra.mxu0 %v4074
    %4132 = vmatprep.subr.mxu0 %v4079
    %4133 = vmatpush1.msra.mxu0 %v4078
    %4134 = vmatprep.subr.mxu0 %v4083
    %4135 = vmatpush1.msra.mxu0 %v4082
    %4136 = vmatprep.subr.mxu0 %v4087
    %4137 = vmatpush1.msra.mxu0 %v4086
    %4138 = vmatprep.subr.mxu0 %v4091
    %4139 = vmatpush1.msra.mxu0 %v4090
    %4140 = vmatprep.subr.mxu0 %v4095
    %4141 = vmatpush1.msra.mxu0 %v4094
    %4142 = vmatprep.subr.mxu0 %v4099
    %4143 = vmatpush1.msra.mxu0 %v4098
    %4144 = vmatprep.subr.mxu0 %v4103
    %4145 = vmatpush1.msra.mxu0 %v4102
    %4146 = vmatprep.subr.mxu0 %v4107
    %4147 = vmatpush1.msra.mxu0 %v4106
    %4148 = vmatprep.subr.mxu0 %v4111
    %4149 = vmatpush1.msra.mxu0 %v4110
    %4150 = vmatprep.subr.mxu0 %v4115
    %4151 = vmatpush1.msra.mxu0 %v4114
    %4152 = vmatprep.subr.mxu0 %v4119
    %4153 = vmatpush1.msra.mxu0 %v4118
    %4154 = vmatprep.subr.mxu0 0.0
    %4155 = vmatpush1.msra.mxu0 0.0
    %4156 = vmatprep.subr.mxu0 0.0
    %4157 = vmatpush1.msra.mxu0 0.0
    %4158 = vmatprep.subr.mxu0 0.0
    %4159 = vmatpush1.msra.mxu0 0.0
    %4160 = vmatprep.subr.mxu0 0.0
    %4161 = vmatpush1.msra.mxu0 0.0
    %4162 = vmatprep.subr.mxu0 0.0
    %4163 = vmatpush1.msra.mxu0 0.0
    %4164 = vmatprep.subr.mxu0 0.0
    %4165 = vmatpush1.msra.mxu0 0.0
    %4166 = vmatprep.subr.mxu0 0.0
    %4167 = vmatpush1.msra.mxu0 0.0
    %4168 = vmatprep.subr.mxu0 0.0
    %4169 = vmatpush1.msra.mxu0 0.0
    %4170 = vmatprep.subr.mxu0 0.0
    %4171 = vmatpush1.msra.mxu0 0.0
    %4172 = vmatprep.subr.mxu0 0.0
    %4173 = vmatpush1.msra.mxu0 0.0
    %4174 = vmatprep.subr.mxu0 0.0
    %4175 = vmatpush1.msra.mxu0 0.0
    %4176 = vmatprep.subr.mxu0 0.0
    %4177 = vmatpush1.msra.mxu0 0.0
    %4178 = vmatprep.subr.mxu0 0.0
    %4179 = vmatpush1.msra.mxu0 0.0
    %4180 = vmatprep.subr.mxu0 0.0
    %4181 = vmatpush1.msra.mxu0 0.0
    %4182 = vmatprep.subr.mxu0 0.0
    %4183 = vmatpush1.msra.mxu0 0.0
    %4184 = vmatprep.subr.mxu0 0.0
    %4185 = vmatpush1.msra.mxu0 0.0
    %4186 = vmatprep.mubr.f32.mxu0 0.0
    %4187 = vmatmul.mubr.f32.gmra.mrb[0].mxu0 %v4052
    %v4188 = vpop.f32.mrb[0].mxu0
    %v4189 = vadd.f32 0.0, %v4188
    %v4190 = vpop.f32.mrb[0].mxu0
    %v4191 = vadd.f32 0.0, %v4190
    %4192 = vdwg.mxu0
    %4193 = vmatprep.subr.mxu0 %v4061
    %4194 = vmatpush1.msra.mxu0 %v4060
    %4195 = vmatprep.subr.mxu0 %v4065
    %4196 = vmatpush1.msra.mxu0 %v4064
    %4197 = vmatprep.subr.mxu0 %v4069
    %4198 = vmatpush1.msra.mxu0 %v4068
    %4199 = vmatprep.subr.mxu0 %v4073
    %4200 = vmatpush1.msra.mxu0 %v4072
    %4201 = vmatprep.subr.mxu0 %v4077
    %4202 = vmatpush1.msra.mxu0 %v4076
    %4203 = vmatprep.subr.mxu0 %v4081
    %4204 = vmatpush1.msra.mxu0 %v4080
    %4205 = vmatprep.subr.mxu0 %v4085
    %4206 = vmatpush1.msra.mxu0 %v4084
    %4207 = vmatprep.subr.mxu0 %v4089
    %4208 = vmatpush1.msra.mxu0 %v4088
    %4209 = vmatprep.subr.mxu0 %v4093
    %4210 = vmatpush1.msra.mxu0 %v4092
    %4211 = vmatprep.subr.mxu0 %v4097
    %4212 = vmatpush1.msra.mxu0 %v4096
    %4213 = vmatprep.subr.mxu0 %v4101
    %4214 = vmatpush1.msra.mxu0 %v4100
    %4215 = vmatprep.subr.mxu0 %v4105
    %4216 = vmatpush1.msra.mxu0 %v4104
    %4217 = vmatprep.subr.mxu0 %v4109
    %4218 = vmatpush1.msra.mxu0 %v4108
    %4219 = vmatprep.subr.mxu0 %v4113
    %4220 = vmatpush1.msra.mxu0 %v4112
    %4221 = vmatprep.subr.mxu0 %v4117
    %4222 = vmatpush1.msra.mxu0 %v4116
    %4223 = vmatprep.subr.mxu0 %v4121
    %4224 = vmatpush1.msra.mxu0 %v4120
    %4225 = vmatprep.subr.mxu0 0.0
    %4226 = vmatpush1.msra.mxu0 0.0
    %4227 = vmatprep.subr.mxu0 0.0
    %4228 = vmatpush1.msra.mxu0 0.0
    %4229 = vmatprep.subr.mxu0 0.0
    %4230 = vmatpush1.msra.mxu0 0.0
    %4231 = vmatprep.subr.mxu0 0.0
    %4232 = vmatpush1.msra.mxu0 0.0
    %4233 = vmatprep.subr.mxu0 0.0
    %4234 = vmatpush1.msra.mxu0 0.0
    %4235 = vmatprep.subr.mxu0 0.0
    %4236 = vmatpush1.msra.mxu0 0.0
    %4237 = vmatprep.subr.mxu0 0.0
    %4238 = vmatpush1.msra.mxu0 0.0
    %4239 = vmatprep.subr.mxu0 0.0
    %4240 = vmatpush1.msra.mxu0 0.0
    %4241 = vmatprep.subr.mxu0 0.0
    %4242 = vmatpush1.msra.mxu0 0.0
    %4243 = vmatprep.subr.mxu0 0.0
    %4244 = vmatpush1.msra.mxu0 0.0
    %4245 = vmatprep.subr.mxu0 0.0
    %4246 = vmatpush1.msra.mxu0 0.0
    %4247 = vmatprep.subr.mxu0 0.0
    %4248 = vmatpush1.msra.mxu0 0.0
    %4249 = vmatprep.subr.mxu0 0.0
    %4250 = vmatpush1.msra.mxu0 0.0
    %4251 = vmatprep.subr.mxu0 0.0
    %4252 = vmatpush1.msra.mxu0 0.0
    %4253 = vmatprep.subr.mxu0 0.0
    %4254 = vmatpush1.msra.mxu0 0.0
    %4255 = vmatprep.subr.mxu0 0.0
    %4256 = vmatpush1.msra.mxu0 0.0
    %4257 = vmatprep.mubr.f32.mxu0 0.0
    %4258 = vmatmul.mubr.f32.gmra.mrb[0].mxu0 %v4052
    %v4259 = vpop.f32.mrb[0].mxu0
    %v4260 = vadd.f32 0.0, %v4259
    %v4261 = vpop.f32.mrb[0].mxu0
    %v4262 = vadd.f32 0.0, %v4261
    %4263 = vdwg.mxu0
    %v4264 = vadd.f32 %v4054, %v4189
    %v4265 = vadd.f32 %v4055, %v4191
    %v4266 = vadd.f32 %v4056, %v4260
    %v4267 = vadd.f32 %v4057, %v4262
    %v4268 = vxor.u32 %v4264, 2147483648
    %v4269 = vmul.f32 %v4268, 1.442695
    %v4270 = vpow.pop %v4269
    %v4271 = vadd.f32 %v4270, 1.0
    %v4272 = vrcp.pop %v4271
    %v4273 = vmul.f32 1.0, %v4272
    %v4274 = vxor.u32 %v4265, 2147483648
    %v4275 = vmul.f32 %v4274, 1.442695
    %v4276 = vpow.pop %v4275
    %v4277 = vadd.f32 %v4276, 1.0
    %v4278 = vrcp.pop %v4277
    %v4279 = vmul.f32 1.0, %v4278
    %v4280 = vtanh.pop %v4266
    %v4281 = vxor.u32 %v4267, 2147483648
    %v4282 = vmul.f32 %v4281, 1.442695
    %v4283 = vpow.pop %v4282
    %v4284 = vadd.f32 %v4283, 1.0
    %v4285 = vrcp.pop %v4284
    %v4286 = vmul.f32 1.0, %v4285
    %v4287 = vmul.f32 %v4279, %v4050
    %v4288 = vmul.f32 %v4273, %v4280
    %v4289 = vadd.f32 %v4287, %v4288
    %v4290 = vtanh.pop %v4289
    %v4291 = vmul.f32 %v4286, %v4290
    %4292 = vst [vmem:[#allocation3 + $0x60] sm:$0xff] %v4291
    %v4293 = vld [vmem:[%s829] sm:$0xff]
    %v4294 = vld [vmem:[%s829 + $0x8] sm:$0xff]
    %v4295 = vld [vmem:[%s829 + $0x10] sm:$0xff]
    %v4296 = vld [vmem:[%s829 + $0x18] sm:$0xff]
    %v4297 = vld [vmem:[#allocation7] sm:$0xff]
    %v4298 = vld [vmem:[#allocation7 + $0x8] sm:$0xff]
    %v4299 = vld [vmem:[#allocation7 + $0x10] sm:$0xff]
    %v4300 = vld [vmem:[#allocation7 + $0x18] sm:$0xff]
    %v4301 = vld [vmem:[#allocation7 + $0x20] sm:$0xff]
    %v4302 = vld [vmem:[#allocation7 + $0x28] sm:$0xff]
    %v4303 = vld [vmem:[#allocation7 + $0x30] sm:$0xff]
    %v4304 = vld [vmem:[#allocation7 + $0x38] sm:$0xff]
    %v4305 = vld [vmem:[#allocation7 + $0x40] sm:$0xff]
    %v4306 = vld [vmem:[#allocation7 + $0x48] sm:$0xff]
    %v4307 = vld [vmem:[#allocation7 + $0x50] sm:$0xff]
    %v4308 = vld [vmem:[#allocation7 + $0x58] sm:$0xff]
    %v4309 = vld [vmem:[#allocation7 + $0x60] sm:$0xff]
    %v4310 = vld [vmem:[#allocation7 + $0x68] sm:$0xff]
    %v4311 = vld [vmem:[#allocation7 + $0x70] sm:$0xff]
    %v4312 = vld [vmem:[#allocation7 + $0x78] sm:$0xff]
    %v4313 = vld [vmem:[#allocation7 + $0x80] sm:$0xff]
    %v4314 = vld [vmem:[#allocation7 + $0x88] sm:$0xff]
    %v4315 = vld [vmem:[#allocation7 + $0x90] sm:$0xff]
    %v4316 = vld [vmem:[#allocation7 + $0x98] sm:$0xff]
    %v4317 = vld [vmem:[#allocation7 + $0xa0] sm:$0xff]
    %v4318 = vld [vmem:[#allocation7 + $0xa8] sm:$0xff]
    %v4319 = vld [vmem:[#allocation7 + $0xb0] sm:$0xff]
    %v4320 = vld [vmem:[#allocation7 + $0xb8] sm:$0xff]
    %v4321 = vld [vmem:[#allocation7 + $0xc0] sm:$0xff]
    %v4322 = vld [vmem:[#allocation7 + $0xc8] sm:$0xff]
    %v4323 = vld [vmem:[#allocation7 + $0xd0] sm:$0xff]
    %v4324 = vld [vmem:[#allocation7 + $0xd8] sm:$0xff]
    %v4325 = vld [vmem:[#allocation7 + $0xe0] sm:$0xff]
    %v4326 = vld [vmem:[#allocation7 + $0xe8] sm:$0xff]
    %v4327 = vld [vmem:[#allocation7 + $0xf0] sm:$0xff]
    %v4328 = vld [vmem:[#allocation7 + $0xf8] sm:$0xff]
    %v4329 = vld [vmem:[#allocation7 + $0x100] sm:$0xff]
    %v4330 = vld [vmem:[#allocation7 + $0x108] sm:$0xff]
    %v4331 = vld [vmem:[#allocation7 + $0x110] sm:$0xff]
    %v4332 = vld [vmem:[#allocation7 + $0x118] sm:$0xff]
    %v4333 = vld [vmem:[#allocation7 + $0x120] sm:$0xff]
    %v4334 = vld [vmem:[#allocation7 + $0x128] sm:$0xff]
    %v4335 = vld [vmem:[#allocation7 + $0x130] sm:$0xff]
    %v4336 = vld [vmem:[#allocation7 + $0x138] sm:$0xff]
    %v4337 = vld [vmem:[#allocation7 + $0x140] sm:$0xff]
    %v4338 = vld [vmem:[#allocation7 + $0x148] sm:$0xff]
    %v4339 = vld [vmem:[#allocation7 + $0x150] sm:$0xff]
    %v4340 = vld [vmem:[#allocation7 + $0x158] sm:$0xff]
    %v4341 = vld [vmem:[#allocation7 + $0x160] sm:$0xff]
    %v4342 = vld [vmem:[#allocation7 + $0x168] sm:$0xff]
    %v4343 = vld [vmem:[#allocation7 + $0x170] sm:$0xff]
    %v4344 = vld [vmem:[#allocation7 + $0x178] sm:$0xff]
    %v4345 = vld [vmem:[#allocation7 + $0x180] sm:$0xff]
    %v4346 = vld [vmem:[#allocation7 + $0x188] sm:$0xff]
    %v4347 = vld [vmem:[#allocation7 + $0x190] sm:$0xff]
    %v4348 = vld [vmem:[#allocation7 + $0x198] sm:$0xff]
    %v4349 = vld [vmem:[#allocation7 + $0x1a0] sm:$0xff]
    %v4350 = vld [vmem:[#allocation7 + $0x1a8] sm:$0xff]
    %v4351 = vld [vmem:[#allocation7 + $0x1b0] sm:$0xff]
    %v4352 = vld [vmem:[#allocation7 + $0x1b8] sm:$0xff]
    %v4353 = vld [vmem:[#allocation7 + $0x1c0] sm:$0xff]
    %v4354 = vld [vmem:[#allocation7 + $0x1c8] sm:$0xff]
    %v4355 = vld [vmem:[#allocation7 + $0x1d0] sm:$0xff]
    %v4356 = vld [vmem:[#allocation7 + $0x1d8] sm:$0xff]
    %v4357 = vld [vmem:[#allocation7 + $0x1e0] sm:$0xff]
    %v4358 = vld [vmem:[#allocation7 + $0x1e8] sm:$0xff]
    %v4359 = vld [vmem:[#allocation7 + $0x1f0] sm:$0xff]
    %v4360 = vld [vmem:[#allocation7 + $0x1f8] sm:$0xff]
    %4361 = vmatprep.subr.mxu0 %v4298
    %4362 = vmatpush1.msra.mxu0 %v4297
    %4363 = vmatprep.subr.mxu0 %v4302
    %4364 = vmatpush1.msra.mxu0 %v4301
    %4365 = vmatprep.subr.mxu0 %v4306
    %4366 = vmatpush1.msra.mxu0 %v4305
    %4367 = vmatprep.subr.mxu0 %v4310
    %4368 = vmatpush1.msra.mxu0 %v4309
    %4369 = vmatprep.subr.mxu0 %v4314
    %4370 = vmatpush1.msra.mxu0 %v4313
    %4371 = vmatprep.subr.mxu0 %v4318
    %4372 = vmatpush1.msra.mxu0 %v4317
    %4373 = vmatprep.subr.mxu0 %v4322
    %4374 = vmatpush1.msra.mxu0 %v4321
    %4375 = vmatprep.subr.mxu0 %v4326
    %4376 = vmatpush1.msra.mxu0 %v4325
    %4377 = vmatprep.subr.mxu0 %v4330
    %4378 = vmatpush1.msra.mxu0 %v4329
    %4379 = vmatprep.subr.mxu0 %v4334
    %4380 = vmatpush1.msra.mxu0 %v4333
    %4381 = vmatprep.subr.mxu0 %v4338
    %4382 = vmatpush1.msra.mxu0 %v4337
    %4383 = vmatprep.subr.mxu0 %v4342
    %4384 = vmatpush1.msra.mxu0 %v4341
    %4385 = vmatprep.subr.mxu0 %v4346
    %4386 = vmatpush1.msra.mxu0 %v4345
    %4387 = vmatprep.subr.mxu0 %v4350
    %4388 = vmatpush1.msra.mxu0 %v4349
    %4389 = vmatprep.subr.mxu0 %v4354
    %4390 = vmatpush1.msra.mxu0 %v4353
    %4391 = vmatprep.subr.mxu0 %v4358
    %4392 = vmatpush1.msra.mxu0 %v4357
    %4393 = vmatprep.subr.mxu0 0.0
    %4394 = vmatpush1.msra.mxu0 0.0
    %4395 = vmatprep.subr.mxu0 0.0
    %4396 = vmatpush1.msra.mxu0 0.0
    %4397 = vmatprep.subr.mxu0 0.0
    %4398 = vmatpush1.msra.mxu0 0.0
    %4399 = vmatprep.subr.mxu0 0.0
    %4400 = vmatpush1.msra.mxu0 0.0
    %4401 = vmatprep.subr.mxu0 0.0
    %4402 = vmatpush1.msra.mxu0 0.0
    %4403 = vmatprep.subr.mxu0 0.0
    %4404 = vmatpush1.msra.mxu0 0.0
    %4405 = vmatprep.subr.mxu0 0.0
    %4406 = vmatpush1.msra.mxu0 0.0
    %4407 = vmatprep.subr.mxu0 0.0
    %4408 = vmatpush1.msra.mxu0 0.0
    %4409 = vmatprep.subr.mxu0 0.0
    %4410 = vmatpush1.msra.mxu0 0.0
    %4411 = vmatprep.subr.mxu0 0.0
    %4412 = vmatpush1.msra.mxu0 0.0
    %4413 = vmatprep.subr.mxu0 0.0
    %4414 = vmatpush1.msra.mxu0 0.0
    %4415 = vmatprep.subr.mxu0 0.0
    %4416 = vmatpush1.msra.mxu0 0.0
    %4417 = vmatprep.subr.mxu0 0.0
    %4418 = vmatpush1.msra.mxu0 0.0
    %4419 = vmatprep.subr.mxu0 0.0
    %4420 = vmatpush1.msra.mxu0 0.0
    %4421 = vmatprep.subr.mxu0 0.0
    %4422 = vmatpush1.msra.mxu0 0.0
    %4423 = vmatprep.subr.mxu0 0.0
    %4424 = vmatpush1.msra.mxu0 0.0
    %4425 = vmatprep.mubr.f32.mxu0 0.0
    %4426 = vmatmul.mubr.f32.gmra.mrb[0].mxu0 %v4291
    %v4427 = vpop.f32.mrb[0].mxu0
    %v4428 = vadd.f32 0.0, %v4427
    %v4429 = vpop.f32.mrb[0].mxu0
    %v4430 = vadd.f32 0.0, %v4429
    %4431 = vdwg.mxu0
    %4432 = vmatprep.subr.mxu0 %v4300
    %4433 = vmatpush1.msra.mxu0 %v4299
    %4434 = vmatprep.subr.mxu0 %v4304
    %4435 = vmatpush1.msra.mxu0 %v4303
    %4436 = vmatprep.subr.mxu0 %v4308
    %4437 = vmatpush1.msra.mxu0 %v4307
    %4438 = vmatprep.subr.mxu0 %v4312
    %4439 = vmatpush1.msra.mxu0 %v4311
    %4440 = vmatprep.subr.mxu0 %v4316
    %4441 = vmatpush1.msra.mxu0 %v4315
    %4442 = vmatprep.subr.mxu0 %v4320
    %4443 = vmatpush1.msra.mxu0 %v4319
    %4444 = vmatprep.subr.mxu0 %v4324
    %4445 = vmatpush1.msra.mxu0 %v4323
    %4446 = vmatprep.subr.mxu0 %v4328
    %4447 = vmatpush1.msra.mxu0 %v4327
    %4448 = vmatprep.subr.mxu0 %v4332
    %4449 = vmatpush1.msra.mxu0 %v4331
    %4450 = vmatprep.subr.mxu0 %v4336
    %4451 = vmatpush1.msra.mxu0 %v4335
    %4452 = vmatprep.subr.mxu0 %v4340
    %4453 = vmatpush1.msra.mxu0 %v4339
    %4454 = vmatprep.subr.mxu0 %v4344
    %4455 = vmatpush1.msra.mxu0 %v4343
    %4456 = vmatprep.subr.mxu0 %v4348
    %4457 = vmatpush1.msra.mxu0 %v4347
    %4458 = vmatprep.subr.mxu0 %v4352
    %4459 = vmatpush1.msra.mxu0 %v4351
    %4460 = vmatprep.subr.mxu0 %v4356
    %4461 = vmatpush1.msra.mxu0 %v4355
    %4462 = vmatprep.subr.mxu0 %v4360
    %4463 = vmatpush1.msra.mxu0 %v4359
    %4464 = vmatprep.subr.mxu0 0.0
    %4465 = vmatpush1.msra.mxu0 0.0
    %4466 = vmatprep.subr.mxu0 0.0
    %4467 = vmatpush1.msra.mxu0 0.0
    %4468 = vmatprep.subr.mxu0 0.0
    %4469 = vmatpush1.msra.mxu0 0.0
    %4470 = vmatprep.subr.mxu0 0.0
    %4471 = vmatpush1.msra.mxu0 0.0
    %4472 = vmatprep.subr.mxu0 0.0
    %4473 = vmatpush1.msra.mxu0 0.0
    %4474 = vmatprep.subr.mxu0 0.0
    %4475 = vmatpush1.msra.mxu0 0.0
    %4476 = vmatprep.subr.mxu0 0.0
    %4477 = vmatpush1.msra.mxu0 0.0
    %4478 = vmatprep.subr.mxu0 0.0
    %4479 = vmatpush1.msra.mxu0 0.0
    %4480 = vmatprep.subr.mxu0 0.0
    %4481 = vmatpush1.msra.mxu0 0.0
    %4482 = vmatprep.subr.mxu0 0.0
    %4483 = vmatpush1.msra.mxu0 0.0
    %4484 = vmatprep.subr.mxu0 0.0
    %4485 = vmatpush1.msra.mxu0 0.0
    %4486 = vmatprep.subr.mxu0 0.0
    %4487 = vmatpush1.msra.mxu0 0.0
    %4488 = vmatprep.subr.mxu0 0.0
    %4489 = vmatpush1.msra.mxu0 0.0
    %4490 = vmatprep.subr.mxu0 0.0
    %4491 = vmatpush1.msra.mxu0 0.0
    %4492 = vmatprep.subr.mxu0 0.0
    %4493 = vmatpush1.msra.mxu0 0.0
    %4494 = vmatprep.subr.mxu0 0.0
    %4495 = vmatpush1.msra.mxu0 0.0
    %4496 = vmatprep.mubr.f32.mxu0 0.0
    %4497 = vmatmul.mubr.f32.gmra.mrb[0].mxu0 %v4291
    %v4498 = vpop.f32.mrb[0].mxu0
    %v4499 = vadd.f32 0.0, %v4498
    %v4500 = vpop.f32.mrb[0].mxu0
    %v4501 = vadd.f32 0.0, %v4500
    %4502 = vdwg.mxu0
    %v4503 = vadd.f32 %v4293, %v4428
    %v4504 = vadd.f32 %v4294, %v4430
    %v4505 = vadd.f32 %v4295, %v4499
    %v4506 = vadd.f32 %v4296, %v4501
    %v4507 = vxor.u32 %v4503, 2147483648
    %v4508 = vmul.f32 %v4507, 1.442695
    %v4509 = vpow.pop %v4508
    %v4510 = vadd.f32 %v4509, 1.0
    %v4511 = vrcp.pop %v4510
    %v4512 = vmul.f32 1.0, %v4511
    %v4513 = vxor.u32 %v4504, 2147483648
    %v4514 = vmul.f32 %v4513, 1.442695
    %v4515 = vpow.pop %v4514
    %v4516 = vadd.f32 %v4515, 1.0
    %v4517 = vrcp.pop %v4516
    %v4518 = vmul.f32 1.0, %v4517
    %v4519 = vtanh.pop %v4505
    %v4520 = vxor.u32 %v4506, 2147483648
    %v4521 = vmul.f32 %v4520, 1.442695
    %v4522 = vpow.pop %v4521
    %v4523 = vadd.f32 %v4522, 1.0
    %v4524 = vrcp.pop %v4523
    %v4525 = vmul.f32 1.0, %v4524
    %v4526 = vmul.f32 %v4518, %v4289
    %v4527 = vmul.f32 %v4512, %v4519
    %v4528 = vadd.f32 %v4526, %v4527
    %v4529 = vtanh.pop %v4528
    %v4530 = vmul.f32 %v4525, %v4529
    %4531 = vst [vmem:[#allocation3 + $0x68] sm:$0xff] %v4530
    %v4532 = vld [vmem:[%s873] sm:$0xff]
    %v4533 = vld [vmem:[%s873 + $0x8] sm:$0xff]
    %v4534 = vld [vmem:[%s873 + $0x10] sm:$0xff]
    %v4535 = vld [vmem:[%s873 + $0x18] sm:$0xff]
    %v4536 = vld [vmem:[#allocation7] sm:$0xff]
    %v4537 = vld [vmem:[#allocation7 + $0x8] sm:$0xff]
    %v4538 = vld [vmem:[#allocation7 + $0x10] sm:$0xff]
    %v4539 = vld [vmem:[#allocation7 + $0x18] sm:$0xff]
    %v4540 = vld [vmem:[#allocation7 + $0x20] sm:$0xff]
    %v4541 = vld [vmem:[#allocation7 + $0x28] sm:$0xff]
    %v4542 = vld [vmem:[#allocation7 + $0x30] sm:$0xff]
    %v4543 = vld [vmem:[#allocation7 + $0x38] sm:$0xff]
    %v4544 = vld [vmem:[#allocation7 + $0x40] sm:$0xff]
    %v4545 = vld [vmem:[#allocation7 + $0x48] sm:$0xff]
    %v4546 = vld [vmem:[#allocation7 + $0x50] sm:$0xff]
    %v4547 = vld [vmem:[#allocation7 + $0x58] sm:$0xff]
    %v4548 = vld [vmem:[#allocation7 + $0x60] sm:$0xff]
    %v4549 = vld [vmem:[#allocation7 + $0x68] sm:$0xff]
    %v4550 = vld [vmem:[#allocation7 + $0x70] sm:$0xff]
    %v4551 = vld [vmem:[#allocation7 + $0x78] sm:$0xff]
    %v4552 = vld [vmem:[#allocation7 + $0x80] sm:$0xff]
    %v4553 = vld [vmem:[#allocation7 + $0x88] sm:$0xff]
    %v4554 = vld [vmem:[#allocation7 + $0x90] sm:$0xff]
    %v4555 = vld [vmem:[#allocation7 + $0x98] sm:$0xff]
    %v4556 = vld [vmem:[#allocation7 + $0xa0] sm:$0xff]
    %v4557 = vld [vmem:[#allocation7 + $0xa8] sm:$0xff]
    %v4558 = vld [vmem:[#allocation7 + $0xb0] sm:$0xff]
    %v4559 = vld [vmem:[#allocation7 + $0xb8] sm:$0xff]
    %v4560 = vld [vmem:[#allocation7 + $0xc0] sm:$0xff]
    %v4561 = vld [vmem:[#allocation7 + $0xc8] sm:$0xff]
    %v4562 = vld [vmem:[#allocation7 + $0xd0] sm:$0xff]
    %v4563 = vld [vmem:[#allocation7 + $0xd8] sm:$0xff]
    %v4564 = vld [vmem:[#allocation7 + $0xe0] sm:$0xff]
    %v4565 = vld [vmem:[#allocation7 + $0xe8] sm:$0xff]
    %v4566 = vld [vmem:[#allocation7 + $0xf0] sm:$0xff]
    %v4567 = vld [vmem:[#allocation7 + $0xf8] sm:$0xff]
    %v4568 = vld [vmem:[#allocation7 + $0x100] sm:$0xff]
    %v4569 = vld [vmem:[#allocation7 + $0x108] sm:$0xff]
    %v4570 = vld [vmem:[#allocation7 + $0x110] sm:$0xff]
    %v4571 = vld [vmem:[#allocation7 + $0x118] sm:$0xff]
    %v4572 = vld [vmem:[#allocation7 + $0x120] sm:$0xff]
    %v4573 = vld [vmem:[#allocation7 + $0x128] sm:$0xff]
    %v4574 = vld [vmem:[#allocation7 + $0x130] sm:$0xff]
    %v4575 = vld [vmem:[#allocation7 + $0x138] sm:$0xff]
    %v4576 = vld [vmem:[#allocation7 + $0x140] sm:$0xff]
    %v4577 = vld [vmem:[#allocation7 + $0x148] sm:$0xff]
    %v4578 = vld [vmem:[#allocation7 + $0x150] sm:$0xff]
    %v4579 = vld [vmem:[#allocation7 + $0x158] sm:$0xff]
    %v4580 = vld [vmem:[#allocation7 + $0x160] sm:$0xff]
    %v4581 = vld [vmem:[#allocation7 + $0x168] sm:$0xff]
    %v4582 = vld [vmem:[#allocation7 + $0x170] sm:$0xff]
    %v4583 = vld [vmem:[#allocation7 + $0x178] sm:$0xff]
    %v4584 = vld [vmem:[#allocation7 + $0x180] sm:$0xff]
    %v4585 = vld [vmem:[#allocation7 + $0x188] sm:$0xff]
    %v4586 = vld [vmem:[#allocation7 + $0x190] sm:$0xff]
    %v4587 = vld [vmem:[#allocation7 + $0x198] sm:$0xff]
    %v4588 = vld [vmem:[#allocation7 + $0x1a0] sm:$0xff]
    %v4589 = vld [vmem:[#allocation7 + $0x1a8] sm:$0xff]
    %v4590 = vld [vmem:[#allocation7 + $0x1b0] sm:$0xff]
    %v4591 = vld [vmem:[#allocation7 + $0x1b8] sm:$0xff]
    %v4592 = vld [vmem:[#allocation7 + $0x1c0] sm:$0xff]
    %v4593 = vld [vmem:[#allocation7 + $0x1c8] sm:$0xff]
    %v4594 = vld [vmem:[#allocation7 + $0x1d0] sm:$0xff]
    %v4595 = vld [vmem:[#allocation7 + $0x1d8] sm:$0xff]
    %v4596 = vld [vmem:[#allocation7 + $0x1e0] sm:$0xff]
    %v4597 = vld [vmem:[#allocation7 + $0x1e8] sm:$0xff]
    %v4598 = vld [vmem:[#allocation7 + $0x1f0] sm:$0xff]
    %v4599 = vld [vmem:[#allocation7 + $0x1f8] sm:$0xff]
    %4600 = vmatprep.subr.mxu0 %v4537
    %4601 = vmatpush1.msra.mxu0 %v4536
    %4602 = vmatprep.subr.mxu0 %v4541
    %4603 = vmatpush1.msra.mxu0 %v4540
    %4604 = vmatprep.subr.mxu0 %v4545
    %4605 = vmatpush1.msra.mxu0 %v4544
    %4606 = vmatprep.subr.mxu0 %v4549
    %4607 = vmatpush1.msra.mxu0 %v4548
    %4608 = vmatprep.subr.mxu0 %v4553
    %4609 = vmatpush1.msra.mxu0 %v4552
    %4610 = vmatprep.subr.mxu0 %v4557
    %4611 = vmatpush1.msra.mxu0 %v4556
    %4612 = vmatprep.subr.mxu0 %v4561
    %4613 = vmatpush1.msra.mxu0 %v4560
    %4614 = vmatprep.subr.mxu0 %v4565
    %4615 = vmatpush1.msra.mxu0 %v4564
    %4616 = vmatprep.subr.mxu0 %v4569
    %4617 = vmatpush1.msra.mxu0 %v4568
    %4618 = vmatprep.subr.mxu0 %v4573
    %4619 = vmatpush1.msra.mxu0 %v4572
    %4620 = vmatprep.subr.mxu0 %v4577
    %4621 = vmatpush1.msra.mxu0 %v4576
    %4622 = vmatprep.subr.mxu0 %v4581
    %4623 = vmatpush1.msra.mxu0 %v4580
    %4624 = vmatprep.subr.mxu0 %v4585
    %4625 = vmatpush1.msra.mxu0 %v4584
    %4626 = vmatprep.subr.mxu0 %v4589
    %4627 = vmatpush1.msra.mxu0 %v4588
    %4628 = vmatprep.subr.mxu0 %v4593
    %4629 = vmatpush1.msra.mxu0 %v4592
    %4630 = vmatprep.subr.mxu0 %v4597
    %4631 = vmatpush1.msra.mxu0 %v4596
    %4632 = vmatprep.subr.mxu0 0.0
    %4633 = vmatpush1.msra.mxu0 0.0
    %4634 = vmatprep.subr.mxu0 0.0
    %4635 = vmatpush1.msra.mxu0 0.0
    %4636 = vmatprep.subr.mxu0 0.0
    %4637 = vmatpush1.msra.mxu0 0.0
    %4638 = vmatprep.subr.mxu0 0.0
    %4639 = vmatpush1.msra.mxu0 0.0
    %4640 = vmatprep.subr.mxu0 0.0
    %4641 = vmatpush1.msra.mxu0 0.0
    %4642 = vmatprep.subr.mxu0 0.0
    %4643 = vmatpush1.msra.mxu0 0.0
    %4644 = vmatprep.subr.mxu0 0.0
    %4645 = vmatpush1.msra.mxu0 0.0
    %4646 = vmatprep.subr.mxu0 0.0
    %4647 = vmatpush1.msra.mxu0 0.0
    %4648 = vmatprep.subr.mxu0 0.0
    %4649 = vmatpush1.msra.mxu0 0.0
    %4650 = vmatprep.subr.mxu0 0.0
    %4651 = vmatpush1.msra.mxu0 0.0
    %4652 = vmatprep.subr.mxu0 0.0
    %4653 = vmatpush1.msra.mxu0 0.0
    %4654 = vmatprep.subr.mxu0 0.0
    %4655 = vmatpush1.msra.mxu0 0.0
    %4656 = vmatprep.subr.mxu0 0.0
    %4657 = vmatpush1.msra.mxu0 0.0
    %4658 = vmatprep.subr.mxu0 0.0
    %4659 = vmatpush1.msra.mxu0 0.0
    %4660 = vmatprep.subr.mxu0 0.0
    %4661 = vmatpush1.msra.mxu0 0.0
    %4662 = vmatprep.subr.mxu0 0.0
    %4663 = vmatpush1.msra.mxu0 0.0
    %4664 = vmatprep.mubr.f32.mxu0 0.0
    %4665 = vmatmul.mubr.f32.gmra.mrb[0].mxu0 %v4530
    %v4666 = vpop.f32.mrb[0].mxu0
    %v4667 = vadd.f32 0.0, %v4666
    %v4668 = vpop.f32.mrb[0].mxu0
    %v4669 = vadd.f32 0.0, %v4668
    %4670 = vdwg.mxu0
    %4671 = vmatprep.subr.mxu0 %v4539
    %4672 = vmatpush1.msra.mxu0 %v4538
    %4673 = vmatprep.subr.mxu0 %v4543
    %4674 = vmatpush1.msra.mxu0 %v4542
    %4675 = vmatprep.subr.mxu0 %v4547
    %4676 = vmatpush1.msra.mxu0 %v4546
    %4677 = vmatprep.subr.mxu0 %v4551
    %4678 = vmatpush1.msra.mxu0 %v4550
    %4679 = vmatprep.subr.mxu0 %v4555
    %4680 = vmatpush1.msra.mxu0 %v4554
    %4681 = vmatprep.subr.mxu0 %v4559
    %4682 = vmatpush1.msra.mxu0 %v4558
    %4683 = vmatprep.subr.mxu0 %v4563
    %4684 = vmatpush1.msra.mxu0 %v4562
    %4685 = vmatprep.subr.mxu0 %v4567
    %4686 = vmatpush1.msra.mxu0 %v4566
    %4687 = vmatprep.subr.mxu0 %v4571
    %4688 = vmatpush1.msra.mxu0 %v4570
    %4689 = vmatprep.subr.mxu0 %v4575
    %4690 = vmatpush1.msra.mxu0 %v4574
    %4691 = vmatprep.subr.mxu0 %v4579
    %4692 = vmatpush1.msra.mxu0 %v4578
    %4693 = vmatprep.subr.mxu0 %v4583
    %4694 = vmatpush1.msra.mxu0 %v4582
    %4695 = vmatprep.subr.mxu0 %v4587
    %4696 = vmatpush1.msra.mxu0 %v4586
    %4697 = vmatprep.subr.mxu0 %v4591
    %4698 = vmatpush1.msra.mxu0 %v4590
    %4699 = vmatprep.subr.mxu0 %v4595
    %4700 = vmatpush1.msra.mxu0 %v4594
    %4701 = vmatprep.subr.mxu0 %v4599
    %4702 = vmatpush1.msra.mxu0 %v4598
    %4703 = vmatprep.subr.mxu0 0.0
    %4704 = vmatpush1.msra.mxu0 0.0
    %4705 = vmatprep.subr.mxu0 0.0
    %4706 = vmatpush1.msra.mxu0 0.0
    %4707 = vmatprep.subr.mxu0 0.0
    %4708 = vmatpush1.msra.mxu0 0.0
    %4709 = vmatprep.subr.mxu0 0.0
    %4710 = vmatpush1.msra.mxu0 0.0
    %4711 = vmatprep.subr.mxu0 0.0
    %4712 = vmatpush1.msra.mxu0 0.0
    %4713 = vmatprep.subr.mxu0 0.0
    %4714 = vmatpush1.msra.mxu0 0.0
    %4715 = vmatprep.subr.mxu0 0.0
    %4716 = vmatpush1.msra.mxu0 0.0
    %4717 = vmatprep.subr.mxu0 0.0
    %4718 = vmatpush1.msra.mxu0 0.0
    %4719 = vmatprep.subr.mxu0 0.0
    %4720 = vmatpush1.msra.mxu0 0.0
    %4721 = vmatprep.subr.mxu0 0.0
    %4722 = vmatpush1.msra.mxu0 0.0
    %4723 = vmatprep.subr.mxu0 0.0
    %4724 = vmatpush1.msra.mxu0 0.0
    %4725 = vmatprep.subr.mxu0 0.0
    %4726 = vmatpush1.msra.mxu0 0.0
    %4727 = vmatprep.subr.mxu0 0.0
    %4728 = vmatpush1.msra.mxu0 0.0
    %4729 = vmatprep.subr.mxu0 0.0
    %4730 = vmatpush1.msra.mxu0 0.0
    %4731 = vmatprep.subr.mxu0 0.0
    %4732 = vmatpush1.msra.mxu0 0.0
    %4733 = vmatprep.subr.mxu0 0.0
    %4734 = vmatpush1.msra.mxu0 0.0
    %4735 = vmatprep.mubr.f32.mxu0 0.0
    %4736 = vmatmul.mubr.f32.gmra.mrb[0].mxu0 %v4530
    %v4737 = vpop.f32.mrb[0].mxu0
    %v4738 = vadd.f32 0.0, %v4737
    %v4739 = vpop.f32.mrb[0].mxu0
    %v4740 = vadd.f32 0.0, %v4739
    %4741 = vdwg.mxu0
    %v4742 = vadd.f32 %v4532, %v4667
    %v4743 = vadd.f32 %v4533, %v4669
    %v4744 = vadd.f32 %v4534, %v4738
    %v4745 = vadd.f32 %v4535, %v4740
    %v4746 = vxor.u32 %v4742, 2147483648
    %v4747 = vmul.f32 %v4746, 1.442695
    %v4748 = vpow.pop %v4747
    %v4749 = vadd.f32 %v4748, 1.0
    %v4750 = vrcp.pop %v4749
    %v4751 = vmul.f32 1.0, %v4750
    %v4752 = vxor.u32 %v4743, 2147483648
    %v4753 = vmul.f32 %v4752, 1.442695
    %v4754 = vpow.pop %v4753
    %v4755 = vadd.f32 %v4754, 1.0
    %v4756 = vrcp.pop %v4755
    %v4757 = vmul.f32 1.0, %v4756
    %v4758 = vtanh.pop %v4744
    %v4759 = vxor.u32 %v4745, 2147483648
    %v4760 = vmul.f32 %v4759, 1.442695
    %v4761 = vpow.pop %v4760
    %v4762 = vadd.f32 %v4761, 1.0
    %v4763 = vrcp.pop %v4762
    %v4764 = vmul.f32 1.0, %v4763
    %v4765 = vmul.f32 %v4757, %v4528
    %v4766 = vmul.f32 %v4751, %v4758
    %v4767 = vadd.f32 %v4765, %v4766
    %v4768 = vtanh.pop %v4767
    %v4769 = vmul.f32 %v4764, %v4768
    %4770 = vst [vmem:[#allocation3 + $0x70] sm:$0xff] %v4769
    %v4771 = vld [vmem:[%s917] sm:$0xff]
    %v4772 = vld [vmem:[%s917 + $0x8] sm:$0xff]
    %v4773 = vld [vmem:[%s917 + $0x10] sm:$0xff]
    %v4774 = vld [vmem:[%s917 + $0x18] sm:$0xff]
    %v4775 = vld [vmem:[#allocation7] sm:$0xff]
    %v4776 = vld [vmem:[#allocation7 + $0x8] sm:$0xff]
    %v4777 = vld [vmem:[#allocation7 + $0x10] sm:$0xff]
    %v4778 = vld [vmem:[#allocation7 + $0x18] sm:$0xff]
    %v4779 = vld [vmem:[#allocation7 + $0x20] sm:$0xff]
    %v4780 = vld [vmem:[#allocation7 + $0x28] sm:$0xff]
    %v4781 = vld [vmem:[#allocation7 + $0x30] sm:$0xff]
    %v4782 = vld [vmem:[#allocation7 + $0x38] sm:$0xff]
    %v4783 = vld [vmem:[#allocation7 + $0x40] sm:$0xff]
    %v4784 = vld [vmem:[#allocation7 + $0x48] sm:$0xff]
    %v4785 = vld [vmem:[#allocation7 + $0x50] sm:$0xff]
    %v4786 = vld [vmem:[#allocation7 + $0x58] sm:$0xff]
    %v4787 = vld [vmem:[#allocation7 + $0x60] sm:$0xff]
    %v4788 = vld [vmem:[#allocation7 + $0x68] sm:$0xff]
    %v4789 = vld [vmem:[#allocation7 + $0x70] sm:$0xff]
    %v4790 = vld [vmem:[#allocation7 + $0x78] sm:$0xff]
    %v4791 = vld [vmem:[#allocation7 + $0x80] sm:$0xff]
    %v4792 = vld [vmem:[#allocation7 + $0x88] sm:$0xff]
    %v4793 = vld [vmem:[#allocation7 + $0x90] sm:$0xff]
    %v4794 = vld [vmem:[#allocation7 + $0x98] sm:$0xff]
    %v4795 = vld [vmem:[#allocation7 + $0xa0] sm:$0xff]
    %v4796 = vld [vmem:[#allocation7 + $0xa8] sm:$0xff]
    %v4797 = vld [vmem:[#allocation7 + $0xb0] sm:$0xff]
    %v4798 = vld [vmem:[#allocation7 + $0xb8] sm:$0xff]
    %v4799 = vld [vmem:[#allocation7 + $0xc0] sm:$0xff]
    %v4800 = vld [vmem:[#allocation7 + $0xc8] sm:$0xff]
    %v4801 = vld [vmem:[#allocation7 + $0xd0] sm:$0xff]
    %v4802 = vld [vmem:[#allocation7 + $0xd8] sm:$0xff]
    %v4803 = vld [vmem:[#allocation7 + $0xe0] sm:$0xff]
    %v4804 = vld [vmem:[#allocation7 + $0xe8] sm:$0xff]
    %v4805 = vld [vmem:[#allocation7 + $0xf0] sm:$0xff]
    %v4806 = vld [vmem:[#allocation7 + $0xf8] sm:$0xff]
    %v4807 = vld [vmem:[#allocation7 + $0x100] sm:$0xff]
    %v4808 = vld [vmem:[#allocation7 + $0x108] sm:$0xff]
    %v4809 = vld [vmem:[#allocation7 + $0x110] sm:$0xff]
    %v4810 = vld [vmem:[#allocation7 + $0x118] sm:$0xff]
    %v4811 = vld [vmem:[#allocation7 + $0x120] sm:$0xff]
    %v4812 = vld [vmem:[#allocation7 + $0x128] sm:$0xff]
    %v4813 = vld [vmem:[#allocation7 + $0x130] sm:$0xff]
    %v4814 = vld [vmem:[#allocation7 + $0x138] sm:$0xff]
    %v4815 = vld [vmem:[#allocation7 + $0x140] sm:$0xff]
    %v4816 = vld [vmem:[#allocation7 + $0x148] sm:$0xff]
    %v4817 = vld [vmem:[#allocation7 + $0x150] sm:$0xff]
    %v4818 = vld [vmem:[#allocation7 + $0x158] sm:$0xff]
    %v4819 = vld [vmem:[#allocation7 + $0x160] sm:$0xff]
    %v4820 = vld [vmem:[#allocation7 + $0x168] sm:$0xff]
    %v4821 = vld [vmem:[#allocation7 + $0x170] sm:$0xff]
    %v4822 = vld [vmem:[#allocation7 + $0x178] sm:$0xff]
    %v4823 = vld [vmem:[#allocation7 + $0x180] sm:$0xff]
    %v4824 = vld [vmem:[#allocation7 + $0x188] sm:$0xff]
    %v4825 = vld [vmem:[#allocation7 + $0x190] sm:$0xff]
    %v4826 = vld [vmem:[#allocation7 + $0x198] sm:$0xff]
    %v4827 = vld [vmem:[#allocation7 + $0x1a0] sm:$0xff]
    %v4828 = vld [vmem:[#allocation7 + $0x1a8] sm:$0xff]
    %v4829 = vld [vmem:[#allocation7 + $0x1b0] sm:$0xff]
    %v4830 = vld [vmem:[#allocation7 + $0x1b8] sm:$0xff]
    %v4831 = vld [vmem:[#allocation7 + $0x1c0] sm:$0xff]
    %v4832 = vld [vmem:[#allocation7 + $0x1c8] sm:$0xff]
    %v4833 = vld [vmem:[#allocation7 + $0x1d0] sm:$0xff]
    %v4834 = vld [vmem:[#allocation7 + $0x1d8] sm:$0xff]
    %v4835 = vld [vmem:[#allocation7 + $0x1e0] sm:$0xff]
    %v4836 = vld [vmem:[#allocation7 + $0x1e8] sm:$0xff]
    %v4837 = vld [vmem:[#allocation7 + $0x1f0] sm:$0xff]
    %v4838 = vld [vmem:[#allocation7 + $0x1f8] sm:$0xff]
    %4839 = vmatprep.subr.mxu0 %v4776
    %4840 = vmatpush1.msra.mxu0 %v4775
    %4841 = vmatprep.subr.mxu0 %v4780
    %4842 = vmatpush1.msra.mxu0 %v4779
    %4843 = vmatprep.subr.mxu0 %v4784
    %4844 = vmatpush1.msra.mxu0 %v4783
    %4845 = vmatprep.subr.mxu0 %v4788
    %4846 = vmatpush1.msra.mxu0 %v4787
    %4847 = vmatprep.subr.mxu0 %v4792
    %4848 = vmatpush1.msra.mxu0 %v4791
    %4849 = vmatprep.subr.mxu0 %v4796
    %4850 = vmatpush1.msra.mxu0 %v4795
    %4851 = vmatprep.subr.mxu0 %v4800
    %4852 = vmatpush1.msra.mxu0 %v4799
    %4853 = vmatprep.subr.mxu0 %v4804
    %4854 = vmatpush1.msra.mxu0 %v4803
    %4855 = vmatprep.subr.mxu0 %v4808
    %4856 = vmatpush1.msra.mxu0 %v4807
    %4857 = vmatprep.subr.mxu0 %v4812
    %4858 = vmatpush1.msra.mxu0 %v4811
    %4859 = vmatprep.subr.mxu0 %v4816
    %4860 = vmatpush1.msra.mxu0 %v4815
    %4861 = vmatprep.subr.mxu0 %v4820
    %4862 = vmatpush1.msra.mxu0 %v4819
    %4863 = vmatprep.subr.mxu0 %v4824
    %4864 = vmatpush1.msra.mxu0 %v4823
    %4865 = vmatprep.subr.mxu0 %v4828
    %4866 = vmatpush1.msra.mxu0 %v4827
    %4867 = vmatprep.subr.mxu0 %v4832
    %4868 = vmatpush1.msra.mxu0 %v4831
    %4869 = vmatprep.subr.mxu0 %v4836
    %4870 = vmatpush1.msra.mxu0 %v4835
    %4871 = vmatprep.subr.mxu0 0.0
    %4872 = vmatpush1.msra.mxu0 0.0
    %4873 = vmatprep.subr.mxu0 0.0
    %4874 = vmatpush1.msra.mxu0 0.0
    %4875 = vmatprep.subr.mxu0 0.0
    %4876 = vmatpush1.msra.mxu0 0.0
    %4877 = vmatprep.subr.mxu0 0.0
    %4878 = vmatpush1.msra.mxu0 0.0
    %4879 = vmatprep.subr.mxu0 0.0
    %4880 = vmatpush1.msra.mxu0 0.0
    %4881 = vmatprep.subr.mxu0 0.0
    %4882 = vmatpush1.msra.mxu0 0.0
    %4883 = vmatprep.subr.mxu0 0.0
    %4884 = vmatpush1.msra.mxu0 0.0
    %4885 = vmatprep.subr.mxu0 0.0
    %4886 = vmatpush1.msra.mxu0 0.0
    %4887 = vmatprep.subr.mxu0 0.0
    %4888 = vmatpush1.msra.mxu0 0.0
    %4889 = vmatprep.subr.mxu0 0.0
    %4890 = vmatpush1.msra.mxu0 0.0
    %4891 = vmatprep.subr.mxu0 0.0
    %4892 = vmatpush1.msra.mxu0 0.0
    %4893 = vmatprep.subr.mxu0 0.0
    %4894 = vmatpush1.msra.mxu0 0.0
    %4895 = vmatprep.subr.mxu0 0.0
    %4896 = vmatpush1.msra.mxu0 0.0
    %4897 = vmatprep.subr.mxu0 0.0
    %4898 = vmatpush1.msra.mxu0 0.0
    %4899 = vmatprep.subr.mxu0 0.0
    %4900 = vmatpush1.msra.mxu0 0.0
    %4901 = vmatprep.subr.mxu0 0.0
    %4902 = vmatpush1.msra.mxu0 0.0
    %4903 = vmatprep.mubr.f32.mxu0 0.0
    %4904 = vmatmul.mubr.f32.gmra.mrb[0].mxu0 %v4769
    %v4905 = vpop.f32.mrb[0].mxu0
    %v4906 = vadd.f32 0.0, %v4905
    %v4907 = vpop.f32.mrb[0].mxu0
    %v4908 = vadd.f32 0.0, %v4907
    %4909 = vdwg.mxu0
    %4910 = vmatprep.subr.mxu0 %v4778
    %4911 = vmatpush1.msra.mxu0 %v4777
    %4912 = vmatprep.subr.mxu0 %v4782
    %4913 = vmatpush1.msra.mxu0 %v4781
    %4914 = vmatprep.subr.mxu0 %v4786
    %4915 = vmatpush1.msra.mxu0 %v4785
    %4916 = vmatprep.subr.mxu0 %v4790
    %4917 = vmatpush1.msra.mxu0 %v4789
    %4918 = vmatprep.subr.mxu0 %v4794
    %4919 = vmatpush1.msra.mxu0 %v4793
    %4920 = vmatprep.subr.mxu0 %v4798
    %4921 = vmatpush1.msra.mxu0 %v4797
    %4922 = vmatprep.subr.mxu0 %v4802
    %4923 = vmatpush1.msra.mxu0 %v4801
    %4924 = vmatprep.subr.mxu0 %v4806
    %4925 = vmatpush1.msra.mxu0 %v4805
    %4926 = vmatprep.subr.mxu0 %v4810
    %4927 = vmatpush1.msra.mxu0 %v4809
    %4928 = vmatprep.subr.mxu0 %v4814
    %4929 = vmatpush1.msra.mxu0 %v4813
    %4930 = vmatprep.subr.mxu0 %v4818
    %4931 = vmatpush1.msra.mxu0 %v4817
    %4932 = vmatprep.subr.mxu0 %v4822
    %4933 = vmatpush1.msra.mxu0 %v4821
    %4934 = vmatprep.subr.mxu0 %v4826
    %4935 = vmatpush1.msra.mxu0 %v4825
    %4936 = vmatprep.subr.mxu0 %v4830
    %4937 = vmatpush1.msra.mxu0 %v4829
    %4938 = vmatprep.subr.mxu0 %v4834
    %4939 = vmatpush1.msra.mxu0 %v4833
    %4940 = vmatprep.subr.mxu0 %v4838
    %4941 = vmatpush1.msra.mxu0 %v4837
    %4942 = vmatprep.subr.mxu0 0.0
    %4943 = vmatpush1.msra.mxu0 0.0
    %4944 = vmatprep.subr.mxu0 0.0
    %4945 = vmatpush1.msra.mxu0 0.0
    %4946 = vmatprep.subr.mxu0 0.0
    %4947 = vmatpush1.msra.mxu0 0.0
    %4948 = vmatprep.subr.mxu0 0.0
    %4949 = vmatpush1.msra.mxu0 0.0
    %4950 = vmatprep.subr.mxu0 0.0
    %4951 = vmatpush1.msra.mxu0 0.0
    %4952 = vmatprep.subr.mxu0 0.0
    %4953 = vmatpush1.msra.mxu0 0.0
    %4954 = vmatprep.subr.mxu0 0.0
    %4955 = vmatpush1.msra.mxu0 0.0
    %4956 = vmatprep.subr.mxu0 0.0
    %4957 = vmatpush1.msra.mxu0 0.0
    %4958 = vmatprep.subr.mxu0 0.0
    %4959 = vmatpush1.msra.mxu0 0.0
    %4960 = vmatprep.subr.mxu0 0.0
    %4961 = vmatpush1.msra.mxu0 0.0
    %4962 = vmatprep.subr.mxu0 0.0
    %4963 = vmatpush1.msra.mxu0 0.0
    %4964 = vmatprep.subr.mxu0 0.0
    %4965 = vmatpush1.msra.mxu0 0.0
    %4966 = vmatprep.subr.mxu0 0.0
    %4967 = vmatpush1.msra.mxu0 0.0
    %4968 = vmatprep.subr.mxu0 0.0
    %4969 = vmatpush1.msra.mxu0 0.0
    %4970 = vmatprep.subr.mxu0 0.0
    %4971 = vmatpush1.msra.mxu0 0.0
    %4972 = vmatprep.subr.mxu0 0.0
    %4973 = vmatpush1.msra.mxu0 0.0
    %4974 = vmatprep.mubr.f32.mxu0 0.0
    %4975 = vmatmul.mubr.f32.gmra.mrb[0].mxu0 %v4769
    %v4976 = vpop.f32.mrb[0].mxu0
    %v4977 = vadd.f32 0.0, %v4976
    %v4978 = vpop.f32.mrb[0].mxu0
    %v4979 = vadd.f32 0.0, %v4978
    %4980 = vdwg.mxu0
    %v4981 = vadd.f32 %v4771, %v4906
    %v4982 = vadd.f32 %v4772, %v4908
    %v4983 = vadd.f32 %v4773, %v4977
    %v4984 = vadd.f32 %v4774, %v4979
    %v4985 = vxor.u32 %v4981, 2147483648
    %v4986 = vmul.f32 %v4985, 1.442695
    %v4987 = vpow.pop %v4986
    %v4988 = vadd.f32 %v4987, 1.0
    %v4989 = vrcp.pop %v4988
    %v4990 = vmul.f32 1.0, %v4989
    %v4991 = vxor.u32 %v4982, 2147483648
    %v4992 = vmul.f32 %v4991, 1.442695
    %v4993 = vpow.pop %v4992
    %v4994 = vadd.f32 %v4993, 1.0
    %v4995 = vrcp.pop %v4994
    %v4996 = vmul.f32 1.0, %v4995
    %v4997 = vtanh.pop %v4983
    %v4998 = vxor.u32 %v4984, 2147483648
    %v4999 = vmul.f32 %v4998, 1.442695
    %v5000 = vpow.pop %v4999
    %v5001 = vadd.f32 %v5000, 1.0
    %v5002 = vrcp.pop %v5001
    %v5003 = vmul.f32 1.0, %v5002
    %v5004 = vmul.f32 %v4996, %v4767
    %v5005 = vmul.f32 %v4990, %v4997
    %v5006 = vadd.f32 %v5004, %v5005
    %v5007 = vtanh.pop %v5006
    %v5008 = vmul.f32 %v5003, %v5007
    %5009 = vst [vmem:[#allocation3 + $0x78] sm:$0xff] %v5008
    %v5010 = vld [vmem:[%s961] sm:$0xff]
    %v5011 = vld [vmem:[%s961 + $0x8] sm:$0xff]
    %v5012 = vld [vmem:[%s961 + $0x10] sm:$0xff]
    %v5013 = vld [vmem:[%s961 + $0x18] sm:$0xff]
    %v5014 = vld [vmem:[#allocation7] sm:$0xff]
    %v5015 = vld [vmem:[#allocation7 + $0x8] sm:$0xff]
    %v5016 = vld [vmem:[#allocation7 + $0x10] sm:$0xff]
    %v5017 = vld [vmem:[#allocation7 + $0x18] sm:$0xff]
    %v5018 = vld [vmem:[#allocation7 + $0x20] sm:$0xff]
    %v5019 = vld [vmem:[#allocation7 + $0x28] sm:$0xff]
    %v5020 = vld [vmem:[#allocation7 + $0x30] sm:$0xff]
    %v5021 = vld [vmem:[#allocation7 + $0x38] sm:$0xff]
    %v5022 = vld [vmem:[#allocation7 + $0x40] sm:$0xff]
    %v5023 = vld [vmem:[#allocation7 + $0x48] sm:$0xff]
    %v5024 = vld [vmem:[#allocation7 + $0x50] sm:$0xff]
    %v5025 = vld [vmem:[#allocation7 + $0x58] sm:$0xff]
    %v5026 = vld [vmem:[#allocation7 + $0x60] sm:$0xff]
    %v5027 = vld [vmem:[#allocation7 + $0x68] sm:$0xff]
    %v5028 = vld [vmem:[#allocation7 + $0x70] sm:$0xff]
    %v5029 = vld [vmem:[#allocation7 + $0x78] sm:$0xff]
    %v5030 = vld [vmem:[#allocation7 + $0x80] sm:$0xff]
    %v5031 = vld [vmem:[#allocation7 + $0x88] sm:$0xff]
    %v5032 = vld [vmem:[#allocation7 + $0x90] sm:$0xff]
    %v5033 = vld [vmem:[#allocation7 + $0x98] sm:$0xff]
    %v5034 = vld [vmem:[#allocation7 + $0xa0] sm:$0xff]
    %v5035 = vld [vmem:[#allocation7 + $0xa8] sm:$0xff]
    %v5036 = vld [vmem:[#allocation7 + $0xb0] sm:$0xff]
    %v5037 = vld [vmem:[#allocation7 + $0xb8] sm:$0xff]
    %v5038 = vld [vmem:[#allocation7 + $0xc0] sm:$0xff]
    %v5039 = vld [vmem:[#allocation7 + $0xc8] sm:$0xff]
    %v5040 = vld [vmem:[#allocation7 + $0xd0] sm:$0xff]
    %v5041 = vld [vmem:[#allocation7 + $0xd8] sm:$0xff]
    %v5042 = vld [vmem:[#allocation7 + $0xe0] sm:$0xff]
    %v5043 = vld [vmem:[#allocation7 + $0xe8] sm:$0xff]
    %v5044 = vld [vmem:[#allocation7 + $0xf0] sm:$0xff]
    %v5045 = vld [vmem:[#allocation7 + $0xf8] sm:$0xff]
    %v5046 = vld [vmem:[#allocation7 + $0x100] sm:$0xff]
    %v5047 = vld [vmem:[#allocation7 + $0x108] sm:$0xff]
    %v5048 = vld [vmem:[#allocation7 + $0x110] sm:$0xff]
    %v5049 = vld [vmem:[#allocation7 + $0x118] sm:$0xff]
    %v5050 = vld [vmem:[#allocation7 + $0x120] sm:$0xff]
    %v5051 = vld [vmem:[#allocation7 + $0x128] sm:$0xff]
    %v5052 = vld [vmem:[#allocation7 + $0x130] sm:$0xff]
    %v5053 = vld [vmem:[#allocation7 + $0x138] sm:$0xff]
    %v5054 = vld [vmem:[#allocation7 + $0x140] sm:$0xff]
    %v5055 = vld [vmem:[#allocation7 + $0x148] sm:$0xff]
    %v5056 = vld [vmem:[#allocation7 + $0x150] sm:$0xff]
    %v5057 = vld [vmem:[#allocation7 + $0x158] sm:$0xff]
    %v5058 = vld [vmem:[#allocation7 + $0x160] sm:$0xff]
    %v5059 = vld [vmem:[#allocation7 + $0x168] sm:$0xff]
    %v5060 = vld [vmem:[#allocation7 + $0x170] sm:$0xff]
    %v5061 = vld [vmem:[#allocation7 + $0x178] sm:$0xff]
    %v5062 = vld [vmem:[#allocation7 + $0x180] sm:$0xff]
    %v5063 = vld [vmem:[#allocation7 + $0x188] sm:$0xff]
    %v5064 = vld [vmem:[#allocation7 + $0x190] sm:$0xff]
    %v5065 = vld [vmem:[#allocation7 + $0x198] sm:$0xff]
    %v5066 = vld [vmem:[#allocation7 + $0x1a0] sm:$0xff]
    %v5067 = vld [vmem:[#allocation7 + $0x1a8] sm:$0xff]
    %v5068 = vld [vmem:[#allocation7 + $0x1b0] sm:$0xff]
    %v5069 = vld [vmem:[#allocation7 + $0x1b8] sm:$0xff]
    %v5070 = vld [vmem:[#allocation7 + $0x1c0] sm:$0xff]
    %v5071 = vld [vmem:[#allocation7 + $0x1c8] sm:$0xff]
    %v5072 = vld [vmem:[#allocation7 + $0x1d0] sm:$0xff]
    %v5073 = vld [vmem:[#allocation7 + $0x1d8] sm:$0xff]
    %v5074 = vld [vmem:[#allocation7 + $0x1e0] sm:$0xff]
    %v5075 = vld [vmem:[#allocation7 + $0x1e8] sm:$0xff]
    %v5076 = vld [vmem:[#allocation7 + $0x1f0] sm:$0xff]
    %v5077 = vld [vmem:[#allocation7 + $0x1f8] sm:$0xff]
    %5078 = vmatprep.subr.mxu0 %v5015
    %5079 = vmatpush1.msra.mxu0 %v5014
    %5080 = vmatprep.subr.mxu0 %v5019
    %5081 = vmatpush1.msra.mxu0 %v5018
    %5082 = vmatprep.subr.mxu0 %v5023
    %5083 = vmatpush1.msra.mxu0 %v5022
    %5084 = vmatprep.subr.mxu0 %v5027
    %5085 = vmatpush1.msra.mxu0 %v5026
    %5086 = vmatprep.subr.mxu0 %v5031
    %5087 = vmatpush1.msra.mxu0 %v5030
    %5088 = vmatprep.subr.mxu0 %v5035
    %5089 = vmatpush1.msra.mxu0 %v5034
    %5090 = vmatprep.subr.mxu0 %v5039
    %5091 = vmatpush1.msra.mxu0 %v5038
    %5092 = vmatprep.subr.mxu0 %v5043
    %5093 = vmatpush1.msra.mxu0 %v5042
    %5094 = vmatprep.subr.mxu0 %v5047
    %5095 = vmatpush1.msra.mxu0 %v5046
    %5096 = vmatprep.subr.mxu0 %v5051
    %5097 = vmatpush1.msra.mxu0 %v5050
    %5098 = vmatprep.subr.mxu0 %v5055
    %5099 = vmatpush1.msra.mxu0 %v5054
    %5100 = vmatprep.subr.mxu0 %v5059
    %5101 = vmatpush1.msra.mxu0 %v5058
    %5102 = vmatprep.subr.mxu0 %v5063
    %5103 = vmatpush1.msra.mxu0 %v5062
    %5104 = vmatprep.subr.mxu0 %v5067
    %5105 = vmatpush1.msra.mxu0 %v5066
    %5106 = vmatprep.subr.mxu0 %v5071
    %5107 = vmatpush1.msra.mxu0 %v5070
    %5108 = vmatprep.subr.mxu0 %v5075
    %5109 = vmatpush1.msra.mxu0 %v5074
    %5110 = vmatprep.subr.mxu0 0.0
    %5111 = vmatpush1.msra.mxu0 0.0
    %5112 = vmatprep.subr.mxu0 0.0
    %5113 = vmatpush1.msra.mxu0 0.0
    %5114 = vmatprep.subr.mxu0 0.0
    %5115 = vmatpush1.msra.mxu0 0.0
    %5116 = vmatprep.subr.mxu0 0.0
    %5117 = vmatpush1.msra.mxu0 0.0
    %5118 = vmatprep.subr.mxu0 0.0
    %5119 = vmatpush1.msra.mxu0 0.0
    %5120 = vmatprep.subr.mxu0 0.0
    %5121 = vmatpush1.msra.mxu0 0.0
    %5122 = vmatprep.subr.mxu0 0.0
    %5123 = vmatpush1.msra.mxu0 0.0
    %5124 = vmatprep.subr.mxu0 0.0
    %5125 = vmatpush1.msra.mxu0 0.0
    %5126 = vmatprep.subr.mxu0 0.0
    %5127 = vmatpush1.msra.mxu0 0.0
    %5128 = vmatprep.subr.mxu0 0.0
    %5129 = vmatpush1.msra.mxu0 0.0
    %5130 = vmatprep.subr.mxu0 0.0
    %5131 = vmatpush1.msra.mxu0 0.0
    %5132 = vmatprep.subr.mxu0 0.0
    %5133 = vmatpush1.msra.mxu0 0.0
    %5134 = vmatprep.subr.mxu0 0.0
    %5135 = vmatpush1.msra.mxu0 0.0
    %5136 = vmatprep.subr.mxu0 0.0
    %5137 = vmatpush1.msra.mxu0 0.0
    %5138 = vmatprep.subr.mxu0 0.0
    %5139 = vmatpush1.msra.mxu0 0.0
    %5140 = vmatprep.subr.mxu0 0.0
    %5141 = vmatpush1.msra.mxu0 0.0
    %5142 = vmatprep.mubr.f32.mxu0 0.0
    %5143 = vmatmul.mubr.f32.gmra.mrb[0].mxu0 %v5008
    %v5144 = vpop.f32.mrb[0].mxu0
    %v5145 = vadd.f32 0.0, %v5144
    %v5146 = vpop.f32.mrb[0].mxu0
    %v5147 = vadd.f32 0.0, %v5146
    %5148 = vdwg.mxu0
    %5149 = vmatprep.subr.mxu0 %v5017
    %5150 = vmatpush1.msra.mxu0 %v5016
    %5151 = vmatprep.subr.mxu0 %v5021
    %5152 = vmatpush1.msra.mxu0 %v5020
    %5153 = vmatprep.subr.mxu0 %v5025
    %5154 = vmatpush1.msra.mxu0 %v5024
    %5155 = vmatprep.subr.mxu0 %v5029
    %5156 = vmatpush1.msra.mxu0 %v5028
    %5157 = vmatprep.subr.mxu0 %v5033
    %5158 = vmatpush1.msra.mxu0 %v5032
    %5159 = vmatprep.subr.mxu0 %v5037
    %5160 = vmatpush1.msra.mxu0 %v5036
    %5161 = vmatprep.subr.mxu0 %v5041
    %5162 = vmatpush1.msra.mxu0 %v5040
    %5163 = vmatprep.subr.mxu0 %v5045
    %5164 = vmatpush1.msra.mxu0 %v5044
    %5165 = vmatprep.subr.mxu0 %v5049
    %5166 = vmatpush1.msra.mxu0 %v5048
    %5167 = vmatprep.subr.mxu0 %v5053
    %5168 = vmatpush1.msra.mxu0 %v5052
    %5169 = vmatprep.subr.mxu0 %v5057
    %5170 = vmatpush1.msra.mxu0 %v5056
    %5171 = vmatprep.subr.mxu0 %v5061
    %5172 = vmatpush1.msra.mxu0 %v5060
    %5173 = vmatprep.subr.mxu0 %v5065
    %5174 = vmatpush1.msra.mxu0 %v5064
    %5175 = vmatprep.subr.mxu0 %v5069
    %5176 = vmatpush1.msra.mxu0 %v5068
    %5177 = vmatprep.subr.mxu0 %v5073
    %5178 = vmatpush1.msra.mxu0 %v5072
    %5179 = vmatprep.subr.mxu0 %v5077
    %5180 = vmatpush1.msra.mxu0 %v5076
    %5181 = vmatprep.subr.mxu0 0.0
    %5182 = vmatpush1.msra.mxu0 0.0
    %5183 = vmatprep.subr.mxu0 0.0
    %5184 = vmatpush1.msra.mxu0 0.0
    %5185 = vmatprep.subr.mxu0 0.0
    %5186 = vmatpush1.msra.mxu0 0.0
    %5187 = vmatprep.subr.mxu0 0.0
    %5188 = vmatpush1.msra.mxu0 0.0
    %5189 = vmatprep.subr.mxu0 0.0
    %5190 = vmatpush1.msra.mxu0 0.0
    %5191 = vmatprep.subr.mxu0 0.0
    %5192 = vmatpush1.msra.mxu0 0.0
    %5193 = vmatprep.subr.mxu0 0.0
    %5194 = vmatpush1.msra.mxu0 0.0
    %5195 = vmatprep.subr.mxu0 0.0
    %5196 = vmatpush1.msra.mxu0 0.0
    %5197 = vmatprep.subr.mxu0 0.0
    %5198 = vmatpush1.msra.mxu0 0.0
    %5199 = vmatprep.subr.mxu0 0.0
    %5200 = vmatpush1.msra.mxu0 0.0
    %5201 = vmatprep.subr.mxu0 0.0
    %5202 = vmatpush1.msra.mxu0 0.0
    %5203 = vmatprep.subr.mxu0 0.0
    %5204 = vmatpush1.msra.mxu0 0.0
    %5205 = vmatprep.subr.mxu0 0.0
    %5206 = vmatpush1.msra.mxu0 0.0
    %5207 = vmatprep.subr.mxu0 0.0
    %5208 = vmatpush1.msra.mxu0 0.0
    %5209 = vmatprep.subr.mxu0 0.0
    %5210 = vmatpush1.msra.mxu0 0.0
    %5211 = vmatprep.subr.mxu0 0.0
    %5212 = vmatpush1.msra.mxu0 0.0
    %5213 = vmatprep.mubr.f32.mxu0 0.0
    %5214 = vmatmul.mubr.f32.gmra.mrb[0].mxu0 %v5008
    %v5215 = vpop.f32.mrb[0].mxu0
    %v5216 = vadd.f32 0.0, %v5215
    %v5217 = vpop.f32.mrb[0].mxu0
    %v5218 = vadd.f32 0.0, %v5217
    %5219 = vdwg.mxu0
    %v5220 = vadd.f32 %v5010, %v5145
    %v5221 = vadd.f32 %v5011, %v5147
    %v5222 = vadd.f32 %v5012, %v5216
    %v5223 = vadd.f32 %v5013, %v5218
    %v5224 = vxor.u32 %v5220, 2147483648
    %v5225 = vmul.f32 %v5224, 1.442695
    %v5226 = vpow.pop %v5225
    %v5227 = vadd.f32 %v5226, 1.0
    %v5228 = vrcp.pop %v5227
    %v5229 = vmul.f32 1.0, %v5228
    %v5230 = vxor.u32 %v5221, 2147483648
    %v5231 = vmul.f32 %v5230, 1.442695
    %v5232 = vpow.pop %v5231
    %v5233 = vadd.f32 %v5232, 1.0
    %v5234 = vrcp.pop %v5233
    %v5235 = vmul.f32 1.0, %v5234
    %v5236 = vtanh.pop %v5222
    %v5237 = vxor.u32 %v5223, 2147483648
    %v5238 = vmul.f32 %v5237, 1.442695
    %v5239 = vpow.pop %v5238
    %v5240 = vadd.f32 %v5239, 1.0
    %v5241 = vrcp.pop %v5240
    %v5242 = vmul.f32 1.0, %v5241
    %v5243 = vmul.f32 %v5235, %v5006
    %v5244 = vmul.f32 %v5229, %v5236
    %v5245 = vadd.f32 %v5243, %v5244
    %v5246 = vtanh.pop %v5245
    %v5247 = vmul.f32 %v5242, %v5246
    %5248 = vst [vmem:[#allocation3 + $0x80] sm:$0xff] %v5247
    %v5249 = vld [vmem:[%s1005] sm:$0xff]
    %v5250 = vld [vmem:[%s1005 + $0x8] sm:$0xff]
    %v5251 = vld [vmem:[%s1005 + $0x10] sm:$0xff]
    %v5252 = vld [vmem:[%s1005 + $0x18] sm:$0xff]
    %v5253 = vld [vmem:[#allocation7] sm:$0xff]
    %v5254 = vld [vmem:[#allocation7 + $0x8] sm:$0xff]
    %v5255 = vld [vmem:[#allocation7 + $0x10] sm:$0xff]
    %v5256 = vld [vmem:[#allocation7 + $0x18] sm:$0xff]
    %v5257 = vld [vmem:[#allocation7 + $0x20] sm:$0xff]
    %v5258 = vld [vmem:[#allocation7 + $0x28] sm:$0xff]
    %v5259 = vld [vmem:[#allocation7 + $0x30] sm:$0xff]
    %v5260 = vld [vmem:[#allocation7 + $0x38] sm:$0xff]
    %v5261 = vld [vmem:[#allocation7 + $0x40] sm:$0xff]
    %v5262 = vld [vmem:[#allocation7 + $0x48] sm:$0xff]
    %v5263 = vld [vmem:[#allocation7 + $0x50] sm:$0xff]
    %v5264 = vld [vmem:[#allocation7 + $0x58] sm:$0xff]
    %v5265 = vld [vmem:[#allocation7 + $0x60] sm:$0xff]
    %v5266 = vld [vmem:[#allocation7 + $0x68] sm:$0xff]
    %v5267 = vld [vmem:[#allocation7 + $0x70] sm:$0xff]
    %v5268 = vld [vmem:[#allocation7 + $0x78] sm:$0xff]
    %v5269 = vld [vmem:[#allocation7 + $0x80] sm:$0xff]
    %v5270 = vld [vmem:[#allocation7 + $0x88] sm:$0xff]
    %v5271 = vld [vmem:[#allocation7 + $0x90] sm:$0xff]
    %v5272 = vld [vmem:[#allocation7 + $0x98] sm:$0xff]
    %v5273 = vld [vmem:[#allocation7 + $0xa0] sm:$0xff]
    %v5274 = vld [vmem:[#allocation7 + $0xa8] sm:$0xff]
    %v5275 = vld [vmem:[#allocation7 + $0xb0] sm:$0xff]
    %v5276 = vld [vmem:[#allocation7 + $0xb8] sm:$0xff]
    %v5277 = vld [vmem:[#allocation7 + $0xc0] sm:$0xff]
    %v5278 = vld [vmem:[#allocation7 + $0xc8] sm:$0xff]
    %v5279 = vld [vmem:[#allocation7 + $0xd0] sm:$0xff]
    %v5280 = vld [vmem:[#allocation7 + $0xd8] sm:$0xff]
    %v5281 = vld [vmem:[#allocation7 + $0xe0] sm:$0xff]
    %v5282 = vld [vmem:[#allocation7 + $0xe8] sm:$0xff]
    %v5283 = vld [vmem:[#allocation7 + $0xf0] sm:$0xff]
    %v5284 = vld [vmem:[#allocation7 + $0xf8] sm:$0xff]
    %v5285 = vld [vmem:[#allocation7 + $0x100] sm:$0xff]
    %v5286 = vld [vmem:[#allocation7 + $0x108] sm:$0xff]
    %v5287 = vld [vmem:[#allocation7 + $0x110] sm:$0xff]
    %v5288 = vld [vmem:[#allocation7 + $0x118] sm:$0xff]
    %v5289 = vld [vmem:[#allocation7 + $0x120] sm:$0xff]
    %v5290 = vld [vmem:[#allocation7 + $0x128] sm:$0xff]
    %v5291 = vld [vmem:[#allocation7 + $0x130] sm:$0xff]
    %v5292 = vld [vmem:[#allocation7 + $0x138] sm:$0xff]
    %v5293 = vld [vmem:[#allocation7 + $0x140] sm:$0xff]
    %v5294 = vld [vmem:[#allocation7 + $0x148] sm:$0xff]
    %v5295 = vld [vmem:[#allocation7 + $0x150] sm:$0xff]
    %v5296 = vld [vmem:[#allocation7 + $0x158] sm:$0xff]
    %v5297 = vld [vmem:[#allocation7 + $0x160] sm:$0xff]
    %v5298 = vld [vmem:[#allocation7 + $0x168] sm:$0xff]
    %v5299 = vld [vmem:[#allocation7 + $0x170] sm:$0xff]
    %v5300 = vld [vmem:[#allocation7 + $0x178] sm:$0xff]
    %v5301 = vld [vmem:[#allocation7 + $0x180] sm:$0xff]
    %v5302 = vld [vmem:[#allocation7 + $0x188] sm:$0xff]
    %v5303 = vld [vmem:[#allocation7 + $0x190] sm:$0xff]
    %v5304 = vld [vmem:[#allocation7 + $0x198] sm:$0xff]
    %v5305 = vld [vmem:[#allocation7 + $0x1a0] sm:$0xff]
    %v5306 = vld [vmem:[#allocation7 + $0x1a8] sm:$0xff]
    %v5307 = vld [vmem:[#allocation7 + $0x1b0] sm:$0xff]
    %v5308 = vld [vmem:[#allocation7 + $0x1b8] sm:$0xff]
    %v5309 = vld [vmem:[#allocation7 + $0x1c0] sm:$0xff]
    %v5310 = vld [vmem:[#allocation7 + $0x1c8] sm:$0xff]
    %v5311 = vld [vmem:[#allocation7 + $0x1d0] sm:$0xff]
    %v5312 = vld [vmem:[#allocation7 + $0x1d8] sm:$0xff]
    %v5313 = vld [vmem:[#allocation7 + $0x1e0] sm:$0xff]
    %v5314 = vld [vmem:[#allocation7 + $0x1e8] sm:$0xff]
    %v5315 = vld [vmem:[#allocation7 + $0x1f0] sm:$0xff]
    %v5316 = vld [vmem:[#allocation7 + $0x1f8] sm:$0xff]
    %5317 = vmatprep.subr.mxu0 %v5254
    %5318 = vmatpush1.msra.mxu0 %v5253
    %5319 = vmatprep.subr.mxu0 %v5258
    %5320 = vmatpush1.msra.mxu0 %v5257
    %5321 = vmatprep.subr.mxu0 %v5262
    %5322 = vmatpush1.msra.mxu0 %v5261
    %5323 = vmatprep.subr.mxu0 %v5266
    %5324 = vmatpush1.msra.mxu0 %v5265
    %5325 = vmatprep.subr.mxu0 %v5270
    %5326 = vmatpush1.msra.mxu0 %v5269
    %5327 = vmatprep.subr.mxu0 %v5274
    %5328 = vmatpush1.msra.mxu0 %v5273
    %5329 = vmatprep.subr.mxu0 %v5278
    %5330 = vmatpush1.msra.mxu0 %v5277
    %5331 = vmatprep.subr.mxu0 %v5282
    %5332 = vmatpush1.msra.mxu0 %v5281
    %5333 = vmatprep.subr.mxu0 %v5286
    %5334 = vmatpush1.msra.mxu0 %v5285
    %5335 = vmatprep.subr.mxu0 %v5290
    %5336 = vmatpush1.msra.mxu0 %v5289
    %5337 = vmatprep.subr.mxu0 %v5294
    %5338 = vmatpush1.msra.mxu0 %v5293
    %5339 = vmatprep.subr.mxu0 %v5298
    %5340 = vmatpush1.msra.mxu0 %v5297
    %5341 = vmatprep.subr.mxu0 %v5302
    %5342 = vmatpush1.msra.mxu0 %v5301
    %5343 = vmatprep.subr.mxu0 %v5306
    %5344 = vmatpush1.msra.mxu0 %v5305
    %5345 = vmatprep.subr.mxu0 %v5310
    %5346 = vmatpush1.msra.mxu0 %v5309
    %5347 = vmatprep.subr.mxu0 %v5314
    %5348 = vmatpush1.msra.mxu0 %v5313
    %5349 = vmatprep.subr.mxu0 0.0
    %5350 = vmatpush1.msra.mxu0 0.0
    %5351 = vmatprep.subr.mxu0 0.0
    %5352 = vmatpush1.msra.mxu0 0.0
    %5353 = vmatprep.subr.mxu0 0.0
    %5354 = vmatpush1.msra.mxu0 0.0
    %5355 = vmatprep.subr.mxu0 0.0
    %5356 = vmatpush1.msra.mxu0 0.0
    %5357 = vmatprep.subr.mxu0 0.0
    %5358 = vmatpush1.msra.mxu0 0.0
    %5359 = vmatprep.subr.mxu0 0.0
    %5360 = vmatpush1.msra.mxu0 0.0
    %5361 = vmatprep.subr.mxu0 0.0
    %5362 = vmatpush1.msra.mxu0 0.0
    %5363 = vmatprep.subr.mxu0 0.0
    %5364 = vmatpush1.msra.mxu0 0.0
    %5365 = vmatprep.subr.mxu0 0.0
    %5366 = vmatpush1.msra.mxu0 0.0
    %5367 = vmatprep.subr.mxu0 0.0
    %5368 = vmatpush1.msra.mxu0 0.0
    %5369 = vmatprep.subr.mxu0 0.0
    %5370 = vmatpush1.msra.mxu0 0.0
    %5371 = vmatprep.subr.mxu0 0.0
    %5372 = vmatpush1.msra.mxu0 0.0
    %5373 = vmatprep.subr.mxu0 0.0
    %5374 = vmatpush1.msra.mxu0 0.0
    %5375 = vmatprep.subr.mxu0 0.0
    %5376 = vmatpush1.msra.mxu0 0.0
    %5377 = vmatprep.subr.mxu0 0.0
    %5378 = vmatpush1.msra.mxu0 0.0
    %5379 = vmatprep.subr.mxu0 0.0
    %5380 = vmatpush1.msra.mxu0 0.0
    %5381 = vmatprep.mubr.f32.mxu0 0.0
    %5382 = vmatmul.mubr.f32.gmra.mrb[0].mxu0 %v5247
    %v5383 = vpop.f32.mrb[0].mxu0
    %v5384 = vadd.f32 0.0, %v5383
    %v5385 = vpop.f32.mrb[0].mxu0
    %v5386 = vadd.f32 0.0, %v5385
    %5387 = vdwg.mxu0
    %5388 = vmatprep.subr.mxu0 %v5256
    %5389 = vmatpush1.msra.mxu0 %v5255
    %5390 = vmatprep.subr.mxu0 %v5260
    %5391 = vmatpush1.msra.mxu0 %v5259
    %5392 = vmatprep.subr.mxu0 %v5264
    %5393 = vmatpush1.msra.mxu0 %v5263
    %5394 = vmatprep.subr.mxu0 %v5268
    %5395 = vmatpush1.msra.mxu0 %v5267
    %5396 = vmatprep.subr.mxu0 %v5272
    %5397 = vmatpush1.msra.mxu0 %v5271
    %5398 = vmatprep.subr.mxu0 %v5276
    %5399 = vmatpush1.msra.mxu0 %v5275
    %5400 = vmatprep.subr.mxu0 %v5280
    %5401 = vmatpush1.msra.mxu0 %v5279
    %5402 = vmatprep.subr.mxu0 %v5284
    %5403 = vmatpush1.msra.mxu0 %v5283
    %5404 = vmatprep.subr.mxu0 %v5288
    %5405 = vmatpush1.msra.mxu0 %v5287
    %5406 = vmatprep.subr.mxu0 %v5292
    %5407 = vmatpush1.msra.mxu0 %v5291
    %5408 = vmatprep.subr.mxu0 %v5296
    %5409 = vmatpush1.msra.mxu0 %v5295
    %5410 = vmatprep.subr.mxu0 %v5300
    %5411 = vmatpush1.msra.mxu0 %v5299
    %5412 = vmatprep.subr.mxu0 %v5304
    %5413 = vmatpush1.msra.mxu0 %v5303
    %5414 = vmatprep.subr.mxu0 %v5308
    %5415 = vmatpush1.msra.mxu0 %v5307
    %5416 = vmatprep.subr.mxu0 %v5312
    %5417 = vmatpush1.msra.mxu0 %v5311
    %5418 = vmatprep.subr.mxu0 %v5316
    %5419 = vmatpush1.msra.mxu0 %v5315
    %5420 = vmatprep.subr.mxu0 0.0
    %5421 = vmatpush1.msra.mxu0 0.0
    %5422 = vmatprep.subr.mxu0 0.0
    %5423 = vmatpush1.msra.mxu0 0.0
    %5424 = vmatprep.subr.mxu0 0.0
    %5425 = vmatpush1.msra.mxu0 0.0
    %5426 = vmatprep.subr.mxu0 0.0
    %5427 = vmatpush1.msra.mxu0 0.0
    %5428 = vmatprep.subr.mxu0 0.0
    %5429 = vmatpush1.msra.mxu0 0.0
    %5430 = vmatprep.subr.mxu0 0.0
    %5431 = vmatpush1.msra.mxu0 0.0
    %5432 = vmatprep.subr.mxu0 0.0
    %5433 = vmatpush1.msra.mxu0 0.0
    %5434 = vmatprep.subr.mxu0 0.0
    %5435 = vmatpush1.msra.mxu0 0.0
    %5436 = vmatprep.subr.mxu0 0.0
    %5437 = vmatpush1.msra.mxu0 0.0
    %5438 = vmatprep.subr.mxu0 0.0
    %5439 = vmatpush1.msra.mxu0 0.0
    %5440 = vmatprep.subr.mxu0 0.0
    %5441 = vmatpush1.msra.mxu0 0.0
    %5442 = vmatprep.subr.mxu0 0.0
    %5443 = vmatpush1.msra.mxu0 0.0
    %5444 = vmatprep.subr.mxu0 0.0
    %5445 = vmatpush1.msra.mxu0 0.0
    %5446 = vmatprep.subr.mxu0 0.0
    %5447 = vmatpush1.msra.mxu0 0.0
    %5448 = vmatprep.subr.mxu0 0.0
    %5449 = vmatpush1.msra.mxu0 0.0
    %5450 = vmatprep.subr.mxu0 0.0
    %5451 = vmatpush1.msra.mxu0 0.0
    %5452 = vmatprep.mubr.f32.mxu0 0.0
    %5453 = vmatmul.mubr.f32.gmra.mrb[0].mxu0 %v5247
    %v5454 = vpop.f32.mrb[0].mxu0
    %v5455 = vadd.f32 0.0, %v5454
    %v5456 = vpop.f32.mrb[0].mxu0
    %v5457 = vadd.f32 0.0, %v5456
    %5458 = vdwg.mxu0
    %v5459 = vadd.f32 %v5249, %v5384
    %v5460 = vadd.f32 %v5250, %v5386
    %v5461 = vadd.f32 %v5251, %v5455
    %v5462 = vadd.f32 %v5252, %v5457
    %v5463 = vxor.u32 %v5459, 2147483648
    %v5464 = vmul.f32 %v5463, 1.442695
    %v5465 = vpow.pop %v5464
    %v5466 = vadd.f32 %v5465, 1.0
    %v5467 = vrcp.pop %v5466
    %v5468 = vmul.f32 1.0, %v5467
    %v5469 = vxor.u32 %v5460, 2147483648
    %v5470 = vmul.f32 %v5469, 1.442695
    %v5471 = vpow.pop %v5470
    %v5472 = vadd.f32 %v5471, 1.0
    %v5473 = vrcp.pop %v5472
    %v5474 = vmul.f32 1.0, %v5473
    %v5475 = vtanh.pop %v5461
    %v5476 = vxor.u32 %v5462, 2147483648
    %v5477 = vmul.f32 %v5476, 1.442695
    %v5478 = vpow.pop %v5477
    %v5479 = vadd.f32 %v5478, 1.0
    %v5480 = vrcp.pop %v5479
    %v5481 = vmul.f32 1.0, %v5480
    %v5482 = vmul.f32 %v5474, %v5245
    %v5483 = vmul.f32 %v5468, %v5475
    %v5484 = vadd.f32 %v5482, %v5483
    %v5485 = vtanh.pop %v5484
    %v5486 = vmul.f32 %v5481, %v5485
    %5487 = vst [vmem:[#allocation3 + $0x88] sm:$0xff] %v5486
    %v5488 = vld [vmem:[%s1049] sm:$0xff]
    %v5489 = vld [vmem:[%s1049 + $0x8] sm:$0xff]
    %v5490 = vld [vmem:[%s1049 + $0x10] sm:$0xff]
    %v5491 = vld [vmem:[%s1049 + $0x18] sm:$0xff]
    %v5492 = vld [vmem:[#allocation7] sm:$0xff]
    %v5493 = vld [vmem:[#allocation7 + $0x8] sm:$0xff]
    %v5494 = vld [vmem:[#allocation7 + $0x10] sm:$0xff]
    %v5495 = vld [vmem:[#allocation7 + $0x18] sm:$0xff]
    %v5496 = vld [vmem:[#allocation7 + $0x20] sm:$0xff]
    %v5497 = vld [vmem:[#allocation7 + $0x28] sm:$0xff]
    %v5498 = vld [vmem:[#allocation7 + $0x30] sm:$0xff]
    %v5499 = vld [vmem:[#allocation7 + $0x38] sm:$0xff]
    %v5500 = vld [vmem:[#allocation7 + $0x40] sm:$0xff]
    %v5501 = vld [vmem:[#allocation7 + $0x48] sm:$0xff]
    %v5502 = vld [vmem:[#allocation7 + $0x50] sm:$0xff]
    %v5503 = vld [vmem:[#allocation7 + $0x58] sm:$0xff]
    %v5504 = vld [vmem:[#allocation7 + $0x60] sm:$0xff]
    %v5505 = vld [vmem:[#allocation7 + $0x68] sm:$0xff]
    %v5506 = vld [vmem:[#allocation7 + $0x70] sm:$0xff]
    %v5507 = vld [vmem:[#allocation7 + $0x78] sm:$0xff]
    %v5508 = vld [vmem:[#allocation7 + $0x80] sm:$0xff]
    %v5509 = vld [vmem:[#allocation7 + $0x88] sm:$0xff]
    %v5510 = vld [vmem:[#allocation7 + $0x90] sm:$0xff]
    %v5511 = vld [vmem:[#allocation7 + $0x98] sm:$0xff]
    %v5512 = vld [vmem:[#allocation7 + $0xa0] sm:$0xff]
    %v5513 = vld [vmem:[#allocation7 + $0xa8] sm:$0xff]
    %v5514 = vld [vmem:[#allocation7 + $0xb0] sm:$0xff]
    %v5515 = vld [vmem:[#allocation7 + $0xb8] sm:$0xff]
    %v5516 = vld [vmem:[#allocation7 + $0xc0] sm:$0xff]
    %v5517 = vld [vmem:[#allocation7 + $0xc8] sm:$0xff]
    %v5518 = vld [vmem:[#allocation7 + $0xd0] sm:$0xff]
    %v5519 = vld [vmem:[#allocation7 + $0xd8] sm:$0xff]
    %v5520 = vld [vmem:[#allocation7 + $0xe0] sm:$0xff]
    %v5521 = vld [vmem:[#allocation7 + $0xe8] sm:$0xff]
    %v5522 = vld [vmem:[#allocation7 + $0xf0] sm:$0xff]
    %v5523 = vld [vmem:[#allocation7 + $0xf8] sm:$0xff]
    %v5524 = vld [vmem:[#allocation7 + $0x100] sm:$0xff]
    %v5525 = vld [vmem:[#allocation7 + $0x108] sm:$0xff]
    %v5526 = vld [vmem:[#allocation7 + $0x110] sm:$0xff]
    %v5527 = vld [vmem:[#allocation7 + $0x118] sm:$0xff]
    %v5528 = vld [vmem:[#allocation7 + $0x120] sm:$0xff]
    %v5529 = vld [vmem:[#allocation7 + $0x128] sm:$0xff]
    %v5530 = vld [vmem:[#allocation7 + $0x130] sm:$0xff]
    %v5531 = vld [vmem:[#allocation7 + $0x138] sm:$0xff]
    %v5532 = vld [vmem:[#allocation7 + $0x140] sm:$0xff]
    %v5533 = vld [vmem:[#allocation7 + $0x148] sm:$0xff]
    %v5534 = vld [vmem:[#allocation7 + $0x150] sm:$0xff]
    %v5535 = vld [vmem:[#allocation7 + $0x158] sm:$0xff]
    %v5536 = vld [vmem:[#allocation7 + $0x160] sm:$0xff]
    %v5537 = vld [vmem:[#allocation7 + $0x168] sm:$0xff]
    %v5538 = vld [vmem:[#allocation7 + $0x170] sm:$0xff]
    %v5539 = vld [vmem:[#allocation7 + $0x178] sm:$0xff]
    %v5540 = vld [vmem:[#allocation7 + $0x180] sm:$0xff]
    %v5541 = vld [vmem:[#allocation7 + $0x188] sm:$0xff]
    %v5542 = vld [vmem:[#allocation7 + $0x190] sm:$0xff]
    %v5543 = vld [vmem:[#allocation7 + $0x198] sm:$0xff]
    %v5544 = vld [vmem:[#allocation7 + $0x1a0] sm:$0xff]
    %v5545 = vld [vmem:[#allocation7 + $0x1a8] sm:$0xff]
    %v5546 = vld [vmem:[#allocation7 + $0x1b0] sm:$0xff]
    %v5547 = vld [vmem:[#allocation7 + $0x1b8] sm:$0xff]
    %v5548 = vld [vmem:[#allocation7 + $0x1c0] sm:$0xff]
    %v5549 = vld [vmem:[#allocation7 + $0x1c8] sm:$0xff]
    %v5550 = vld [vmem:[#allocation7 + $0x1d0] sm:$0xff]
    %v5551 = vld [vmem:[#allocation7 + $0x1d8] sm:$0xff]
    %v5552 = vld [vmem:[#allocation7 + $0x1e0] sm:$0xff]
    %v5553 = vld [vmem:[#allocation7 + $0x1e8] sm:$0xff]
    %v5554 = vld [vmem:[#allocation7 + $0x1f0] sm:$0xff]
    %v5555 = vld [vmem:[#allocation7 + $0x1f8] sm:$0xff]
    %5556 = vmatprep.subr.mxu0 %v5493
    %5557 = vmatpush1.msra.mxu0 %v5492
    %5558 = vmatprep.subr.mxu0 %v5497
    %5559 = vmatpush1.msra.mxu0 %v5496
    %5560 = vmatprep.subr.mxu0 %v5501
    %5561 = vmatpush1.msra.mxu0 %v5500
    %5562 = vmatprep.subr.mxu0 %v5505
    %5563 = vmatpush1.msra.mxu0 %v5504
    %5564 = vmatprep.subr.mxu0 %v5509
    %5565 = vmatpush1.msra.mxu0 %v5508
    %5566 = vmatprep.subr.mxu0 %v5513
    %5567 = vmatpush1.msra.mxu0 %v5512
    %5568 = vmatprep.subr.mxu0 %v5517
    %5569 = vmatpush1.msra.mxu0 %v5516
    %5570 = vmatprep.subr.mxu0 %v5521
    %5571 = vmatpush1.msra.mxu0 %v5520
    %5572 = vmatprep.subr.mxu0 %v5525
    %5573 = vmatpush1.msra.mxu0 %v5524
    %5574 = vmatprep.subr.mxu0 %v5529
    %5575 = vmatpush1.msra.mxu0 %v5528
    %5576 = vmatprep.subr.mxu0 %v5533
    %5577 = vmatpush1.msra.mxu0 %v5532
    %5578 = vmatprep.subr.mxu0 %v5537
    %5579 = vmatpush1.msra.mxu0 %v5536
    %5580 = vmatprep.subr.mxu0 %v5541
    %5581 = vmatpush1.msra.mxu0 %v5540
    %5582 = vmatprep.subr.mxu0 %v5545
    %5583 = vmatpush1.msra.mxu0 %v5544
    %5584 = vmatprep.subr.mxu0 %v5549
    %5585 = vmatpush1.msra.mxu0 %v5548
    %5586 = vmatprep.subr.mxu0 %v5553
    %5587 = vmatpush1.msra.mxu0 %v5552
    %5588 = vmatprep.subr.mxu0 0.0
    %5589 = vmatpush1.msra.mxu0 0.0
    %5590 = vmatprep.subr.mxu0 0.0
    %5591 = vmatpush1.msra.mxu0 0.0
    %5592 = vmatprep.subr.mxu0 0.0
    %5593 = vmatpush1.msra.mxu0 0.0
    %5594 = vmatprep.subr.mxu0 0.0
    %5595 = vmatpush1.msra.mxu0 0.0
    %5596 = vmatprep.subr.mxu0 0.0
    %5597 = vmatpush1.msra.mxu0 0.0
    %5598 = vmatprep.subr.mxu0 0.0
    %5599 = vmatpush1.msra.mxu0 0.0
    %5600 = vmatprep.subr.mxu0 0.0
    %5601 = vmatpush1.msra.mxu0 0.0
    %5602 = vmatprep.subr.mxu0 0.0
    %5603 = vmatpush1.msra.mxu0 0.0
    %5604 = vmatprep.subr.mxu0 0.0
    %5605 = vmatpush1.msra.mxu0 0.0
    %5606 = vmatprep.subr.mxu0 0.0
    %5607 = vmatpush1.msra.mxu0 0.0
    %5608 = vmatprep.subr.mxu0 0.0
    %5609 = vmatpush1.msra.mxu0 0.0
    %5610 = vmatprep.subr.mxu0 0.0
    %5611 = vmatpush1.msra.mxu0 0.0
    %5612 = vmatprep.subr.mxu0 0.0
    %5613 = vmatpush1.msra.mxu0 0.0
    %5614 = vmatprep.subr.mxu0 0.0
    %5615 = vmatpush1.msra.mxu0 0.0
    %5616 = vmatprep.subr.mxu0 0.0
    %5617 = vmatpush1.msra.mxu0 0.0
    %5618 = vmatprep.subr.mxu0 0.0
    %5619 = vmatpush1.msra.mxu0 0.0
    %5620 = vmatprep.mubr.f32.mxu0 0.0
    %5621 = vmatmul.mubr.f32.gmra.mrb[0].mxu0 %v5486
    %v5622 = vpop.f32.mrb[0].mxu0
    %v5623 = vadd.f32 0.0, %v5622
    %v5624 = vpop.f32.mrb[0].mxu0
    %v5625 = vadd.f32 0.0, %v5624
    %5626 = vdwg.mxu0
    %5627 = vmatprep.subr.mxu0 %v5495
    %5628 = vmatpush1.msra.mxu0 %v5494
    %5629 = vmatprep.subr.mxu0 %v5499
    %5630 = vmatpush1.msra.mxu0 %v5498
    %5631 = vmatprep.subr.mxu0 %v5503
    %5632 = vmatpush1.msra.mxu0 %v5502
    %5633 = vmatprep.subr.mxu0 %v5507
    %5634 = vmatpush1.msra.mxu0 %v5506
    %5635 = vmatprep.subr.mxu0 %v5511
    %5636 = vmatpush1.msra.mxu0 %v5510
    %5637 = vmatprep.subr.mxu0 %v5515
    %5638 = vmatpush1.msra.mxu0 %v5514
    %5639 = vmatprep.subr.mxu0 %v5519
    %5640 = vmatpush1.msra.mxu0 %v5518
    %5641 = vmatprep.subr.mxu0 %v5523
    %5642 = vmatpush1.msra.mxu0 %v5522
    %5643 = vmatprep.subr.mxu0 %v5527
    %5644 = vmatpush1.msra.mxu0 %v5526
    %5645 = vmatprep.subr.mxu0 %v5531
    %5646 = vmatpush1.msra.mxu0 %v5530
    %5647 = vmatprep.subr.mxu0 %v5535
    %5648 = vmatpush1.msra.mxu0 %v5534
    %5649 = vmatprep.subr.mxu0 %v5539
    %5650 = vmatpush1.msra.mxu0 %v5538
    %5651 = vmatprep.subr.mxu0 %v5543
    %5652 = vmatpush1.msra.mxu0 %v5542
    %5653 = vmatprep.subr.mxu0 %v5547
    %5654 = vmatpush1.msra.mxu0 %v5546
    %5655 = vmatprep.subr.mxu0 %v5551
    %5656 = vmatpush1.msra.mxu0 %v5550
    %5657 = vmatprep.subr.mxu0 %v5555
    %5658 = vmatpush1.msra.mxu0 %v5554
    %5659 = vmatprep.subr.mxu0 0.0
    %5660 = vmatpush1.msra.mxu0 0.0
    %5661 = vmatprep.subr.mxu0 0.0
    %5662 = vmatpush1.msra.mxu0 0.0
    %5663 = vmatprep.subr.mxu0 0.0
    %5664 = vmatpush1.msra.mxu0 0.0
    %5665 = vmatprep.subr.mxu0 0.0
    %5666 = vmatpush1.msra.mxu0 0.0
    %5667 = vmatprep.subr.mxu0 0.0
    %5668 = vmatpush1.msra.mxu0 0.0
    %5669 = vmatprep.subr.mxu0 0.0
    %5670 = vmatpush1.msra.mxu0 0.0
    %5671 = vmatprep.subr.mxu0 0.0
    %5672 = vmatpush1.msra.mxu0 0.0
    %5673 = vmatprep.subr.mxu0 0.0
    %5674 = vmatpush1.msra.mxu0 0.0
    %5675 = vmatprep.subr.mxu0 0.0
    %5676 = vmatpush1.msra.mxu0 0.0
    %5677 = vmatprep.subr.mxu0 0.0
    %5678 = vmatpush1.msra.mxu0 0.0
    %5679 = vmatprep.subr.mxu0 0.0
    %5680 = vmatpush1.msra.mxu0 0.0
    %5681 = vmatprep.subr.mxu0 0.0
    %5682 = vmatpush1.msra.mxu0 0.0
    %5683 = vmatprep.subr.mxu0 0.0
    %5684 = vmatpush1.msra.mxu0 0.0
    %5685 = vmatprep.subr.mxu0 0.0
    %5686 = vmatpush1.msra.mxu0 0.0
    %5687 = vmatprep.subr.mxu0 0.0
    %5688 = vmatpush1.msra.mxu0 0.0
    %5689 = vmatprep.subr.mxu0 0.0
    %5690 = vmatpush1.msra.mxu0 0.0
    %5691 = vmatprep.mubr.f32.mxu0 0.0
    %5692 = vmatmul.mubr.f32.gmra.mrb[0].mxu0 %v5486
    %v5693 = vpop.f32.mrb[0].mxu0
    %v5694 = vadd.f32 0.0, %v5693
    %v5695 = vpop.f32.mrb[0].mxu0
    %v5696 = vadd.f32 0.0, %v5695
    %5697 = vdwg.mxu0
    %v5698 = vadd.f32 %v5488, %v5623
    %v5699 = vadd.f32 %v5489, %v5625
    %v5700 = vadd.f32 %v5490, %v5694
    %v5701 = vadd.f32 %v5491, %v5696
    %v5702 = vxor.u32 %v5698, 2147483648
    %v5703 = vmul.f32 %v5702, 1.442695
    %v5704 = vpow.pop %v5703
    %v5705 = vadd.f32 %v5704, 1.0
    %v5706 = vrcp.pop %v5705
    %v5707 = vmul.f32 1.0, %v5706
    %v5708 = vxor.u32 %v5699, 2147483648
    %v5709 = vmul.f32 %v5708, 1.442695
    %v5710 = vpow.pop %v5709
    %v5711 = vadd.f32 %v5710, 1.0
    %v5712 = vrcp.pop %v5711
    %v5713 = vmul.f32 1.0, %v5712
    %v5714 = vtanh.pop %v5700
    %v5715 = vxor.u32 %v5701, 2147483648
    %v5716 = vmul.f32 %v5715, 1.442695
    %v5717 = vpow.pop %v5716
    %v5718 = vadd.f32 %v5717, 1.0
    %v5719 = vrcp.pop %v5718
    %v5720 = vmul.f32 1.0, %v5719
    %v5721 = vmul.f32 %v5713, %v5484
    %v5722 = vmul.f32 %v5707, %v5714
    %v5723 = vadd.f32 %v5721, %v5722
    %v5724 = vtanh.pop %v5723
    %v5725 = vmul.f32 %v5720, %v5724
    %5726 = vst [vmem:[#allocation3 + $0x90] sm:$0xff] %v5725
    %v5727 = vld [vmem:[%s1093] sm:$0xff]
    %v5728 = vld [vmem:[%s1093 + $0x8] sm:$0xff]
    %v5729 = vld [vmem:[%s1093 + $0x10] sm:$0xff]
    %v5730 = vld [vmem:[%s1093 + $0x18] sm:$0xff]
    %v5731 = vld [vmem:[#allocation7] sm:$0xff]
    %v5732 = vld [vmem:[#allocation7 + $0x8] sm:$0xff]
    %v5733 = vld [vmem:[#allocation7 + $0x10] sm:$0xff]
    %v5734 = vld [vmem:[#allocation7 + $0x18] sm:$0xff]
    %v5735 = vld [vmem:[#allocation7 + $0x20] sm:$0xff]
    %v5736 = vld [vmem:[#allocation7 + $0x28] sm:$0xff]
    %v5737 = vld [vmem:[#allocation7 + $0x30] sm:$0xff]
    %v5738 = vld [vmem:[#allocation7 + $0x38] sm:$0xff]
    %v5739 = vld [vmem:[#allocation7 + $0x40] sm:$0xff]
    %v5740 = vld [vmem:[#allocation7 + $0x48] sm:$0xff]
    %v5741 = vld [vmem:[#allocation7 + $0x50] sm:$0xff]
    %v5742 = vld [vmem:[#allocation7 + $0x58] sm:$0xff]
    %v5743 = vld [vmem:[#allocation7 + $0x60] sm:$0xff]
    %v5744 = vld [vmem:[#allocation7 + $0x68] sm:$0xff]
    %v5745 = vld [vmem:[#allocation7 + $0x70] sm:$0xff]
    %v5746 = vld [vmem:[#allocation7 + $0x78] sm:$0xff]
    %v5747 = vld [vmem:[#allocation7 + $0x80] sm:$0xff]
    %v5748 = vld [vmem:[#allocation7 + $0x88] sm:$0xff]
    %v5749 = vld [vmem:[#allocation7 + $0x90] sm:$0xff]
    %v5750 = vld [vmem:[#allocation7 + $0x98] sm:$0xff]
    %v5751 = vld [vmem:[#allocation7 + $0xa0] sm:$0xff]
    %v5752 = vld [vmem:[#allocation7 + $0xa8] sm:$0xff]
    %v5753 = vld [vmem:[#allocation7 + $0xb0] sm:$0xff]
    %v5754 = vld [vmem:[#allocation7 + $0xb8] sm:$0xff]
    %v5755 = vld [vmem:[#allocation7 + $0xc0] sm:$0xff]
    %v5756 = vld [vmem:[#allocation7 + $0xc8] sm:$0xff]
    %v5757 = vld [vmem:[#allocation7 + $0xd0] sm:$0xff]
    %v5758 = vld [vmem:[#allocation7 + $0xd8] sm:$0xff]
    %v5759 = vld [vmem:[#allocation7 + $0xe0] sm:$0xff]
    %v5760 = vld [vmem:[#allocation7 + $0xe8] sm:$0xff]
    %v5761 = vld [vmem:[#allocation7 + $0xf0] sm:$0xff]
    %v5762 = vld [vmem:[#allocation7 + $0xf8] sm:$0xff]
    %v5763 = vld [vmem:[#allocation7 + $0x100] sm:$0xff]
    %v5764 = vld [vmem:[#allocation7 + $0x108] sm:$0xff]
    %v5765 = vld [vmem:[#allocation7 + $0x110] sm:$0xff]
    %v5766 = vld [vmem:[#allocation7 + $0x118] sm:$0xff]
    %v5767 = vld [vmem:[#allocation7 + $0x120] sm:$0xff]
    %v5768 = vld [vmem:[#allocation7 + $0x128] sm:$0xff]
    %v5769 = vld [vmem:[#allocation7 + $0x130] sm:$0xff]
    %v5770 = vld [vmem:[#allocation7 + $0x138] sm:$0xff]
    %v5771 = vld [vmem:[#allocation7 + $0x140] sm:$0xff]
    %v5772 = vld [vmem:[#allocation7 + $0x148] sm:$0xff]
    %v5773 = vld [vmem:[#allocation7 + $0x150] sm:$0xff]
    %v5774 = vld [vmem:[#allocation7 + $0x158] sm:$0xff]
    %v5775 = vld [vmem:[#allocation7 + $0x160] sm:$0xff]
    %v5776 = vld [vmem:[#allocation7 + $0x168] sm:$0xff]
    %v5777 = vld [vmem:[#allocation7 + $0x170] sm:$0xff]
    %v5778 = vld [vmem:[#allocation7 + $0x178] sm:$0xff]
    %v5779 = vld [vmem:[#allocation7 + $0x180] sm:$0xff]
    %v5780 = vld [vmem:[#allocation7 + $0x188] sm:$0xff]
    %v5781 = vld [vmem:[#allocation7 + $0x190] sm:$0xff]
    %v5782 = vld [vmem:[#allocation7 + $0x198] sm:$0xff]
    %v5783 = vld [vmem:[#allocation7 + $0x1a0] sm:$0xff]
    %v5784 = vld [vmem:[#allocation7 + $0x1a8] sm:$0xff]
    %v5785 = vld [vmem:[#allocation7 + $0x1b0] sm:$0xff]
    %v5786 = vld [vmem:[#allocation7 + $0x1b8] sm:$0xff]
    %v5787 = vld [vmem:[#allocation7 + $0x1c0] sm:$0xff]
    %v5788 = vld [vmem:[#allocation7 + $0x1c8] sm:$0xff]
    %v5789 = vld [vmem:[#allocation7 + $0x1d0] sm:$0xff]
    %v5790 = vld [vmem:[#allocation7 + $0x1d8] sm:$0xff]
    %v5791 = vld [vmem:[#allocation7 + $0x1e0] sm:$0xff]
    %v5792 = vld [vmem:[#allocation7 + $0x1e8] sm:$0xff]
    %v5793 = vld [vmem:[#allocation7 + $0x1f0] sm:$0xff]
    %v5794 = vld [vmem:[#allocation7 + $0x1f8] sm:$0xff]
    %5795 = vmatprep.subr.mxu0 %v5732
    %5796 = vmatpush1.msra.mxu0 %v5731
    %5797 = vmatprep.subr.mxu0 %v5736
    %5798 = vmatpush1.msra.mxu0 %v5735
    %5799 = vmatprep.subr.mxu0 %v5740
    %5800 = vmatpush1.msra.mxu0 %v5739
    %5801 = vmatprep.subr.mxu0 %v5744
    %5802 = vmatpush1.msra.mxu0 %v5743
    %5803 = vmatprep.subr.mxu0 %v5748
    %5804 = vmatpush1.msra.mxu0 %v5747
    %5805 = vmatprep.subr.mxu0 %v5752
    %5806 = vmatpush1.msra.mxu0 %v5751
    %5807 = vmatprep.subr.mxu0 %v5756
    %5808 = vmatpush1.msra.mxu0 %v5755
    %5809 = vmatprep.subr.mxu0 %v5760
    %5810 = vmatpush1.msra.mxu0 %v5759
    %5811 = vmatprep.subr.mxu0 %v5764
    %5812 = vmatpush1.msra.mxu0 %v5763
    %5813 = vmatprep.subr.mxu0 %v5768
    %5814 = vmatpush1.msra.mxu0 %v5767
    %5815 = vmatprep.subr.mxu0 %v5772
    %5816 = vmatpush1.msra.mxu0 %v5771
    %5817 = vmatprep.subr.mxu0 %v5776
    %5818 = vmatpush1.msra.mxu0 %v5775
    %5819 = vmatprep.subr.mxu0 %v5780
    %5820 = vmatpush1.msra.mxu0 %v5779
    %5821 = vmatprep.subr.mxu0 %v5784
    %5822 = vmatpush1.msra.mxu0 %v5783
    %5823 = vmatprep.subr.mxu0 %v5788
    %5824 = vmatpush1.msra.mxu0 %v5787
    %5825 = vmatprep.subr.mxu0 %v5792
    %5826 = vmatpush1.msra.mxu0 %v5791
    %5827 = vmatprep.subr.mxu0 0.0
    %5828 = vmatpush1.msra.mxu0 0.0
    %5829 = vmatprep.subr.mxu0 0.0
    %5830 = vmatpush1.msra.mxu0 0.0
    %5831 = vmatprep.subr.mxu0 0.0
    %5832 = vmatpush1.msra.mxu0 0.0
    %5833 = vmatprep.subr.mxu0 0.0
    %5834 = vmatpush1.msra.mxu0 0.0
    %5835 = vmatprep.subr.mxu0 0.0
    %5836 = vmatpush1.msra.mxu0 0.0
    %5837 = vmatprep.subr.mxu0 0.0
    %5838 = vmatpush1.msra.mxu0 0.0
    %5839 = vmatprep.subr.mxu0 0.0
    %5840 = vmatpush1.msra.mxu0 0.0
    %5841 = vmatprep.subr.mxu0 0.0
    %5842 = vmatpush1.msra.mxu0 0.0
    %5843 = vmatprep.subr.mxu0 0.0
    %5844 = vmatpush1.msra.mxu0 0.0
    %5845 = vmatprep.subr.mxu0 0.0
    %5846 = vmatpush1.msra.mxu0 0.0
    %5847 = vmatprep.subr.mxu0 0.0
    %5848 = vmatpush1.msra.mxu0 0.0
    %5849 = vmatprep.subr.mxu0 0.0
    %5850 = vmatpush1.msra.mxu0 0.0
    %5851 = vmatprep.subr.mxu0 0.0
    %5852 = vmatpush1.msra.mxu0 0.0
    %5853 = vmatprep.subr.mxu0 0.0
    %5854 = vmatpush1.msra.mxu0 0.0
    %5855 = vmatprep.subr.mxu0 0.0
    %5856 = vmatpush1.msra.mxu0 0.0
    %5857 = vmatprep.subr.mxu0 0.0
    %5858 = vmatpush1.msra.mxu0 0.0
    %5859 = vmatprep.mubr.f32.mxu0 0.0
    %5860 = vmatmul.mubr.f32.gmra.mrb[0].mxu0 %v5725
    %v5861 = vpop.f32.mrb[0].mxu0
    %v5862 = vadd.f32 0.0, %v5861
    %v5863 = vpop.f32.mrb[0].mxu0
    %v5864 = vadd.f32 0.0, %v5863
    %5865 = vdwg.mxu0
    %5866 = vmatprep.subr.mxu0 %v5734
    %5867 = vmatpush1.msra.mxu0 %v5733
    %5868 = vmatprep.subr.mxu0 %v5738
    %5869 = vmatpush1.msra.mxu0 %v5737
    %5870 = vmatprep.subr.mxu0 %v5742
    %5871 = vmatpush1.msra.mxu0 %v5741
    %5872 = vmatprep.subr.mxu0 %v5746
    %5873 = vmatpush1.msra.mxu0 %v5745
    %5874 = vmatprep.subr.mxu0 %v5750
    %5875 = vmatpush1.msra.mxu0 %v5749
    %5876 = vmatprep.subr.mxu0 %v5754
    %5877 = vmatpush1.msra.mxu0 %v5753
    %5878 = vmatprep.subr.mxu0 %v5758
    %5879 = vmatpush1.msra.mxu0 %v5757
    %5880 = vmatprep.subr.mxu0 %v5762
    %5881 = vmatpush1.msra.mxu0 %v5761
    %5882 = vmatprep.subr.mxu0 %v5766
    %5883 = vmatpush1.msra.mxu0 %v5765
    %5884 = vmatprep.subr.mxu0 %v5770
    %5885 = vmatpush1.msra.mxu0 %v5769
    %5886 = vmatprep.subr.mxu0 %v5774
    %5887 = vmatpush1.msra.mxu0 %v5773
    %5888 = vmatprep.subr.mxu0 %v5778
    %5889 = vmatpush1.msra.mxu0 %v5777
    %5890 = vmatprep.subr.mxu0 %v5782
    %5891 = vmatpush1.msra.mxu0 %v5781
    %5892 = vmatprep.subr.mxu0 %v5786
    %5893 = vmatpush1.msra.mxu0 %v5785
    %5894 = vmatprep.subr.mxu0 %v5790
    %5895 = vmatpush1.msra.mxu0 %v5789
    %5896 = vmatprep.subr.mxu0 %v5794
    %5897 = vmatpush1.msra.mxu0 %v5793
    %5898 = vmatprep.subr.mxu0 0.0
    %5899 = vmatpush1.msra.mxu0 0.0
    %5900 = vmatprep.subr.mxu0 0.0
    %5901 = vmatpush1.msra.mxu0 0.0
    %5902 = vmatprep.subr.mxu0 0.0
    %5903 = vmatpush1.msra.mxu0 0.0
    %5904 = vmatprep.subr.mxu0 0.0
    %5905 = vmatpush1.msra.mxu0 0.0
    %5906 = vmatprep.subr.mxu0 0.0
    %5907 = vmatpush1.msra.mxu0 0.0
    %5908 = vmatprep.subr.mxu0 0.0
    %5909 = vmatpush1.msra.mxu0 0.0
    %5910 = vmatprep.subr.mxu0 0.0
    %5911 = vmatpush1.msra.mxu0 0.0
    %5912 = vmatprep.subr.mxu0 0.0
    %5913 = vmatpush1.msra.mxu0 0.0
    %5914 = vmatprep.subr.mxu0 0.0
    %5915 = vmatpush1.msra.mxu0 0.0
    %5916 = vmatprep.subr.mxu0 0.0
    %5917 = vmatpush1.msra.mxu0 0.0
    %5918 = vmatprep.subr.mxu0 0.0
    %5919 = vmatpush1.msra.mxu0 0.0
    %5920 = vmatprep.subr.mxu0 0.0
    %5921 = vmatpush1.msra.mxu0 0.0
    %5922 = vmatprep.subr.mxu0 0.0
    %5923 = vmatpush1.msra.mxu0 0.0
    %5924 = vmatprep.subr.mxu0 0.0
    %5925 = vmatpush1.msra.mxu0 0.0
    %5926 = vmatprep.subr.mxu0 0.0
    %5927 = vmatpush1.msra.mxu0 0.0
    %5928 = vmatprep.subr.mxu0 0.0
    %5929 = vmatpush1.msra.mxu0 0.0
    %5930 = vmatprep.mubr.f32.mxu0 0.0
    %5931 = vmatmul.mubr.f32.gmra.mrb[0].mxu0 %v5725
    %v5932 = vpop.f32.mrb[0].mxu0
    %v5933 = vadd.f32 0.0, %v5932
    %v5934 = vpop.f32.mrb[0].mxu0
    %v5935 = vadd.f32 0.0, %v5934
    %5936 = vdwg.mxu0
    %v5937 = vadd.f32 %v5727, %v5862
    %v5938 = vadd.f32 %v5728, %v5864
    %v5939 = vadd.f32 %v5729, %v5933
    %v5940 = vadd.f32 %v5730, %v5935
    %v5941 = vxor.u32 %v5937, 2147483648
    %v5942 = vmul.f32 %v5941, 1.442695
    %v5943 = vpow.pop %v5942
    %v5944 = vadd.f32 %v5943, 1.0
    %v5945 = vrcp.pop %v5944
    %v5946 = vmul.f32 1.0, %v5945
    %v5947 = vxor.u32 %v5938, 2147483648
    %v5948 = vmul.f32 %v5947, 1.442695
    %v5949 = vpow.pop %v5948
    %v5950 = vadd.f32 %v5949, 1.0
    %v5951 = vrcp.pop %v5950
    %v5952 = vmul.f32 1.0, %v5951
    %v5953 = vtanh.pop %v5939
    %v5954 = vxor.u32 %v5940, 2147483648
    %v5955 = vmul.f32 %v5954, 1.442695
    %v5956 = vpow.pop %v5955
    %v5957 = vadd.f32 %v5956, 1.0
    %v5958 = vrcp.pop %v5957
    %v5959 = vmul.f32 1.0, %v5958
    %v5960 = vmul.f32 %v5952, %v5723
    %v5961 = vmul.f32 %v5946, %v5953
    %v5962 = vadd.f32 %v5960, %v5961
    %v5963 = vtanh.pop %v5962
    %v5964 = vmul.f32 %v5959, %v5963
    %5965 = vst [vmem:[#allocation3 + $0x98] sm:$0xff] %v5964
    %v5966 = vld [vmem:[%s1137] sm:$0xff]
    %v5967 = vld [vmem:[%s1137 + $0x8] sm:$0xff]
    %v5968 = vld [vmem:[%s1137 + $0x10] sm:$0xff]
    %v5969 = vld [vmem:[%s1137 + $0x18] sm:$0xff]
    %v5970 = vld [vmem:[#allocation7] sm:$0xff]
    %v5971 = vld [vmem:[#allocation7 + $0x8] sm:$0xff]
    %v5972 = vld [vmem:[#allocation7 + $0x10] sm:$0xff]
    %v5973 = vld [vmem:[#allocation7 + $0x18] sm:$0xff]
    %v5974 = vld [vmem:[#allocation7 + $0x20] sm:$0xff]
    %v5975 = vld [vmem:[#allocation7 + $0x28] sm:$0xff]
    %v5976 = vld [vmem:[#allocation7 + $0x30] sm:$0xff]
    %v5977 = vld [vmem:[#allocation7 + $0x38] sm:$0xff]
    %v5978 = vld [vmem:[#allocation7 + $0x40] sm:$0xff]
    %v5979 = vld [vmem:[#allocation7 + $0x48] sm:$0xff]
    %v5980 = vld [vmem:[#allocation7 + $0x50] sm:$0xff]
    %v5981 = vld [vmem:[#allocation7 + $0x58] sm:$0xff]
    %v5982 = vld [vmem:[#allocation7 + $0x60] sm:$0xff]
    %v5983 = vld [vmem:[#allocation7 + $0x68] sm:$0xff]
    %v5984 = vld [vmem:[#allocation7 + $0x70] sm:$0xff]
    %v5985 = vld [vmem:[#allocation7 + $0x78] sm:$0xff]
    %v5986 = vld [vmem:[#allocation7 + $0x80] sm:$0xff]
    %v5987 = vld [vmem:[#allocation7 + $0x88] sm:$0xff]
    %v5988 = vld [vmem:[#allocation7 + $0x90] sm:$0xff]
    %v5989 = vld [vmem:[#allocation7 + $0x98] sm:$0xff]
    %v5990 = vld [vmem:[#allocation7 + $0xa0] sm:$0xff]
    %v5991 = vld [vmem:[#allocation7 + $0xa8] sm:$0xff]
    %v5992 = vld [vmem:[#allocation7 + $0xb0] sm:$0xff]
    %v5993 = vld [vmem:[#allocation7 + $0xb8] sm:$0xff]
    %v5994 = vld [vmem:[#allocation7 + $0xc0] sm:$0xff]
    %v5995 = vld [vmem:[#allocation7 + $0xc8] sm:$0xff]
    %v5996 = vld [vmem:[#allocation7 + $0xd0] sm:$0xff]
    %v5997 = vld [vmem:[#allocation7 + $0xd8] sm:$0xff]
    %v5998 = vld [vmem:[#allocation7 + $0xe0] sm:$0xff]
    %v5999 = vld [vmem:[#allocation7 + $0xe8] sm:$0xff]
    %v6000 = vld [vmem:[#allocation7 + $0xf0] sm:$0xff]
    %v6001 = vld [vmem:[#allocation7 + $0xf8] sm:$0xff]
    %v6002 = vld [vmem:[#allocation7 + $0x100] sm:$0xff]
    %v6003 = vld [vmem:[#allocation7 + $0x108] sm:$0xff]
    %v6004 = vld [vmem:[#allocation7 + $0x110] sm:$0xff]
    %v6005 = vld [vmem:[#allocation7 + $0x118] sm:$0xff]
    %v6006 = vld [vmem:[#allocation7 + $0x120] sm:$0xff]
    %v6007 = vld [vmem:[#allocation7 + $0x128] sm:$0xff]
    %v6008 = vld [vmem:[#allocation7 + $0x130] sm:$0xff]
    %v6009 = vld [vmem:[#allocation7 + $0x138] sm:$0xff]
    %v6010 = vld [vmem:[#allocation7 + $0x140] sm:$0xff]
    %v6011 = vld [vmem:[#allocation7 + $0x148] sm:$0xff]
    %v6012 = vld [vmem:[#allocation7 + $0x150] sm:$0xff]
    %v6013 = vld [vmem:[#allocation7 + $0x158] sm:$0xff]
    %v6014 = vld [vmem:[#allocation7 + $0x160] sm:$0xff]
    %v6015 = vld [vmem:[#allocation7 + $0x168] sm:$0xff]
    %v6016 = vld [vmem:[#allocation7 + $0x170] sm:$0xff]
    %v6017 = vld [vmem:[#allocation7 + $0x178] sm:$0xff]
    %v6018 = vld [vmem:[#allocation7 + $0x180] sm:$0xff]
    %v6019 = vld [vmem:[#allocation7 + $0x188] sm:$0xff]
    %v6020 = vld [vmem:[#allocation7 + $0x190] sm:$0xff]
    %v6021 = vld [vmem:[#allocation7 + $0x198] sm:$0xff]
    %v6022 = vld [vmem:[#allocation7 + $0x1a0] sm:$0xff]
    %v6023 = vld [vmem:[#allocation7 + $0x1a8] sm:$0xff]
    %v6024 = vld [vmem:[#allocation7 + $0x1b0] sm:$0xff]
    %v6025 = vld [vmem:[#allocation7 + $0x1b8] sm:$0xff]
    %v6026 = vld [vmem:[#allocation7 + $0x1c0] sm:$0xff]
    %v6027 = vld [vmem:[#allocation7 + $0x1c8] sm:$0xff]
    %v6028 = vld [vmem:[#allocation7 + $0x1d0] sm:$0xff]
    %v6029 = vld [vmem:[#allocation7 + $0x1d8] sm:$0xff]
    %v6030 = vld [vmem:[#allocation7 + $0x1e0] sm:$0xff]
    %v6031 = vld [vmem:[#allocation7 + $0x1e8] sm:$0xff]
    %v6032 = vld [vmem:[#allocation7 + $0x1f0] sm:$0xff]
    %v6033 = vld [vmem:[#allocation7 + $0x1f8] sm:$0xff]
    %6034 = vmatprep.subr.mxu0 %v5971
    %6035 = vmatpush1.msra.mxu0 %v5970
    %6036 = vmatprep.subr.mxu0 %v5975
    %6037 = vmatpush1.msra.mxu0 %v5974
    %6038 = vmatprep.subr.mxu0 %v5979
    %6039 = vmatpush1.msra.mxu0 %v5978
    %6040 = vmatprep.subr.mxu0 %v5983
    %6041 = vmatpush1.msra.mxu0 %v5982
    %6042 = vmatprep.subr.mxu0 %v5987
    %6043 = vmatpush1.msra.mxu0 %v5986
    %6044 = vmatprep.subr.mxu0 %v5991
    %6045 = vmatpush1.msra.mxu0 %v5990
    %6046 = vmatprep.subr.mxu0 %v5995
    %6047 = vmatpush1.msra.mxu0 %v5994
    %6048 = vmatprep.subr.mxu0 %v5999
    %6049 = vmatpush1.msra.mxu0 %v5998
    %6050 = vmatprep.subr.mxu0 %v6003
    %6051 = vmatpush1.msra.mxu0 %v6002
    %6052 = vmatprep.subr.mxu0 %v6007
    %6053 = vmatpush1.msra.mxu0 %v6006
    %6054 = vmatprep.subr.mxu0 %v6011
    %6055 = vmatpush1.msra.mxu0 %v6010
    %6056 = vmatprep.subr.mxu0 %v6015
    %6057 = vmatpush1.msra.mxu0 %v6014
    %6058 = vmatprep.subr.mxu0 %v6019
    %6059 = vmatpush1.msra.mxu0 %v6018
    %6060 = vmatprep.subr.mxu0 %v6023
    %6061 = vmatpush1.msra.mxu0 %v6022
    %6062 = vmatprep.subr.mxu0 %v6027
    %6063 = vmatpush1.msra.mxu0 %v6026
    %6064 = vmatprep.subr.mxu0 %v6031
    %6065 = vmatpush1.msra.mxu0 %v6030
    %6066 = vmatprep.subr.mxu0 0.0
    %6067 = vmatpush1.msra.mxu0 0.0
    %6068 = vmatprep.subr.mxu0 0.0
    %6069 = vmatpush1.msra.mxu0 0.0
    %6070 = vmatprep.subr.mxu0 0.0
    %6071 = vmatpush1.msra.mxu0 0.0
    %6072 = vmatprep.subr.mxu0 0.0
    %6073 = vmatpush1.msra.mxu0 0.0
    %6074 = vmatprep.subr.mxu0 0.0
    %6075 = vmatpush1.msra.mxu0 0.0
    %6076 = vmatprep.subr.mxu0 0.0
    %6077 = vmatpush1.msra.mxu0 0.0
    %6078 = vmatprep.subr.mxu0 0.0
    %6079 = vmatpush1.msra.mxu0 0.0
    %6080 = vmatprep.subr.mxu0 0.0
    %6081 = vmatpush1.msra.mxu0 0.0
    %6082 = vmatprep.subr.mxu0 0.0
    %6083 = vmatpush1.msra.mxu0 0.0
    %6084 = vmatprep.subr.mxu0 0.0
    %6085 = vmatpush1.msra.mxu0 0.0
    %6086 = vmatprep.subr.mxu0 0.0
    %6087 = vmatpush1.msra.mxu0 0.0
    %6088 = vmatprep.subr.mxu0 0.0
    %6089 = vmatpush1.msra.mxu0 0.0
    %6090 = vmatprep.subr.mxu0 0.0
    %6091 = vmatpush1.msra.mxu0 0.0
    %6092 = vmatprep.subr.mxu0 0.0
    %6093 = vmatpush1.msra.mxu0 0.0
    %6094 = vmatprep.subr.mxu0 0.0
    %6095 = vmatpush1.msra.mxu0 0.0
    %6096 = vmatprep.subr.mxu0 0.0
    %6097 = vmatpush1.msra.mxu0 0.0
    %6098 = vmatprep.mubr.f32.mxu0 0.0
    %6099 = vmatmul.mubr.f32.gmra.mrb[0].mxu0 %v5964
    %v6100 = vpop.f32.mrb[0].mxu0
    %v6101 = vadd.f32 0.0, %v6100
    %v6102 = vpop.f32.mrb[0].mxu0
    %v6103 = vadd.f32 0.0, %v6102
    %6104 = vdwg.mxu0
    %6105 = vmatprep.subr.mxu0 %v5973
    %6106 = vmatpush1.msra.mxu0 %v5972
    %6107 = vmatprep.subr.mxu0 %v5977
    %6108 = vmatpush1.msra.mxu0 %v5976
    %6109 = vmatprep.subr.mxu0 %v5981
    %6110 = vmatpush1.msra.mxu0 %v5980
    %6111 = vmatprep.subr.mxu0 %v5985
    %6112 = vmatpush1.msra.mxu0 %v5984
    %6113 = vmatprep.subr.mxu0 %v5989
    %6114 = vmatpush1.msra.mxu0 %v5988
    %6115 = vmatprep.subr.mxu0 %v5993
    %6116 = vmatpush1.msra.mxu0 %v5992
    %6117 = vmatprep.subr.mxu0 %v5997
    %6118 = vmatpush1.msra.mxu0 %v5996
    %6119 = vmatprep.subr.mxu0 %v6001
    %6120 = vmatpush1.msra.mxu0 %v6000
    %6121 = vmatprep.subr.mxu0 %v6005
    %6122 = vmatpush1.msra.mxu0 %v6004
    %6123 = vmatprep.subr.mxu0 %v6009
    %6124 = vmatpush1.msra.mxu0 %v6008
    %6125 = vmatprep.subr.mxu0 %v6013
    %6126 = vmatpush1.msra.mxu0 %v6012
    %6127 = vmatprep.subr.mxu0 %v6017
    %6128 = vmatpush1.msra.mxu0 %v6016
    %6129 = vmatprep.subr.mxu0 %v6021
    %6130 = vmatpush1.msra.mxu0 %v6020
    %6131 = vmatprep.subr.mxu0 %v6025
    %6132 = vmatpush1.msra.mxu0 %v6024
    %6133 = vmatprep.subr.mxu0 %v6029
    %6134 = vmatpush1.msra.mxu0 %v6028
    %6135 = vmatprep.subr.mxu0 %v6033
    %6136 = vmatpush1.msra.mxu0 %v6032
    %6137 = vmatprep.subr.mxu0 0.0
    %6138 = vmatpush1.msra.mxu0 0.0
    %6139 = vmatprep.subr.mxu0 0.0
    %6140 = vmatpush1.msra.mxu0 0.0
    %6141 = vmatprep.subr.mxu0 0.0
    %6142 = vmatpush1.msra.mxu0 0.0
    %6143 = vmatprep.subr.mxu0 0.0
    %6144 = vmatpush1.msra.mxu0 0.0
    %6145 = vmatprep.subr.mxu0 0.0
    %6146 = vmatpush1.msra.mxu0 0.0
    %6147 = vmatprep.subr.mxu0 0.0
    %6148 = vmatpush1.msra.mxu0 0.0
    %6149 = vmatprep.subr.mxu0 0.0
    %6150 = vmatpush1.msra.mxu0 0.0
    %6151 = vmatprep.subr.mxu0 0.0
    %6152 = vmatpush1.msra.mxu0 0.0
    %6153 = vmatprep.subr.mxu0 0.0
    %6154 = vmatpush1.msra.mxu0 0.0
    %6155 = vmatprep.subr.mxu0 0.0
    %6156 = vmatpush1.msra.mxu0 0.0
    %6157 = vmatprep.subr.mxu0 0.0
    %6158 = vmatpush1.msra.mxu0 0.0
    %6159 = vmatprep.subr.mxu0 0.0
    %6160 = vmatpush1.msra.mxu0 0.0
    %6161 = vmatprep.subr.mxu0 0.0
    %6162 = vmatpush1.msra.mxu0 0.0
    %6163 = vmatprep.subr.mxu0 0.0
    %6164 = vmatpush1.msra.mxu0 0.0
    %6165 = vmatprep.subr.mxu0 0.0
    %6166 = vmatpush1.msra.mxu0 0.0
    %6167 = vmatprep.subr.mxu0 0.0
    %6168 = vmatpush1.msra.mxu0 0.0
    %6169 = vmatprep.mubr.f32.mxu0 0.0
    %6170 = vmatmul.mubr.f32.gmra.mrb[0].mxu0 %v5964
    %v6171 = vpop.f32.mrb[0].mxu0
    %v6172 = vadd.f32 0.0, %v6171
    %v6173 = vpop.f32.mrb[0].mxu0
    %v6174 = vadd.f32 0.0, %v6173
    %6175 = vdwg.mxu0
    %v6176 = vadd.f32 %v5966, %v6101
    %v6177 = vadd.f32 %v5967, %v6103
    %v6178 = vadd.f32 %v5968, %v6172
    %v6179 = vadd.f32 %v5969, %v6174
    %v6180 = vxor.u32 %v6176, 2147483648
    %v6181 = vmul.f32 %v6180, 1.442695
    %v6182 = vpow.pop %v6181
    %v6183 = vadd.f32 %v6182, 1.0
    %v6184 = vrcp.pop %v6183
    %v6185 = vmul.f32 1.0, %v6184
    %v6186 = vxor.u32 %v6177, 2147483648
    %v6187 = vmul.f32 %v6186, 1.442695
    %v6188 = vpow.pop %v6187
    %v6189 = vadd.f32 %v6188, 1.0
    %v6190 = vrcp.pop %v6189
    %v6191 = vmul.f32 1.0, %v6190
    %v6192 = vtanh.pop %v6178
    %v6193 = vxor.u32 %v6179, 2147483648
    %v6194 = vmul.f32 %v6193, 1.442695
    %v6195 = vpow.pop %v6194
    %v6196 = vadd.f32 %v6195, 1.0
    %v6197 = vrcp.pop %v6196
    %v6198 = vmul.f32 1.0, %v6197
    %v6199 = vmul.f32 %v6191, %v5962
    %v6200 = vmul.f32 %v6185, %v6192
    %v6201 = vadd.f32 %v6199, %v6200
    %v6202 = vtanh.pop %v6201
    %v6203 = vmul.f32 %v6198, %v6202
    %6204 = vst [vmem:[#allocation3 + $0xa0] sm:$0xff] %v6203
    %v6205 = vld [vmem:[%s1181] sm:$0xff]
    %v6206 = vld [vmem:[%s1181 + $0x8] sm:$0xff]
    %v6207 = vld [vmem:[%s1181 + $0x10] sm:$0xff]
    %v6208 = vld [vmem:[%s1181 + $0x18] sm:$0xff]
    %v6209 = vld [vmem:[#allocation7] sm:$0xff]
    %v6210 = vld [vmem:[#allocation7 + $0x8] sm:$0xff]
    %v6211 = vld [vmem:[#allocation7 + $0x10] sm:$0xff]
    %v6212 = vld [vmem:[#allocation7 + $0x18] sm:$0xff]
    %v6213 = vld [vmem:[#allocation7 + $0x20] sm:$0xff]
    %v6214 = vld [vmem:[#allocation7 + $0x28] sm:$0xff]
    %v6215 = vld [vmem:[#allocation7 + $0x30] sm:$0xff]
    %v6216 = vld [vmem:[#allocation7 + $0x38] sm:$0xff]
    %v6217 = vld [vmem:[#allocation7 + $0x40] sm:$0xff]
    %v6218 = vld [vmem:[#allocation7 + $0x48] sm:$0xff]
    %v6219 = vld [vmem:[#allocation7 + $0x50] sm:$0xff]
    %v6220 = vld [vmem:[#allocation7 + $0x58] sm:$0xff]
    %v6221 = vld [vmem:[#allocation7 + $0x60] sm:$0xff]
    %v6222 = vld [vmem:[#allocation7 + $0x68] sm:$0xff]
    %v6223 = vld [vmem:[#allocation7 + $0x70] sm:$0xff]
    %v6224 = vld [vmem:[#allocation7 + $0x78] sm:$0xff]
    %v6225 = vld [vmem:[#allocation7 + $0x80] sm:$0xff]
    %v6226 = vld [vmem:[#allocation7 + $0x88] sm:$0xff]
    %v6227 = vld [vmem:[#allocation7 + $0x90] sm:$0xff]
    %v6228 = vld [vmem:[#allocation7 + $0x98] sm:$0xff]
    %v6229 = vld [vmem:[#allocation7 + $0xa0] sm:$0xff]
    %v6230 = vld [vmem:[#allocation7 + $0xa8] sm:$0xff]
    %v6231 = vld [vmem:[#allocation7 + $0xb0] sm:$0xff]
    %v6232 = vld [vmem:[#allocation7 + $0xb8] sm:$0xff]
    %v6233 = vld [vmem:[#allocation7 + $0xc0] sm:$0xff]
    %v6234 = vld [vmem:[#allocation7 + $0xc8] sm:$0xff]
    %v6235 = vld [vmem:[#allocation7 + $0xd0] sm:$0xff]
    %v6236 = vld [vmem:[#allocation7 + $0xd8] sm:$0xff]
    %v6237 = vld [vmem:[#allocation7 + $0xe0] sm:$0xff]
    %v6238 = vld [vmem:[#allocation7 + $0xe8] sm:$0xff]
    %v6239 = vld [vmem:[#allocation7 + $0xf0] sm:$0xff]
    %v6240 = vld [vmem:[#allocation7 + $0xf8] sm:$0xff]
    %v6241 = vld [vmem:[#allocation7 + $0x100] sm:$0xff]
    %v6242 = vld [vmem:[#allocation7 + $0x108] sm:$0xff]
    %v6243 = vld [vmem:[#allocation7 + $0x110] sm:$0xff]
    %v6244 = vld [vmem:[#allocation7 + $0x118] sm:$0xff]
    %v6245 = vld [vmem:[#allocation7 + $0x120] sm:$0xff]
    %v6246 = vld [vmem:[#allocation7 + $0x128] sm:$0xff]
    %v6247 = vld [vmem:[#allocation7 + $0x130] sm:$0xff]
    %v6248 = vld [vmem:[#allocation7 + $0x138] sm:$0xff]
    %v6249 = vld [vmem:[#allocation7 + $0x140] sm:$0xff]
    %v6250 = vld [vmem:[#allocation7 + $0x148] sm:$0xff]
    %v6251 = vld [vmem:[#allocation7 + $0x150] sm:$0xff]
    %v6252 = vld [vmem:[#allocation7 + $0x158] sm:$0xff]
    %v6253 = vld [vmem:[#allocation7 + $0x160] sm:$0xff]
    %v6254 = vld [vmem:[#allocation7 + $0x168] sm:$0xff]
    %v6255 = vld [vmem:[#allocation7 + $0x170] sm:$0xff]
    %v6256 = vld [vmem:[#allocation7 + $0x178] sm:$0xff]
    %v6257 = vld [vmem:[#allocation7 + $0x180] sm:$0xff]
    %v6258 = vld [vmem:[#allocation7 + $0x188] sm:$0xff]
    %v6259 = vld [vmem:[#allocation7 + $0x190] sm:$0xff]
    %v6260 = vld [vmem:[#allocation7 + $0x198] sm:$0xff]
    %v6261 = vld [vmem:[#allocation7 + $0x1a0] sm:$0xff]
    %v6262 = vld [vmem:[#allocation7 + $0x1a8] sm:$0xff]
    %v6263 = vld [vmem:[#allocation7 + $0x1b0] sm:$0xff]
    %v6264 = vld [vmem:[#allocation7 + $0x1b8] sm:$0xff]
    %v6265 = vld [vmem:[#allocation7 + $0x1c0] sm:$0xff]
    %v6266 = vld [vmem:[#allocation7 + $0x1c8] sm:$0xff]
    %v6267 = vld [vmem:[#allocation7 + $0x1d0] sm:$0xff]
    %v6268 = vld [vmem:[#allocation7 + $0x1d8] sm:$0xff]
    %v6269 = vld [vmem:[#allocation7 + $0x1e0] sm:$0xff]
    %v6270 = vld [vmem:[#allocation7 + $0x1e8] sm:$0xff]
    %v6271 = vld [vmem:[#allocation7 + $0x1f0] sm:$0xff]
    %v6272 = vld [vmem:[#allocation7 + $0x1f8] sm:$0xff]
    %6273 = vmatprep.subr.mxu0 %v6210
    %6274 = vmatpush1.msra.mxu0 %v6209
    %6275 = vmatprep.subr.mxu0 %v6214
    %6276 = vmatpush1.msra.mxu0 %v6213
    %6277 = vmatprep.subr.mxu0 %v6218
    %6278 = vmatpush1.msra.mxu0 %v6217
    %6279 = vmatprep.subr.mxu0 %v6222
    %6280 = vmatpush1.msra.mxu0 %v6221
    %6281 = vmatprep.subr.mxu0 %v6226
    %6282 = vmatpush1.msra.mxu0 %v6225
    %6283 = vmatprep.subr.mxu0 %v6230
    %6284 = vmatpush1.msra.mxu0 %v6229
    %6285 = vmatprep.subr.mxu0 %v6234
    %6286 = vmatpush1.msra.mxu0 %v6233
    %6287 = vmatprep.subr.mxu0 %v6238
    %6288 = vmatpush1.msra.mxu0 %v6237
    %6289 = vmatprep.subr.mxu0 %v6242
    %6290 = vmatpush1.msra.mxu0 %v6241
    %6291 = vmatprep.subr.mxu0 %v6246
    %6292 = vmatpush1.msra.mxu0 %v6245
    %6293 = vmatprep.subr.mxu0 %v6250
    %6294 = vmatpush1.msra.mxu0 %v6249
    %6295 = vmatprep.subr.mxu0 %v6254
    %6296 = vmatpush1.msra.mxu0 %v6253
    %6297 = vmatprep.subr.mxu0 %v6258
    %6298 = vmatpush1.msra.mxu0 %v6257
    %6299 = vmatprep.subr.mxu0 %v6262
    %6300 = vmatpush1.msra.mxu0 %v6261
    %6301 = vmatprep.subr.mxu0 %v6266
    %6302 = vmatpush1.msra.mxu0 %v6265
    %6303 = vmatprep.subr.mxu0 %v6270
    %6304 = vmatpush1.msra.mxu0 %v6269
    %6305 = vmatprep.subr.mxu0 0.0
    %6306 = vmatpush1.msra.mxu0 0.0
    %6307 = vmatprep.subr.mxu0 0.0
    %6308 = vmatpush1.msra.mxu0 0.0
    %6309 = vmatprep.subr.mxu0 0.0
    %6310 = vmatpush1.msra.mxu0 0.0
    %6311 = vmatprep.subr.mxu0 0.0
    %6312 = vmatpush1.msra.mxu0 0.0
    %6313 = vmatprep.subr.mxu0 0.0
    %6314 = vmatpush1.msra.mxu0 0.0
    %6315 = vmatprep.subr.mxu0 0.0
    %6316 = vmatpush1.msra.mxu0 0.0
    %6317 = vmatprep.subr.mxu0 0.0
    %6318 = vmatpush1.msra.mxu0 0.0
    %6319 = vmatprep.subr.mxu0 0.0
    %6320 = vmatpush1.msra.mxu0 0.0
    %6321 = vmatprep.subr.mxu0 0.0
    %6322 = vmatpush1.msra.mxu0 0.0
    %6323 = vmatprep.subr.mxu0 0.0
    %6324 = vmatpush1.msra.mxu0 0.0
    %6325 = vmatprep.subr.mxu0 0.0
    %6326 = vmatpush1.msra.mxu0 0.0
    %6327 = vmatprep.subr.mxu0 0.0
    %6328 = vmatpush1.msra.mxu0 0.0
    %6329 = vmatprep.subr.mxu0 0.0
    %6330 = vmatpush1.msra.mxu0 0.0
    %6331 = vmatprep.subr.mxu0 0.0
    %6332 = vmatpush1.msra.mxu0 0.0
    %6333 = vmatprep.subr.mxu0 0.0
    %6334 = vmatpush1.msra.mxu0 0.0
    %6335 = vmatprep.subr.mxu0 0.0
    %6336 = vmatpush1.msra.mxu0 0.0
    %6337 = vmatprep.mubr.f32.mxu0 0.0
    %6338 = vmatmul.mubr.f32.gmra.mrb[0].mxu0 %v6203
    %v6339 = vpop.f32.mrb[0].mxu0
    %v6340 = vadd.f32 0.0, %v6339
    %v6341 = vpop.f32.mrb[0].mxu0
    %v6342 = vadd.f32 0.0, %v6341
    %6343 = vdwg.mxu0
    %6344 = vmatprep.subr.mxu0 %v6212
    %6345 = vmatpush1.msra.mxu0 %v6211
    %6346 = vmatprep.subr.mxu0 %v6216
    %6347 = vmatpush1.msra.mxu0 %v6215
    %6348 = vmatprep.subr.mxu0 %v6220
    %6349 = vmatpush1.msra.mxu0 %v6219
    %6350 = vmatprep.subr.mxu0 %v6224
    %6351 = vmatpush1.msra.mxu0 %v6223
    %6352 = vmatprep.subr.mxu0 %v6228
    %6353 = vmatpush1.msra.mxu0 %v6227
    %6354 = vmatprep.subr.mxu0 %v6232
    %6355 = vmatpush1.msra.mxu0 %v6231
    %6356 = vmatprep.subr.mxu0 %v6236
    %6357 = vmatpush1.msra.mxu0 %v6235
    %6358 = vmatprep.subr.mxu0 %v6240
    %6359 = vmatpush1.msra.mxu0 %v6239
    %6360 = vmatprep.subr.mxu0 %v6244
    %6361 = vmatpush1.msra.mxu0 %v6243
    %6362 = vmatprep.subr.mxu0 %v6248
    %6363 = vmatpush1.msra.mxu0 %v6247
    %6364 = vmatprep.subr.mxu0 %v6252
    %6365 = vmatpush1.msra.mxu0 %v6251
    %6366 = vmatprep.subr.mxu0 %v6256
    %6367 = vmatpush1.msra.mxu0 %v6255
    %6368 = vmatprep.subr.mxu0 %v6260
    %6369 = vmatpush1.msra.mxu0 %v6259
    %6370 = vmatprep.subr.mxu0 %v6264
    %6371 = vmatpush1.msra.mxu0 %v6263
    %6372 = vmatprep.subr.mxu0 %v6268
    %6373 = vmatpush1.msra.mxu0 %v6267
    %6374 = vmatprep.subr.mxu0 %v6272
    %6375 = vmatpush1.msra.mxu0 %v6271
    %6376 = vmatprep.subr.mxu0 0.0
    %6377 = vmatpush1.msra.mxu0 0.0
    %6378 = vmatprep.subr.mxu0 0.0
    %6379 = vmatpush1.msra.mxu0 0.0
    %6380 = vmatprep.subr.mxu0 0.0
    %6381 = vmatpush1.msra.mxu0 0.0
    %6382 = vmatprep.subr.mxu0 0.0
    %6383 = vmatpush1.msra.mxu0 0.0
    %6384 = vmatprep.subr.mxu0 0.0
    %6385 = vmatpush1.msra.mxu0 0.0
    %6386 = vmatprep.subr.mxu0 0.0
    %6387 = vmatpush1.msra.mxu0 0.0
    %6388 = vmatprep.subr.mxu0 0.0
    %6389 = vmatpush1.msra.mxu0 0.0
    %6390 = vmatprep.subr.mxu0 0.0
    %6391 = vmatpush1.msra.mxu0 0.0
    %6392 = vmatprep.subr.mxu0 0.0
    %6393 = vmatpush1.msra.mxu0 0.0
    %6394 = vmatprep.subr.mxu0 0.0
    %6395 = vmatpush1.msra.mxu0 0.0
    %6396 = vmatprep.subr.mxu0 0.0
    %6397 = vmatpush1.msra.mxu0 0.0
    %6398 = vmatprep.subr.mxu0 0.0
    %6399 = vmatpush1.msra.mxu0 0.0
    %6400 = vmatprep.subr.mxu0 0.0
    %6401 = vmatpush1.msra.mxu0 0.0
    %6402 = vmatprep.subr.mxu0 0.0
    %6403 = vmatpush1.msra.mxu0 0.0
    %6404 = vmatprep.subr.mxu0 0.0
    %6405 = vmatpush1.msra.mxu0 0.0
    %6406 = vmatprep.subr.mxu0 0.0
    %6407 = vmatpush1.msra.mxu0 0.0
    %6408 = vmatprep.mubr.f32.mxu0 0.0
    %6409 = vmatmul.mubr.f32.gmra.mrb[0].mxu0 %v6203
    %v6410 = vpop.f32.mrb[0].mxu0
    %v6411 = vadd.f32 0.0, %v6410
    %v6412 = vpop.f32.mrb[0].mxu0
    %v6413 = vadd.f32 0.0, %v6412
    %6414 = vdwg.mxu0
    %v6415 = vadd.f32 %v6205, %v6340
    %v6416 = vadd.f32 %v6206, %v6342
    %v6417 = vadd.f32 %v6207, %v6411
    %v6418 = vadd.f32 %v6208, %v6413
    %v6419 = vxor.u32 %v6415, 2147483648
    %v6420 = vmul.f32 %v6419, 1.442695
    %v6421 = vpow.pop %v6420
    %v6422 = vadd.f32 %v6421, 1.0
    %v6423 = vrcp.pop %v6422
    %v6424 = vmul.f32 1.0, %v6423
    %v6425 = vxor.u32 %v6416, 2147483648
    %v6426 = vmul.f32 %v6425, 1.442695
    %v6427 = vpow.pop %v6426
    %v6428 = vadd.f32 %v6427, 1.0
    %v6429 = vrcp.pop %v6428
    %v6430 = vmul.f32 1.0, %v6429
    %v6431 = vtanh.pop %v6417
    %v6432 = vxor.u32 %v6418, 2147483648
    %v6433 = vmul.f32 %v6432, 1.442695
    %v6434 = vpow.pop %v6433
    %v6435 = vadd.f32 %v6434, 1.0
    %v6436 = vrcp.pop %v6435
    %v6437 = vmul.f32 1.0, %v6436
    %v6438 = vmul.f32 %v6430, %v6201
    %v6439 = vmul.f32 %v6424, %v6431
    %v6440 = vadd.f32 %v6438, %v6439
    %v6441 = vtanh.pop %v6440
    %v6442 = vmul.f32 %v6437, %v6441
    %6443 = vst [vmem:[#allocation3 + $0xa8] sm:$0xff] %v6442
    %v6444 = vld [vmem:[#allocation3] sm:$0xff]
    %v6445 = vld [vmem:[#allocation3 + $0x8] sm:$0xff]
    %v6446 = vld [vmem:[#allocation3 + $0x10] sm:$0xff]
    %v6447 = vld [vmem:[#allocation3 + $0x18] sm:$0xff]
    %v6448 = vld [vmem:[#allocation3 + $0x20] sm:$0xff]
    %v6449 = vld [vmem:[#allocation3 + $0x28] sm:$0xff]
    %v6450 = vld [vmem:[#allocation3 + $0x30] sm:$0xff]
    %v6451 = vld [vmem:[#allocation3 + $0x38] sm:$0xff]
    %v6452 = vld [vmem:[#allocation3 + $0x40] sm:$0xff]
    %v6453 = vld [vmem:[#allocation3 + $0x48] sm:$0xff]
    %v6454 = vld [vmem:[#allocation3 + $0x50] sm:$0xff]
    %v6455 = vld [vmem:[#allocation3 + $0x58] sm:$0xff]
    %v6456 = vld [vmem:[#allocation3 + $0x60] sm:$0xff]
    %v6457 = vld [vmem:[#allocation3 + $0x68] sm:$0xff]
    %v6458 = vld [vmem:[#allocation3 + $0x70] sm:$0xff]
    %v6459 = vld [vmem:[#allocation3 + $0x78] sm:$0xff]
    %v6460 = vld [vmem:[#allocation3 + $0x80] sm:$0xff]
    %v6461 = vld [vmem:[#allocation3 + $0x88] sm:$0xff]
    %v6462 = vld [vmem:[#allocation3 + $0x90] sm:$0xff]
    %v6463 = vld [vmem:[#allocation3 + $0x98] sm:$0xff]
    %v6464 = vld [vmem:[#allocation3 + $0xa0] sm:$0xff]
    %v6465 = vld [vmem:[#allocation3 + $0xa8] sm:$0xff]
    %v6466 = vld [vmem:[#allocation10] sm:$0xff]
    %v6467 = vld [vmem:[#allocation10 + $0x8] sm:$0xff]
    %v6468 = vld [vmem:[#allocation10 + $0x10] sm:$0xff]
    %v6469 = vld [vmem:[#allocation10 + $0x18] sm:$0xff]
    %v6470 = vld [vmem:[#allocation10 + $0x20] sm:$0xff]
    %v6471 = vld [vmem:[#allocation10 + $0x28] sm:$0xff]
    %v6472 = vld [vmem:[#allocation10 + $0x30] sm:$0xff]
    %v6473 = vld [vmem:[#allocation10 + $0x38] sm:$0xff]
    %v6474 = vld [vmem:[#allocation10 + $0x40] sm:$0xff]
    %v6475 = vld [vmem:[#allocation10 + $0x48] sm:$0xff]
    %v6476 = vld [vmem:[#allocation10 + $0x50] sm:$0xff]
    %v6477 = vld [vmem:[#allocation10 + $0x58] sm:$0xff]
    %v6478 = vld [vmem:[#allocation10 + $0x60] sm:$0xff]
    %v6479 = vld [vmem:[#allocation10 + $0x68] sm:$0xff]
    %v6480 = vld [vmem:[#allocation10 + $0x70] sm:$0xff]
    %v6481 = vld [vmem:[#allocation10 + $0x78] sm:$0xff]
    %v6482 = vld [vmem:[#allocation10 + $0x80] sm:$0xff]
    %v6483 = vld [vmem:[#allocation10 + $0x88] sm:$0xff]
    %v6484 = vld [vmem:[#allocation10 + $0x90] sm:$0xff]
    %v6485 = vld [vmem:[#allocation10 + $0x98] sm:$0xff]
    %v6486 = vld [vmem:[#allocation10 + $0xa0] sm:$0xff]
    %v6487 = vld [vmem:[#allocation10 + $0xa8] sm:$0xff]
    %v6488 = vld [vmem:[#allocation10 + $0xb0] sm:$0xff]
    %v6489 = vld [vmem:[#allocation10 + $0xb8] sm:$0xff]
    %v6490 = vld [vmem:[#allocation10 + $0xc0] sm:$0xff]
    %v6491 = vld [vmem:[#allocation10 + $0xc8] sm:$0xff]
    %v6492 = vld [vmem:[#allocation10 + $0xd0] sm:$0xff]
    %v6493 = vld [vmem:[#allocation10 + $0xd8] sm:$0xff]
    %v6494 = vld [vmem:[#allocation10 + $0xe0] sm:$0xff]
    %v6495 = vld [vmem:[#allocation10 + $0xe8] sm:$0xff]
    %v6496 = vld [vmem:[#allocation10 + $0xf0] sm:$0xff]
    %v6497 = vld [vmem:[#allocation10 + $0xf8] sm:$0xff]
    %v6498 = vld [vmem:[#allocation10 + $0x100] sm:$0xff]
    %v6499 = vld [vmem:[#allocation10 + $0x108] sm:$0xff]
    %v6500 = vld [vmem:[#allocation10 + $0x110] sm:$0xff]
    %v6501 = vld [vmem:[#allocation10 + $0x118] sm:$0xff]
    %v6502 = vld [vmem:[#allocation10 + $0x120] sm:$0xff]
    %v6503 = vld [vmem:[#allocation10 + $0x128] sm:$0xff]
    %v6504 = vld [vmem:[#allocation10 + $0x130] sm:$0xff]
    %v6505 = vld [vmem:[#allocation10 + $0x138] sm:$0xff]
    %v6506 = vld [vmem:[#allocation10 + $0x140] sm:$0xff]
    %v6507 = vld [vmem:[#allocation10 + $0x148] sm:$0xff]
    %v6508 = vld [vmem:[#allocation10 + $0x150] sm:$0xff]
    %v6509 = vld [vmem:[#allocation10 + $0x158] sm:$0xff]
    %v6510 = vld [vmem:[#allocation10 + $0x160] sm:$0xff]
    %v6511 = vld [vmem:[#allocation10 + $0x168] sm:$0xff]
    %v6512 = vld [vmem:[#allocation10 + $0x170] sm:$0xff]
    %v6513 = vld [vmem:[#allocation10 + $0x178] sm:$0xff]
    %v6514 = vld [vmem:[#allocation10 + $0x180] sm:$0xff]
    %v6515 = vld [vmem:[#allocation10 + $0x188] sm:$0xff]
    %v6516 = vld [vmem:[#allocation10 + $0x190] sm:$0xff]
    %v6517 = vld [vmem:[#allocation10 + $0x198] sm:$0xff]
    %v6518 = vld [vmem:[#allocation10 + $0x1a0] sm:$0xff]
    %v6519 = vld [vmem:[#allocation10 + $0x1a8] sm:$0xff]
    %v6520 = vld [vmem:[#allocation10 + $0x1b0] sm:$0xff]
    %v6521 = vld [vmem:[#allocation10 + $0x1b8] sm:$0xff]
    %v6522 = vld [vmem:[#allocation10 + $0x1c0] sm:$0xff]
    %v6523 = vld [vmem:[#allocation10 + $0x1c8] sm:$0xff]
    %v6524 = vld [vmem:[#allocation10 + $0x1d0] sm:$0xff]
    %v6525 = vld [vmem:[#allocation10 + $0x1d8] sm:$0xff]
    %v6526 = vld [vmem:[#allocation10 + $0x1e0] sm:$0xff]
    %v6527 = vld [vmem:[#allocation10 + $0x1e8] sm:$0xff]
    %v6528 = vld [vmem:[#allocation10 + $0x1f0] sm:$0xff]
    %v6529 = vld [vmem:[#allocation10 + $0x1f8] sm:$0xff]
    %v6530 = vld [vmem:[#allocation10 + $0x200] sm:$0xff]
    %v6531 = vld [vmem:[#allocation10 + $0x208] sm:$0xff]
    %v6532 = vld [vmem:[#allocation10 + $0x210] sm:$0xff]
    %v6533 = vld [vmem:[#allocation10 + $0x218] sm:$0xff]
    %v6534 = vld [vmem:[#allocation10 + $0x220] sm:$0xff]
    %v6535 = vld [vmem:[#allocation10 + $0x228] sm:$0xff]
    %v6536 = vld [vmem:[#allocation10 + $0x230] sm:$0xff]
    %v6537 = vld [vmem:[#allocation10 + $0x238] sm:$0xff]
    %v6538 = vld [vmem:[#allocation10 + $0x240] sm:$0xff]
    %v6539 = vld [vmem:[#allocation10 + $0x248] sm:$0xff]
    %v6540 = vld [vmem:[#allocation10 + $0x250] sm:$0xff]
    %v6541 = vld [vmem:[#allocation10 + $0x258] sm:$0xff]
    %v6542 = vld [vmem:[#allocation10 + $0x260] sm:$0xff]
    %v6543 = vld [vmem:[#allocation10 + $0x268] sm:$0xff]
    %v6544 = vld [vmem:[#allocation10 + $0x270] sm:$0xff]
    %v6545 = vld [vmem:[#allocation10 + $0x278] sm:$0xff]
    %v6546 = vld [vmem:[#allocation10 + $0x280] sm:$0xff]
    %v6547 = vld [vmem:[#allocation10 + $0x288] sm:$0xff]
    %v6548 = vld [vmem:[#allocation10 + $0x290] sm:$0xff]
    %v6549 = vld [vmem:[#allocation10 + $0x298] sm:$0xff]
    %v6550 = vld [vmem:[#allocation10 + $0x2a0] sm:$0xff]
    %v6551 = vld [vmem:[#allocation10 + $0x2a8] sm:$0xff]
    %v6552 = vld [vmem:[#allocation10 + $0x2b0] sm:$0xff]
    %v6553 = vld [vmem:[#allocation10 + $0x2b8] sm:$0xff]
    %v6554 = vld [vmem:[#allocation10 + $0x2c0] sm:$0xff]
    %v6555 = vld [vmem:[#allocation10 + $0x2c8] sm:$0xff]
    %v6556 = vld [vmem:[#allocation10 + $0x2d0] sm:$0xff]
    %v6557 = vld [vmem:[#allocation10 + $0x2d8] sm:$0xff]
    %v6558 = vld [vmem:[#allocation10 + $0x2e0] sm:$0xff]
    %v6559 = vld [vmem:[#allocation10 + $0x2e8] sm:$0xff]
    %v6560 = vld [vmem:[#allocation10 + $0x2f0] sm:$0xff]
    %v6561 = vld [vmem:[#allocation10 + $0x2f8] sm:$0xff]
    %v6562 = vld [vmem:[#allocation10 + $0x300] sm:$0xff]
    %v6563 = vld [vmem:[#allocation10 + $0x308] sm:$0xff]
    %v6564 = vld [vmem:[#allocation10 + $0x310] sm:$0xff]
    %v6565 = vld [vmem:[#allocation10 + $0x318] sm:$0xff]
    %v6566 = vld [vmem:[#allocation10 + $0x320] sm:$0xff]
    %v6567 = vld [vmem:[#allocation10 + $0x328] sm:$0xff]
    %v6568 = vld [vmem:[#allocation10 + $0x330] sm:$0xff]
    %v6569 = vld [vmem:[#allocation10 + $0x338] sm:$0xff]
    %v6570 = vld [vmem:[#allocation10 + $0x340] sm:$0xff]
    %v6571 = vld [vmem:[#allocation10 + $0x348] sm:$0xff]
    %v6572 = vld [vmem:[#allocation10 + $0x350] sm:$0xff]
    %v6573 = vld [vmem:[#allocation10 + $0x358] sm:$0xff]
    %v6574 = vld [vmem:[#allocation10 + $0x360] sm:$0xff]
    %v6575 = vld [vmem:[#allocation10 + $0x368] sm:$0xff]
    %v6576 = vld [vmem:[#allocation10 + $0x370] sm:$0xff]
    %v6577 = vld [vmem:[#allocation10 + $0x378] sm:$0xff]
    %v6578 = vld [vmem:[#allocation10 + $0x380] sm:$0xff]
    %v6579 = vld [vmem:[#allocation10 + $0x388] sm:$0xff]
    %v6580 = vld [vmem:[#allocation10 + $0x390] sm:$0xff]
    %v6581 = vld [vmem:[#allocation10 + $0x398] sm:$0xff]
    %v6582 = vld [vmem:[#allocation10 + $0x3a0] sm:$0xff]
    %v6583 = vld [vmem:[#allocation10 + $0x3a8] sm:$0xff]
    %v6584 = vld [vmem:[#allocation10 + $0x3b0] sm:$0xff]
    %v6585 = vld [vmem:[#allocation10 + $0x3b8] sm:$0xff]
    %v6586 = vld [vmem:[#allocation10 + $0x3c0] sm:$0xff]
    %v6587 = vld [vmem:[#allocation10 + $0x3c8] sm:$0xff]
    %v6588 = vld [vmem:[#allocation10 + $0x3d0] sm:$0xff]
    %v6589 = vld [vmem:[#allocation10 + $0x3d8] sm:$0xff]
    %v6590 = vld [vmem:[#allocation10 + $0x3e0] sm:$0xff]
    %v6591 = vld [vmem:[#allocation10 + $0x3e8] sm:$0xff]
    %v6592 = vld [vmem:[#allocation10 + $0x3f0] sm:$0xff]
    %v6593 = vld [vmem:[#allocation10 + $0x3f8] sm:$0xff]
    %v6594 = vld [vmem:[#allocation10 + $0x400] sm:$0xff]
    %v6595 = vld [vmem:[#allocation10 + $0x408] sm:$0xff]
    %v6596 = vld [vmem:[#allocation10 + $0x410] sm:$0xff]
    %v6597 = vld [vmem:[#allocation10 + $0x418] sm:$0xff]
    %v6598 = vld [vmem:[#allocation10 + $0x420] sm:$0xff]
    %v6599 = vld [vmem:[#allocation10 + $0x428] sm:$0xff]
    %v6600 = vld [vmem:[#allocation10 + $0x430] sm:$0xff]
    %v6601 = vld [vmem:[#allocation10 + $0x438] sm:$0xff]
    %v6602 = vld [vmem:[#allocation10 + $0x440] sm:$0xff]
    %v6603 = vld [vmem:[#allocation10 + $0x448] sm:$0xff]
    %v6604 = vld [vmem:[#allocation10 + $0x450] sm:$0xff]
    %v6605 = vld [vmem:[#allocation10 + $0x458] sm:$0xff]
    %v6606 = vld [vmem:[#allocation10 + $0x460] sm:$0xff]
    %v6607 = vld [vmem:[#allocation10 + $0x468] sm:$0xff]
    %v6608 = vld [vmem:[#allocation10 + $0x470] sm:$0xff]
    %v6609 = vld [vmem:[#allocation10 + $0x478] sm:$0xff]
    %v6610 = vld [vmem:[#allocation10 + $0x480] sm:$0xff]
    %v6611 = vld [vmem:[#allocation10 + $0x488] sm:$0xff]
    %v6612 = vld [vmem:[#allocation10 + $0x490] sm:$0xff]
    %v6613 = vld [vmem:[#allocation10 + $0x498] sm:$0xff]
    %v6614 = vld [vmem:[#allocation10 + $0x4a0] sm:$0xff]
    %v6615 = vld [vmem:[#allocation10 + $0x4a8] sm:$0xff]
    %v6616 = vld [vmem:[#allocation10 + $0x4b0] sm:$0xff]
    %v6617 = vld [vmem:[#allocation10 + $0x4b8] sm:$0xff]
    %v6618 = vld [vmem:[#allocation10 + $0x4c0] sm:$0xff]
    %v6619 = vld [vmem:[#allocation10 + $0x4c8] sm:$0xff]
    %v6620 = vld [vmem:[#allocation10 + $0x4d0] sm:$0xff]
    %v6621 = vld [vmem:[#allocation10 + $0x4d8] sm:$0xff]
    %v6622 = vld [vmem:[#allocation10 + $0x4e0] sm:$0xff]
    %v6623 = vld [vmem:[#allocation10 + $0x4e8] sm:$0xff]
    %v6624 = vld [vmem:[#allocation10 + $0x4f0] sm:$0xff]
    %v6625 = vld [vmem:[#allocation10 + $0x4f8] sm:$0xff]
    %v6626 = vld [vmem:[#allocation10 + $0x500] sm:$0xff]
    %v6627 = vld [vmem:[#allocation10 + $0x508] sm:$0xff]
    %v6628 = vld [vmem:[#allocation10 + $0x510] sm:$0xff]
    %v6629 = vld [vmem:[#allocation10 + $0x518] sm:$0xff]
    %v6630 = vld [vmem:[#allocation10 + $0x520] sm:$0xff]
    %v6631 = vld [vmem:[#allocation10 + $0x528] sm:$0xff]
    %v6632 = vld [vmem:[#allocation10 + $0x530] sm:$0xff]
    %v6633 = vld [vmem:[#allocation10 + $0x538] sm:$0xff]
    %v6634 = vld [vmem:[#allocation10 + $0x540] sm:$0xff]
    %v6635 = vld [vmem:[#allocation10 + $0x548] sm:$0xff]
    %v6636 = vld [vmem:[#allocation10 + $0x550] sm:$0xff]
    %v6637 = vld [vmem:[#allocation10 + $0x558] sm:$0xff]
    %v6638 = vld [vmem:[#allocation10 + $0x560] sm:$0xff]
    %v6639 = vld [vmem:[#allocation10 + $0x568] sm:$0xff]
    %v6640 = vld [vmem:[#allocation10 + $0x570] sm:$0xff]
    %v6641 = vld [vmem:[#allocation10 + $0x578] sm:$0xff]
    %v6642 = vld [vmem:[#allocation10 + $0x580] sm:$0xff]
    %v6643 = vld [vmem:[#allocation10 + $0x588] sm:$0xff]
    %v6644 = vld [vmem:[#allocation10 + $0x590] sm:$0xff]
    %v6645 = vld [vmem:[#allocation10 + $0x598] sm:$0xff]
    %v6646 = vld [vmem:[#allocation10 + $0x5a0] sm:$0xff]
    %v6647 = vld [vmem:[#allocation10 + $0x5a8] sm:$0xff]
    %v6648 = vld [vmem:[#allocation10 + $0x5b0] sm:$0xff]
    %v6649 = vld [vmem:[#allocation10 + $0x5b8] sm:$0xff]
    %v6650 = vld [vmem:[#allocation10 + $0x5c0] sm:$0xff]
    %v6651 = vld [vmem:[#allocation10 + $0x5c8] sm:$0xff]
    %v6652 = vld [vmem:[#allocation10 + $0x5d0] sm:$0xff]
    %v6653 = vld [vmem:[#allocation10 + $0x5d8] sm:$0xff]
    %v6654 = vld [vmem:[#allocation10 + $0x5e0] sm:$0xff]
    %v6655 = vld [vmem:[#allocation10 + $0x5e8] sm:$0xff]
    %v6656 = vld [vmem:[#allocation10 + $0x5f0] sm:$0xff]
    %v6657 = vld [vmem:[#allocation10 + $0x5f8] sm:$0xff]
    %v6658 = vld [vmem:[#allocation10 + $0x600] sm:$0xff]
    %v6659 = vld [vmem:[#allocation10 + $0x608] sm:$0xff]
    %v6660 = vld [vmem:[#allocation10 + $0x610] sm:$0xff]
    %v6661 = vld [vmem:[#allocation10 + $0x618] sm:$0xff]
    %v6662 = vld [vmem:[#allocation10 + $0x620] sm:$0xff]
    %v6663 = vld [vmem:[#allocation10 + $0x628] sm:$0xff]
    %v6664 = vld [vmem:[#allocation10 + $0x630] sm:$0xff]
    %v6665 = vld [vmem:[#allocation10 + $0x638] sm:$0xff]
    %v6666 = vld [vmem:[#allocation10 + $0x640] sm:$0xff]
    %v6667 = vld [vmem:[#allocation10 + $0x648] sm:$0xff]
    %v6668 = vld [vmem:[#allocation10 + $0x650] sm:$0xff]
    %v6669 = vld [vmem:[#allocation10 + $0x658] sm:$0xff]
    %v6670 = vld [vmem:[#allocation10 + $0x660] sm:$0xff]
    %v6671 = vld [vmem:[#allocation10 + $0x668] sm:$0xff]
    %v6672 = vld [vmem:[#allocation10 + $0x670] sm:$0xff]
    %v6673 = vld [vmem:[#allocation10 + $0x678] sm:$0xff]
    %v6674 = vld [vmem:[#allocation10 + $0x680] sm:$0xff]
    %v6675 = vld [vmem:[#allocation10 + $0x688] sm:$0xff]
    %v6676 = vld [vmem:[#allocation10 + $0x690] sm:$0xff]
    %v6677 = vld [vmem:[#allocation10 + $0x698] sm:$0xff]
    %v6678 = vld [vmem:[#allocation10 + $0x6a0] sm:$0xff]
    %v6679 = vld [vmem:[#allocation10 + $0x6a8] sm:$0xff]
    %v6680 = vld [vmem:[#allocation10 + $0x6b0] sm:$0xff]
    %v6681 = vld [vmem:[#allocation10 + $0x6b8] sm:$0xff]
    %v6682 = vld [vmem:[#allocation10 + $0x6c0] sm:$0xff]
    %v6683 = vld [vmem:[#allocation10 + $0x6c8] sm:$0xff]
    %v6684 = vld [vmem:[#allocation10 + $0x6d0] sm:$0xff]
    %v6685 = vld [vmem:[#allocation10 + $0x6d8] sm:$0xff]
    %v6686 = vld [vmem:[#allocation10 + $0x6e0] sm:$0xff]
    %v6687 = vld [vmem:[#allocation10 + $0x6e8] sm:$0xff]
    %v6688 = vld [vmem:[#allocation10 + $0x6f0] sm:$0xff]
    %v6689 = vld [vmem:[#allocation10 + $0x6f8] sm:$0xff]
    %v6690 = vld [vmem:[#allocation10 + $0x700] sm:$0xff]
    %v6691 = vld [vmem:[#allocation10 + $0x708] sm:$0xff]
    %v6692 = vld [vmem:[#allocation10 + $0x710] sm:$0xff]
    %v6693 = vld [vmem:[#allocation10 + $0x718] sm:$0xff]
    %v6694 = vld [vmem:[#allocation10 + $0x720] sm:$0xff]
    %v6695 = vld [vmem:[#allocation10 + $0x728] sm:$0xff]
    %v6696 = vld [vmem:[#allocation10 + $0x730] sm:$0xff]
    %v6697 = vld [vmem:[#allocation10 + $0x738] sm:$0xff]
    %v6698 = vld [vmem:[#allocation10 + $0x740] sm:$0xff]
    %v6699 = vld [vmem:[#allocation10 + $0x748] sm:$0xff]
    %v6700 = vld [vmem:[#allocation10 + $0x750] sm:$0xff]
    %v6701 = vld [vmem:[#allocation10 + $0x758] sm:$0xff]
    %v6702 = vld [vmem:[#allocation10 + $0x760] sm:$0xff]
    %v6703 = vld [vmem:[#allocation10 + $0x768] sm:$0xff]
    %v6704 = vld [vmem:[#allocation10 + $0x770] sm:$0xff]
    %v6705 = vld [vmem:[#allocation10 + $0x778] sm:$0xff]
    %v6706 = vld [vmem:[#allocation10 + $0x780] sm:$0xff]
    %v6707 = vld [vmem:[#allocation10 + $0x788] sm:$0xff]
    %v6708 = vld [vmem:[#allocation10 + $0x790] sm:$0xff]
    %v6709 = vld [vmem:[#allocation10 + $0x798] sm:$0xff]
    %v6710 = vld [vmem:[#allocation10 + $0x7a0] sm:$0xff]
    %v6711 = vld [vmem:[#allocation10 + $0x7a8] sm:$0xff]
    %v6712 = vld [vmem:[#allocation10 + $0x7b0] sm:$0xff]
    %v6713 = vld [vmem:[#allocation10 + $0x7b8] sm:$0xff]
    %v6714 = vld [vmem:[#allocation10 + $0x7c0] sm:$0xff]
    %v6715 = vld [vmem:[#allocation10 + $0x7c8] sm:$0xff]
    %v6716 = vld [vmem:[#allocation10 + $0x7d0] sm:$0xff]
    %v6717 = vld [vmem:[#allocation10 + $0x7d8] sm:$0xff]
    %v6718 = vld [vmem:[#allocation10 + $0x7e0] sm:$0xff]
    %v6719 = vld [vmem:[#allocation10 + $0x7e8] sm:$0xff]
    %v6720 = vld [vmem:[#allocation10 + $0x7f0] sm:$0xff]
    %v6721 = vld [vmem:[#allocation10 + $0x7f8] sm:$0xff]
    %v6722 = vld [vmem:[#allocation10 + $0x800] sm:$0xff]
    %v6723 = vld [vmem:[#allocation10 + $0x808] sm:$0xff]
    %v6724 = vld [vmem:[#allocation10 + $0x810] sm:$0xff]
    %v6725 = vld [vmem:[#allocation10 + $0x818] sm:$0xff]
    %v6726 = vld [vmem:[#allocation10 + $0x820] sm:$0xff]
    %v6727 = vld [vmem:[#allocation10 + $0x828] sm:$0xff]
    %v6728 = vld [vmem:[#allocation10 + $0x830] sm:$0xff]
    %v6729 = vld [vmem:[#allocation10 + $0x838] sm:$0xff]
    %v6730 = vld [vmem:[#allocation10 + $0x840] sm:$0xff]
    %v6731 = vld [vmem:[#allocation10 + $0x848] sm:$0xff]
    %v6732 = vld [vmem:[#allocation10 + $0x850] sm:$0xff]
    %v6733 = vld [vmem:[#allocation10 + $0x858] sm:$0xff]
    %v6734 = vld [vmem:[#allocation10 + $0x860] sm:$0xff]
    %v6735 = vld [vmem:[#allocation10 + $0x868] sm:$0xff]
    %v6736 = vld [vmem:[#allocation10 + $0x870] sm:$0xff]
    %v6737 = vld [vmem:[#allocation10 + $0x878] sm:$0xff]
    %v6738 = vld [vmem:[#allocation10 + $0x880] sm:$0xff]
    %v6739 = vld [vmem:[#allocation10 + $0x888] sm:$0xff]
    %v6740 = vld [vmem:[#allocation10 + $0x890] sm:$0xff]
    %v6741 = vld [vmem:[#allocation10 + $0x898] sm:$0xff]
    %v6742 = vld [vmem:[#allocation10 + $0x8a0] sm:$0xff]
    %v6743 = vld [vmem:[#allocation10 + $0x8a8] sm:$0xff]
    %v6744 = vld [vmem:[#allocation10 + $0x8b0] sm:$0xff]
    %v6745 = vld [vmem:[#allocation10 + $0x8b8] sm:$0xff]
    %v6746 = vld [vmem:[#allocation10 + $0x8c0] sm:$0xff]
    %v6747 = vld [vmem:[#allocation10 + $0x8c8] sm:$0xff]
    %v6748 = vld [vmem:[#allocation10 + $0x8d0] sm:$0xff]
    %v6749 = vld [vmem:[#allocation10 + $0x8d8] sm:$0xff]
    %v6750 = vld [vmem:[#allocation10 + $0x8e0] sm:$0xff]
    %v6751 = vld [vmem:[#allocation10 + $0x8e8] sm:$0xff]
    %v6752 = vld [vmem:[#allocation10 + $0x8f0] sm:$0xff]
    %v6753 = vld [vmem:[#allocation10 + $0x8f8] sm:$0xff]
    %v6754 = vld [vmem:[#allocation10 + $0x900] sm:$0xff]
    %v6755 = vld [vmem:[#allocation10 + $0x908] sm:$0xff]
    %v6756 = vld [vmem:[#allocation10 + $0x910] sm:$0xff]
    %v6757 = vld [vmem:[#allocation10 + $0x918] sm:$0xff]
    %v6758 = vld [vmem:[#allocation10 + $0x920] sm:$0xff]
    %v6759 = vld [vmem:[#allocation10 + $0x928] sm:$0xff]
    %v6760 = vld [vmem:[#allocation10 + $0x930] sm:$0xff]
    %v6761 = vld [vmem:[#allocation10 + $0x938] sm:$0xff]
    %v6762 = vld [vmem:[#allocation10 + $0x940] sm:$0xff]
    %v6763 = vld [vmem:[#allocation10 + $0x948] sm:$0xff]
    %v6764 = vld [vmem:[#allocation10 + $0x950] sm:$0xff]
    %v6765 = vld [vmem:[#allocation10 + $0x958] sm:$0xff]
    %v6766 = vld [vmem:[#allocation10 + $0x960] sm:$0xff]
    %v6767 = vld [vmem:[#allocation10 + $0x968] sm:$0xff]
    %v6768 = vld [vmem:[#allocation10 + $0x970] sm:$0xff]
    %v6769 = vld [vmem:[#allocation10 + $0x978] sm:$0xff]
    %v6770 = vld [vmem:[#allocation10 + $0x980] sm:$0xff]
    %v6771 = vld [vmem:[#allocation10 + $0x988] sm:$0xff]
    %v6772 = vld [vmem:[#allocation10 + $0x990] sm:$0xff]
    %v6773 = vld [vmem:[#allocation10 + $0x998] sm:$0xff]
    %v6774 = vld [vmem:[#allocation10 + $0x9a0] sm:$0xff]
    %v6775 = vld [vmem:[#allocation10 + $0x9a8] sm:$0xff]
    %v6776 = vld [vmem:[#allocation10 + $0x9b0] sm:$0xff]
    %v6777 = vld [vmem:[#allocation10 + $0x9b8] sm:$0xff]
    %v6778 = vld [vmem:[#allocation10 + $0x9c0] sm:$0xff]
    %v6779 = vld [vmem:[#allocation10 + $0x9c8] sm:$0xff]
    %v6780 = vld [vmem:[#allocation10 + $0x9d0] sm:$0xff]
    %v6781 = vld [vmem:[#allocation10 + $0x9d8] sm:$0xff]
    %v6782 = vld [vmem:[#allocation10 + $0x9e0] sm:$0xff]
    %v6783 = vld [vmem:[#allocation10 + $0x9e8] sm:$0xff]
    %v6784 = vld [vmem:[#allocation10 + $0x9f0] sm:$0xff]
    %v6785 = vld [vmem:[#allocation10 + $0x9f8] sm:$0xff]
    %v6786 = vld [vmem:[#allocation10 + $0xa00] sm:$0xff]
    %v6787 = vld [vmem:[#allocation10 + $0xa08] sm:$0xff]
    %v6788 = vld [vmem:[#allocation10 + $0xa10] sm:$0xff]
    %v6789 = vld [vmem:[#allocation10 + $0xa18] sm:$0xff]
    %v6790 = vld [vmem:[#allocation10 + $0xa20] sm:$0xff]
    %v6791 = vld [vmem:[#allocation10 + $0xa28] sm:$0xff]
    %v6792 = vld [vmem:[#allocation10 + $0xa30] sm:$0xff]
    %v6793 = vld [vmem:[#allocation10 + $0xa38] sm:$0xff]
    %v6794 = vld [vmem:[#allocation10 + $0xa40] sm:$0xff]
    %v6795 = vld [vmem:[#allocation10 + $0xa48] sm:$0xff]
    %v6796 = vld [vmem:[#allocation10 + $0xa50] sm:$0xff]
    %v6797 = vld [vmem:[#allocation10 + $0xa58] sm:$0xff]
    %v6798 = vld [vmem:[#allocation10 + $0xa60] sm:$0xff]
    %v6799 = vld [vmem:[#allocation10 + $0xa68] sm:$0xff]
    %v6800 = vld [vmem:[#allocation10 + $0xa70] sm:$0xff]
    %v6801 = vld [vmem:[#allocation10 + $0xa78] sm:$0xff]
    %v6802 = vld [vmem:[#allocation10 + $0xa80] sm:$0xff]
    %v6803 = vld [vmem:[#allocation10 + $0xa88] sm:$0xff]
    %v6804 = vld [vmem:[#allocation10 + $0xa90] sm:$0xff]
    %v6805 = vld [vmem:[#allocation10 + $0xa98] sm:$0xff]
    %v6806 = vld [vmem:[#allocation10 + $0xaa0] sm:$0xff]
    %v6807 = vld [vmem:[#allocation10 + $0xaa8] sm:$0xff]
    %v6808 = vld [vmem:[#allocation10 + $0xab0] sm:$0xff]
    %v6809 = vld [vmem:[#allocation10 + $0xab8] sm:$0xff]
    %v6810 = vld [vmem:[#allocation10 + $0xac0] sm:$0xff]
    %v6811 = vld [vmem:[#allocation10 + $0xac8] sm:$0xff]
    %v6812 = vld [vmem:[#allocation10 + $0xad0] sm:$0xff]
    %v6813 = vld [vmem:[#allocation10 + $0xad8] sm:$0xff]
    %v6814 = vld [vmem:[#allocation10 + $0xae0] sm:$0xff]
    %v6815 = vld [vmem:[#allocation10 + $0xae8] sm:$0xff]
    %v6816 = vld [vmem:[#allocation10 + $0xaf0] sm:$0xff]
    %v6817 = vld [vmem:[#allocation10 + $0xaf8] sm:$0xff]
    %v6818 = vld [vmem:[#allocation12] sm:$0x1]
    %v6820 = vlaneseq
    %v6821 = vshrl.u32 %v6820, 7
    %v6822 = vsub.s32 0, %v6821
    %v6823 = vrot.slane %v6818, %v6822
    %6825 = vmatprep.subr.mxu0 0.0
    %6826 = vmatpush1.msra.mxu0 %v6466
    %6827 = vmatprep.subr.mxu0 0.0
    %6828 = vmatpush1.msra.mxu0 %v6467
    %6829 = vmatprep.subr.mxu0 0.0
    %6830 = vmatpush1.msra.mxu0 %v6468
    %6831 = vmatprep.subr.mxu0 0.0
    %6832 = vmatpush1.msra.mxu0 %v6469
    %6833 = vmatprep.subr.mxu0 0.0
    %6834 = vmatpush1.msra.mxu0 %v6470
    %6835 = vmatprep.subr.mxu0 0.0
    %6836 = vmatpush1.msra.mxu0 %v6471
    %6837 = vmatprep.subr.mxu0 0.0
    %6838 = vmatpush1.msra.mxu0 %v6472
    %6839 = vmatprep.subr.mxu0 0.0
    %6840 = vmatpush1.msra.mxu0 %v6473
    %6841 = vmatprep.subr.mxu0 0.0
    %6842 = vmatpush1.msra.mxu0 %v6474
    %6843 = vmatprep.subr.mxu0 0.0
    %6844 = vmatpush1.msra.mxu0 %v6475
    %6845 = vmatprep.subr.mxu0 0.0
    %6846 = vmatpush1.msra.mxu0 %v6476
    %6847 = vmatprep.subr.mxu0 0.0
    %6848 = vmatpush1.msra.mxu0 %v6477
    %6849 = vmatprep.subr.mxu0 0.0
    %6850 = vmatpush1.msra.mxu0 %v6478
    %6851 = vmatprep.subr.mxu0 0.0
    %6852 = vmatpush1.msra.mxu0 %v6479
    %6853 = vmatprep.subr.mxu0 0.0
    %6854 = vmatpush1.msra.mxu0 %v6480
    %6855 = vmatprep.subr.mxu0 0.0
    %6856 = vmatpush1.msra.mxu0 %v6481
    %6857 = vmatprep.subr.mxu0 0.0
    %6858 = vmatpush1.msra.mxu0 %v6482
    %6859 = vmatprep.subr.mxu0 0.0
    %6860 = vmatpush1.msra.mxu0 %v6483
    %6861 = vmatprep.subr.mxu0 0.0
    %6862 = vmatpush1.msra.mxu0 %v6484
    %6863 = vmatprep.subr.mxu0 0.0
    %6864 = vmatpush1.msra.mxu0 %v6485
    %6865 = vmatprep.subr.mxu0 0.0
    %6866 = vmatpush1.msra.mxu0 %v6486
    %6867 = vmatprep.subr.mxu0 0.0
    %6868 = vmatpush1.msra.mxu0 %v6487
    %6869 = vmatprep.subr.mxu0 0.0
    %6870 = vmatpush1.msra.mxu0 %v6488
    %6871 = vmatprep.subr.mxu0 0.0
    %6872 = vmatpush1.msra.mxu0 %v6489
    %6873 = vmatprep.subr.mxu0 0.0
    %6874 = vmatpush1.msra.mxu0 %v6490
    %6875 = vmatprep.subr.mxu0 0.0
    %6876 = vmatpush1.msra.mxu0 %v6491
    %6877 = vmatprep.subr.mxu0 0.0
    %6878 = vmatpush1.msra.mxu0 %v6492
    %6879 = vmatprep.subr.mxu0 0.0
    %6880 = vmatpush1.msra.mxu0 %v6493
    %6881 = vmatprep.subr.mxu0 0.0
    %6882 = vmatpush1.msra.mxu0 %v6494
    %6883 = vmatprep.subr.mxu0 0.0
    %6884 = vmatpush1.msra.mxu0 %v6495
    %6885 = vmatprep.subr.mxu0 0.0
    %6886 = vmatpush1.msra.mxu0 %v6496
    %6887 = vmatprep.subr.mxu0 0.0
    %6888 = vmatpush1.msra.mxu0 %v6497
    %6889 = vmatprep.mubr.f32.mxu0 %v6445
    %6890 = vmatmul.mubr.f32.gmra.mrb[0].mxu0 %v6444
    %v6891 = vpop.f32.mrb[0].mxu0
    %v6892 = vadd.f32 %v6823, %v6891
    %v6893 = vpop.f32.mrb[0].mxu0
    %6894 = vdwg.mxu0
    %6895 = vmatprep.subr.mxu0 0.0
    %6896 = vmatpush1.msra.mxu0 %v6498
    %6897 = vmatprep.subr.mxu0 0.0
    %6898 = vmatpush1.msra.mxu0 %v6499
    %6899 = vmatprep.subr.mxu0 0.0
    %6900 = vmatpush1.msra.mxu0 %v6500
    %6901 = vmatprep.subr.mxu0 0.0
    %6902 = vmatpush1.msra.mxu0 %v6501
    %6903 = vmatprep.subr.mxu0 0.0
    %6904 = vmatpush1.msra.mxu0 %v6502
    %6905 = vmatprep.subr.mxu0 0.0
    %6906 = vmatpush1.msra.mxu0 %v6503
    %6907 = vmatprep.subr.mxu0 0.0
    %6908 = vmatpush1.msra.mxu0 %v6504
    %6909 = vmatprep.subr.mxu0 0.0
    %6910 = vmatpush1.msra.mxu0 %v6505
    %6911 = vmatprep.subr.mxu0 0.0
    %6912 = vmatpush1.msra.mxu0 %v6506
    %6913 = vmatprep.subr.mxu0 0.0
    %6914 = vmatpush1.msra.mxu0 %v6507
    %6915 = vmatprep.subr.mxu0 0.0
    %6916 = vmatpush1.msra.mxu0 %v6508
    %6917 = vmatprep.subr.mxu0 0.0
    %6918 = vmatpush1.msra.mxu0 %v6509
    %6919 = vmatprep.subr.mxu0 0.0
    %6920 = vmatpush1.msra.mxu0 %v6510
    %6921 = vmatprep.subr.mxu0 0.0
    %6922 = vmatpush1.msra.mxu0 %v6511
    %6923 = vmatprep.subr.mxu0 0.0
    %6924 = vmatpush1.msra.mxu0 %v6512
    %6925 = vmatprep.subr.mxu0 0.0
    %6926 = vmatpush1.msra.mxu0 %v6513
    %6927 = vmatprep.subr.mxu0 0.0
    %6928 = vmatpush1.msra.mxu0 %v6514
    %6929 = vmatprep.subr.mxu0 0.0
    %6930 = vmatpush1.msra.mxu0 %v6515
    %6931 = vmatprep.subr.mxu0 0.0
    %6932 = vmatpush1.msra.mxu0 %v6516
    %6933 = vmatprep.subr.mxu0 0.0
    %6934 = vmatpush1.msra.mxu0 %v6517
    %6935 = vmatprep.subr.mxu0 0.0
    %6936 = vmatpush1.msra.mxu0 %v6518
    %6937 = vmatprep.subr.mxu0 0.0
    %6938 = vmatpush1.msra.mxu0 %v6519
    %6939 = vmatprep.subr.mxu0 0.0
    %6940 = vmatpush1.msra.mxu0 %v6520
    %6941 = vmatprep.subr.mxu0 0.0
    %6942 = vmatpush1.msra.mxu0 %v6521
    %6943 = vmatprep.subr.mxu0 0.0
    %6944 = vmatpush1.msra.mxu0 %v6522
    %6945 = vmatprep.subr.mxu0 0.0
    %6946 = vmatpush1.msra.mxu0 %v6523
    %6947 = vmatprep.subr.mxu0 0.0
    %6948 = vmatpush1.msra.mxu0 %v6524
    %6949 = vmatprep.subr.mxu0 0.0
    %6950 = vmatpush1.msra.mxu0 %v6525
    %6951 = vmatprep.subr.mxu0 0.0
    %6952 = vmatpush1.msra.mxu0 %v6526
    %6953 = vmatprep.subr.mxu0 0.0
    %6954 = vmatpush1.msra.mxu0 %v6527
    %6955 = vmatprep.subr.mxu0 0.0
    %6956 = vmatpush1.msra.mxu0 %v6528
    %6957 = vmatprep.subr.mxu0 0.0
    %6958 = vmatpush1.msra.mxu0 %v6529
    %6959 = vmatprep.mubr.f32.mxu0 %v6447
    %6960 = vmatmul.mubr.f32.gmra.mrb[0].mxu0 %v6446
    %v6961 = vpop.f32.mrb[0].mxu0
    %v6962 = vadd.f32 %v6892, %v6961
    %v6963 = vpop.f32.mrb[0].mxu0
    %6964 = vdwg.mxu0
    %6965 = vmatprep.subr.mxu0 0.0
    %6966 = vmatpush1.msra.mxu0 %v6530
    %6967 = vmatprep.subr.mxu0 0.0
    %6968 = vmatpush1.msra.mxu0 %v6531
    %6969 = vmatprep.subr.mxu0 0.0
    %6970 = vmatpush1.msra.mxu0 %v6532
    %6971 = vmatprep.subr.mxu0 0.0
    %6972 = vmatpush1.msra.mxu0 %v6533
    %6973 = vmatprep.subr.mxu0 0.0
    %6974 = vmatpush1.msra.mxu0 %v6534
    %6975 = vmatprep.subr.mxu0 0.0
    %6976 = vmatpush1.msra.mxu0 %v6535
    %6977 = vmatprep.subr.mxu0 0.0
    %6978 = vmatpush1.msra.mxu0 %v6536
    %6979 = vmatprep.subr.mxu0 0.0
    %6980 = vmatpush1.msra.mxu0 %v6537
    %6981 = vmatprep.subr.mxu0 0.0
    %6982 = vmatpush1.msra.mxu0 %v6538
    %6983 = vmatprep.subr.mxu0 0.0
    %6984 = vmatpush1.msra.mxu0 %v6539
    %6985 = vmatprep.subr.mxu0 0.0
    %6986 = vmatpush1.msra.mxu0 %v6540
    %6987 = vmatprep.subr.mxu0 0.0
    %6988 = vmatpush1.msra.mxu0 %v6541
    %6989 = vmatprep.subr.mxu0 0.0
    %6990 = vmatpush1.msra.mxu0 %v6542
    %6991 = vmatprep.subr.mxu0 0.0
    %6992 = vmatpush1.msra.mxu0 %v6543
    %6993 = vmatprep.subr.mxu0 0.0
    %6994 = vmatpush1.msra.mxu0 %v6544
    %6995 = vmatprep.subr.mxu0 0.0
    %6996 = vmatpush1.msra.mxu0 %v6545
    %6997 = vmatprep.subr.mxu0 0.0
    %6998 = vmatpush1.msra.mxu0 %v6546
    %6999 = vmatprep.subr.mxu0 0.0
    %7000 = vmatpush1.msra.mxu0 %v6547
    %7001 = vmatprep.subr.mxu0 0.0
    %7002 = vmatpush1.msra.mxu0 %v6548
    %7003 = vmatprep.subr.mxu0 0.0
    %7004 = vmatpush1.msra.mxu0 %v6549
    %7005 = vmatprep.subr.mxu0 0.0
    %7006 = vmatpush1.msra.mxu0 %v6550
    %7007 = vmatprep.subr.mxu0 0.0
    %7008 = vmatpush1.msra.mxu0 %v6551
    %7009 = vmatprep.subr.mxu0 0.0
    %7010 = vmatpush1.msra.mxu0 %v6552
    %7011 = vmatprep.subr.mxu0 0.0
    %7012 = vmatpush1.msra.mxu0 %v6553
    %7013 = vmatprep.subr.mxu0 0.0
    %7014 = vmatpush1.msra.mxu0 %v6554
    %7015 = vmatprep.subr.mxu0 0.0
    %7016 = vmatpush1.msra.mxu0 %v6555
    %7017 = vmatprep.subr.mxu0 0.0
    %7018 = vmatpush1.msra.mxu0 %v6556
    %7019 = vmatprep.subr.mxu0 0.0
    %7020 = vmatpush1.msra.mxu0 %v6557
    %7021 = vmatprep.subr.mxu0 0.0
    %7022 = vmatpush1.msra.mxu0 %v6558
    %7023 = vmatprep.subr.mxu0 0.0
    %7024 = vmatpush1.msra.mxu0 %v6559
    %7025 = vmatprep.subr.mxu0 0.0
    %7026 = vmatpush1.msra.mxu0 %v6560
    %7027 = vmatprep.subr.mxu0 0.0
    %7028 = vmatpush1.msra.mxu0 %v6561
    %7029 = vmatprep.mubr.f32.mxu0 %v6449
    %7030 = vmatmul.mubr.f32.gmra.mrb[0].mxu0 %v6448
    %v7031 = vpop.f32.mrb[0].mxu0
    %v7032 = vadd.f32 %v6962, %v7031
    %v7033 = vpop.f32.mrb[0].mxu0
    %7034 = vdwg.mxu0
    %7035 = vmatprep.subr.mxu0 0.0
    %7036 = vmatpush1.msra.mxu0 %v6562
    %7037 = vmatprep.subr.mxu0 0.0
    %7038 = vmatpush1.msra.mxu0 %v6563
    %7039 = vmatprep.subr.mxu0 0.0
    %7040 = vmatpush1.msra.mxu0 %v6564
    %7041 = vmatprep.subr.mxu0 0.0
    %7042 = vmatpush1.msra.mxu0 %v6565
    %7043 = vmatprep.subr.mxu0 0.0
    %7044 = vmatpush1.msra.mxu0 %v6566
    %7045 = vmatprep.subr.mxu0 0.0
    %7046 = vmatpush1.msra.mxu0 %v6567
    %7047 = vmatprep.subr.mxu0 0.0
    %7048 = vmatpush1.msra.mxu0 %v6568
    %7049 = vmatprep.subr.mxu0 0.0
    %7050 = vmatpush1.msra.mxu0 %v6569
    %7051 = vmatprep.subr.mxu0 0.0
    %7052 = vmatpush1.msra.mxu0 %v6570
    %7053 = vmatprep.subr.mxu0 0.0
    %7054 = vmatpush1.msra.mxu0 %v6571
    %7055 = vmatprep.subr.mxu0 0.0
    %7056 = vmatpush1.msra.mxu0 %v6572
    %7057 = vmatprep.subr.mxu0 0.0
    %7058 = vmatpush1.msra.mxu0 %v6573
    %7059 = vmatprep.subr.mxu0 0.0
    %7060 = vmatpush1.msra.mxu0 %v6574
    %7061 = vmatprep.subr.mxu0 0.0
    %7062 = vmatpush1.msra.mxu0 %v6575
    %7063 = vmatprep.subr.mxu0 0.0
    %7064 = vmatpush1.msra.mxu0 %v6576
    %7065 = vmatprep.subr.mxu0 0.0
    %7066 = vmatpush1.msra.mxu0 %v6577
    %7067 = vmatprep.subr.mxu0 0.0
    %7068 = vmatpush1.msra.mxu0 %v6578
    %7069 = vmatprep.subr.mxu0 0.0
    %7070 = vmatpush1.msra.mxu0 %v6579
    %7071 = vmatprep.subr.mxu0 0.0
    %7072 = vmatpush1.msra.mxu0 %v6580
    %7073 = vmatprep.subr.mxu0 0.0
    %7074 = vmatpush1.msra.mxu0 %v6581
    %7075 = vmatprep.subr.mxu0 0.0
    %7076 = vmatpush1.msra.mxu0 %v6582
    %7077 = vmatprep.subr.mxu0 0.0
    %7078 = vmatpush1.msra.mxu0 %v6583
    %7079 = vmatprep.subr.mxu0 0.0
    %7080 = vmatpush1.msra.mxu0 %v6584
    %7081 = vmatprep.subr.mxu0 0.0
    %7082 = vmatpush1.msra.mxu0 %v6585
    %7083 = vmatprep.subr.mxu0 0.0
    %7084 = vmatpush1.msra.mxu0 %v6586
    %7085 = vmatprep.subr.mxu0 0.0
    %7086 = vmatpush1.msra.mxu0 %v6587
    %7087 = vmatprep.subr.mxu0 0.0
    %7088 = vmatpush1.msra.mxu0 %v6588
    %7089 = vmatprep.subr.mxu0 0.0
    %7090 = vmatpush1.msra.mxu0 %v6589
    %7091 = vmatprep.subr.mxu0 0.0
    %7092 = vmatpush1.msra.mxu0 %v6590
    %7093 = vmatprep.subr.mxu0 0.0
    %7094 = vmatpush1.msra.mxu0 %v6591
    %7095 = vmatprep.subr.mxu0 0.0
    %7096 = vmatpush1.msra.mxu0 %v6592
    %7097 = vmatprep.subr.mxu0 0.0
    %7098 = vmatpush1.msra.mxu0 %v6593
    %7099 = vmatprep.mubr.f32.mxu0 %v6451
    %7100 = vmatmul.mubr.f32.gmra.mrb[0].mxu0 %v6450
    %v7101 = vpop.f32.mrb[0].mxu0
    %v7102 = vadd.f32 %v7032, %v7101
    %v7103 = vpop.f32.mrb[0].mxu0
    %7104 = vdwg.mxu0
    %7105 = vmatprep.subr.mxu0 0.0
    %7106 = vmatpush1.msra.mxu0 %v6594
    %7107 = vmatprep.subr.mxu0 0.0
    %7108 = vmatpush1.msra.mxu0 %v6595
    %7109 = vmatprep.subr.mxu0 0.0
    %7110 = vmatpush1.msra.mxu0 %v6596
    %7111 = vmatprep.subr.mxu0 0.0
    %7112 = vmatpush1.msra.mxu0 %v6597
    %7113 = vmatprep.subr.mxu0 0.0
    %7114 = vmatpush1.msra.mxu0 %v6598
    %7115 = vmatprep.subr.mxu0 0.0
    %7116 = vmatpush1.msra.mxu0 %v6599
    %7117 = vmatprep.subr.mxu0 0.0
    %7118 = vmatpush1.msra.mxu0 %v6600
    %7119 = vmatprep.subr.mxu0 0.0
    %7120 = vmatpush1.msra.mxu0 %v6601
    %7121 = vmatprep.subr.mxu0 0.0
    %7122 = vmatpush1.msra.mxu0 %v6602
    %7123 = vmatprep.subr.mxu0 0.0
    %7124 = vmatpush1.msra.mxu0 %v6603
    %7125 = vmatprep.subr.mxu0 0.0
    %7126 = vmatpush1.msra.mxu0 %v6604
    %7127 = vmatprep.subr.mxu0 0.0
    %7128 = vmatpush1.msra.mxu0 %v6605
    %7129 = vmatprep.subr.mxu0 0.0
    %7130 = vmatpush1.msra.mxu0 %v6606
    %7131 = vmatprep.subr.mxu0 0.0
    %7132 = vmatpush1.msra.mxu0 %v6607
    %7133 = vmatprep.subr.mxu0 0.0
    %7134 = vmatpush1.msra.mxu0 %v6608
    %7135 = vmatprep.subr.mxu0 0.0
    %7136 = vmatpush1.msra.mxu0 %v6609
    %7137 = vmatprep.subr.mxu0 0.0
    %7138 = vmatpush1.msra.mxu0 %v6610
    %7139 = vmatprep.subr.mxu0 0.0
    %7140 = vmatpush1.msra.mxu0 %v6611
    %7141 = vmatprep.subr.mxu0 0.0
    %7142 = vmatpush1.msra.mxu0 %v6612
    %7143 = vmatprep.subr.mxu0 0.0
    %7144 = vmatpush1.msra.mxu0 %v6613
    %7145 = vmatprep.subr.mxu0 0.0
    %7146 = vmatpush1.msra.mxu0 %v6614
    %7147 = vmatprep.subr.mxu0 0.0
    %7148 = vmatpush1.msra.mxu0 %v6615
    %7149 = vmatprep.subr.mxu0 0.0
    %7150 = vmatpush1.msra.mxu0 %v6616
    %7151 = vmatprep.subr.mxu0 0.0
    %7152 = vmatpush1.msra.mxu0 %v6617
    %7153 = vmatprep.subr.mxu0 0.0
    %7154 = vmatpush1.msra.mxu0 %v6618
    %7155 = vmatprep.subr.mxu0 0.0
    %7156 = vmatpush1.msra.mxu0 %v6619
    %7157 = vmatprep.subr.mxu0 0.0
    %7158 = vmatpush1.msra.mxu0 %v6620
    %7159 = vmatprep.subr.mxu0 0.0
    %7160 = vmatpush1.msra.mxu0 %v6621
    %7161 = vmatprep.subr.mxu0 0.0
    %7162 = vmatpush1.msra.mxu0 %v6622
    %7163 = vmatprep.subr.mxu0 0.0
    %7164 = vmatpush1.msra.mxu0 %v6623
    %7165 = vmatprep.subr.mxu0 0.0
    %7166 = vmatpush1.msra.mxu0 %v6624
    %7167 = vmatprep.subr.mxu0 0.0
    %7168 = vmatpush1.msra.mxu0 %v6625
    %7169 = vmatprep.mubr.f32.mxu0 %v6453
    %7170 = vmatmul.mubr.f32.gmra.mrb[0].mxu0 %v6452
    %v7171 = vpop.f32.mrb[0].mxu0
    %v7172 = vadd.f32 %v7102, %v7171
    %v7173 = vpop.f32.mrb[0].mxu0
    %7174 = vdwg.mxu0
    %7175 = vmatprep.subr.mxu0 0.0
    %7176 = vmatpush1.msra.mxu0 %v6626
    %7177 = vmatprep.subr.mxu0 0.0
    %7178 = vmatpush1.msra.mxu0 %v6627
    %7179 = vmatprep.subr.mxu0 0.0
    %7180 = vmatpush1.msra.mxu0 %v6628
    %7181 = vmatprep.subr.mxu0 0.0
    %7182 = vmatpush1.msra.mxu0 %v6629
    %7183 = vmatprep.subr.mxu0 0.0
    %7184 = vmatpush1.msra.mxu0 %v6630
    %7185 = vmatprep.subr.mxu0 0.0
    %7186 = vmatpush1.msra.mxu0 %v6631
    %7187 = vmatprep.subr.mxu0 0.0
    %7188 = vmatpush1.msra.mxu0 %v6632
    %7189 = vmatprep.subr.mxu0 0.0
    %7190 = vmatpush1.msra.mxu0 %v6633
    %7191 = vmatprep.subr.mxu0 0.0
    %7192 = vmatpush1.msra.mxu0 %v6634
    %7193 = vmatprep.subr.mxu0 0.0
    %7194 = vmatpush1.msra.mxu0 %v6635
    %7195 = vmatprep.subr.mxu0 0.0
    %7196 = vmatpush1.msra.mxu0 %v6636
    %7197 = vmatprep.subr.mxu0 0.0
    %7198 = vmatpush1.msra.mxu0 %v6637
    %7199 = vmatprep.subr.mxu0 0.0
    %7200 = vmatpush1.msra.mxu0 %v6638
    %7201 = vmatprep.subr.mxu0 0.0
    %7202 = vmatpush1.msra.mxu0 %v6639
    %7203 = vmatprep.subr.mxu0 0.0
    %7204 = vmatpush1.msra.mxu0 %v6640
    %7205 = vmatprep.subr.mxu0 0.0
    %7206 = vmatpush1.msra.mxu0 %v6641
    %7207 = vmatprep.subr.mxu0 0.0
    %7208 = vmatpush1.msra.mxu0 %v6642
    %7209 = vmatprep.subr.mxu0 0.0
    %7210 = vmatpush1.msra.mxu0 %v6643
    %7211 = vmatprep.subr.mxu0 0.0
    %7212 = vmatpush1.msra.mxu0 %v6644
    %7213 = vmatprep.subr.mxu0 0.0
    %7214 = vmatpush1.msra.mxu0 %v6645
    %7215 = vmatprep.subr.mxu0 0.0
    %7216 = vmatpush1.msra.mxu0 %v6646
    %7217 = vmatprep.subr.mxu0 0.0
    %7218 = vmatpush1.msra.mxu0 %v6647
    %7219 = vmatprep.subr.mxu0 0.0
    %7220 = vmatpush1.msra.mxu0 %v6648
    %7221 = vmatprep.subr.mxu0 0.0
    %7222 = vmatpush1.msra.mxu0 %v6649
    %7223 = vmatprep.subr.mxu0 0.0
    %7224 = vmatpush1.msra.mxu0 %v6650
    %7225 = vmatprep.subr.mxu0 0.0
    %7226 = vmatpush1.msra.mxu0 %v6651
    %7227 = vmatprep.subr.mxu0 0.0
    %7228 = vmatpush1.msra.mxu0 %v6652
    %7229 = vmatprep.subr.mxu0 0.0
    %7230 = vmatpush1.msra.mxu0 %v6653
    %7231 = vmatprep.subr.mxu0 0.0
    %7232 = vmatpush1.msra.mxu0 %v6654
    %7233 = vmatprep.subr.mxu0 0.0
    %7234 = vmatpush1.msra.mxu0 %v6655
    %7235 = vmatprep.subr.mxu0 0.0
    %7236 = vmatpush1.msra.mxu0 %v6656
    %7237 = vmatprep.subr.mxu0 0.0
    %7238 = vmatpush1.msra.mxu0 %v6657
    %7239 = vmatprep.mubr.f32.mxu0 %v6455
    %7240 = vmatmul.mubr.f32.gmra.mrb[0].mxu0 %v6454
    %v7241 = vpop.f32.mrb[0].mxu0
    %v7242 = vadd.f32 %v7172, %v7241
    %v7243 = vpop.f32.mrb[0].mxu0
    %7244 = vdwg.mxu0
    %7245 = vmatprep.subr.mxu0 0.0
    %7246 = vmatpush1.msra.mxu0 %v6658
    %7247 = vmatprep.subr.mxu0 0.0
    %7248 = vmatpush1.msra.mxu0 %v6659
    %7249 = vmatprep.subr.mxu0 0.0
    %7250 = vmatpush1.msra.mxu0 %v6660
    %7251 = vmatprep.subr.mxu0 0.0
    %7252 = vmatpush1.msra.mxu0 %v6661
    %7253 = vmatprep.subr.mxu0 0.0
    %7254 = vmatpush1.msra.mxu0 %v6662
    %7255 = vmatprep.subr.mxu0 0.0
    %7256 = vmatpush1.msra.mxu0 %v6663
    %7257 = vmatprep.subr.mxu0 0.0
    %7258 = vmatpush1.msra.mxu0 %v6664
    %7259 = vmatprep.subr.mxu0 0.0
    %7260 = vmatpush1.msra.mxu0 %v6665
    %7261 = vmatprep.subr.mxu0 0.0
    %7262 = vmatpush1.msra.mxu0 %v6666
    %7263 = vmatprep.subr.mxu0 0.0
    %7264 = vmatpush1.msra.mxu0 %v6667
    %7265 = vmatprep.subr.mxu0 0.0
    %7266 = vmatpush1.msra.mxu0 %v6668
    %7267 = vmatprep.subr.mxu0 0.0
    %7268 = vmatpush1.msra.mxu0 %v6669
    %7269 = vmatprep.subr.mxu0 0.0
    %7270 = vmatpush1.msra.mxu0 %v6670
    %7271 = vmatprep.subr.mxu0 0.0
    %7272 = vmatpush1.msra.mxu0 %v6671
    %7273 = vmatprep.subr.mxu0 0.0
    %7274 = vmatpush1.msra.mxu0 %v6672
    %7275 = vmatprep.subr.mxu0 0.0
    %7276 = vmatpush1.msra.mxu0 %v6673
    %7277 = vmatprep.subr.mxu0 0.0
    %7278 = vmatpush1.msra.mxu0 %v6674
    %7279 = vmatprep.subr.mxu0 0.0
    %7280 = vmatpush1.msra.mxu0 %v6675
    %7281 = vmatprep.subr.mxu0 0.0
    %7282 = vmatpush1.msra.mxu0 %v6676
    %7283 = vmatprep.subr.mxu0 0.0
    %7284 = vmatpush1.msra.mxu0 %v6677
    %7285 = vmatprep.subr.mxu0 0.0
    %7286 = vmatpush1.msra.mxu0 %v6678
    %7287 = vmatprep.subr.mxu0 0.0
    %7288 = vmatpush1.msra.mxu0 %v6679
    %7289 = vmatprep.subr.mxu0 0.0
    %7290 = vmatpush1.msra.mxu0 %v6680
    %7291 = vmatprep.subr.mxu0 0.0
    %7292 = vmatpush1.msra.mxu0 %v6681
    %7293 = vmatprep.subr.mxu0 0.0
    %7294 = vmatpush1.msra.mxu0 %v6682
    %7295 = vmatprep.subr.mxu0 0.0
    %7296 = vmatpush1.msra.mxu0 %v6683
    %7297 = vmatprep.subr.mxu0 0.0
    %7298 = vmatpush1.msra.mxu0 %v6684
    %7299 = vmatprep.subr.mxu0 0.0
    %7300 = vmatpush1.msra.mxu0 %v6685
    %7301 = vmatprep.subr.mxu0 0.0
    %7302 = vmatpush1.msra.mxu0 %v6686
    %7303 = vmatprep.subr.mxu0 0.0
    %7304 = vmatpush1.msra.mxu0 %v6687
    %7305 = vmatprep.subr.mxu0 0.0
    %7306 = vmatpush1.msra.mxu0 %v6688
    %7307 = vmatprep.subr.mxu0 0.0
    %7308 = vmatpush1.msra.mxu0 %v6689
    %7309 = vmatprep.mubr.f32.mxu0 %v6457
    %7310 = vmatmul.mubr.f32.gmra.mrb[0].mxu0 %v6456
    %v7311 = vpop.f32.mrb[0].mxu0
    %v7312 = vadd.f32 %v7242, %v7311
    %v7313 = vpop.f32.mrb[0].mxu0
    %7314 = vdwg.mxu0
    %7315 = vmatprep.subr.mxu0 0.0
    %7316 = vmatpush1.msra.mxu0 %v6690
    %7317 = vmatprep.subr.mxu0 0.0
    %7318 = vmatpush1.msra.mxu0 %v6691
    %7319 = vmatprep.subr.mxu0 0.0
    %7320 = vmatpush1.msra.mxu0 %v6692
    %7321 = vmatprep.subr.mxu0 0.0
    %7322 = vmatpush1.msra.mxu0 %v6693
    %7323 = vmatprep.subr.mxu0 0.0
    %7324 = vmatpush1.msra.mxu0 %v6694
    %7325 = vmatprep.subr.mxu0 0.0
    %7326 = vmatpush1.msra.mxu0 %v6695
    %7327 = vmatprep.subr.mxu0 0.0
    %7328 = vmatpush1.msra.mxu0 %v6696
    %7329 = vmatprep.subr.mxu0 0.0
    %7330 = vmatpush1.msra.mxu0 %v6697
    %7331 = vmatprep.subr.mxu0 0.0
    %7332 = vmatpush1.msra.mxu0 %v6698
    %7333 = vmatprep.subr.mxu0 0.0
    %7334 = vmatpush1.msra.mxu0 %v6699
    %7335 = vmatprep.subr.mxu0 0.0
    %7336 = vmatpush1.msra.mxu0 %v6700
    %7337 = vmatprep.subr.mxu0 0.0
    %7338 = vmatpush1.msra.mxu0 %v6701
    %7339 = vmatprep.subr.mxu0 0.0
    %7340 = vmatpush1.msra.mxu0 %v6702
    %7341 = vmatprep.subr.mxu0 0.0
    %7342 = vmatpush1.msra.mxu0 %v6703
    %7343 = vmatprep.subr.mxu0 0.0
    %7344 = vmatpush1.msra.mxu0 %v6704
    %7345 = vmatprep.subr.mxu0 0.0
    %7346 = vmatpush1.msra.mxu0 %v6705
    %7347 = vmatprep.subr.mxu0 0.0
    %7348 = vmatpush1.msra.mxu0 %v6706
    %7349 = vmatprep.subr.mxu0 0.0
    %7350 = vmatpush1.msra.mxu0 %v6707
    %7351 = vmatprep.subr.mxu0 0.0
    %7352 = vmatpush1.msra.mxu0 %v6708
    %7353 = vmatprep.subr.mxu0 0.0
    %7354 = vmatpush1.msra.mxu0 %v6709
    %7355 = vmatprep.subr.mxu0 0.0
    %7356 = vmatpush1.msra.mxu0 %v6710
    %7357 = vmatprep.subr.mxu0 0.0
    %7358 = vmatpush1.msra.mxu0 %v6711
    %7359 = vmatprep.subr.mxu0 0.0
    %7360 = vmatpush1.msra.mxu0 %v6712
    %7361 = vmatprep.subr.mxu0 0.0
    %7362 = vmatpush1.msra.mxu0 %v6713
    %7363 = vmatprep.subr.mxu0 0.0
    %7364 = vmatpush1.msra.mxu0 %v6714
    %7365 = vmatprep.subr.mxu0 0.0
    %7366 = vmatpush1.msra.mxu0 %v6715
    %7367 = vmatprep.subr.mxu0 0.0
    %7368 = vmatpush1.msra.mxu0 %v6716
    %7369 = vmatprep.subr.mxu0 0.0
    %7370 = vmatpush1.msra.mxu0 %v6717
    %7371 = vmatprep.subr.mxu0 0.0
    %7372 = vmatpush1.msra.mxu0 %v6718
    %7373 = vmatprep.subr.mxu0 0.0
    %7374 = vmatpush1.msra.mxu0 %v6719
    %7375 = vmatprep.subr.mxu0 0.0
    %7376 = vmatpush1.msra.mxu0 %v6720
    %7377 = vmatprep.subr.mxu0 0.0
    %7378 = vmatpush1.msra.mxu0 %v6721
    %7379 = vmatprep.mubr.f32.mxu0 %v6459
    %7380 = vmatmul.mubr.f32.gmra.mrb[0].mxu0 %v6458
    %v7381 = vpop.f32.mrb[0].mxu0
    %v7382 = vadd.f32 %v7312, %v7381
    %v7383 = vpop.f32.mrb[0].mxu0
    %7384 = vdwg.mxu0
    %7385 = vmatprep.subr.mxu0 0.0
    %7386 = vmatpush1.msra.mxu0 %v6722
    %7387 = vmatprep.subr.mxu0 0.0
    %7388 = vmatpush1.msra.mxu0 %v6723
    %7389 = vmatprep.subr.mxu0 0.0
    %7390 = vmatpush1.msra.mxu0 %v6724
    %7391 = vmatprep.subr.mxu0 0.0
    %7392 = vmatpush1.msra.mxu0 %v6725
    %7393 = vmatprep.subr.mxu0 0.0
    %7394 = vmatpush1.msra.mxu0 %v6726
    %7395 = vmatprep.subr.mxu0 0.0
    %7396 = vmatpush1.msra.mxu0 %v6727
    %7397 = vmatprep.subr.mxu0 0.0
    %7398 = vmatpush1.msra.mxu0 %v6728
    %7399 = vmatprep.subr.mxu0 0.0
    %7400 = vmatpush1.msra.mxu0 %v6729
    %7401 = vmatprep.subr.mxu0 0.0
    %7402 = vmatpush1.msra.mxu0 %v6730
    %7403 = vmatprep.subr.mxu0 0.0
    %7404 = vmatpush1.msra.mxu0 %v6731
    %7405 = vmatprep.subr.mxu0 0.0
    %7406 = vmatpush1.msra.mxu0 %v6732
    %7407 = vmatprep.subr.mxu0 0.0
    %7408 = vmatpush1.msra.mxu0 %v6733
    %7409 = vmatprep.subr.mxu0 0.0
    %7410 = vmatpush1.msra.mxu0 %v6734
    %7411 = vmatprep.subr.mxu0 0.0
    %7412 = vmatpush1.msra.mxu0 %v6735
    %7413 = vmatprep.subr.mxu0 0.0
    %7414 = vmatpush1.msra.mxu0 %v6736
    %7415 = vmatprep.subr.mxu0 0.0
    %7416 = vmatpush1.msra.mxu0 %v6737
    %7417 = vmatprep.subr.mxu0 0.0
    %7418 = vmatpush1.msra.mxu0 %v6738
    %7419 = vmatprep.subr.mxu0 0.0
    %7420 = vmatpush1.msra.mxu0 %v6739
    %7421 = vmatprep.subr.mxu0 0.0
    %7422 = vmatpush1.msra.mxu0 %v6740
    %7423 = vmatprep.subr.mxu0 0.0
    %7424 = vmatpush1.msra.mxu0 %v6741
    %7425 = vmatprep.subr.mxu0 0.0
    %7426 = vmatpush1.msra.mxu0 %v6742
    %7427 = vmatprep.subr.mxu0 0.0
    %7428 = vmatpush1.msra.mxu0 %v6743
    %7429 = vmatprep.subr.mxu0 0.0
    %7430 = vmatpush1.msra.mxu0 %v6744
    %7431 = vmatprep.subr.mxu0 0.0
    %7432 = vmatpush1.msra.mxu0 %v6745
    %7433 = vmatprep.subr.mxu0 0.0
    %7434 = vmatpush1.msra.mxu0 %v6746
    %7435 = vmatprep.subr.mxu0 0.0
    %7436 = vmatpush1.msra.mxu0 %v6747
    %7437 = vmatprep.subr.mxu0 0.0
    %7438 = vmatpush1.msra.mxu0 %v6748
    %7439 = vmatprep.subr.mxu0 0.0
    %7440 = vmatpush1.msra.mxu0 %v6749
    %7441 = vmatprep.subr.mxu0 0.0
    %7442 = vmatpush1.msra.mxu0 %v6750
    %7443 = vmatprep.subr.mxu0 0.0
    %7444 = vmatpush1.msra.mxu0 %v6751
    %7445 = vmatprep.subr.mxu0 0.0
    %7446 = vmatpush1.msra.mxu0 %v6752
    %7447 = vmatprep.subr.mxu0 0.0
    %7448 = vmatpush1.msra.mxu0 %v6753
    %7449 = vmatprep.mubr.f32.mxu0 %v6461
    %7450 = vmatmul.mubr.f32.gmra.mrb[0].mxu0 %v6460
    %v7451 = vpop.f32.mrb[0].mxu0
    %v7452 = vadd.f32 %v7382, %v7451
    %v7453 = vpop.f32.mrb[0].mxu0
    %7454 = vdwg.mxu0
    %7455 = vmatprep.subr.mxu0 0.0
    %7456 = vmatpush1.msra.mxu0 %v6754
    %7457 = vmatprep.subr.mxu0 0.0
    %7458 = vmatpush1.msra.mxu0 %v6755
    %7459 = vmatprep.subr.mxu0 0.0
    %7460 = vmatpush1.msra.mxu0 %v6756
    %7461 = vmatprep.subr.mxu0 0.0
    %7462 = vmatpush1.msra.mxu0 %v6757
    %7463 = vmatprep.subr.mxu0 0.0
    %7464 = vmatpush1.msra.mxu0 %v6758
    %7465 = vmatprep.subr.mxu0 0.0
    %7466 = vmatpush1.msra.mxu0 %v6759
    %7467 = vmatprep.subr.mxu0 0.0
    %7468 = vmatpush1.msra.mxu0 %v6760
    %7469 = vmatprep.subr.mxu0 0.0
    %7470 = vmatpush1.msra.mxu0 %v6761
    %7471 = vmatprep.subr.mxu0 0.0
    %7472 = vmatpush1.msra.mxu0 %v6762
    %7473 = vmatprep.subr.mxu0 0.0
    %7474 = vmatpush1.msra.mxu0 %v6763
    %7475 = vmatprep.subr.mxu0 0.0
    %7476 = vmatpush1.msra.mxu0 %v6764
    %7477 = vmatprep.subr.mxu0 0.0
    %7478 = vmatpush1.msra.mxu0 %v6765
    %7479 = vmatprep.subr.mxu0 0.0
    %7480 = vmatpush1.msra.mxu0 %v6766
    %7481 = vmatprep.subr.mxu0 0.0
    %7482 = vmatpush1.msra.mxu0 %v6767
    %7483 = vmatprep.subr.mxu0 0.0
    %7484 = vmatpush1.msra.mxu0 %v6768
    %7485 = vmatprep.subr.mxu0 0.0
    %7486 = vmatpush1.msra.mxu0 %v6769
    %7487 = vmatprep.subr.mxu0 0.0
    %7488 = vmatpush1.msra.mxu0 %v6770
    %7489 = vmatprep.subr.mxu0 0.0
    %7490 = vmatpush1.msra.mxu0 %v6771
    %7491 = vmatprep.subr.mxu0 0.0
    %7492 = vmatpush1.msra.mxu0 %v6772
    %7493 = vmatprep.subr.mxu0 0.0
    %7494 = vmatpush1.msra.mxu0 %v6773
    %7495 = vmatprep.subr.mxu0 0.0
    %7496 = vmatpush1.msra.mxu0 %v6774
    %7497 = vmatprep.subr.mxu0 0.0
    %7498 = vmatpush1.msra.mxu0 %v6775
    %7499 = vmatprep.subr.mxu0 0.0
    %7500 = vmatpush1.msra.mxu0 %v6776
    %7501 = vmatprep.subr.mxu0 0.0
    %7502 = vmatpush1.msra.mxu0 %v6777
    %7503 = vmatprep.subr.mxu0 0.0
    %7504 = vmatpush1.msra.mxu0 %v6778
    %7505 = vmatprep.subr.mxu0 0.0
    %7506 = vmatpush1.msra.mxu0 %v6779
    %7507 = vmatprep.subr.mxu0 0.0
    %7508 = vmatpush1.msra.mxu0 %v6780
    %7509 = vmatprep.subr.mxu0 0.0
    %7510 = vmatpush1.msra.mxu0 %v6781
    %7511 = vmatprep.subr.mxu0 0.0
    %7512 = vmatpush1.msra.mxu0 %v6782
    %7513 = vmatprep.subr.mxu0 0.0
    %7514 = vmatpush1.msra.mxu0 %v6783
    %7515 = vmatprep.subr.mxu0 0.0
    %7516 = vmatpush1.msra.mxu0 %v6784
    %7517 = vmatprep.subr.mxu0 0.0
    %7518 = vmatpush1.msra.mxu0 %v6785
    %7519 = vmatprep.mubr.f32.mxu0 %v6463
    %7520 = vmatmul.mubr.f32.gmra.mrb[0].mxu0 %v6462
    %v7521 = vpop.f32.mrb[0].mxu0
    %v7522 = vadd.f32 %v7452, %v7521
    %v7523 = vpop.f32.mrb[0].mxu0
    %7524 = vdwg.mxu0
    %7525 = vmatprep.subr.mxu0 0.0
    %7526 = vmatpush1.msra.mxu0 %v6786
    %7527 = vmatprep.subr.mxu0 0.0
    %7528 = vmatpush1.msra.mxu0 %v6787
    %7529 = vmatprep.subr.mxu0 0.0
    %7530 = vmatpush1.msra.mxu0 %v6788
    %7531 = vmatprep.subr.mxu0 0.0
    %7532 = vmatpush1.msra.mxu0 %v6789
    %7533 = vmatprep.subr.mxu0 0.0
    %7534 = vmatpush1.msra.mxu0 %v6790
    %7535 = vmatprep.subr.mxu0 0.0
    %7536 = vmatpush1.msra.mxu0 %v6791
    %7537 = vmatprep.subr.mxu0 0.0
    %7538 = vmatpush1.msra.mxu0 %v6792
    %7539 = vmatprep.subr.mxu0 0.0
    %7540 = vmatpush1.msra.mxu0 %v6793
    %7541 = vmatprep.subr.mxu0 0.0
    %7542 = vmatpush1.msra.mxu0 %v6794
    %7543 = vmatprep.subr.mxu0 0.0
    %7544 = vmatpush1.msra.mxu0 %v6795
    %7545 = vmatprep.subr.mxu0 0.0
    %7546 = vmatpush1.msra.mxu0 %v6796
    %7547 = vmatprep.subr.mxu0 0.0
    %7548 = vmatpush1.msra.mxu0 %v6797
    %7549 = vmatprep.subr.mxu0 0.0
    %7550 = vmatpush1.msra.mxu0 %v6798
    %7551 = vmatprep.subr.mxu0 0.0
    %7552 = vmatpush1.msra.mxu0 %v6799
    %7553 = vmatprep.subr.mxu0 0.0
    %7554 = vmatpush1.msra.mxu0 %v6800
    %7555 = vmatprep.subr.mxu0 0.0
    %7556 = vmatpush1.msra.mxu0 %v6801
    %7557 = vmatprep.subr.mxu0 0.0
    %7558 = vmatpush1.msra.mxu0 %v6802
    %7559 = vmatprep.subr.mxu0 0.0
    %7560 = vmatpush1.msra.mxu0 %v6803
    %7561 = vmatprep.subr.mxu0 0.0
    %7562 = vmatpush1.msra.mxu0 %v6804
    %7563 = vmatprep.subr.mxu0 0.0
    %7564 = vmatpush1.msra.mxu0 %v6805
    %7565 = vmatprep.subr.mxu0 0.0
    %7566 = vmatpush1.msra.mxu0 %v6806
    %7567 = vmatprep.subr.mxu0 0.0
    %7568 = vmatpush1.msra.mxu0 %v6807
    %7569 = vmatprep.subr.mxu0 0.0
    %7570 = vmatpush1.msra.mxu0 %v6808
    %7571 = vmatprep.subr.mxu0 0.0
    %7572 = vmatpush1.msra.mxu0 %v6809
    %7573 = vmatprep.subr.mxu0 0.0
    %7574 = vmatpush1.msra.mxu0 %v6810
    %7575 = vmatprep.subr.mxu0 0.0
    %7576 = vmatpush1.msra.mxu0 %v6811
    %7577 = vmatprep.subr.mxu0 0.0
    %7578 = vmatpush1.msra.mxu0 %v6812
    %7579 = vmatprep.subr.mxu0 0.0
    %7580 = vmatpush1.msra.mxu0 %v6813
    %7581 = vmatprep.subr.mxu0 0.0
    %7582 = vmatpush1.msra.mxu0 %v6814
    %7583 = vmatprep.subr.mxu0 0.0
    %7584 = vmatpush1.msra.mxu0 %v6815
    %7585 = vmatprep.subr.mxu0 0.0
    %7586 = vmatpush1.msra.mxu0 %v6816
    %7587 = vmatprep.subr.mxu0 0.0
    %7588 = vmatpush1.msra.mxu0 %v6817
    %7589 = vmatprep.mubr.f32.mxu0 %v6465
    %7590 = vmatmul.mubr.f32.gmra.mrb[0].mxu0 %v6464
    %v7591 = vpop.f32.mrb[0].mxu0
    %v7592 = vadd.f32 %v7522, %v7591
    %v7593 = vpop.f32.mrb[0].mxu0
    %7594 = vdwg.mxu0
    %7595 = vmax.xlane.f32.xlu0 %v7592
    %v7596 = vpop.xlane.xlu0 %7595
    %v7597 = vsub.f32 %v7592, %v7596
    %v7598 = vmul.f32 %v7597, 1.442695
    %v7599 = vpow.pop %v7598
    %7600 = vadd.xlane.f32.xlu0 %v7599
    %v7601 = vpop.xlane.xlu0 %7600
    %v7602 = vlog2.pop %v7601
    %v7603 = vmul.f32 %v7602, 0.6931472
    %v7604 = vsub.f32 %v7597, %v7603
    %7605 = vst [vmem:[#allocation13] sm:$0xff] %v7604
    // Predicated region
    $region46: #{ultra_gloves_forward.1} parent=1 // pred_check
      _
    $region47: #{ultra_gloves_forward.1} parent=1 // pred_check_branch
      %7607 = sbr.rel (0) target = $region49
    $region48: #{ultra_gloves_forward.1} parent=1 // pred_region
      %s7609 = ssub.s32 128, 128
      %7610 = vsyncadd [#allocation6], %s7609
      %s7612 = sshll.u32 [#allocation13], 4
      %s7613 = int_to_ptr.vmem [resolvable:$true] %s7612
      %7615 = dma.vmem_to_hbm [thread:$0]  %s7613, 128, %s6, [#allocation6]
    $region49: #{ultra_gloves_forward.1} parent=1 // pred_fallthru
      _
    // Predicated region
    $region50: #{ultra_gloves_forward.1} parent=1 // pred_check
      _
    $region51: #{ultra_gloves_forward.1} parent=1 // pred_check_branch
      %7617 = sbr.rel (0) target = $region53
    $region52: #{ultra_gloves_forward.1} parent=1 // pred_region
      %7618 = dma.done [#allocation6], 128
    $region53: #{ultra_gloves_forward.1} parent=1 // pred_fallthru
      _
    %7619 = vsyncpa [#allocation5], 1
    %7620 = vsyncpa [#allocation8], 1
    %7621 = vsyncpa [#allocation11], 1
    %7622 = vsyncpa [#allocation6], 1

</llo_original>
